<compile_context>
chip_gen: v7x
topology: tpu7x:2x2x1
jax: 0.10.0
libtpu: 0.0.40
codegen_flags: <defaults>
</compile_context>

<pallas_src>
import jax
import jax.numpy as jnp
from jax.experimental import pallas as pl
from jax.experimental.pallas import tpu as pltpu


def _upsampler_kernel(x_ref, w1_ref, b1_ref, w2s_ref, b2_ref, o_ref):
    # x_ref : (1, D, T)     channel-major block of T pixels (straight from NCHW)
    # w1_ref: (P2*D, D)     conv1 weight, row = (kh*p+kw)*D + co, col = ci (f32 or bf16)
    # b1_ref: (P2*D, 1)     conv1 bias, tiled per kernel position (f32)
    # w2s_ref:(P2*D, 1)     1x1-conv weight, tiled per kernel position (f32)
    # b2_ref: (1, 1)        1x1-conv bias (f32)
    # o_ref : (1, P2, T)    per-pixel patch values, kernel-position major (lane-dense)
    D = x_ref.shape[1]
    P2 = o_ref.shape[1]

    # Single MXU matmul: (P2*D, D) @ (D, T) -> (P2*D, T), f32 accumulation.
    x_blk = x_ref[0].astype(w1_ref.dtype)
    h = jnp.dot(w1_ref[...], x_blk, preferred_element_type=jnp.float32)

    # Bias + ReLU + per-channel 1x1-conv weight, all f32 on the VPU.
    t = jnp.maximum(h + b1_ref[...], 0.0) * w2s_ref[...]

    # Channel contraction: sum the D conv1 output channels inside each of the P2 kernel
    # positions.  Replaces the old block-diagonal (D*P2, P2) MXU matmul with static,
    # sublane-aligned slices + XLU sublane reductions (MXU stays free for the matmul).
    rows = []
    for kpos in range(P2):
        rows.append(jnp.sum(t[kpos * D:(kpos + 1) * D, :], axis=0, keepdims=True))
    y = jnp.concatenate(rows, axis=0) + b2_ref[...]          # (P2, T)

    o_ref[0] = y.astype(o_ref.dtype)


def _pick_pixel_tile(hw: int, max_tile: int) -> int:
    """Largest tile <= max_tile dividing h*w whose lane dim is a multiple of 128."""
    if hw <= max_tile:
        return hw
    t = (max_tile // 128) * 128
    while t >= 128:
        if hw % t == 0:
            return t
        t -= 128
    return hw  # fall back: one block per image (full extent is always legal)


def upsampler_forward(x, w1, b1, w2, b2, patch_size, *, tile_pixels=512,
                      matmul_dtype=None):
    """x: (B, dim, h, w) NCHW.  Returns (B, 1, h*p, w*p).  Matches the PyTorch module."""
    B, D, h, w = x.shape
    p = patch_size
    P2 = p * p
    hw = h * w
    T = _pick_pixel_tile(hw, tile_pixels)
    mxu_dtype = x.dtype if matmul_dtype is None else matmul_dtype

    # ConvTranspose2d #1 weight (ci, co, kh, kw) -> rows (kh*p+kw)*D + co, cols ci.
    w1rT = jnp.transpose(w1, (2, 3, 1, 0)).reshape(P2 * D, D).astype(mxu_dtype)
    b1rT = jnp.tile(b1.astype(jnp.float32), P2).reshape(P2 * D, 1)
    # 1x1 ConvTranspose2d weight (ci, 1, 1, 1), tiled per kernel position.
    w2rT = jnp.tile(w2.reshape(D).astype(jnp.float32), P2).reshape(P2 * D, 1)
    b2r = b2.reshape(1, 1).astype(jnp.float32)

    # NCHW -> (B, D, h*w): pure metadata reshape, no host-side transpose of x.
    x3 = x.reshape(B, D, hw)

    grid = (B, hw // T)
    itemsize = jnp.dtype(x.dtype).itemsize
    cost = pl.CostEstimate(
        flops=2 * B * hw * D * D * P2 + 4 * B * hw * D * P2,
        transcendentals=0,
        bytes_accessed=(B * D * hw * itemsize + B * P2 * hw * itemsize
                        + P2 * D * D * jnp.dtype(mxu_dtype).itemsize),
    )

    out3 = pl.pallas_call(
        _upsampler_kernel,
        out_shape=jax.ShapeDtypeStruct((B, P2, hw), x.dtype),
        grid_spec=pltpu.PrefetchScalarGridSpec(
            num_scalar_prefetch=0,
            grid=grid,
            in_specs=[
                pl.BlockSpec((1, D, T), lambda b, i: (b, 0, i)),
                # Grid-invariant operands (weights / biases).  For very large D these
                # could also use pipeline_mode=pl.Buffered(1) to halve weight VMEM.
                pl.BlockSpec((P2 * D, D), lambda b, i: (0, 0)),
                pl.BlockSpec((P2 * D, 1), lambda b, i: (0, 0)),
                pl.BlockSpec((P2 * D, 1), lambda b, i: (0, 0)),
                pl.BlockSpec((1, 1), lambda b, i: (0, 0)),
            ],
            out_specs=pl.BlockSpec((1, P2, T), lambda b, i: (b, 0, i)),
        ),
        compiler_params=pltpu.CompilerParams(
            dimension_semantics=("parallel", "parallel"),
            vmem_limit_bytes=40 * 1024 * 1024,
        ),
        cost_estimate=cost,
    )(x3, w1rT, b1rT, w2rT, b2r)

    # (B, p*p, h*w) -> (B, 1, h*p, w*p).  One XLA transpose over the output only.
    out = out3.reshape(B, p, p, h, w)
    out = jnp.transpose(out, (0, 3, 1, 4, 2)).reshape(B, 1, h * p, w * p)
    return out


def upsampler_reference(x, w1, b1, w2, b2, patch_size):
    """Pure-JAX reference matching PyTorch ConvTranspose2d semantics."""
    B, D, h, w = x.shape
    p = patch_size
    hp = jax.lax.Precision.HIGHEST
    # conv_transpose #1: out[b,co,i*p+kh,j*p+kw] = sum_ci x[b,ci,i,j]*w1[ci,co,kh,kw]+b1
    t = jnp.einsum("bcij,cokl->boijkl", x, w1, precision=hp)       # (B, D, h, w, p, p)
    t = jnp.transpose(t, (0, 1, 2, 4, 3, 5)).reshape(B, D, h * p, w * p)
    t = jnp.maximum(t + b1[None, :, None, None], 0.0)
    # 1x1 conv_transpose: contract over channels
    o = jnp.einsum("bchw,c->bhw", t, w2.reshape(D), precision=hp) + b2[0]
    return o[:, None, :, :]


if __name__ == "__main__":
    key = jax.random.PRNGKey(0)
    B, dim, patch_size = 2, 128, 4
    h = w = 32                       # input spatial = H / patch_size  -> output 128x128
    dtype = jnp.float32

    k1, k2, k3, k4, k5 = jax.random.split(key, 5)
    x = jax.random.normal(k1, (B, dim, h, w), dtype=dtype)
    # ConvTranspose2d(dim, dim, kernel_size=p, stride=p): weight (dim, dim, p, p)
    w1 = jax.random.normal(k2, (dim, dim, patch_size, patch_size), dtype=dtype) * 0.1
    b1 = jax.random.normal(k3, (dim,), dtype=dtype) * 0.1
    # ConvTranspose2d(dim, 1, kernel_size=1): weight (dim, 1, 1, 1)
    w2 = jax.random.normal(k4, (dim, 1, 1, 1), dtype=dtype) * 0.1
    b2 = jax.random.normal(k5, (1,), dtype=dtype) * 0.1

    # f32 path (strict check)
    out = upsampler_forward(x, w1, b1, w2, b2, patch_size)
    out = jax.block_until_ready(out)

    ref = upsampler_reference(x, w1, b1, w2, b2, patch_size)
    assert out.shape == (B, 1, h * patch_size, w * patch_size), out.shape
    assert jnp.allclose(out, ref, atol=2e-3, rtol=2e-3), \
        float(jnp.max(jnp.abs(out - ref)))

    # bf16 MXU operands (v6e/v7x fast path); accumulation and epilogue stay f32.
    out_bf16 = upsampler_forward(x, w1, b1, w2, b2, patch_size,
                                 matmul_dtype=jnp.bfloat16)
    out_bf16 = jax.block_until_ready(out_bf16)
    assert float(jnp.max(jnp.abs(out_bf16 - ref))) < 0.2

    print("KERNEL_OK")
</pallas_src>

<mosaic_0001>
module attributes {stable_mosaic.version = 11 : i64} {
  func.func @_upsampler_kernel(%arg0: i32, %arg1: i32, %arg2: memref<1x128x512xf32, #tpu.memory_space<vmem>>, %arg3: memref<2048x128xf32, #tpu.memory_space<vmem>>, %arg4: memref<2048x1xf32, #tpu.memory_space<vmem>>, %arg5: memref<2048x1xf32, #tpu.memory_space<vmem>>, %arg6: memref<1x1xf32, #tpu.memory_space<vmem>>, %arg7: memref<1x16x512xf32, #tpu.memory_space<vmem>>) attributes {dimension_semantics = [#tpu.dimension_semantics<parallel>, #tpu.dimension_semantics<parallel>], iteration_bounds = array<i64: 2, 2>, scalar_prefetch = 0 : i64, scratch_operands = 0 : i64, tpu.core_type = #tpu.core_type<tc>, window_params = [{transform_indices = @transform_0, window_bounds = array<i64: 1, 128, 512>}, {pipeline_mode = #tpu.pipeline_mode<synchronous>, transform_indices = @transform_1, window_bounds = array<i64: 2048, 128>}, {pipeline_mode = #tpu.pipeline_mode<synchronous>, transform_indices = @transform_2, window_bounds = array<i64: 2048, 1>}, {pipeline_mode = #tpu.pipeline_mode<synchronous>, transform_indices = @transform_3, window_bounds = array<i64: 2048, 1>}, {pipeline_mode = #tpu.pipeline_mode<synchronous>, transform_indices = @transform_4, window_bounds = array<i64: 1, 1>}, {transform_indices = @transform_5, window_bounds = array<i64: 1, 16, 512>}]} {
    %c0 = arith.constant 0 : index
    %c0_0 = arith.constant 0 : index
    %c0_1 = arith.constant 0 : index
    %0 = vector.load %arg2[%c0, %c0_0, %c0_1] : memref<1x128x512xf32, #tpu.memory_space<vmem>>, vector<1x128x512xf32>
    %1 = vector.shape_cast %0 : vector<1x128x512xf32> to vector<128x512xf32>
    %c0_2 = arith.constant 0 : index
    %c0_3 = arith.constant 0 : index
    %2 = vector.load %arg3[%c0_2, %c0_3] : memref<2048x128xf32, #tpu.memory_space<vmem>>, vector<2048x128xf32>
    %cst = arith.constant dense<0.000000e+00> : vector<2048x512xf32>
    %3 = tpu.matmul %2, %1, %cst {dimension_numbers = #tpu.dot_dimension_numbers<[1], [0], [0], [1], [0, 0, 1, 1], [], []>} : vector<2048x128xf32>, vector<128x512xf32>, vector<2048x512xf32> -> vector<2048x512xf32>
    %c0_4 = arith.constant 0 : index
    %c0_5 = arith.constant 0 : index
    %4 = vector.load %arg4[%c0_4, %c0_5] : memref<2048x1xf32, #tpu.memory_space<vmem>>, vector<2048x1xf32>
    %5 = vector.broadcast %4 : vector<2048x1xf32> to vector<2048x512xf32>
    %6 = arith.addf %3, %5 : vector<2048x512xf32>
    %cst_6 = arith.constant 0.000000e+00 : f32
    %7 = vector.broadcast %cst_6 : f32 to vector<2048x512xf32>
    %8 = arith.maximumf %6, %7 : vector<2048x512xf32>
    %c0_7 = arith.constant 0 : index
    %c0_8 = arith.constant 0 : index
    %9 = vector.load %arg5[%c0_7, %c0_8] : memref<2048x1xf32, #tpu.memory_space<vmem>>, vector<2048x1xf32>
    %10 = vector.broadcast %9 : vector<2048x1xf32> to vector<2048x512xf32>
    %11 = arith.mulf %8, %10 : vector<2048x512xf32>
    %12 = vector.extract_strided_slice %11 {offsets = [0, 0], sizes = [128, 512], strides = [1, 1]} : vector<2048x512xf32> to vector<128x512xf32>
    %cst_9 = arith.constant dense<0.000000e+00> : vector<512xf32>
    %13 = vector.multi_reduction <add>, %12, %cst_9 [0] : vector<128x512xf32> to vector<512xf32>
    %14 = vector.shape_cast %13 : vector<512xf32> to vector<1x512xf32>
    %15 = vector.extract_strided_slice %11 {offsets = [128, 0], sizes = [128, 512], strides = [1, 1]} : vector<2048x512xf32> to vector<128x512xf32>
    %cst_10 = arith.constant dense<0.000000e+00> : vector<512xf32>
    %16 = vector.multi_reduction <add>, %15, %cst_10 [0] : vector<128x512xf32> to vector<512xf32>
    %17 = vector.shape_cast %16 : vector<512xf32> to vector<1x512xf32>
    %18 = vector.extract_strided_slice %11 {offsets = [256, 0], sizes = [128, 512], strides = [1, 1]} : vector<2048x512xf32> to vector<128x512xf32>
    %cst_11 = arith.constant dense<0.000000e+00> : vector<512xf32>
    %19 = vector.multi_reduction <add>, %18, %cst_11 [0] : vector<128x512xf32> to vector<512xf32>
    %20 = vector.shape_cast %19 : vector<512xf32> to vector<1x512xf32>
    %21 = vector.extract_strided_slice %11 {offsets = [384, 0], sizes = [128, 512], strides = [1, 1]} : vector<2048x512xf32> to vector<128x512xf32>
    %cst_12 = arith.constant dense<0.000000e+00> : vector<512xf32>
    %22 = vector.multi_reduction <add>, %21, %cst_12 [0] : vector<128x512xf32> to vector<512xf32>
    %23 = vector.shape_cast %22 : vector<512xf32> to vector<1x512xf32>
    %24 = vector.extract_strided_slice %11 {offsets = [512, 0], sizes = [128, 512], strides = [1, 1]} : vector<2048x512xf32> to vector<128x512xf32>
    %cst_13 = arith.constant dense<0.000000e+00> : vector<512xf32>
    %25 = vector.multi_reduction <add>, %24, %cst_13 [0] : vector<128x512xf32> to vector<512xf32>
    %26 = vector.shape_cast %25 : vector<512xf32> to vector<1x512xf32>
    %27 = vector.extract_strided_slice %11 {offsets = [640, 0], sizes = [128, 512], strides = [1, 1]} : vector<2048x512xf32> to vector<128x512xf32>
    %cst_14 = arith.constant dense<0.000000e+00> : vector<512xf32>
    %28 = vector.multi_reduction <add>, %27, %cst_14 [0] : vector<128x512xf32> to vector<512xf32>
    %29 = vector.shape_cast %28 : vector<512xf32> to vector<1x512xf32>
    %30 = vector.extract_strided_slice %11 {offsets = [768, 0], sizes = [128, 512], strides = [1, 1]} : vector<2048x512xf32> to vector<128x512xf32>
    %cst_15 = arith.constant dense<0.000000e+00> : vector<512xf32>
    %31 = vector.multi_reduction <add>, %30, %cst_15 [0] : vector<128x512xf32> to vector<512xf32>
    %32 = vector.shape_cast %31 : vector<512xf32> to vector<1x512xf32>
    %33 = vector.extract_strided_slice %11 {offsets = [896, 0], sizes = [128, 512], strides = [1, 1]} : vector<2048x512xf32> to vector<128x512xf32>
    %cst_16 = arith.constant dense<0.000000e+00> : vector<512xf32>
    %34 = vector.multi_reduction <add>, %33, %cst_16 [0] : vector<128x512xf32> to vector<512xf32>
    %35 = vector.shape_cast %34 : vector<512xf32> to vector<1x512xf32>
    %36 = vector.extract_strided_slice %11 {offsets = [1024, 0], sizes = [128, 512], strides = [1, 1]} : vector<2048x512xf32> to vector<128x512xf32>
    %cst_17 = arith.constant dense<0.000000e+00> : vector<512xf32>
    %37 = vector.multi_reduction <add>, %36, %cst_17 [0] : vector<128x512xf32> to vector<512xf32>
    %38 = vector.shape_cast %37 : vector<512xf32> to vector<1x512xf32>
    %39 = vector.extract_strided_slice %11 {offsets = [1152, 0], sizes = [128, 512], strides = [1, 1]} : vector<2048x512xf32> to vector<128x512xf32>
    %cst_18 = arith.constant dense<0.000000e+00> : vector<512xf32>
    %40 = vector.multi_reduction <add>, %39, %cst_18 [0] : vector<128x512xf32> to vector<512xf32>
    %41 = vector.shape_cast %40 : vector<512xf32> to vector<1x512xf32>
    %42 = vector.extract_strided_slice %11 {offsets = [1280, 0], sizes = [128, 512], strides = [1, 1]} : vector<2048x512xf32> to vector<128x512xf32>
    %cst_19 = arith.constant dense<0.000000e+00> : vector<512xf32>
    %43 = vector.multi_reduction <add>, %42, %cst_19 [0] : vector<128x512xf32> to vector<512xf32>
    %44 = vector.shape_cast %43 : vector<512xf32> to vector<1x512xf32>
    %45 = vector.extract_strided_slice %11 {offsets = [1408, 0], sizes = [128, 512], strides = [1, 1]} : vector<2048x512xf32> to vector<128x512xf32>
    %cst_20 = arith.constant dense<0.000000e+00> : vector<512xf32>
    %46 = vector.multi_reduction <add>, %45, %cst_20 [0] : vector<128x512xf32> to vector<512xf32>
    %47 = vector.shape_cast %46 : vector<512xf32> to vector<1x512xf32>
    %48 = vector.extract_strided_slice %11 {offsets = [1536, 0], sizes = [128, 512], strides = [1, 1]} : vector<2048x512xf32> to vector<128x512xf32>
    %cst_21 = arith.constant dense<0.000000e+00> : vector<512xf32>
    %49 = vector.multi_reduction <add>, %48, %cst_21 [0] : vector<128x512xf32> to vector<512xf32>
    %50 = vector.shape_cast %49 : vector<512xf32> to vector<1x512xf32>
    %51 = vector.extract_strided_slice %11 {offsets = [1664, 0], sizes = [128, 512], strides = [1, 1]} : vector<2048x512xf32> to vector<128x512xf32>
    %cst_22 = arith.constant dense<0.000000e+00> : vector<512xf32>
    %52 = vector.multi_reduction <add>, %51, %cst_22 [0] : vector<128x512xf32> to vector<512xf32>
    %53 = vector.shape_cast %52 : vector<512xf32> to vector<1x512xf32>
    %54 = vector.extract_strided_slice %11 {offsets = [1792, 0], sizes = [128, 512], strides = [1, 1]} : vector<2048x512xf32> to vector<128x512xf32>
    %cst_23 = arith.constant dense<0.000000e+00> : vector<512xf32>
    %55 = vector.multi_reduction <add>, %54, %cst_23 [0] : vector<128x512xf32> to vector<512xf32>
    %56 = vector.shape_cast %55 : vector<512xf32> to vector<1x512xf32>
    %57 = vector.extract_strided_slice %11 {offsets = [1920, 0], sizes = [128, 512], strides = [1, 1]} : vector<2048x512xf32> to vector<128x512xf32>
    %cst_24 = arith.constant dense<0.000000e+00> : vector<512xf32>
    %58 = vector.multi_reduction <add>, %57, %cst_24 [0] : vector<128x512xf32> to vector<512xf32>
    %59 = vector.shape_cast %58 : vector<512xf32> to vector<1x512xf32>
    %60 = tpu.concatenate %14, %17, %20, %23, %26, %29, %32, %35, %38, %41, %44, %47, %50, %53, %56, %59 in 0 : vector<1x512xf32>, vector<1x512xf32>, vector<1x512xf32>, vector<1x512xf32>, vector<1x512xf32>, vector<1x512xf32>, vector<1x512xf32>, vector<1x512xf32>, vector<1x512xf32>, vector<1x512xf32>, vector<1x512xf32>, vector<1x512xf32>, vector<1x512xf32>, vector<1x512xf32>, vector<1x512xf32>, vector<1x512xf32> -> vector<16x512xf32>
    %c0_25 = arith.constant 0 : index
    %c0_26 = arith.constant 0 : index
    %61 = vector.load %arg6[%c0_25, %c0_26] : memref<1x1xf32, #tpu.memory_space<vmem>>, vector<1x1xf32>
    %62 = vector.broadcast %61 : vector<1x1xf32> to vector<16x512xf32>
    %63 = arith.addf %60, %62 : vector<16x512xf32>
    %c0_27 = arith.constant 0 : index
    %c0_28 = arith.constant 0 : index
    %c0_29 = arith.constant 0 : index
    %64 = vector.load %arg7[%c0_27, %c0_28, %c0_29] : memref<1x16x512xf32, #tpu.memory_space<vmem>>, vector<1x16x512xf32>
    %65 = vector.shape_cast %64 : vector<1x16x512xf32> to vector<16x512xf32>
    %66 = vector.shape_cast %63 : vector<16x512xf32> to vector<1x16x512xf32>
    tpu.vector_store %arg7[%c0_27, %c0_28, %c0_29], %66 {strides = array<i32>} : memref<1x16x512xf32, #tpu.memory_space<vmem>>, vector<1x16x512xf32>,
    return
  }
  func.func @transform_0(%arg0: i32, %arg1: i32) -> (i32, i32, i32) {
    %c0_i32 = arith.constant 0 : i32
    %c0_i32_0 = arith.constant 0 : i32
    return %arg0, %c0_i32, %arg1 : i32, i32, i32
  }
  func.func @transform_1(%arg0: i32, %arg1: i32) -> (i32, i32) {
    %c0_i32 = arith.constant 0 : i32
    %c0_i32_0 = arith.constant 0 : i32
    %c0_i32_1 = arith.constant 0 : i32
    return %c0_i32, %c0_i32_0 : i32, i32
  }
  func.func @transform_2(%arg0: i32, %arg1: i32) -> (i32, i32) {
    %c0_i32 = arith.constant 0 : i32
    %c0_i32_0 = arith.constant 0 : i32
    %c0_i32_1 = arith.constant 0 : i32
    return %c0_i32, %c0_i32_0 : i32, i32
  }
  func.func @transform_3(%arg0: i32, %arg1: i32) -> (i32, i32) {
    %c0_i32 = arith.constant 0 : i32
    %c0_i32_0 = arith.constant 0 : i32
    %c0_i32_1 = arith.constant 0 : i32
    return %c0_i32, %c0_i32_0 : i32, i32
  }
  func.func @transform_4(%arg0: i32, %arg1: i32) -> (i32, i32) {
    %c0_i32 = arith.constant 0 : i32
    %c0_i32_0 = arith.constant 0 : i32
    %c0_i32_1 = arith.constant 0 : i32
    return %c0_i32, %c0_i32_0 : i32, i32
  }
  func.func @transform_5(%arg0: i32, %arg1: i32) -> (i32, i32, i32) {
    %c0_i32 = arith.constant 0 : i32
    %c0_i32_0 = arith.constant 0 : i32
    return %arg0, %c0_i32, %arg1 : i32, i32, i32
  }
}

</mosaic_0001>

<llo_original>
// kernel: tpu_custom_call.1
$region0: #{tpu_custom_call.1}
  #allocation0 [shape = 'u32[]', space=smem, size = 0x4, offset = 0x4, fixed_abs, tag = 'smem constant byte address 0x4 - core index']
  #allocation1 [shape = 'u32[144,128]{1,0:T(1,128)}', space=vmem, size = 0x12000, scoped, tag = 'internal scratch']
  #allocation2 [shape = 'f32[1,1]{1,0:T(1,128)S(1)}', space=vmem, size = 0x200, scoped, tag = 'scoped memory for tpu_custom_call.1']
  %s0 = inlined_call_operand.vmem [shape: f32[2,128,1024], index: 0, kind: input, shape index: {}]
  %s1 = inlined_call_operand.vmem [shape: f32[2048,128], index: 1, kind: input, shape index: {}]
  %s2 = inlined_call_operand.vmem [shape: f32[2048,1], index: 2, kind: input, shape index: {}]
  %s3 = inlined_call_operand.vmem [shape: f32[2048,1], index: 3, kind: input, shape index: {}]
  %s4 = inlined_call_operand.<no memory space> [shape: f32[1,1], index: 4, kind: input, shape index: {}]
  %s5 = inlined_call_operand.hbm [shape: f32[2,16,1024], index: 5, kind: output, shape index: {}]
  %s6 = sld [smem:[#allocation0]]
  $region76: #{tpu_custom_call.1} parent=0
    _
  %s8 = ssub.s32 1, %s6
  %s9 = scalar_select 0, %s8, %s6
  %v10 = vstv %s4
  %11 = vst [vmem:[#allocation2] sm:$0x1] %v10
  $region1: #{tpu_custom_call.1} parent=0
    #allocation3 [shape = 'u8[524288]{0}', space=vmem, size = 0x80000, scoped, tag = 'input window, operand 0']
    #allocation4 [shape = 'u8[65536]{0}', space=vmem, size = 0x10000, scoped, tag = 'output window, operand 0']
    #allocation5 [shape = 's32[2]{0}', space=sflag, size = 0x8, scoped, tag = 'scoped memory for tpu_custom_call.1']
    %12 = vsyncpa [#allocation5], 0
    %s13 = scalar_lea.sflag [#allocation5], 1
    %14 = vsyncpa %s13, 0
    loop: start=0, step=1, limit=6
    $region2: #{tpu_custom_call.1} parent=1 // loop_pre_header
      _
    $region3: #{tpu_custom_call.1} parent=1 // loop_header
      %s16 = sphi 0, %s20
      %p17 = scmp.ge.s32.totalorder %s16, 6
      %s23 = sphi 0, %s35
      %s24 = sphi 0, %s31
      %s25 = sphi 0, %s23
      %s26 = sphi 0, %s24
      %s27 = sphi 0, %s25
      %s28 = sphi 0, %s26
      %s40 = sphi 0, %s42
      %s43 = sphi 0, %s40
      %s44 = sphi 0, %s43
      %s60 = sphi 0, %s44
      %s64 = sphi 0, %s64
      %s66 = sphi 0, %s64
      %s67 = sphi 0, %s66
      %s81 = sphi 0, %s67
      %s85 = sphi 0, %s85
      %s87 = sphi 0, %s85
      %s88 = sphi 0, %s87
      %s102 = sphi 0, %s88
      %s106 = sphi 0, %s106
      %s108 = sphi 0, %s106
      %s109 = sphi 0, %s108
      %s123 = sphi 0, %s109
      %s127 = sphi 0, %s127
      %s129 = sphi 0, %s127
      %s130 = sphi 0, %s129
      %s144 = sphi 0, %s130
      %s152 = sphi 0, %s154
      %s155 = sphi 0, %s152
      %s156 = sphi 0, %s155
      %s172 = sphi 0, %s156
    $region4: #{tpu_custom_call.1} parent=1 // loop_header_branch
      %19 = sbr.rel (%p17) target = $region8
    $region5: #{tpu_custom_call.1} parent=1 // loop_body
      %s21 = ssub.s32 %s16, 1
      %s22 = ssub.s32 %s16, 2
      %s29 = sadd.s32 1, %s24
      %p30 = scmp.ge.s32.totalorder %s29, 2
      %s31 = scalar_select %p30, 0, %s29
      %s32 = sadd.s32 1, %s23
      %s33 = scalar_select %p30, %s32, %s23
      %p34 = scmp.ge.s32.totalorder %s33, 2
      %s35 = scalar_select %p34, 0, %s33
      %s36 = ssub.s32 %s23, %s35
      %s37 = ssub.s32 %s24, %s31
      %s38 = sor.u32 %s36, %s37
      %p39 = scmp.eq.s32.totalorder %s38, 0
      %s41 = sadd.s32 %s40, 1
      %s42 = scalar_select %p39, %s40, %s41
      %p45 = pneg %p39
      %p46 = scmp.eq.s32.totalorder %s16, 3
      %p47 = por %p45, %p46
      %p48 = scmp.ne.s32.totalorder %s40, %s43
      %p49 = scmp.eq.s32.totalorder %s16, 0
      %p50 = por %p48, %p49
      %p51 = scmp.ne.s32.totalorder %s40, %s43
      %p52 = scmp.eq.s32.totalorder %s21, 3
      %p53 = por %p51, %p52
      %p54 = scmp.ne.s32.totalorder %s43, %s44
      %p55 = scmp.eq.s32.totalorder %s21, 0
      %p56 = por %p54, %p55
      %p57 = scmp.ne.s32.totalorder %s43, %s44
      %p58 = scmp.eq.s32.totalorder %s22, 3
      %p59 = por %p57, %p58
      %p61 = scmp.ne.s32.totalorder %s44, %s60
      %p62 = scmp.eq.s32.totalorder %s22, 0
      %p63 = por %p61, %p62
      %s65 = sadd.s32 %s64, 1
      %p68 = scmp.eq.s32.totalorder %s16, 3
      %p69 = scmp.ne.s32.totalorder %s64, %s66
      %p70 = scmp.eq.s32.totalorder %s16, 0
      %p71 = por %p69, %p70
      %p72 = scmp.ne.s32.totalorder %s64, %s66
      %p73 = scmp.eq.s32.totalorder %s21, 3
      %p74 = por %p72, %p73
      %p75 = scmp.ne.s32.totalorder %s66, %s67
      %p76 = scmp.eq.s32.totalorder %s21, 0
      %p77 = por %p75, %p76
      %p78 = scmp.ne.s32.totalorder %s66, %s67
      %p79 = scmp.eq.s32.totalorder %s22, 3
      %p80 = por %p78, %p79
      %p82 = scmp.ne.s32.totalorder %s67, %s81
      %p83 = scmp.eq.s32.totalorder %s22, 0
      %p84 = por %p82, %p83
      %s86 = sadd.s32 %s85, 1
      %p89 = scmp.eq.s32.totalorder %s16, 3
      %p90 = scmp.ne.s32.totalorder %s85, %s87
      %p91 = scmp.eq.s32.totalorder %s16, 0
      %p92 = por %p90, %p91
      %p93 = scmp.ne.s32.totalorder %s85, %s87
      %p94 = scmp.eq.s32.totalorder %s21, 3
      %p95 = por %p93, %p94
      %p96 = scmp.ne.s32.totalorder %s87, %s88
      %p97 = scmp.eq.s32.totalorder %s21, 0
      %p98 = por %p96, %p97
      %p99 = scmp.ne.s32.totalorder %s87, %s88
      %p100 = scmp.eq.s32.totalorder %s22, 3
      %p101 = por %p99, %p100
      %p103 = scmp.ne.s32.totalorder %s88, %s102
      %p104 = scmp.eq.s32.totalorder %s22, 0
      %p105 = por %p103, %p104
      %s107 = sadd.s32 %s106, 1
      %p110 = scmp.eq.s32.totalorder %s16, 3
      %p111 = scmp.ne.s32.totalorder %s106, %s108
      %p112 = scmp.eq.s32.totalorder %s16, 0
      %p113 = por %p111, %p112
      %p114 = scmp.ne.s32.totalorder %s106, %s108
      %p115 = scmp.eq.s32.totalorder %s21, 3
      %p116 = por %p114, %p115
      %p117 = scmp.ne.s32.totalorder %s108, %s109
      %p118 = scmp.eq.s32.totalorder %s21, 0
      %p119 = por %p117, %p118
      %p120 = scmp.ne.s32.totalorder %s108, %s109
      %p121 = scmp.eq.s32.totalorder %s22, 3
      %p122 = por %p120, %p121
      %p124 = scmp.ne.s32.totalorder %s109, %s123
      %p125 = scmp.eq.s32.totalorder %s22, 0
      %p126 = por %p124, %p125
      %s128 = sadd.s32 %s127, 1
      %p131 = scmp.eq.s32.totalorder %s16, 3
      %p132 = scmp.ne.s32.totalorder %s127, %s129
      %p133 = scmp.eq.s32.totalorder %s16, 0
      %p134 = por %p132, %p133
      %p135 = scmp.ne.s32.totalorder %s127, %s129
      %p136 = scmp.eq.s32.totalorder %s21, 3
      %p137 = por %p135, %p136
      %p138 = scmp.ne.s32.totalorder %s129, %s130
      %p139 = scmp.eq.s32.totalorder %s21, 0
      %p140 = por %p138, %p139
      %p141 = scmp.ne.s32.totalorder %s129, %s130
      %p142 = scmp.eq.s32.totalorder %s22, 3
      %p143 = por %p141, %p142
      %p145 = scmp.ne.s32.totalorder %s130, %s144
      %p146 = scmp.eq.s32.totalorder %s22, 0
      %p147 = por %p145, %p146
      %s148 = ssub.s32 %s23, %s35
      %s149 = ssub.s32 %s24, %s31
      %s150 = sor.u32 %s148, %s149
      %p151 = scmp.eq.s32.totalorder %s150, 0
      %s153 = sadd.s32 %s152, 1
      %s154 = scalar_select %p151, %s152, %s153
      %p157 = pneg %p151
      %p158 = scmp.eq.s32.totalorder %s16, 3
      %p159 = por %p157, %p158
      %p160 = scmp.ne.s32.totalorder %s152, %s155
      %p161 = scmp.eq.s32.totalorder %s16, 0
      %p162 = por %p160, %p161
      %p163 = scmp.ne.s32.totalorder %s152, %s155
      %p164 = scmp.eq.s32.totalorder %s21, 3
      %p165 = por %p163, %p164
      %p166 = scmp.ne.s32.totalorder %s155, %s156
      %p167 = scmp.eq.s32.totalorder %s21, 0
      %p168 = por %p166, %p167
      %p169 = scmp.ne.s32.totalorder %s155, %s156
      %p170 = scmp.eq.s32.totalorder %s22, 3
      %p171 = por %p169, %p170
      %p173 = scmp.ne.s32.totalorder %s156, %s172
      %p174 = scmp.eq.s32.totalorder %s22, 0
      %p175 = por %p173, %p174
      %p176 = scmp.le.s32.totalorder 1, %s16
      %p177 = scmp.lt.s32.totalorder %s16, 5
      %p178 = pnand %p176, %p177
      %p179 = pneg %p178
      // Predicated region
      $region9: #{tpu_custom_call.1} parent=5 // pred_check
        _
      $region10: #{tpu_custom_call.1} parent=5 // pred_check_branch
        %181 = sbr.rel (%p178) target = $region12
      $region11: #{tpu_custom_call.1} parent=5 // pred_region
        %s182 = ssub.s32 %s16, 1
        // Predicated region
        $region13: #{tpu_custom_call.1} parent=11 // pred_check
          %p183 = pneg %p77
        $region14: #{tpu_custom_call.1} parent=11 // pred_check_branch
          %185 = sbr.rel (%p183) target = $region16
        $region15: #{tpu_custom_call.1} parent=11 // pred_region
          _
        $region16: #{tpu_custom_call.1} parent=11 // pred_fallthru
          _
        // Predicated region
        $region17: #{tpu_custom_call.1} parent=11 // pred_check
          %p186 = pneg %p98
        $region18: #{tpu_custom_call.1} parent=11 // pred_check_branch
          %188 = sbr.rel (%p186) target = $region20
        $region19: #{tpu_custom_call.1} parent=11 // pred_region
          _
        $region20: #{tpu_custom_call.1} parent=11 // pred_fallthru
          _
        // Predicated region
        $region21: #{tpu_custom_call.1} parent=11 // pred_check
          %p189 = pneg %p119
        $region22: #{tpu_custom_call.1} parent=11 // pred_check_branch
          %191 = sbr.rel (%p189) target = $region24
        $region23: #{tpu_custom_call.1} parent=11 // pred_region
          _
        $region24: #{tpu_custom_call.1} parent=11 // pred_fallthru
          _
        // Predicated region
        $region25: #{tpu_custom_call.1} parent=11 // pred_check
          %p192 = pneg %p140
        $region26: #{tpu_custom_call.1} parent=11 // pred_check_branch
          %194 = sbr.rel (%p192) target = $region28
        $region27: #{tpu_custom_call.1} parent=11 // pred_region
          _
        $region28: #{tpu_custom_call.1} parent=11 // pred_fallthru
          _
      $region12: #{tpu_custom_call.1} parent=5 // pred_fallthru
        _
      %p195 = scmp.lt.s32.totalorder %s16, 4
      // Predicated region
      $region29: #{tpu_custom_call.1} parent=5 // pred_check
        %p196 = pneg %p195
      $region30: #{tpu_custom_call.1} parent=5 // pred_check_branch
        %198 = sbr.rel (%p196) target = $region32
      $region31: #{tpu_custom_call.1} parent=5 // pred_region
        // Predicated region
        $region33: #{tpu_custom_call.1} parent=31 // pred_check
          %p199 = pneg %p50
        $region34: #{tpu_custom_call.1} parent=31 // pred_check_branch
          %201 = sbr.rel (%p199) target = $region36
        $region35: #{tpu_custom_call.1} parent=31 // pred_region
          %s202 = sand.u32 %s40, 1
          %s203 = sand.u32 %s40, 1
          %s204 = smul.addr %s203, 512
          %s205 = scalar_lea.vmem [#allocation3], %s204
          %s206 = smul.u32 4, %s24
          %s207 = smul.addr %s23, 128
          %s208 = sadd.s32 %s206, %s207
          %s209 = smul.addr %s208, 8
          %s210 = scalar_lea.vmem %s0, %s209
          // Predicated region
          $region37: #{tpu_custom_call.1} parent=35 // pred_check
            _
          $region38: #{tpu_custom_call.1} parent=35 // pred_check_branch
            %212 = sbr.rel (0) target = $region40
          $region39: #{tpu_custom_call.1} parent=35 // pred_region
            // Predicated region
            $region41: #{tpu_custom_call.1} parent=39 // pred_check
              _
            $region42: #{tpu_custom_call.1} parent=39 // pred_check_branch
              %214 = sbr.rel (0) target = $region44
            $region43: #{tpu_custom_call.1} parent=39 // pred_region
              loop: start=0, step=1, limit=1
              $region45: #{tpu_custom_call.1} parent=43 // loop_pre_header
                _
              $region46: #{tpu_custom_call.1} parent=43 // loop_header
                %s216 = sphi 0, %s220
                %p217 = scmp.ge.s32.totalorder %s216, 1
                %s221 = sphi %s210, %s210
                %s222 = sphi %s205, %s205
              $region47: #{tpu_custom_call.1} parent=43 // loop_header_branch
                %219 = sbr.rel (%p217) target = $region51
              $region48: #{tpu_custom_call.1} parent=43 // loop_body
                %v223 = vld [vmem:[%s221] sm:$0xff]
                %224 = vst [vmem:[%s222] sm:$0xff] %v223
                %v225 = vld [vmem:[%s221 + $0x8] sm:$0xff]
                %226 = vst [vmem:[%s222 + $0x8] sm:$0xff] %v225
                %v227 = vld [vmem:[%s221 + $0x10] sm:$0xff]
                %228 = vst [vmem:[%s222 + $0x10] sm:$0xff] %v227
                %v229 = vld [vmem:[%s221 + $0x18] sm:$0xff]
                %230 = vst [vmem:[%s222 + $0x18] sm:$0xff] %v229
                %v231 = vld [vmem:[%s221 + $0x40] sm:$0xff]
                %232 = vst [vmem:[%s222 + $0x20] sm:$0xff] %v231
                %v233 = vld [vmem:[%s221 + $0x48] sm:$0xff]
                %234 = vst [vmem:[%s222 + $0x28] sm:$0xff] %v233
                %v235 = vld [vmem:[%s221 + $0x50] sm:$0xff]
                %236 = vst [vmem:[%s222 + $0x30] sm:$0xff] %v235
                %v237 = vld [vmem:[%s221 + $0x58] sm:$0xff]
                %238 = vst [vmem:[%s222 + $0x38] sm:$0xff] %v237
                %v239 = vld [vmem:[%s221 + $0x80] sm:$0xff]
                %240 = vst [vmem:[%s222 + $0x40] sm:$0xff] %v239
                %v241 = vld [vmem:[%s221 + $0x88] sm:$0xff]
                %242 = vst [vmem:[%s222 + $0x48] sm:$0xff] %v241
                %v243 = vld [vmem:[%s221 + $0x90] sm:$0xff]
                %244 = vst [vmem:[%s222 + $0x50] sm:$0xff] %v243
                %v245 = vld [vmem:[%s221 + $0x98] sm:$0xff]
                %246 = vst [vmem:[%s222 + $0x58] sm:$0xff] %v245
                %v247 = vld [vmem:[%s221 + $0xc0] sm:$0xff]
                %248 = vst [vmem:[%s222 + $0x60] sm:$0xff] %v247
                %v249 = vld [vmem:[%s221 + $0xc8] sm:$0xff]
                %250 = vst [vmem:[%s222 + $0x68] sm:$0xff] %v249
                %v251 = vld [vmem:[%s221 + $0xd0] sm:$0xff]
                %252 = vst [vmem:[%s222 + $0x70] sm:$0xff] %v251
                %v253 = vld [vmem:[%s221 + $0xd8] sm:$0xff]
                %254 = vst [vmem:[%s222 + $0x78] sm:$0xff] %v253
                %v255 = vld [vmem:[%s221 + $0x100] sm:$0xff]
                %256 = vst [vmem:[%s222 + $0x80] sm:$0xff] %v255
                %v257 = vld [vmem:[%s221 + $0x108] sm:$0xff]
                %258 = vst [vmem:[%s222 + $0x88] sm:$0xff] %v257
                %v259 = vld [vmem:[%s221 + $0x110] sm:$0xff]
                %260 = vst [vmem:[%s222 + $0x90] sm:$0xff] %v259
                %v261 = vld [vmem:[%s221 + $0x118] sm:$0xff]
                %262 = vst [vmem:[%s222 + $0x98] sm:$0xff] %v261
                %v263 = vld [vmem:[%s221 + $0x140] sm:$0xff]
                %264 = vst [vmem:[%s222 + $0xa0] sm:$0xff] %v263
                %v265 = vld [vmem:[%s221 + $0x148] sm:$0xff]
                %266 = vst [vmem:[%s222 + $0xa8] sm:$0xff] %v265
                %v267 = vld [vmem:[%s221 + $0x150] sm:$0xff]
                %268 = vst [vmem:[%s222 + $0xb0] sm:$0xff] %v267
                %v269 = vld [vmem:[%s221 + $0x158] sm:$0xff]
                %270 = vst [vmem:[%s222 + $0xb8] sm:$0xff] %v269
                %v271 = vld [vmem:[%s221 + $0x180] sm:$0xff]
                %272 = vst [vmem:[%s222 + $0xc0] sm:$0xff] %v271
                %v273 = vld [vmem:[%s221 + $0x188] sm:$0xff]
                %274 = vst [vmem:[%s222 + $0xc8] sm:$0xff] %v273
                %v275 = vld [vmem:[%s221 + $0x190] sm:$0xff]
                %276 = vst [vmem:[%s222 + $0xd0] sm:$0xff] %v275
                %v277 = vld [vmem:[%s221 + $0x198] sm:$0xff]
                %278 = vst [vmem:[%s222 + $0xd8] sm:$0xff] %v277
                %v279 = vld [vmem:[%s221 + $0x1c0] sm:$0xff]
                %280 = vst [vmem:[%s222 + $0xe0] sm:$0xff] %v279
                %v281 = vld [vmem:[%s221 + $0x1c8] sm:$0xff]
                %282 = vst [vmem:[%s222 + $0xe8] sm:$0xff] %v281
                %v283 = vld [vmem:[%s221 + $0x1d0] sm:$0xff]
                %284 = vst [vmem:[%s222 + $0xf0] sm:$0xff] %v283
                %v285 = vld [vmem:[%s221 + $0x1d8] sm:$0xff]
                %286 = vst [vmem:[%s222 + $0xf8] sm:$0xff] %v285
                %v287 = vld [vmem:[%s221 + $0x200] sm:$0xff]
                %288 = vst [vmem:[%s222 + $0x100] sm:$0xff] %v287
                %v289 = vld [vmem:[%s221 + $0x208] sm:$0xff]
                %290 = vst [vmem:[%s222 + $0x108] sm:$0xff] %v289
                %v291 = vld [vmem:[%s221 + $0x210] sm:$0xff]
                %292 = vst [vmem:[%s222 + $0x110] sm:$0xff] %v291
                %v293 = vld [vmem:[%s221 + $0x218] sm:$0xff]
                %294 = vst [vmem:[%s222 + $0x118] sm:$0xff] %v293
                %v295 = vld [vmem:[%s221 + $0x240] sm:$0xff]
                %296 = vst [vmem:[%s222 + $0x120] sm:$0xff] %v295
                %v297 = vld [vmem:[%s221 + $0x248] sm:$0xff]
                %298 = vst [vmem:[%s222 + $0x128] sm:$0xff] %v297
                %v299 = vld [vmem:[%s221 + $0x250] sm:$0xff]
                %300 = vst [vmem:[%s222 + $0x130] sm:$0xff] %v299
                %v301 = vld [vmem:[%s221 + $0x258] sm:$0xff]
                %302 = vst [vmem:[%s222 + $0x138] sm:$0xff] %v301
                %v303 = vld [vmem:[%s221 + $0x280] sm:$0xff]
                %304 = vst [vmem:[%s222 + $0x140] sm:$0xff] %v303
                %v305 = vld [vmem:[%s221 + $0x288] sm:$0xff]
                %306 = vst [vmem:[%s222 + $0x148] sm:$0xff] %v305
                %v307 = vld [vmem:[%s221 + $0x290] sm:$0xff]
                %308 = vst [vmem:[%s222 + $0x150] sm:$0xff] %v307
                %v309 = vld [vmem:[%s221 + $0x298] sm:$0xff]
                %310 = vst [vmem:[%s222 + $0x158] sm:$0xff] %v309
                %v311 = vld [vmem:[%s221 + $0x2c0] sm:$0xff]
                %312 = vst [vmem:[%s222 + $0x160] sm:$0xff] %v311
                %v313 = vld [vmem:[%s221 + $0x2c8] sm:$0xff]
                %314 = vst [vmem:[%s222 + $0x168] sm:$0xff] %v313
                %v315 = vld [vmem:[%s221 + $0x2d0] sm:$0xff]
                %316 = vst [vmem:[%s222 + $0x170] sm:$0xff] %v315
                %v317 = vld [vmem:[%s221 + $0x2d8] sm:$0xff]
                %318 = vst [vmem:[%s222 + $0x178] sm:$0xff] %v317
                %v319 = vld [vmem:[%s221 + $0x300] sm:$0xff]
                %320 = vst [vmem:[%s222 + $0x180] sm:$0xff] %v319
                %v321 = vld [vmem:[%s221 + $0x308] sm:$0xff]
                %322 = vst [vmem:[%s222 + $0x188] sm:$0xff] %v321
                %v323 = vld [vmem:[%s221 + $0x310] sm:$0xff]
                %324 = vst [vmem:[%s222 + $0x190] sm:$0xff] %v323
                %v325 = vld [vmem:[%s221 + $0x318] sm:$0xff]
                %326 = vst [vmem:[%s222 + $0x198] sm:$0xff] %v325
                %v327 = vld [vmem:[%s221 + $0x340] sm:$0xff]
                %328 = vst [vmem:[%s222 + $0x1a0] sm:$0xff] %v327
                %v329 = vld [vmem:[%s221 + $0x348] sm:$0xff]
                %330 = vst [vmem:[%s222 + $0x1a8] sm:$0xff] %v329
                %v331 = vld [vmem:[%s221 + $0x350] sm:$0xff]
                %332 = vst [vmem:[%s222 + $0x1b0] sm:$0xff] %v331
                %v333 = vld [vmem:[%s221 + $0x358] sm:$0xff]
                %334 = vst [vmem:[%s222 + $0x1b8] sm:$0xff] %v333
                %v335 = vld [vmem:[%s221 + $0x380] sm:$0xff]
                %336 = vst [vmem:[%s222 + $0x1c0] sm:$0xff] %v335
                %v337 = vld [vmem:[%s221 + $0x388] sm:$0xff]
                %338 = vst [vmem:[%s222 + $0x1c8] sm:$0xff] %v337
                %v339 = vld [vmem:[%s221 + $0x390] sm:$0xff]
                %340 = vst [vmem:[%s222 + $0x1d0] sm:$0xff] %v339
                %v341 = vld [vmem:[%s221 + $0x398] sm:$0xff]
                %342 = vst [vmem:[%s222 + $0x1d8] sm:$0xff] %v341
                %v343 = vld [vmem:[%s221 + $0x3c0] sm:$0xff]
                %344 = vst [vmem:[%s222 + $0x1e0] sm:$0xff] %v343
                %v345 = vld [vmem:[%s221 + $0x3c8] sm:$0xff]
                %346 = vst [vmem:[%s222 + $0x1e8] sm:$0xff] %v345
                %v347 = vld [vmem:[%s221 + $0x3d0] sm:$0xff]
                %348 = vst [vmem:[%s222 + $0x1f0] sm:$0xff] %v347
                %v349 = vld [vmem:[%s221 + $0x3d8] sm:$0xff]
                %350 = vst [vmem:[%s222 + $0x1f8] sm:$0xff] %v349
              $region49: #{tpu_custom_call.1} parent=43 // loop_footer
                %s220 = sadd.s32 1, %s216
              $region50: #{tpu_custom_call.1} parent=43 // loop_footer_branch
                %215 = sbr.rel target = $region46
              $region51: #{tpu_custom_call.1} parent=43 // loop_exit
                _
            $region44: #{tpu_custom_call.1} parent=39 // pred_fallthru
              _
            // Predicated region
            $region52: #{tpu_custom_call.1} parent=39 // pred_check
              _
            $region53: #{tpu_custom_call.1} parent=39 // pred_check_branch
              %352 = sbr.rel target = $region55
            $region54: #{tpu_custom_call.1} parent=39 // pred_region
              _
            $region55: #{tpu_custom_call.1} parent=39 // pred_fallthru
              _
          $region40: #{tpu_custom_call.1} parent=35 // pred_fallthru
            _
          %353 = vnop
        $region36: #{tpu_custom_call.1} parent=31 // pred_fallthru
          _
      $region32: #{tpu_custom_call.1} parent=5 // pred_fallthru
        _
      %p354 = scmp.le.s32.totalorder 1, %s16
      %p355 = scmp.lt.s32.totalorder %s16, 5
      %p356 = pnand %p354, %p355
      %p357 = pneg %p356
      // Predicated region
      $region56: #{tpu_custom_call.1} parent=5 // pred_check
        _
      $region57: #{tpu_custom_call.1} parent=5 // pred_check_branch
        %359 = sbr.rel (%p356) target = $region59
      $region58: #{tpu_custom_call.1} parent=5 // pred_region
        %s360 = ssub.s32 %s16, 1
        %s361 = sand.u32 %s43, 1
        %s362 = sand.u32 %s43, 1
        %s363 = smul.addr %s362, 512
        %s364 = scalar_lea.vmem [#allocation3], %s363
        // Predicated region
        $region60: #{tpu_custom_call.1} parent=58 // pred_check
          %p365 = pneg %p56
        $region61: #{tpu_custom_call.1} parent=58 // pred_check_branch
          %367 = sbr.rel (%p365) target = $region63
        $region62: #{tpu_custom_call.1} parent=58 // pred_region
          _
        $region63: #{tpu_custom_call.1} parent=58 // pred_fallthru
          _
        %s368 = sand.u32 %s43, 1
        %s369 = sand.u32 %s43, 1
        %s370 = smul.addr %s369, 512
        %s371 = scalar_lea.vmem [#allocation3], %s370
        %p372 = pneg %p56
        %p373 = pneg %p53
        %p374 = pneg %p77
        %p375 = pneg %p74
        %p376 = pneg %p98
        %p377 = pneg %p95
        %p378 = pneg %p119
        %p379 = pneg %p116
        %p380 = pneg %p140
        %p381 = pneg %p137
        %p382 = pneg %p168
        %p383 = pneg %p165
        %s384 = sand.u32 %s155, 1
        %s385 = scalar_lea.sflag [#allocation5], %s384
        %s386 = sand.u32 %s155, 1
        %s387 = smul.addr %s386, 64
        %s388 = scalar_lea.vmem [#allocation4], %s387
        %s389 = smul.u32 4, %s26
        %s390 = smul.u32 4, %s26
        %v391 = vld [vmem:[%s364] sm:$0xff]
        %v392 = vld [vmem:[%s364 + $0x8] sm:$0xff]
        %v393 = vld [vmem:[%s364 + $0x10] sm:$0xff]
        %v394 = vld [vmem:[%s364 + $0x18] sm:$0xff]
        %v395 = vld [vmem:[%s364 + $0x20] sm:$0xff]
        %v396 = vld [vmem:[%s364 + $0x28] sm:$0xff]
        %v397 = vld [vmem:[%s364 + $0x30] sm:$0xff]
        %v398 = vld [vmem:[%s364 + $0x38] sm:$0xff]
        %v399 = vld [vmem:[%s364 + $0x40] sm:$0xff]
        %v400 = vld [vmem:[%s364 + $0x48] sm:$0xff]
        %v401 = vld [vmem:[%s364 + $0x50] sm:$0xff]
        %v402 = vld [vmem:[%s364 + $0x58] sm:$0xff]
        %v403 = vld [vmem:[%s364 + $0x60] sm:$0xff]
        %v404 = vld [vmem:[%s364 + $0x68] sm:$0xff]
        %v405 = vld [vmem:[%s364 + $0x70] sm:$0xff]
        %v406 = vld [vmem:[%s364 + $0x78] sm:$0xff]
        %v407 = vld [vmem:[%s364 + $0x80] sm:$0xff]
        %v408 = vld [vmem:[%s364 + $0x88] sm:$0xff]
        %v409 = vld [vmem:[%s364 + $0x90] sm:$0xff]
        %v410 = vld [vmem:[%s364 + $0x98] sm:$0xff]
        %v411 = vld [vmem:[%s364 + $0xa0] sm:$0xff]
        %v412 = vld [vmem:[%s364 + $0xa8] sm:$0xff]
        %v413 = vld [vmem:[%s364 + $0xb0] sm:$0xff]
        %v414 = vld [vmem:[%s364 + $0xb8] sm:$0xff]
        %v415 = vld [vmem:[%s364 + $0xc0] sm:$0xff]
        %v416 = vld [vmem:[%s364 + $0xc8] sm:$0xff]
        %v417 = vld [vmem:[%s364 + $0xd0] sm:$0xff]
        %v418 = vld [vmem:[%s364 + $0xd8] sm:$0xff]
        %v419 = vld [vmem:[%s364 + $0xe0] sm:$0xff]
        %v420 = vld [vmem:[%s364 + $0xe8] sm:$0xff]
        %v421 = vld [vmem:[%s364 + $0xf0] sm:$0xff]
        %v422 = vld [vmem:[%s364 + $0xf8] sm:$0xff]
        %v423 = vld [vmem:[%s364 + $0x100] sm:$0xff]
        %v424 = vld [vmem:[%s364 + $0x108] sm:$0xff]
        %v425 = vld [vmem:[%s364 + $0x110] sm:$0xff]
        %v426 = vld [vmem:[%s364 + $0x118] sm:$0xff]
        %v427 = vld [vmem:[%s364 + $0x120] sm:$0xff]
        %v428 = vld [vmem:[%s364 + $0x128] sm:$0xff]
        %v429 = vld [vmem:[%s364 + $0x130] sm:$0xff]
        %v430 = vld [vmem:[%s364 + $0x138] sm:$0xff]
        %v431 = vld [vmem:[%s364 + $0x140] sm:$0xff]
        %v432 = vld [vmem:[%s364 + $0x148] sm:$0xff]
        %v433 = vld [vmem:[%s364 + $0x150] sm:$0xff]
        %v434 = vld [vmem:[%s364 + $0x158] sm:$0xff]
        %v435 = vld [vmem:[%s364 + $0x160] sm:$0xff]
        %v436 = vld [vmem:[%s364 + $0x168] sm:$0xff]
        %v437 = vld [vmem:[%s364 + $0x170] sm:$0xff]
        %v438 = vld [vmem:[%s364 + $0x178] sm:$0xff]
        %v439 = vld [vmem:[%s364 + $0x180] sm:$0xff]
        %v440 = vld [vmem:[%s364 + $0x188] sm:$0xff]
        %v441 = vld [vmem:[%s364 + $0x190] sm:$0xff]
        %v442 = vld [vmem:[%s364 + $0x198] sm:$0xff]
        %v443 = vld [vmem:[%s364 + $0x1a0] sm:$0xff]
        %v444 = vld [vmem:[%s364 + $0x1a8] sm:$0xff]
        %v445 = vld [vmem:[%s364 + $0x1b0] sm:$0xff]
        %v446 = vld [vmem:[%s364 + $0x1b8] sm:$0xff]
        %v447 = vld [vmem:[%s364 + $0x1c0] sm:$0xff]
        %v448 = vld [vmem:[%s364 + $0x1c8] sm:$0xff]
        %v449 = vld [vmem:[%s364 + $0x1d0] sm:$0xff]
        %v450 = vld [vmem:[%s364 + $0x1d8] sm:$0xff]
        %v451 = vld [vmem:[%s364 + $0x1e0] sm:$0xff]
        %v452 = vld [vmem:[%s364 + $0x1e8] sm:$0xff]
        %v453 = vld [vmem:[%s364 + $0x1f0] sm:$0xff]
        %v454 = vld [vmem:[%s364 + $0x1f8] sm:$0xff]
        %v455 = vld [vmem:[%s1] sm:$0xff]
        %v456 = vld [vmem:[%s1 + $0x8] sm:$0xff]
        %v457 = vld [vmem:[%s1 + $0x10] sm:$0xff]
        %v458 = vld [vmem:[%s1 + $0x18] sm:$0xff]
        %v459 = vld [vmem:[%s1 + $0x20] sm:$0xff]
        %v460 = vld [vmem:[%s1 + $0x28] sm:$0xff]
        %v461 = vld [vmem:[%s1 + $0x30] sm:$0xff]
        %v462 = vld [vmem:[%s1 + $0x38] sm:$0xff]
        %v463 = vld [vmem:[%s1 + $0x40] sm:$0xff]
        %v464 = vld [vmem:[%s1 + $0x48] sm:$0xff]
        %v465 = vld [vmem:[%s1 + $0x50] sm:$0xff]
        %v466 = vld [vmem:[%s1 + $0x58] sm:$0xff]
        %v467 = vld [vmem:[%s1 + $0x60] sm:$0xff]
        %v468 = vld [vmem:[%s1 + $0x68] sm:$0xff]
        %v469 = vld [vmem:[%s1 + $0x70] sm:$0xff]
        %v470 = vld [vmem:[%s1 + $0x78] sm:$0xff]
        %v471 = vld [vmem:[%s1 + $0x80] sm:$0xff]
        %v472 = vld [vmem:[%s1 + $0x88] sm:$0xff]
        %v473 = vld [vmem:[%s1 + $0x90] sm:$0xff]
        %v474 = vld [vmem:[%s1 + $0x98] sm:$0xff]
        %v475 = vld [vmem:[%s1 + $0xa0] sm:$0xff]
        %v476 = vld [vmem:[%s1 + $0xa8] sm:$0xff]
        %v477 = vld [vmem:[%s1 + $0xb0] sm:$0xff]
        %v478 = vld [vmem:[%s1 + $0xb8] sm:$0xff]
        %v479 = vld [vmem:[%s1 + $0xc0] sm:$0xff]
        %v480 = vld [vmem:[%s1 + $0xc8] sm:$0xff]
        %v481 = vld [vmem:[%s1 + $0xd0] sm:$0xff]
        %v482 = vld [vmem:[%s1 + $0xd8] sm:$0xff]
        %v483 = vld [vmem:[%s1 + $0xe0] sm:$0xff]
        %v484 = vld [vmem:[%s1 + $0xe8] sm:$0xff]
        %v485 = vld [vmem:[%s1 + $0xf0] sm:$0xff]
        %v486 = vld [vmem:[%s1 + $0xf8] sm:$0xff]
        %v487 = vld [vmem:[%s1 + $0x100] sm:$0xff]
        %v488 = vld [vmem:[%s1 + $0x108] sm:$0xff]
        %v489 = vld [vmem:[%s1 + $0x110] sm:$0xff]
        %v490 = vld [vmem:[%s1 + $0x118] sm:$0xff]
        %v491 = vld [vmem:[%s1 + $0x120] sm:$0xff]
        %v492 = vld [vmem:[%s1 + $0x128] sm:$0xff]
        %v493 = vld [vmem:[%s1 + $0x130] sm:$0xff]
        %v494 = vld [vmem:[%s1 + $0x138] sm:$0xff]
        %v495 = vld [vmem:[%s1 + $0x140] sm:$0xff]
        %v496 = vld [vmem:[%s1 + $0x148] sm:$0xff]
        %v497 = vld [vmem:[%s1 + $0x150] sm:$0xff]
        %v498 = vld [vmem:[%s1 + $0x158] sm:$0xff]
        %v499 = vld [vmem:[%s1 + $0x160] sm:$0xff]
        %v500 = vld [vmem:[%s1 + $0x168] sm:$0xff]
        %v501 = vld [vmem:[%s1 + $0x170] sm:$0xff]
        %v502 = vld [vmem:[%s1 + $0x178] sm:$0xff]
        %v503 = vld [vmem:[%s1 + $0x180] sm:$0xff]
        %v504 = vld [vmem:[%s1 + $0x188] sm:$0xff]
        %v505 = vld [vmem:[%s1 + $0x190] sm:$0xff]
        %v506 = vld [vmem:[%s1 + $0x198] sm:$0xff]
        %v507 = vld [vmem:[%s1 + $0x1a0] sm:$0xff]
        %v508 = vld [vmem:[%s1 + $0x1a8] sm:$0xff]
        %v509 = vld [vmem:[%s1 + $0x1b0] sm:$0xff]
        %v510 = vld [vmem:[%s1 + $0x1b8] sm:$0xff]
        %v511 = vld [vmem:[%s1 + $0x1c0] sm:$0xff]
        %v512 = vld [vmem:[%s1 + $0x1c8] sm:$0xff]
        %v513 = vld [vmem:[%s1 + $0x1d0] sm:$0xff]
        %v514 = vld [vmem:[%s1 + $0x1d8] sm:$0xff]
        %v515 = vld [vmem:[%s1 + $0x1e0] sm:$0xff]
        %v516 = vld [vmem:[%s1 + $0x1e8] sm:$0xff]
        %v517 = vld [vmem:[%s1 + $0x1f0] sm:$0xff]
        %v518 = vld [vmem:[%s1 + $0x1f8] sm:$0xff]
        %v519 = vld [vmem:[%s1 + $0x200] sm:$0xff]
        %v520 = vld [vmem:[%s1 + $0x208] sm:$0xff]
        %v521 = vld [vmem:[%s1 + $0x210] sm:$0xff]
        %v522 = vld [vmem:[%s1 + $0x218] sm:$0xff]
        %v523 = vld [vmem:[%s1 + $0x220] sm:$0xff]
        %v524 = vld [vmem:[%s1 + $0x228] sm:$0xff]
        %v525 = vld [vmem:[%s1 + $0x230] sm:$0xff]
        %v526 = vld [vmem:[%s1 + $0x238] sm:$0xff]
        %v527 = vld [vmem:[%s1 + $0x240] sm:$0xff]
        %v528 = vld [vmem:[%s1 + $0x248] sm:$0xff]
        %v529 = vld [vmem:[%s1 + $0x250] sm:$0xff]
        %v530 = vld [vmem:[%s1 + $0x258] sm:$0xff]
        %v531 = vld [vmem:[%s1 + $0x260] sm:$0xff]
        %v532 = vld [vmem:[%s1 + $0x268] sm:$0xff]
        %v533 = vld [vmem:[%s1 + $0x270] sm:$0xff]
        %v534 = vld [vmem:[%s1 + $0x278] sm:$0xff]
        %v535 = vld [vmem:[%s1 + $0x280] sm:$0xff]
        %v536 = vld [vmem:[%s1 + $0x288] sm:$0xff]
        %v537 = vld [vmem:[%s1 + $0x290] sm:$0xff]
        %v538 = vld [vmem:[%s1 + $0x298] sm:$0xff]
        %v539 = vld [vmem:[%s1 + $0x2a0] sm:$0xff]
        %v540 = vld [vmem:[%s1 + $0x2a8] sm:$0xff]
        %v541 = vld [vmem:[%s1 + $0x2b0] sm:$0xff]
        %v542 = vld [vmem:[%s1 + $0x2b8] sm:$0xff]
        %v543 = vld [vmem:[%s1 + $0x2c0] sm:$0xff]
        %v544 = vld [vmem:[%s1 + $0x2c8] sm:$0xff]
        %v545 = vld [vmem:[%s1 + $0x2d0] sm:$0xff]
        %v546 = vld [vmem:[%s1 + $0x2d8] sm:$0xff]
        %v547 = vld [vmem:[%s1 + $0x2e0] sm:$0xff]
        %v548 = vld [vmem:[%s1 + $0x2e8] sm:$0xff]
        %v549 = vld [vmem:[%s1 + $0x2f0] sm:$0xff]
        %v550 = vld [vmem:[%s1 + $0x2f8] sm:$0xff]
        %v551 = vld [vmem:[%s1 + $0x300] sm:$0xff]
        %v552 = vld [vmem:[%s1 + $0x308] sm:$0xff]
        %v553 = vld [vmem:[%s1 + $0x310] sm:$0xff]
        %v554 = vld [vmem:[%s1 + $0x318] sm:$0xff]
        %v555 = vld [vmem:[%s1 + $0x320] sm:$0xff]
        %v556 = vld [vmem:[%s1 + $0x328] sm:$0xff]
        %v557 = vld [vmem:[%s1 + $0x330] sm:$0xff]
        %v558 = vld [vmem:[%s1 + $0x338] sm:$0xff]
        %v559 = vld [vmem:[%s1 + $0x340] sm:$0xff]
        %v560 = vld [vmem:[%s1 + $0x348] sm:$0xff]
        %v561 = vld [vmem:[%s1 + $0x350] sm:$0xff]
        %v562 = vld [vmem:[%s1 + $0x358] sm:$0xff]
        %v563 = vld [vmem:[%s1 + $0x360] sm:$0xff]
        %v564 = vld [vmem:[%s1 + $0x368] sm:$0xff]
        %v565 = vld [vmem:[%s1 + $0x370] sm:$0xff]
        %v566 = vld [vmem:[%s1 + $0x378] sm:$0xff]
        %v567 = vld [vmem:[%s1 + $0x380] sm:$0xff]
        %v568 = vld [vmem:[%s1 + $0x388] sm:$0xff]
        %v569 = vld [vmem:[%s1 + $0x390] sm:$0xff]
        %v570 = vld [vmem:[%s1 + $0x398] sm:$0xff]
        %v571 = vld [vmem:[%s1 + $0x3a0] sm:$0xff]
        %v572 = vld [vmem:[%s1 + $0x3a8] sm:$0xff]
        %v573 = vld [vmem:[%s1 + $0x3b0] sm:$0xff]
        %v574 = vld [vmem:[%s1 + $0x3b8] sm:$0xff]
        %v575 = vld [vmem:[%s1 + $0x3c0] sm:$0xff]
        %v576 = vld [vmem:[%s1 + $0x3c8] sm:$0xff]
        %v577 = vld [vmem:[%s1 + $0x3d0] sm:$0xff]
        %v578 = vld [vmem:[%s1 + $0x3d8] sm:$0xff]
        %v579 = vld [vmem:[%s1 + $0x3e0] sm:$0xff]
        %v580 = vld [vmem:[%s1 + $0x3e8] sm:$0xff]
        %v581 = vld [vmem:[%s1 + $0x3f0] sm:$0xff]
        %v582 = vld [vmem:[%s1 + $0x3f8] sm:$0xff]
        %v583 = vld [vmem:[%s1 + $0x400] sm:$0xff]
        %v584 = vld [vmem:[%s1 + $0x408] sm:$0xff]
        %v585 = vld [vmem:[%s1 + $0x410] sm:$0xff]
        %v586 = vld [vmem:[%s1 + $0x418] sm:$0xff]
        %v587 = vld [vmem:[%s1 + $0x420] sm:$0xff]
        %v588 = vld [vmem:[%s1 + $0x428] sm:$0xff]
        %v589 = vld [vmem:[%s1 + $0x430] sm:$0xff]
        %v590 = vld [vmem:[%s1 + $0x438] sm:$0xff]
        %v591 = vld [vmem:[%s1 + $0x440] sm:$0xff]
        %v592 = vld [vmem:[%s1 + $0x448] sm:$0xff]
        %v593 = vld [vmem:[%s1 + $0x450] sm:$0xff]
        %v594 = vld [vmem:[%s1 + $0x458] sm:$0xff]
        %v595 = vld [vmem:[%s1 + $0x460] sm:$0xff]
        %v596 = vld [vmem:[%s1 + $0x468] sm:$0xff]
        %v597 = vld [vmem:[%s1 + $0x470] sm:$0xff]
        %v598 = vld [vmem:[%s1 + $0x478] sm:$0xff]
        %v599 = vld [vmem:[%s1 + $0x480] sm:$0xff]
        %v600 = vld [vmem:[%s1 + $0x488] sm:$0xff]
        %v601 = vld [vmem:[%s1 + $0x490] sm:$0xff]
        %v602 = vld [vmem:[%s1 + $0x498] sm:$0xff]
        %v603 = vld [vmem:[%s1 + $0x4a0] sm:$0xff]
        %v604 = vld [vmem:[%s1 + $0x4a8] sm:$0xff]
        %v605 = vld [vmem:[%s1 + $0x4b0] sm:$0xff]
        %v606 = vld [vmem:[%s1 + $0x4b8] sm:$0xff]
        %v607 = vld [vmem:[%s1 + $0x4c0] sm:$0xff]
        %v608 = vld [vmem:[%s1 + $0x4c8] sm:$0xff]
        %v609 = vld [vmem:[%s1 + $0x4d0] sm:$0xff]
        %v610 = vld [vmem:[%s1 + $0x4d8] sm:$0xff]
        %v611 = vld [vmem:[%s1 + $0x4e0] sm:$0xff]
        %v612 = vld [vmem:[%s1 + $0x4e8] sm:$0xff]
        %v613 = vld [vmem:[%s1 + $0x4f0] sm:$0xff]
        %v614 = vld [vmem:[%s1 + $0x4f8] sm:$0xff]
        %v615 = vld [vmem:[%s1 + $0x500] sm:$0xff]
        %v616 = vld [vmem:[%s1 + $0x508] sm:$0xff]
        %v617 = vld [vmem:[%s1 + $0x510] sm:$0xff]
        %v618 = vld [vmem:[%s1 + $0x518] sm:$0xff]
        %v619 = vld [vmem:[%s1 + $0x520] sm:$0xff]
        %v620 = vld [vmem:[%s1 + $0x528] sm:$0xff]
        %v621 = vld [vmem:[%s1 + $0x530] sm:$0xff]
        %v622 = vld [vmem:[%s1 + $0x538] sm:$0xff]
        %v623 = vld [vmem:[%s1 + $0x540] sm:$0xff]
        %v624 = vld [vmem:[%s1 + $0x548] sm:$0xff]
        %v625 = vld [vmem:[%s1 + $0x550] sm:$0xff]
        %v626 = vld [vmem:[%s1 + $0x558] sm:$0xff]
        %v627 = vld [vmem:[%s1 + $0x560] sm:$0xff]
        %v628 = vld [vmem:[%s1 + $0x568] sm:$0xff]
        %v629 = vld [vmem:[%s1 + $0x570] sm:$0xff]
        %v630 = vld [vmem:[%s1 + $0x578] sm:$0xff]
        %v631 = vld [vmem:[%s1 + $0x580] sm:$0xff]
        %v632 = vld [vmem:[%s1 + $0x588] sm:$0xff]
        %v633 = vld [vmem:[%s1 + $0x590] sm:$0xff]
        %v634 = vld [vmem:[%s1 + $0x598] sm:$0xff]
        %v635 = vld [vmem:[%s1 + $0x5a0] sm:$0xff]
        %v636 = vld [vmem:[%s1 + $0x5a8] sm:$0xff]
        %v637 = vld [vmem:[%s1 + $0x5b0] sm:$0xff]
        %v638 = vld [vmem:[%s1 + $0x5b8] sm:$0xff]
        %v639 = vld [vmem:[%s1 + $0x5c0] sm:$0xff]
        %v640 = vld [vmem:[%s1 + $0x5c8] sm:$0xff]
        %v641 = vld [vmem:[%s1 + $0x5d0] sm:$0xff]
        %v642 = vld [vmem:[%s1 + $0x5d8] sm:$0xff]
        %v643 = vld [vmem:[%s1 + $0x5e0] sm:$0xff]
        %v644 = vld [vmem:[%s1 + $0x5e8] sm:$0xff]
        %v645 = vld [vmem:[%s1 + $0x5f0] sm:$0xff]
        %v646 = vld [vmem:[%s1 + $0x5f8] sm:$0xff]
        %v647 = vld [vmem:[%s1 + $0x600] sm:$0xff]
        %v648 = vld [vmem:[%s1 + $0x608] sm:$0xff]
        %v649 = vld [vmem:[%s1 + $0x610] sm:$0xff]
        %v650 = vld [vmem:[%s1 + $0x618] sm:$0xff]
        %v651 = vld [vmem:[%s1 + $0x620] sm:$0xff]
        %v652 = vld [vmem:[%s1 + $0x628] sm:$0xff]
        %v653 = vld [vmem:[%s1 + $0x630] sm:$0xff]
        %v654 = vld [vmem:[%s1 + $0x638] sm:$0xff]
        %v655 = vld [vmem:[%s1 + $0x640] sm:$0xff]
        %v656 = vld [vmem:[%s1 + $0x648] sm:$0xff]
        %v657 = vld [vmem:[%s1 + $0x650] sm:$0xff]
        %v658 = vld [vmem:[%s1 + $0x658] sm:$0xff]
        %v659 = vld [vmem:[%s1 + $0x660] sm:$0xff]
        %v660 = vld [vmem:[%s1 + $0x668] sm:$0xff]
        %v661 = vld [vmem:[%s1 + $0x670] sm:$0xff]
        %v662 = vld [vmem:[%s1 + $0x678] sm:$0xff]
        %v663 = vld [vmem:[%s1 + $0x680] sm:$0xff]
        %v664 = vld [vmem:[%s1 + $0x688] sm:$0xff]
        %v665 = vld [vmem:[%s1 + $0x690] sm:$0xff]
        %v666 = vld [vmem:[%s1 + $0x698] sm:$0xff]
        %v667 = vld [vmem:[%s1 + $0x6a0] sm:$0xff]
        %v668 = vld [vmem:[%s1 + $0x6a8] sm:$0xff]
        %v669 = vld [vmem:[%s1 + $0x6b0] sm:$0xff]
        %v670 = vld [vmem:[%s1 + $0x6b8] sm:$0xff]
        %v671 = vld [vmem:[%s1 + $0x6c0] sm:$0xff]
        %v672 = vld [vmem:[%s1 + $0x6c8] sm:$0xff]
        %v673 = vld [vmem:[%s1 + $0x6d0] sm:$0xff]
        %v674 = vld [vmem:[%s1 + $0x6d8] sm:$0xff]
        %v675 = vld [vmem:[%s1 + $0x6e0] sm:$0xff]
        %v676 = vld [vmem:[%s1 + $0x6e8] sm:$0xff]
        %v677 = vld [vmem:[%s1 + $0x6f0] sm:$0xff]
        %v678 = vld [vmem:[%s1 + $0x6f8] sm:$0xff]
        %v679 = vld [vmem:[%s1 + $0x700] sm:$0xff]
        %v680 = vld [vmem:[%s1 + $0x708] sm:$0xff]
        %v681 = vld [vmem:[%s1 + $0x710] sm:$0xff]
        %v682 = vld [vmem:[%s1 + $0x718] sm:$0xff]
        %v683 = vld [vmem:[%s1 + $0x720] sm:$0xff]
        %v684 = vld [vmem:[%s1 + $0x728] sm:$0xff]
        %v685 = vld [vmem:[%s1 + $0x730] sm:$0xff]
        %v686 = vld [vmem:[%s1 + $0x738] sm:$0xff]
        %v687 = vld [vmem:[%s1 + $0x740] sm:$0xff]
        %v688 = vld [vmem:[%s1 + $0x748] sm:$0xff]
        %v689 = vld [vmem:[%s1 + $0x750] sm:$0xff]
        %v690 = vld [vmem:[%s1 + $0x758] sm:$0xff]
        %v691 = vld [vmem:[%s1 + $0x760] sm:$0xff]
        %v692 = vld [vmem:[%s1 + $0x768] sm:$0xff]
        %v693 = vld [vmem:[%s1 + $0x770] sm:$0xff]
        %v694 = vld [vmem:[%s1 + $0x778] sm:$0xff]
        %v695 = vld [vmem:[%s1 + $0x780] sm:$0xff]
        %v696 = vld [vmem:[%s1 + $0x788] sm:$0xff]
        %v697 = vld [vmem:[%s1 + $0x790] sm:$0xff]
        %v698 = vld [vmem:[%s1 + $0x798] sm:$0xff]
        %v699 = vld [vmem:[%s1 + $0x7a0] sm:$0xff]
        %v700 = vld [vmem:[%s1 + $0x7a8] sm:$0xff]
        %v701 = vld [vmem:[%s1 + $0x7b0] sm:$0xff]
        %v702 = vld [vmem:[%s1 + $0x7b8] sm:$0xff]
        %v703 = vld [vmem:[%s1 + $0x7c0] sm:$0xff]
        %v704 = vld [vmem:[%s1 + $0x7c8] sm:$0xff]
        %v705 = vld [vmem:[%s1 + $0x7d0] sm:$0xff]
        %v706 = vld [vmem:[%s1 + $0x7d8] sm:$0xff]
        %v707 = vld [vmem:[%s1 + $0x7e0] sm:$0xff]
        %v708 = vld [vmem:[%s1 + $0x7e8] sm:$0xff]
        %v709 = vld [vmem:[%s1 + $0x7f0] sm:$0xff]
        %v710 = vld [vmem:[%s1 + $0x7f8] sm:$0xff]
        %v711 = vld [vmem:[%s2] sm:$0xff]
        %v712 = vld [vmem:[%s2 + $0x8] sm:$0xff]
        %v713 = vld [vmem:[%s2 + $0x10] sm:$0xff]
        %v714 = vld [vmem:[%s2 + $0x18] sm:$0xff]
        %v715 = vld [vmem:[%s2 + $0x20] sm:$0xff]
        %v716 = vld [vmem:[%s2 + $0x28] sm:$0xff]
        %v717 = vld [vmem:[%s2 + $0x30] sm:$0xff]
        %v718 = vld [vmem:[%s2 + $0x38] sm:$0xff]
        %v719 = vld [vmem:[%s2 + $0x40] sm:$0xff]
        %v720 = vld [vmem:[%s2 + $0x48] sm:$0xff]
        %v721 = vld [vmem:[%s2 + $0x50] sm:$0xff]
        %v722 = vld [vmem:[%s2 + $0x58] sm:$0xff]
        %v723 = vld [vmem:[%s2 + $0x60] sm:$0xff]
        %v724 = vld [vmem:[%s2 + $0x68] sm:$0xff]
        %v725 = vld [vmem:[%s2 + $0x70] sm:$0xff]
        %v726 = vld [vmem:[%s2 + $0x78] sm:$0xff]
        %v727 = vld [vmem:[%s2 + $0x80] sm:$0xff]
        %v728 = vld [vmem:[%s2 + $0x88] sm:$0xff]
        %v729 = vld [vmem:[%s2 + $0x90] sm:$0xff]
        %v730 = vld [vmem:[%s2 + $0x98] sm:$0xff]
        %v731 = vld [vmem:[%s2 + $0xa0] sm:$0xff]
        %v732 = vld [vmem:[%s2 + $0xa8] sm:$0xff]
        %v733 = vld [vmem:[%s2 + $0xb0] sm:$0xff]
        %v734 = vld [vmem:[%s2 + $0xb8] sm:$0xff]
        %v735 = vld [vmem:[%s2 + $0xc0] sm:$0xff]
        %v736 = vld [vmem:[%s2 + $0xc8] sm:$0xff]
        %v737 = vld [vmem:[%s2 + $0xd0] sm:$0xff]
        %v738 = vld [vmem:[%s2 + $0xd8] sm:$0xff]
        %v739 = vld [vmem:[%s2 + $0xe0] sm:$0xff]
        %v740 = vld [vmem:[%s2 + $0xe8] sm:$0xff]
        %v741 = vld [vmem:[%s2 + $0xf0] sm:$0xff]
        %v742 = vld [vmem:[%s2 + $0xf8] sm:$0xff]
        %v743 = vld [vmem:[%s2 + $0x100] sm:$0xff]
        %v744 = vld [vmem:[%s2 + $0x108] sm:$0xff]
        %v745 = vld [vmem:[%s2 + $0x110] sm:$0xff]
        %v746 = vld [vmem:[%s2 + $0x118] sm:$0xff]
        %v747 = vld [vmem:[%s2 + $0x120] sm:$0xff]
        %v748 = vld [vmem:[%s2 + $0x128] sm:$0xff]
        %v749 = vld [vmem:[%s2 + $0x130] sm:$0xff]
        %v750 = vld [vmem:[%s2 + $0x138] sm:$0xff]
        %v751 = vld [vmem:[%s2 + $0x140] sm:$0xff]
        %v752 = vld [vmem:[%s2 + $0x148] sm:$0xff]
        %v753 = vld [vmem:[%s2 + $0x150] sm:$0xff]
        %v754 = vld [vmem:[%s2 + $0x158] sm:$0xff]
        %v755 = vld [vmem:[%s2 + $0x160] sm:$0xff]
        %v756 = vld [vmem:[%s2 + $0x168] sm:$0xff]
        %v757 = vld [vmem:[%s2 + $0x170] sm:$0xff]
        %v758 = vld [vmem:[%s2 + $0x178] sm:$0xff]
        %v759 = vld [vmem:[%s2 + $0x180] sm:$0xff]
        %v760 = vld [vmem:[%s2 + $0x188] sm:$0xff]
        %v761 = vld [vmem:[%s2 + $0x190] sm:$0xff]
        %v762 = vld [vmem:[%s2 + $0x198] sm:$0xff]
        %v763 = vld [vmem:[%s2 + $0x1a0] sm:$0xff]
        %v764 = vld [vmem:[%s2 + $0x1a8] sm:$0xff]
        %v765 = vld [vmem:[%s2 + $0x1b0] sm:$0xff]
        %v766 = vld [vmem:[%s2 + $0x1b8] sm:$0xff]
        %v767 = vld [vmem:[%s2 + $0x1c0] sm:$0xff]
        %v768 = vld [vmem:[%s2 + $0x1c8] sm:$0xff]
        %v769 = vld [vmem:[%s2 + $0x1d0] sm:$0xff]
        %v770 = vld [vmem:[%s2 + $0x1d8] sm:$0xff]
        %v771 = vld [vmem:[%s2 + $0x1e0] sm:$0xff]
        %v772 = vld [vmem:[%s2 + $0x1e8] sm:$0xff]
        %v773 = vld [vmem:[%s2 + $0x1f0] sm:$0xff]
        %v774 = vld [vmem:[%s2 + $0x1f8] sm:$0xff]
        %v775 = vld [vmem:[%s2 + $0x200] sm:$0xff]
        %v776 = vld [vmem:[%s2 + $0x208] sm:$0xff]
        %v777 = vld [vmem:[%s2 + $0x210] sm:$0xff]
        %v778 = vld [vmem:[%s2 + $0x218] sm:$0xff]
        %v779 = vld [vmem:[%s2 + $0x220] sm:$0xff]
        %v780 = vld [vmem:[%s2 + $0x228] sm:$0xff]
        %v781 = vld [vmem:[%s2 + $0x230] sm:$0xff]
        %v782 = vld [vmem:[%s2 + $0x238] sm:$0xff]
        %v783 = vld [vmem:[%s2 + $0x240] sm:$0xff]
        %v784 = vld [vmem:[%s2 + $0x248] sm:$0xff]
        %v785 = vld [vmem:[%s2 + $0x250] sm:$0xff]
        %v786 = vld [vmem:[%s2 + $0x258] sm:$0xff]
        %v787 = vld [vmem:[%s2 + $0x260] sm:$0xff]
        %v788 = vld [vmem:[%s2 + $0x268] sm:$0xff]
        %v789 = vld [vmem:[%s2 + $0x270] sm:$0xff]
        %v790 = vld [vmem:[%s2 + $0x278] sm:$0xff]
        %v791 = vld [vmem:[%s2 + $0x280] sm:$0xff]
        %v792 = vld [vmem:[%s2 + $0x288] sm:$0xff]
        %v793 = vld [vmem:[%s2 + $0x290] sm:$0xff]
        %v794 = vld [vmem:[%s2 + $0x298] sm:$0xff]
        %v795 = vld [vmem:[%s2 + $0x2a0] sm:$0xff]
        %v796 = vld [vmem:[%s2 + $0x2a8] sm:$0xff]
        %v797 = vld [vmem:[%s2 + $0x2b0] sm:$0xff]
        %v798 = vld [vmem:[%s2 + $0x2b8] sm:$0xff]
        %v799 = vld [vmem:[%s2 + $0x2c0] sm:$0xff]
        %v800 = vld [vmem:[%s2 + $0x2c8] sm:$0xff]
        %v801 = vld [vmem:[%s2 + $0x2d0] sm:$0xff]
        %v802 = vld [vmem:[%s2 + $0x2d8] sm:$0xff]
        %v803 = vld [vmem:[%s2 + $0x2e0] sm:$0xff]
        %v804 = vld [vmem:[%s2 + $0x2e8] sm:$0xff]
        %v805 = vld [vmem:[%s2 + $0x2f0] sm:$0xff]
        %v806 = vld [vmem:[%s2 + $0x2f8] sm:$0xff]
        %v807 = vld [vmem:[%s2 + $0x300] sm:$0xff]
        %v808 = vld [vmem:[%s2 + $0x308] sm:$0xff]
        %v809 = vld [vmem:[%s2 + $0x310] sm:$0xff]
        %v810 = vld [vmem:[%s2 + $0x318] sm:$0xff]
        %v811 = vld [vmem:[%s2 + $0x320] sm:$0xff]
        %v812 = vld [vmem:[%s2 + $0x328] sm:$0xff]
        %v813 = vld [vmem:[%s2 + $0x330] sm:$0xff]
        %v814 = vld [vmem:[%s2 + $0x338] sm:$0xff]
        %v815 = vld [vmem:[%s2 + $0x340] sm:$0xff]
        %v816 = vld [vmem:[%s2 + $0x348] sm:$0xff]
        %v817 = vld [vmem:[%s2 + $0x350] sm:$0xff]
        %v818 = vld [vmem:[%s2 + $0x358] sm:$0xff]
        %v819 = vld [vmem:[%s2 + $0x360] sm:$0xff]
        %v820 = vld [vmem:[%s2 + $0x368] sm:$0xff]
        %v821 = vld [vmem:[%s2 + $0x370] sm:$0xff]
        %v822 = vld [vmem:[%s2 + $0x378] sm:$0xff]
        %v823 = vld [vmem:[%s2 + $0x380] sm:$0xff]
        %v824 = vld [vmem:[%s2 + $0x388] sm:$0xff]
        %v825 = vld [vmem:[%s2 + $0x390] sm:$0xff]
        %v826 = vld [vmem:[%s2 + $0x398] sm:$0xff]
        %v827 = vld [vmem:[%s2 + $0x3a0] sm:$0xff]
        %v828 = vld [vmem:[%s2 + $0x3a8] sm:$0xff]
        %v829 = vld [vmem:[%s2 + $0x3b0] sm:$0xff]
        %v830 = vld [vmem:[%s2 + $0x3b8] sm:$0xff]
        %v831 = vld [vmem:[%s2 + $0x3c0] sm:$0xff]
        %v832 = vld [vmem:[%s2 + $0x3c8] sm:$0xff]
        %v833 = vld [vmem:[%s2 + $0x3d0] sm:$0xff]
        %v834 = vld [vmem:[%s2 + $0x3d8] sm:$0xff]
        %v835 = vld [vmem:[%s2 + $0x3e0] sm:$0xff]
        %v836 = vld [vmem:[%s2 + $0x3e8] sm:$0xff]
        %v837 = vld [vmem:[%s2 + $0x3f0] sm:$0xff]
        %v838 = vld [vmem:[%s2 + $0x3f8] sm:$0xff]
        %v839 = vld [vmem:[%s2 + $0x400] sm:$0xff]
        %v840 = vld [vmem:[%s2 + $0x408] sm:$0xff]
        %v841 = vld [vmem:[%s2 + $0x410] sm:$0xff]
        %v842 = vld [vmem:[%s2 + $0x418] sm:$0xff]
        %v843 = vld [vmem:[%s2 + $0x420] sm:$0xff]
        %v844 = vld [vmem:[%s2 + $0x428] sm:$0xff]
        %v845 = vld [vmem:[%s2 + $0x430] sm:$0xff]
        %v846 = vld [vmem:[%s2 + $0x438] sm:$0xff]
        %v847 = vld [vmem:[%s2 + $0x440] sm:$0xff]
        %v848 = vld [vmem:[%s2 + $0x448] sm:$0xff]
        %v849 = vld [vmem:[%s2 + $0x450] sm:$0xff]
        %v850 = vld [vmem:[%s2 + $0x458] sm:$0xff]
        %v851 = vld [vmem:[%s2 + $0x460] sm:$0xff]
        %v852 = vld [vmem:[%s2 + $0x468] sm:$0xff]
        %v853 = vld [vmem:[%s2 + $0x470] sm:$0xff]
        %v854 = vld [vmem:[%s2 + $0x478] sm:$0xff]
        %v855 = vld [vmem:[%s2 + $0x480] sm:$0xff]
        %v856 = vld [vmem:[%s2 + $0x488] sm:$0xff]
        %v857 = vld [vmem:[%s2 + $0x490] sm:$0xff]
        %v858 = vld [vmem:[%s2 + $0x498] sm:$0xff]
        %v859 = vld [vmem:[%s2 + $0x4a0] sm:$0xff]
        %v860 = vld [vmem:[%s2 + $0x4a8] sm:$0xff]
        %v861 = vld [vmem:[%s2 + $0x4b0] sm:$0xff]
        %v862 = vld [vmem:[%s2 + $0x4b8] sm:$0xff]
        %v863 = vld [vmem:[%s2 + $0x4c0] sm:$0xff]
        %v864 = vld [vmem:[%s2 + $0x4c8] sm:$0xff]
        %v865 = vld [vmem:[%s2 + $0x4d0] sm:$0xff]
        %v866 = vld [vmem:[%s2 + $0x4d8] sm:$0xff]
        %v867 = vld [vmem:[%s2 + $0x4e0] sm:$0xff]
        %v868 = vld [vmem:[%s2 + $0x4e8] sm:$0xff]
        %v869 = vld [vmem:[%s2 + $0x4f0] sm:$0xff]
        %v870 = vld [vmem:[%s2 + $0x4f8] sm:$0xff]
        %v871 = vld [vmem:[%s2 + $0x500] sm:$0xff]
        %v872 = vld [vmem:[%s2 + $0x508] sm:$0xff]
        %v873 = vld [vmem:[%s2 + $0x510] sm:$0xff]
        %v874 = vld [vmem:[%s2 + $0x518] sm:$0xff]
        %v875 = vld [vmem:[%s2 + $0x520] sm:$0xff]
        %v876 = vld [vmem:[%s2 + $0x528] sm:$0xff]
        %v877 = vld [vmem:[%s2 + $0x530] sm:$0xff]
        %v878 = vld [vmem:[%s2 + $0x538] sm:$0xff]
        %v879 = vld [vmem:[%s2 + $0x540] sm:$0xff]
        %v880 = vld [vmem:[%s2 + $0x548] sm:$0xff]
        %v881 = vld [vmem:[%s2 + $0x550] sm:$0xff]
        %v882 = vld [vmem:[%s2 + $0x558] sm:$0xff]
        %v883 = vld [vmem:[%s2 + $0x560] sm:$0xff]
        %v884 = vld [vmem:[%s2 + $0x568] sm:$0xff]
        %v885 = vld [vmem:[%s2 + $0x570] sm:$0xff]
        %v886 = vld [vmem:[%s2 + $0x578] sm:$0xff]
        %v887 = vld [vmem:[%s2 + $0x580] sm:$0xff]
        %v888 = vld [vmem:[%s2 + $0x588] sm:$0xff]
        %v889 = vld [vmem:[%s2 + $0x590] sm:$0xff]
        %v890 = vld [vmem:[%s2 + $0x598] sm:$0xff]
        %v891 = vld [vmem:[%s2 + $0x5a0] sm:$0xff]
        %v892 = vld [vmem:[%s2 + $0x5a8] sm:$0xff]
        %v893 = vld [vmem:[%s2 + $0x5b0] sm:$0xff]
        %v894 = vld [vmem:[%s2 + $0x5b8] sm:$0xff]
        %v895 = vld [vmem:[%s2 + $0x5c0] sm:$0xff]
        %v896 = vld [vmem:[%s2 + $0x5c8] sm:$0xff]
        %v897 = vld [vmem:[%s2 + $0x5d0] sm:$0xff]
        %v898 = vld [vmem:[%s2 + $0x5d8] sm:$0xff]
        %v899 = vld [vmem:[%s2 + $0x5e0] sm:$0xff]
        %v900 = vld [vmem:[%s2 + $0x5e8] sm:$0xff]
        %v901 = vld [vmem:[%s2 + $0x5f0] sm:$0xff]
        %v902 = vld [vmem:[%s2 + $0x5f8] sm:$0xff]
        %v903 = vld [vmem:[%s2 + $0x600] sm:$0xff]
        %v904 = vld [vmem:[%s2 + $0x608] sm:$0xff]
        %v905 = vld [vmem:[%s2 + $0x610] sm:$0xff]
        %v906 = vld [vmem:[%s2 + $0x618] sm:$0xff]
        %v907 = vld [vmem:[%s2 + $0x620] sm:$0xff]
        %v908 = vld [vmem:[%s2 + $0x628] sm:$0xff]
        %v909 = vld [vmem:[%s2 + $0x630] sm:$0xff]
        %v910 = vld [vmem:[%s2 + $0x638] sm:$0xff]
        %v911 = vld [vmem:[%s2 + $0x640] sm:$0xff]
        %v912 = vld [vmem:[%s2 + $0x648] sm:$0xff]
        %v913 = vld [vmem:[%s2 + $0x650] sm:$0xff]
        %v914 = vld [vmem:[%s2 + $0x658] sm:$0xff]
        %v915 = vld [vmem:[%s2 + $0x660] sm:$0xff]
        %v916 = vld [vmem:[%s2 + $0x668] sm:$0xff]
        %v917 = vld [vmem:[%s2 + $0x670] sm:$0xff]
        %v918 = vld [vmem:[%s2 + $0x678] sm:$0xff]
        %v919 = vld [vmem:[%s2 + $0x680] sm:$0xff]
        %v920 = vld [vmem:[%s2 + $0x688] sm:$0xff]
        %v921 = vld [vmem:[%s2 + $0x690] sm:$0xff]
        %v922 = vld [vmem:[%s2 + $0x698] sm:$0xff]
        %v923 = vld [vmem:[%s2 + $0x6a0] sm:$0xff]
        %v924 = vld [vmem:[%s2 + $0x6a8] sm:$0xff]
        %v925 = vld [vmem:[%s2 + $0x6b0] sm:$0xff]
        %v926 = vld [vmem:[%s2 + $0x6b8] sm:$0xff]
        %v927 = vld [vmem:[%s2 + $0x6c0] sm:$0xff]
        %v928 = vld [vmem:[%s2 + $0x6c8] sm:$0xff]
        %v929 = vld [vmem:[%s2 + $0x6d0] sm:$0xff]
        %v930 = vld [vmem:[%s2 + $0x6d8] sm:$0xff]
        %v931 = vld [vmem:[%s2 + $0x6e0] sm:$0xff]
        %v932 = vld [vmem:[%s2 + $0x6e8] sm:$0xff]
        %v933 = vld [vmem:[%s2 + $0x6f0] sm:$0xff]
        %v934 = vld [vmem:[%s2 + $0x6f8] sm:$0xff]
        %v935 = vld [vmem:[%s2 + $0x700] sm:$0xff]
        %v936 = vld [vmem:[%s2 + $0x708] sm:$0xff]
        %v937 = vld [vmem:[%s2 + $0x710] sm:$0xff]
        %v938 = vld [vmem:[%s2 + $0x718] sm:$0xff]
        %v939 = vld [vmem:[%s2 + $0x720] sm:$0xff]
        %v940 = vld [vmem:[%s2 + $0x728] sm:$0xff]
        %v941 = vld [vmem:[%s2 + $0x730] sm:$0xff]
        %v942 = vld [vmem:[%s2 + $0x738] sm:$0xff]
        %v943 = vld [vmem:[%s2 + $0x740] sm:$0xff]
        %v944 = vld [vmem:[%s2 + $0x748] sm:$0xff]
        %v945 = vld [vmem:[%s2 + $0x750] sm:$0xff]
        %v946 = vld [vmem:[%s2 + $0x758] sm:$0xff]
        %v947 = vld [vmem:[%s2 + $0x760] sm:$0xff]
        %v948 = vld [vmem:[%s2 + $0x768] sm:$0xff]
        %v949 = vld [vmem:[%s2 + $0x770] sm:$0xff]
        %v950 = vld [vmem:[%s2 + $0x778] sm:$0xff]
        %v951 = vld [vmem:[%s2 + $0x780] sm:$0xff]
        %v952 = vld [vmem:[%s2 + $0x788] sm:$0xff]
        %v953 = vld [vmem:[%s2 + $0x790] sm:$0xff]
        %v954 = vld [vmem:[%s2 + $0x798] sm:$0xff]
        %v955 = vld [vmem:[%s2 + $0x7a0] sm:$0xff]
        %v956 = vld [vmem:[%s2 + $0x7a8] sm:$0xff]
        %v957 = vld [vmem:[%s2 + $0x7b0] sm:$0xff]
        %v958 = vld [vmem:[%s2 + $0x7b8] sm:$0xff]
        %v959 = vld [vmem:[%s2 + $0x7c0] sm:$0xff]
        %v960 = vld [vmem:[%s2 + $0x7c8] sm:$0xff]
        %v961 = vld [vmem:[%s2 + $0x7d0] sm:$0xff]
        %v962 = vld [vmem:[%s2 + $0x7d8] sm:$0xff]
        %v963 = vld [vmem:[%s2 + $0x7e0] sm:$0xff]
        %v964 = vld [vmem:[%s2 + $0x7e8] sm:$0xff]
        %v965 = vld [vmem:[%s2 + $0x7f0] sm:$0xff]
        %v966 = vld [vmem:[%s2 + $0x7f8] sm:$0xff]
        %968 = vset.pattern.permute.xlu0 0
        %969 = vperm.xlu0 %968, %v711
        %v970 = vpop.permute.xlu0 %969
        %973 = vset.pattern.permute.xlu0 0
        %974 = vperm.xlu0 %973, %v712
        %v975 = vpop.permute.xlu0 %974
        %978 = vset.pattern.permute.xlu0 0
        %979 = vperm.xlu0 %978, %v713
        %v980 = vpop.permute.xlu0 %979
        %983 = vset.pattern.permute.xlu0 0
        %984 = vperm.xlu0 %983, %v714
        %v985 = vpop.permute.xlu0 %984
        %988 = vset.pattern.permute.xlu0 0
        %989 = vperm.xlu0 %988, %v715
        %v990 = vpop.permute.xlu0 %989
        %993 = vset.pattern.permute.xlu0 0
        %994 = vperm.xlu0 %993, %v716
        %v995 = vpop.permute.xlu0 %994
        %998 = vset.pattern.permute.xlu0 0
        %999 = vperm.xlu0 %998, %v717
        %v1000 = vpop.permute.xlu0 %999
        %1003 = vset.pattern.permute.xlu0 0
        %1004 = vperm.xlu0 %1003, %v718
        %v1005 = vpop.permute.xlu0 %1004
        %1008 = vset.pattern.permute.xlu0 0
        %1009 = vperm.xlu0 %1008, %v719
        %v1010 = vpop.permute.xlu0 %1009
        %1013 = vset.pattern.permute.xlu0 0
        %1014 = vperm.xlu0 %1013, %v720
        %v1015 = vpop.permute.xlu0 %1014
        %1018 = vset.pattern.permute.xlu0 0
        %1019 = vperm.xlu0 %1018, %v721
        %v1020 = vpop.permute.xlu0 %1019
        %1023 = vset.pattern.permute.xlu0 0
        %1024 = vperm.xlu0 %1023, %v722
        %v1025 = vpop.permute.xlu0 %1024
        %1028 = vset.pattern.permute.xlu0 0
        %1029 = vperm.xlu0 %1028, %v723
        %v1030 = vpop.permute.xlu0 %1029
        %1033 = vset.pattern.permute.xlu0 0
        %1034 = vperm.xlu0 %1033, %v724
        %v1035 = vpop.permute.xlu0 %1034
        %1038 = vset.pattern.permute.xlu0 0
        %1039 = vperm.xlu0 %1038, %v725
        %v1040 = vpop.permute.xlu0 %1039
        %1043 = vset.pattern.permute.xlu0 0
        %1044 = vperm.xlu0 %1043, %v726
        %v1045 = vpop.permute.xlu0 %1044
        %1048 = vset.pattern.permute.xlu0 0
        %1049 = vperm.xlu0 %1048, %v727
        %v1050 = vpop.permute.xlu0 %1049
        %1053 = vset.pattern.permute.xlu0 0
        %1054 = vperm.xlu0 %1053, %v728
        %v1055 = vpop.permute.xlu0 %1054
        %1058 = vset.pattern.permute.xlu0 0
        %1059 = vperm.xlu0 %1058, %v729
        %v1060 = vpop.permute.xlu0 %1059
        %1063 = vset.pattern.permute.xlu0 0
        %1064 = vperm.xlu0 %1063, %v730
        %v1065 = vpop.permute.xlu0 %1064
        %1068 = vset.pattern.permute.xlu0 0
        %1069 = vperm.xlu0 %1068, %v731
        %v1070 = vpop.permute.xlu0 %1069
        %1073 = vset.pattern.permute.xlu0 0
        %1074 = vperm.xlu0 %1073, %v732
        %v1075 = vpop.permute.xlu0 %1074
        %1078 = vset.pattern.permute.xlu0 0
        %1079 = vperm.xlu0 %1078, %v733
        %v1080 = vpop.permute.xlu0 %1079
        %1083 = vset.pattern.permute.xlu0 0
        %1084 = vperm.xlu0 %1083, %v734
        %v1085 = vpop.permute.xlu0 %1084
        %1088 = vset.pattern.permute.xlu0 0
        %1089 = vperm.xlu0 %1088, %v735
        %v1090 = vpop.permute.xlu0 %1089
        %1093 = vset.pattern.permute.xlu0 0
        %1094 = vperm.xlu0 %1093, %v736
        %v1095 = vpop.permute.xlu0 %1094
        %1098 = vset.pattern.permute.xlu0 0
        %1099 = vperm.xlu0 %1098, %v737
        %v1100 = vpop.permute.xlu0 %1099
        %1103 = vset.pattern.permute.xlu0 0
        %1104 = vperm.xlu0 %1103, %v738
        %v1105 = vpop.permute.xlu0 %1104
        %1108 = vset.pattern.permute.xlu0 0
        %1109 = vperm.xlu0 %1108, %v739
        %v1110 = vpop.permute.xlu0 %1109
        %1113 = vset.pattern.permute.xlu0 0
        %1114 = vperm.xlu0 %1113, %v740
        %v1115 = vpop.permute.xlu0 %1114
        %1118 = vset.pattern.permute.xlu0 0
        %1119 = vperm.xlu0 %1118, %v741
        %v1120 = vpop.permute.xlu0 %1119
        %1123 = vset.pattern.permute.xlu0 0
        %1124 = vperm.xlu0 %1123, %v742
        %v1125 = vpop.permute.xlu0 %1124
        %1128 = vset.pattern.permute.xlu0 0
        %1129 = vperm.xlu0 %1128, %v743
        %v1130 = vpop.permute.xlu0 %1129
        %1133 = vset.pattern.permute.xlu0 0
        %1134 = vperm.xlu0 %1133, %v744
        %v1135 = vpop.permute.xlu0 %1134
        %1138 = vset.pattern.permute.xlu0 0
        %1139 = vperm.xlu0 %1138, %v745
        %v1140 = vpop.permute.xlu0 %1139
        %1143 = vset.pattern.permute.xlu0 0
        %1144 = vperm.xlu0 %1143, %v746
        %v1145 = vpop.permute.xlu0 %1144
        %1148 = vset.pattern.permute.xlu0 0
        %1149 = vperm.xlu0 %1148, %v747
        %v1150 = vpop.permute.xlu0 %1149
        %1153 = vset.pattern.permute.xlu0 0
        %1154 = vperm.xlu0 %1153, %v748
        %v1155 = vpop.permute.xlu0 %1154
        %1158 = vset.pattern.permute.xlu0 0
        %1159 = vperm.xlu0 %1158, %v749
        %v1160 = vpop.permute.xlu0 %1159
        %1163 = vset.pattern.permute.xlu0 0
        %1164 = vperm.xlu0 %1163, %v750
        %v1165 = vpop.permute.xlu0 %1164
        %1168 = vset.pattern.permute.xlu0 0
        %1169 = vperm.xlu0 %1168, %v751
        %v1170 = vpop.permute.xlu0 %1169
        %1173 = vset.pattern.permute.xlu0 0
        %1174 = vperm.xlu0 %1173, %v752
        %v1175 = vpop.permute.xlu0 %1174
        %1178 = vset.pattern.permute.xlu0 0
        %1179 = vperm.xlu0 %1178, %v753
        %v1180 = vpop.permute.xlu0 %1179
        %1183 = vset.pattern.permute.xlu0 0
        %1184 = vperm.xlu0 %1183, %v754
        %v1185 = vpop.permute.xlu0 %1184
        %1188 = vset.pattern.permute.xlu0 0
        %1189 = vperm.xlu0 %1188, %v755
        %v1190 = vpop.permute.xlu0 %1189
        %1193 = vset.pattern.permute.xlu0 0
        %1194 = vperm.xlu0 %1193, %v756
        %v1195 = vpop.permute.xlu0 %1194
        %1198 = vset.pattern.permute.xlu0 0
        %1199 = vperm.xlu0 %1198, %v757
        %v1200 = vpop.permute.xlu0 %1199
        %1203 = vset.pattern.permute.xlu0 0
        %1204 = vperm.xlu0 %1203, %v758
        %v1205 = vpop.permute.xlu0 %1204
        %1208 = vset.pattern.permute.xlu0 0
        %1209 = vperm.xlu0 %1208, %v759
        %v1210 = vpop.permute.xlu0 %1209
        %1213 = vset.pattern.permute.xlu0 0
        %1214 = vperm.xlu0 %1213, %v760
        %v1215 = vpop.permute.xlu0 %1214
        %1218 = vset.pattern.permute.xlu0 0
        %1219 = vperm.xlu0 %1218, %v761
        %v1220 = vpop.permute.xlu0 %1219
        %1223 = vset.pattern.permute.xlu0 0
        %1224 = vperm.xlu0 %1223, %v762
        %v1225 = vpop.permute.xlu0 %1224
        %1228 = vset.pattern.permute.xlu0 0
        %1229 = vperm.xlu0 %1228, %v763
        %v1230 = vpop.permute.xlu0 %1229
        %1233 = vset.pattern.permute.xlu0 0
        %1234 = vperm.xlu0 %1233, %v764
        %v1235 = vpop.permute.xlu0 %1234
        %1238 = vset.pattern.permute.xlu0 0
        %1239 = vperm.xlu0 %1238, %v765
        %v1240 = vpop.permute.xlu0 %1239
        %1243 = vset.pattern.permute.xlu0 0
        %1244 = vperm.xlu0 %1243, %v766
        %v1245 = vpop.permute.xlu0 %1244
        %1248 = vset.pattern.permute.xlu0 0
        %1249 = vperm.xlu0 %1248, %v767
        %v1250 = vpop.permute.xlu0 %1249
        %1253 = vset.pattern.permute.xlu0 0
        %1254 = vperm.xlu0 %1253, %v768
        %v1255 = vpop.permute.xlu0 %1254
        %1258 = vset.pattern.permute.xlu0 0
        %1259 = vperm.xlu0 %1258, %v769
        %v1260 = vpop.permute.xlu0 %1259
        %1263 = vset.pattern.permute.xlu0 0
        %1264 = vperm.xlu0 %1263, %v770
        %v1265 = vpop.permute.xlu0 %1264
        %1268 = vset.pattern.permute.xlu0 0
        %1269 = vperm.xlu0 %1268, %v771
        %v1270 = vpop.permute.xlu0 %1269
        %1273 = vset.pattern.permute.xlu0 0
        %1274 = vperm.xlu0 %1273, %v772
        %v1275 = vpop.permute.xlu0 %1274
        %1278 = vset.pattern.permute.xlu0 0
        %1279 = vperm.xlu0 %1278, %v773
        %v1280 = vpop.permute.xlu0 %1279
        %1283 = vset.pattern.permute.xlu0 0
        %1284 = vperm.xlu0 %1283, %v774
        %v1285 = vpop.permute.xlu0 %1284
        %1288 = vset.pattern.permute.xlu0 0
        %1289 = vperm.xlu0 %1288, %v775
        %v1290 = vpop.permute.xlu0 %1289
        %1293 = vset.pattern.permute.xlu0 0
        %1294 = vperm.xlu0 %1293, %v776
        %v1295 = vpop.permute.xlu0 %1294
        %1298 = vset.pattern.permute.xlu0 0
        %1299 = vperm.xlu0 %1298, %v777
        %v1300 = vpop.permute.xlu0 %1299
        %1303 = vset.pattern.permute.xlu0 0
        %1304 = vperm.xlu0 %1303, %v778
        %v1305 = vpop.permute.xlu0 %1304
        %1308 = vset.pattern.permute.xlu0 0
        %1309 = vperm.xlu0 %1308, %v779
        %v1310 = vpop.permute.xlu0 %1309
        %1313 = vset.pattern.permute.xlu0 0
        %1314 = vperm.xlu0 %1313, %v780
        %v1315 = vpop.permute.xlu0 %1314
        %1318 = vset.pattern.permute.xlu0 0
        %1319 = vperm.xlu0 %1318, %v781
        %v1320 = vpop.permute.xlu0 %1319
        %1323 = vset.pattern.permute.xlu0 0
        %1324 = vperm.xlu0 %1323, %v782
        %v1325 = vpop.permute.xlu0 %1324
        %1328 = vset.pattern.permute.xlu0 0
        %1329 = vperm.xlu0 %1328, %v783
        %v1330 = vpop.permute.xlu0 %1329
        %1333 = vset.pattern.permute.xlu0 0
        %1334 = vperm.xlu0 %1333, %v784
        %v1335 = vpop.permute.xlu0 %1334
        %1338 = vset.pattern.permute.xlu0 0
        %1339 = vperm.xlu0 %1338, %v785
        %v1340 = vpop.permute.xlu0 %1339
        %1343 = vset.pattern.permute.xlu0 0
        %1344 = vperm.xlu0 %1343, %v786
        %v1345 = vpop.permute.xlu0 %1344
        %1348 = vset.pattern.permute.xlu0 0
        %1349 = vperm.xlu0 %1348, %v787
        %v1350 = vpop.permute.xlu0 %1349
        %1353 = vset.pattern.permute.xlu0 0
        %1354 = vperm.xlu0 %1353, %v788
        %v1355 = vpop.permute.xlu0 %1354
        %1358 = vset.pattern.permute.xlu0 0
        %1359 = vperm.xlu0 %1358, %v789
        %v1360 = vpop.permute.xlu0 %1359
        %1363 = vset.pattern.permute.xlu0 0
        %1364 = vperm.xlu0 %1363, %v790
        %v1365 = vpop.permute.xlu0 %1364
        %1368 = vset.pattern.permute.xlu0 0
        %1369 = vperm.xlu0 %1368, %v791
        %v1370 = vpop.permute.xlu0 %1369
        %1373 = vset.pattern.permute.xlu0 0
        %1374 = vperm.xlu0 %1373, %v792
        %v1375 = vpop.permute.xlu0 %1374
        %1378 = vset.pattern.permute.xlu0 0
        %1379 = vperm.xlu0 %1378, %v793
        %v1380 = vpop.permute.xlu0 %1379
        %1383 = vset.pattern.permute.xlu0 0
        %1384 = vperm.xlu0 %1383, %v794
        %v1385 = vpop.permute.xlu0 %1384
        %1388 = vset.pattern.permute.xlu0 0
        %1389 = vperm.xlu0 %1388, %v795
        %v1390 = vpop.permute.xlu0 %1389
        %1393 = vset.pattern.permute.xlu0 0
        %1394 = vperm.xlu0 %1393, %v796
        %v1395 = vpop.permute.xlu0 %1394
        %1398 = vset.pattern.permute.xlu0 0
        %1399 = vperm.xlu0 %1398, %v797
        %v1400 = vpop.permute.xlu0 %1399
        %1403 = vset.pattern.permute.xlu0 0
        %1404 = vperm.xlu0 %1403, %v798
        %v1405 = vpop.permute.xlu0 %1404
        %1408 = vset.pattern.permute.xlu0 0
        %1409 = vperm.xlu0 %1408, %v799
        %v1410 = vpop.permute.xlu0 %1409
        %1413 = vset.pattern.permute.xlu0 0
        %1414 = vperm.xlu0 %1413, %v800
        %v1415 = vpop.permute.xlu0 %1414
        %1418 = vset.pattern.permute.xlu0 0
        %1419 = vperm.xlu0 %1418, %v801
        %v1420 = vpop.permute.xlu0 %1419
        %1423 = vset.pattern.permute.xlu0 0
        %1424 = vperm.xlu0 %1423, %v802
        %v1425 = vpop.permute.xlu0 %1424
        %1428 = vset.pattern.permute.xlu0 0
        %1429 = vperm.xlu0 %1428, %v803
        %v1430 = vpop.permute.xlu0 %1429
        %1433 = vset.pattern.permute.xlu0 0
        %1434 = vperm.xlu0 %1433, %v804
        %v1435 = vpop.permute.xlu0 %1434
        %1438 = vset.pattern.permute.xlu0 0
        %1439 = vperm.xlu0 %1438, %v805
        %v1440 = vpop.permute.xlu0 %1439
        %1443 = vset.pattern.permute.xlu0 0
        %1444 = vperm.xlu0 %1443, %v806
        %v1445 = vpop.permute.xlu0 %1444
        %1448 = vset.pattern.permute.xlu0 0
        %1449 = vperm.xlu0 %1448, %v807
        %v1450 = vpop.permute.xlu0 %1449
        %1453 = vset.pattern.permute.xlu0 0
        %1454 = vperm.xlu0 %1453, %v808
        %v1455 = vpop.permute.xlu0 %1454
        %1458 = vset.pattern.permute.xlu0 0
        %1459 = vperm.xlu0 %1458, %v809
        %v1460 = vpop.permute.xlu0 %1459
        %1463 = vset.pattern.permute.xlu0 0
        %1464 = vperm.xlu0 %1463, %v810
        %v1465 = vpop.permute.xlu0 %1464
        %1468 = vset.pattern.permute.xlu0 0
        %1469 = vperm.xlu0 %1468, %v811
        %v1470 = vpop.permute.xlu0 %1469
        %1473 = vset.pattern.permute.xlu0 0
        %1474 = vperm.xlu0 %1473, %v812
        %v1475 = vpop.permute.xlu0 %1474
        %1478 = vset.pattern.permute.xlu0 0
        %1479 = vperm.xlu0 %1478, %v813
        %v1480 = vpop.permute.xlu0 %1479
        %1483 = vset.pattern.permute.xlu0 0
        %1484 = vperm.xlu0 %1483, %v814
        %v1485 = vpop.permute.xlu0 %1484
        %1488 = vset.pattern.permute.xlu0 0
        %1489 = vperm.xlu0 %1488, %v815
        %v1490 = vpop.permute.xlu0 %1489
        %1493 = vset.pattern.permute.xlu0 0
        %1494 = vperm.xlu0 %1493, %v816
        %v1495 = vpop.permute.xlu0 %1494
        %1498 = vset.pattern.permute.xlu0 0
        %1499 = vperm.xlu0 %1498, %v817
        %v1500 = vpop.permute.xlu0 %1499
        %1503 = vset.pattern.permute.xlu0 0
        %1504 = vperm.xlu0 %1503, %v818
        %v1505 = vpop.permute.xlu0 %1504
        %1508 = vset.pattern.permute.xlu0 0
        %1509 = vperm.xlu0 %1508, %v819
        %v1510 = vpop.permute.xlu0 %1509
        %1513 = vset.pattern.permute.xlu0 0
        %1514 = vperm.xlu0 %1513, %v820
        %v1515 = vpop.permute.xlu0 %1514
        %1518 = vset.pattern.permute.xlu0 0
        %1519 = vperm.xlu0 %1518, %v821
        %v1520 = vpop.permute.xlu0 %1519
        %1523 = vset.pattern.permute.xlu0 0
        %1524 = vperm.xlu0 %1523, %v822
        %v1525 = vpop.permute.xlu0 %1524
        %1528 = vset.pattern.permute.xlu0 0
        %1529 = vperm.xlu0 %1528, %v823
        %v1530 = vpop.permute.xlu0 %1529
        %1533 = vset.pattern.permute.xlu0 0
        %1534 = vperm.xlu0 %1533, %v824
        %v1535 = vpop.permute.xlu0 %1534
        %1538 = vset.pattern.permute.xlu0 0
        %1539 = vperm.xlu0 %1538, %v825
        %v1540 = vpop.permute.xlu0 %1539
        %1543 = vset.pattern.permute.xlu0 0
        %1544 = vperm.xlu0 %1543, %v826
        %v1545 = vpop.permute.xlu0 %1544
        %1548 = vset.pattern.permute.xlu0 0
        %1549 = vperm.xlu0 %1548, %v827
        %v1550 = vpop.permute.xlu0 %1549
        %1553 = vset.pattern.permute.xlu0 0
        %1554 = vperm.xlu0 %1553, %v828
        %v1555 = vpop.permute.xlu0 %1554
        %1558 = vset.pattern.permute.xlu0 0
        %1559 = vperm.xlu0 %1558, %v829
        %v1560 = vpop.permute.xlu0 %1559
        %1563 = vset.pattern.permute.xlu0 0
        %1564 = vperm.xlu0 %1563, %v830
        %v1565 = vpop.permute.xlu0 %1564
        %1568 = vset.pattern.permute.xlu0 0
        %1569 = vperm.xlu0 %1568, %v831
        %v1570 = vpop.permute.xlu0 %1569
        %1573 = vset.pattern.permute.xlu0 0
        %1574 = vperm.xlu0 %1573, %v832
        %v1575 = vpop.permute.xlu0 %1574
        %1578 = vset.pattern.permute.xlu0 0
        %1579 = vperm.xlu0 %1578, %v833
        %v1580 = vpop.permute.xlu0 %1579
        %1583 = vset.pattern.permute.xlu0 0
        %1584 = vperm.xlu0 %1583, %v834
        %v1585 = vpop.permute.xlu0 %1584
        %1588 = vset.pattern.permute.xlu0 0
        %1589 = vperm.xlu0 %1588, %v835
        %v1590 = vpop.permute.xlu0 %1589
        %1593 = vset.pattern.permute.xlu0 0
        %1594 = vperm.xlu0 %1593, %v836
        %v1595 = vpop.permute.xlu0 %1594
        %1598 = vset.pattern.permute.xlu0 0
        %1599 = vperm.xlu0 %1598, %v837
        %v1600 = vpop.permute.xlu0 %1599
        %1603 = vset.pattern.permute.xlu0 0
        %1604 = vperm.xlu0 %1603, %v838
        %v1605 = vpop.permute.xlu0 %1604
        %1608 = vset.pattern.permute.xlu0 0
        %1609 = vperm.xlu0 %1608, %v839
        %v1610 = vpop.permute.xlu0 %1609
        %1613 = vset.pattern.permute.xlu0 0
        %1614 = vperm.xlu0 %1613, %v840
        %v1615 = vpop.permute.xlu0 %1614
        %1618 = vset.pattern.permute.xlu0 0
        %1619 = vperm.xlu0 %1618, %v841
        %v1620 = vpop.permute.xlu0 %1619
        %1623 = vset.pattern.permute.xlu0 0
        %1624 = vperm.xlu0 %1623, %v842
        %v1625 = vpop.permute.xlu0 %1624
        %1628 = vset.pattern.permute.xlu0 0
        %1629 = vperm.xlu0 %1628, %v843
        %v1630 = vpop.permute.xlu0 %1629
        %1633 = vset.pattern.permute.xlu0 0
        %1634 = vperm.xlu0 %1633, %v844
        %v1635 = vpop.permute.xlu0 %1634
        %1638 = vset.pattern.permute.xlu0 0
        %1639 = vperm.xlu0 %1638, %v845
        %v1640 = vpop.permute.xlu0 %1639
        %1643 = vset.pattern.permute.xlu0 0
        %1644 = vperm.xlu0 %1643, %v846
        %v1645 = vpop.permute.xlu0 %1644
        %1648 = vset.pattern.permute.xlu0 0
        %1649 = vperm.xlu0 %1648, %v847
        %v1650 = vpop.permute.xlu0 %1649
        %1653 = vset.pattern.permute.xlu0 0
        %1654 = vperm.xlu0 %1653, %v848
        %v1655 = vpop.permute.xlu0 %1654
        %1658 = vset.pattern.permute.xlu0 0
        %1659 = vperm.xlu0 %1658, %v849
        %v1660 = vpop.permute.xlu0 %1659
        %1663 = vset.pattern.permute.xlu0 0
        %1664 = vperm.xlu0 %1663, %v850
        %v1665 = vpop.permute.xlu0 %1664
        %1668 = vset.pattern.permute.xlu0 0
        %1669 = vperm.xlu0 %1668, %v851
        %v1670 = vpop.permute.xlu0 %1669
        %1673 = vset.pattern.permute.xlu0 0
        %1674 = vperm.xlu0 %1673, %v852
        %v1675 = vpop.permute.xlu0 %1674
        %1678 = vset.pattern.permute.xlu0 0
        %1679 = vperm.xlu0 %1678, %v853
        %v1680 = vpop.permute.xlu0 %1679
        %1683 = vset.pattern.permute.xlu0 0
        %1684 = vperm.xlu0 %1683, %v854
        %v1685 = vpop.permute.xlu0 %1684
        %1688 = vset.pattern.permute.xlu0 0
        %1689 = vperm.xlu0 %1688, %v855
        %v1690 = vpop.permute.xlu0 %1689
        %1693 = vset.pattern.permute.xlu0 0
        %1694 = vperm.xlu0 %1693, %v856
        %v1695 = vpop.permute.xlu0 %1694
        %1698 = vset.pattern.permute.xlu0 0
        %1699 = vperm.xlu0 %1698, %v857
        %v1700 = vpop.permute.xlu0 %1699
        %1703 = vset.pattern.permute.xlu0 0
        %1704 = vperm.xlu0 %1703, %v858
        %v1705 = vpop.permute.xlu0 %1704
        %1708 = vset.pattern.permute.xlu0 0
        %1709 = vperm.xlu0 %1708, %v859
        %v1710 = vpop.permute.xlu0 %1709
        %1713 = vset.pattern.permute.xlu0 0
        %1714 = vperm.xlu0 %1713, %v860
        %v1715 = vpop.permute.xlu0 %1714
        %1718 = vset.pattern.permute.xlu0 0
        %1719 = vperm.xlu0 %1718, %v861
        %v1720 = vpop.permute.xlu0 %1719
        %1723 = vset.pattern.permute.xlu0 0
        %1724 = vperm.xlu0 %1723, %v862
        %v1725 = vpop.permute.xlu0 %1724
        %1728 = vset.pattern.permute.xlu0 0
        %1729 = vperm.xlu0 %1728, %v863
        %v1730 = vpop.permute.xlu0 %1729
        %1733 = vset.pattern.permute.xlu0 0
        %1734 = vperm.xlu0 %1733, %v864
        %v1735 = vpop.permute.xlu0 %1734
        %1738 = vset.pattern.permute.xlu0 0
        %1739 = vperm.xlu0 %1738, %v865
        %v1740 = vpop.permute.xlu0 %1739
        %1743 = vset.pattern.permute.xlu0 0
        %1744 = vperm.xlu0 %1743, %v866
        %v1745 = vpop.permute.xlu0 %1744
        %1748 = vset.pattern.permute.xlu0 0
        %1749 = vperm.xlu0 %1748, %v867
        %v1750 = vpop.permute.xlu0 %1749
        %1753 = vset.pattern.permute.xlu0 0
        %1754 = vperm.xlu0 %1753, %v868
        %v1755 = vpop.permute.xlu0 %1754
        %1758 = vset.pattern.permute.xlu0 0
        %1759 = vperm.xlu0 %1758, %v869
        %v1760 = vpop.permute.xlu0 %1759
        %1763 = vset.pattern.permute.xlu0 0
        %1764 = vperm.xlu0 %1763, %v870
        %v1765 = vpop.permute.xlu0 %1764
        %1768 = vset.pattern.permute.xlu0 0
        %1769 = vperm.xlu0 %1768, %v871
        %v1770 = vpop.permute.xlu0 %1769
        %1773 = vset.pattern.permute.xlu0 0
        %1774 = vperm.xlu0 %1773, %v872
        %v1775 = vpop.permute.xlu0 %1774
        %1778 = vset.pattern.permute.xlu0 0
        %1779 = vperm.xlu0 %1778, %v873
        %v1780 = vpop.permute.xlu0 %1779
        %1783 = vset.pattern.permute.xlu0 0
        %1784 = vperm.xlu0 %1783, %v874
        %v1785 = vpop.permute.xlu0 %1784
        %1788 = vset.pattern.permute.xlu0 0
        %1789 = vperm.xlu0 %1788, %v875
        %v1790 = vpop.permute.xlu0 %1789
        %1793 = vset.pattern.permute.xlu0 0
        %1794 = vperm.xlu0 %1793, %v876
        %v1795 = vpop.permute.xlu0 %1794
        %1798 = vset.pattern.permute.xlu0 0
        %1799 = vperm.xlu0 %1798, %v877
        %v1800 = vpop.permute.xlu0 %1799
        %1803 = vset.pattern.permute.xlu0 0
        %1804 = vperm.xlu0 %1803, %v878
        %v1805 = vpop.permute.xlu0 %1804
        %1808 = vset.pattern.permute.xlu0 0
        %1809 = vperm.xlu0 %1808, %v879
        %v1810 = vpop.permute.xlu0 %1809
        %1813 = vset.pattern.permute.xlu0 0
        %1814 = vperm.xlu0 %1813, %v880
        %v1815 = vpop.permute.xlu0 %1814
        %1818 = vset.pattern.permute.xlu0 0
        %1819 = vperm.xlu0 %1818, %v881
        %v1820 = vpop.permute.xlu0 %1819
        %1823 = vset.pattern.permute.xlu0 0
        %1824 = vperm.xlu0 %1823, %v882
        %v1825 = vpop.permute.xlu0 %1824
        %1828 = vset.pattern.permute.xlu0 0
        %1829 = vperm.xlu0 %1828, %v883
        %v1830 = vpop.permute.xlu0 %1829
        %1833 = vset.pattern.permute.xlu0 0
        %1834 = vperm.xlu0 %1833, %v884
        %v1835 = vpop.permute.xlu0 %1834
        %1838 = vset.pattern.permute.xlu0 0
        %1839 = vperm.xlu0 %1838, %v885
        %v1840 = vpop.permute.xlu0 %1839
        %1843 = vset.pattern.permute.xlu0 0
        %1844 = vperm.xlu0 %1843, %v886
        %v1845 = vpop.permute.xlu0 %1844
        %1848 = vset.pattern.permute.xlu0 0
        %1849 = vperm.xlu0 %1848, %v887
        %v1850 = vpop.permute.xlu0 %1849
        %1853 = vset.pattern.permute.xlu0 0
        %1854 = vperm.xlu0 %1853, %v888
        %v1855 = vpop.permute.xlu0 %1854
        %1858 = vset.pattern.permute.xlu0 0
        %1859 = vperm.xlu0 %1858, %v889
        %v1860 = vpop.permute.xlu0 %1859
        %1863 = vset.pattern.permute.xlu0 0
        %1864 = vperm.xlu0 %1863, %v890
        %v1865 = vpop.permute.xlu0 %1864
        %1868 = vset.pattern.permute.xlu0 0
        %1869 = vperm.xlu0 %1868, %v891
        %v1870 = vpop.permute.xlu0 %1869
        %1873 = vset.pattern.permute.xlu0 0
        %1874 = vperm.xlu0 %1873, %v892
        %v1875 = vpop.permute.xlu0 %1874
        %1878 = vset.pattern.permute.xlu0 0
        %1879 = vperm.xlu0 %1878, %v893
        %v1880 = vpop.permute.xlu0 %1879
        %1883 = vset.pattern.permute.xlu0 0
        %1884 = vperm.xlu0 %1883, %v894
        %v1885 = vpop.permute.xlu0 %1884
        %1888 = vset.pattern.permute.xlu0 0
        %1889 = vperm.xlu0 %1888, %v895
        %v1890 = vpop.permute.xlu0 %1889
        %1893 = vset.pattern.permute.xlu0 0
        %1894 = vperm.xlu0 %1893, %v896
        %v1895 = vpop.permute.xlu0 %1894
        %1898 = vset.pattern.permute.xlu0 0
        %1899 = vperm.xlu0 %1898, %v897
        %v1900 = vpop.permute.xlu0 %1899
        %1903 = vset.pattern.permute.xlu0 0
        %1904 = vperm.xlu0 %1903, %v898
        %v1905 = vpop.permute.xlu0 %1904
        %1908 = vset.pattern.permute.xlu0 0
        %1909 = vperm.xlu0 %1908, %v899
        %v1910 = vpop.permute.xlu0 %1909
        %1913 = vset.pattern.permute.xlu0 0
        %1914 = vperm.xlu0 %1913, %v900
        %v1915 = vpop.permute.xlu0 %1914
        %1918 = vset.pattern.permute.xlu0 0
        %1919 = vperm.xlu0 %1918, %v901
        %v1920 = vpop.permute.xlu0 %1919
        %1923 = vset.pattern.permute.xlu0 0
        %1924 = vperm.xlu0 %1923, %v902
        %v1925 = vpop.permute.xlu0 %1924
        %1928 = vset.pattern.permute.xlu0 0
        %1929 = vperm.xlu0 %1928, %v903
        %v1930 = vpop.permute.xlu0 %1929
        %1933 = vset.pattern.permute.xlu0 0
        %1934 = vperm.xlu0 %1933, %v904
        %v1935 = vpop.permute.xlu0 %1934
        %1938 = vset.pattern.permute.xlu0 0
        %1939 = vperm.xlu0 %1938, %v905
        %v1940 = vpop.permute.xlu0 %1939
        %1943 = vset.pattern.permute.xlu0 0
        %1944 = vperm.xlu0 %1943, %v906
        %v1945 = vpop.permute.xlu0 %1944
        %1948 = vset.pattern.permute.xlu0 0
        %1949 = vperm.xlu0 %1948, %v907
        %v1950 = vpop.permute.xlu0 %1949
        %1953 = vset.pattern.permute.xlu0 0
        %1954 = vperm.xlu0 %1953, %v908
        %v1955 = vpop.permute.xlu0 %1954
        %1958 = vset.pattern.permute.xlu0 0
        %1959 = vperm.xlu0 %1958, %v909
        %v1960 = vpop.permute.xlu0 %1959
        %1963 = vset.pattern.permute.xlu0 0
        %1964 = vperm.xlu0 %1963, %v910
        %v1965 = vpop.permute.xlu0 %1964
        %1968 = vset.pattern.permute.xlu0 0
        %1969 = vperm.xlu0 %1968, %v911
        %v1970 = vpop.permute.xlu0 %1969
        %1973 = vset.pattern.permute.xlu0 0
        %1974 = vperm.xlu0 %1973, %v912
        %v1975 = vpop.permute.xlu0 %1974
        %1978 = vset.pattern.permute.xlu0 0
        %1979 = vperm.xlu0 %1978, %v913
        %v1980 = vpop.permute.xlu0 %1979
        %1983 = vset.pattern.permute.xlu0 0
        %1984 = vperm.xlu0 %1983, %v914
        %v1985 = vpop.permute.xlu0 %1984
        %1988 = vset.pattern.permute.xlu0 0
        %1989 = vperm.xlu0 %1988, %v915
        %v1990 = vpop.permute.xlu0 %1989
        %1993 = vset.pattern.permute.xlu0 0
        %1994 = vperm.xlu0 %1993, %v916
        %v1995 = vpop.permute.xlu0 %1994
        %1998 = vset.pattern.permute.xlu0 0
        %1999 = vperm.xlu0 %1998, %v917
        %v2000 = vpop.permute.xlu0 %1999
        %2003 = vset.pattern.permute.xlu0 0
        %2004 = vperm.xlu0 %2003, %v918
        %v2005 = vpop.permute.xlu0 %2004
        %2008 = vset.pattern.permute.xlu0 0
        %2009 = vperm.xlu0 %2008, %v919
        %v2010 = vpop.permute.xlu0 %2009
        %2013 = vset.pattern.permute.xlu0 0
        %2014 = vperm.xlu0 %2013, %v920
        %v2015 = vpop.permute.xlu0 %2014
        %2018 = vset.pattern.permute.xlu0 0
        %2019 = vperm.xlu0 %2018, %v921
        %v2020 = vpop.permute.xlu0 %2019
        %2023 = vset.pattern.permute.xlu0 0
        %2024 = vperm.xlu0 %2023, %v922
        %v2025 = vpop.permute.xlu0 %2024
        %2028 = vset.pattern.permute.xlu0 0
        %2029 = vperm.xlu0 %2028, %v923
        %v2030 = vpop.permute.xlu0 %2029
        %2033 = vset.pattern.permute.xlu0 0
        %2034 = vperm.xlu0 %2033, %v924
        %v2035 = vpop.permute.xlu0 %2034
        %2038 = vset.pattern.permute.xlu0 0
        %2039 = vperm.xlu0 %2038, %v925
        %v2040 = vpop.permute.xlu0 %2039
        %2043 = vset.pattern.permute.xlu0 0
        %2044 = vperm.xlu0 %2043, %v926
        %v2045 = vpop.permute.xlu0 %2044
        %2048 = vset.pattern.permute.xlu0 0
        %2049 = vperm.xlu0 %2048, %v927
        %v2050 = vpop.permute.xlu0 %2049
        %2053 = vset.pattern.permute.xlu0 0
        %2054 = vperm.xlu0 %2053, %v928
        %v2055 = vpop.permute.xlu0 %2054
        %2058 = vset.pattern.permute.xlu0 0
        %2059 = vperm.xlu0 %2058, %v929
        %v2060 = vpop.permute.xlu0 %2059
        %2063 = vset.pattern.permute.xlu0 0
        %2064 = vperm.xlu0 %2063, %v930
        %v2065 = vpop.permute.xlu0 %2064
        %2068 = vset.pattern.permute.xlu0 0
        %2069 = vperm.xlu0 %2068, %v931
        %v2070 = vpop.permute.xlu0 %2069
        %2073 = vset.pattern.permute.xlu0 0
        %2074 = vperm.xlu0 %2073, %v932
        %v2075 = vpop.permute.xlu0 %2074
        %2078 = vset.pattern.permute.xlu0 0
        %2079 = vperm.xlu0 %2078, %v933
        %v2080 = vpop.permute.xlu0 %2079
        %2083 = vset.pattern.permute.xlu0 0
        %2084 = vperm.xlu0 %2083, %v934
        %v2085 = vpop.permute.xlu0 %2084
        %2088 = vset.pattern.permute.xlu0 0
        %2089 = vperm.xlu0 %2088, %v935
        %v2090 = vpop.permute.xlu0 %2089
        %2093 = vset.pattern.permute.xlu0 0
        %2094 = vperm.xlu0 %2093, %v936
        %v2095 = vpop.permute.xlu0 %2094
        %2098 = vset.pattern.permute.xlu0 0
        %2099 = vperm.xlu0 %2098, %v937
        %v2100 = vpop.permute.xlu0 %2099
        %2103 = vset.pattern.permute.xlu0 0
        %2104 = vperm.xlu0 %2103, %v938
        %v2105 = vpop.permute.xlu0 %2104
        %2108 = vset.pattern.permute.xlu0 0
        %2109 = vperm.xlu0 %2108, %v939
        %v2110 = vpop.permute.xlu0 %2109
        %2113 = vset.pattern.permute.xlu0 0
        %2114 = vperm.xlu0 %2113, %v940
        %v2115 = vpop.permute.xlu0 %2114
        %2118 = vset.pattern.permute.xlu0 0
        %2119 = vperm.xlu0 %2118, %v941
        %v2120 = vpop.permute.xlu0 %2119
        %2123 = vset.pattern.permute.xlu0 0
        %2124 = vperm.xlu0 %2123, %v942
        %v2125 = vpop.permute.xlu0 %2124
        %2128 = vset.pattern.permute.xlu0 0
        %2129 = vperm.xlu0 %2128, %v943
        %v2130 = vpop.permute.xlu0 %2129
        %2133 = vset.pattern.permute.xlu0 0
        %2134 = vperm.xlu0 %2133, %v944
        %v2135 = vpop.permute.xlu0 %2134
        %2138 = vset.pattern.permute.xlu0 0
        %2139 = vperm.xlu0 %2138, %v945
        %v2140 = vpop.permute.xlu0 %2139
        %2143 = vset.pattern.permute.xlu0 0
        %2144 = vperm.xlu0 %2143, %v946
        %v2145 = vpop.permute.xlu0 %2144
        %2148 = vset.pattern.permute.xlu0 0
        %2149 = vperm.xlu0 %2148, %v947
        %v2150 = vpop.permute.xlu0 %2149
        %2153 = vset.pattern.permute.xlu0 0
        %2154 = vperm.xlu0 %2153, %v948
        %v2155 = vpop.permute.xlu0 %2154
        %2158 = vset.pattern.permute.xlu0 0
        %2159 = vperm.xlu0 %2158, %v949
        %v2160 = vpop.permute.xlu0 %2159
        %2163 = vset.pattern.permute.xlu0 0
        %2164 = vperm.xlu0 %2163, %v950
        %v2165 = vpop.permute.xlu0 %2164
        %2168 = vset.pattern.permute.xlu0 0
        %2169 = vperm.xlu0 %2168, %v951
        %v2170 = vpop.permute.xlu0 %2169
        %2173 = vset.pattern.permute.xlu0 0
        %2174 = vperm.xlu0 %2173, %v952
        %v2175 = vpop.permute.xlu0 %2174
        %2178 = vset.pattern.permute.xlu0 0
        %2179 = vperm.xlu0 %2178, %v953
        %v2180 = vpop.permute.xlu0 %2179
        %2183 = vset.pattern.permute.xlu0 0
        %2184 = vperm.xlu0 %2183, %v954
        %v2185 = vpop.permute.xlu0 %2184
        %2188 = vset.pattern.permute.xlu0 0
        %2189 = vperm.xlu0 %2188, %v955
        %v2190 = vpop.permute.xlu0 %2189
        %2193 = vset.pattern.permute.xlu0 0
        %2194 = vperm.xlu0 %2193, %v956
        %v2195 = vpop.permute.xlu0 %2194
        %2198 = vset.pattern.permute.xlu0 0
        %2199 = vperm.xlu0 %2198, %v957
        %v2200 = vpop.permute.xlu0 %2199
        %2203 = vset.pattern.permute.xlu0 0
        %2204 = vperm.xlu0 %2203, %v958
        %v2205 = vpop.permute.xlu0 %2204
        %2208 = vset.pattern.permute.xlu0 0
        %2209 = vperm.xlu0 %2208, %v959
        %v2210 = vpop.permute.xlu0 %2209
        %2213 = vset.pattern.permute.xlu0 0
        %2214 = vperm.xlu0 %2213, %v960
        %v2215 = vpop.permute.xlu0 %2214
        %2218 = vset.pattern.permute.xlu0 0
        %2219 = vperm.xlu0 %2218, %v961
        %v2220 = vpop.permute.xlu0 %2219
        %2223 = vset.pattern.permute.xlu0 0
        %2224 = vperm.xlu0 %2223, %v962
        %v2225 = vpop.permute.xlu0 %2224
        %2228 = vset.pattern.permute.xlu0 0
        %2229 = vperm.xlu0 %2228, %v963
        %v2230 = vpop.permute.xlu0 %2229
        %2233 = vset.pattern.permute.xlu0 0
        %2234 = vperm.xlu0 %2233, %v964
        %v2235 = vpop.permute.xlu0 %2234
        %2238 = vset.pattern.permute.xlu0 0
        %2239 = vperm.xlu0 %2238, %v965
        %v2240 = vpop.permute.xlu0 %2239
        %2243 = vset.pattern.permute.xlu0 0
        %2244 = vperm.xlu0 %2243, %v966
        %v2245 = vpop.permute.xlu0 %2244
        %2247 = vmatprep.subr.mxu0 %v392
        %2248 = vmatpush1.msra.mxu0 %v391
        %2249 = vmatprep.subr.mxu0 %v396
        %2250 = vmatpush1.msra.mxu0 %v395
        %2251 = vmatprep.subr.mxu0 %v400
        %2252 = vmatpush1.msra.mxu0 %v399
        %2253 = vmatprep.subr.mxu0 %v404
        %2254 = vmatpush1.msra.mxu0 %v403
        %2255 = vmatprep.subr.mxu0 %v408
        %2256 = vmatpush1.msra.mxu0 %v407
        %2257 = vmatprep.subr.mxu0 %v412
        %2258 = vmatpush1.msra.mxu0 %v411
        %2259 = vmatprep.subr.mxu0 %v416
        %2260 = vmatpush1.msra.mxu0 %v415
        %2261 = vmatprep.subr.mxu0 %v420
        %2262 = vmatpush1.msra.mxu0 %v419
        %2263 = vmatprep.subr.mxu0 %v424
        %2264 = vmatpush1.msra.mxu0 %v423
        %2265 = vmatprep.subr.mxu0 %v428
        %2266 = vmatpush1.msra.mxu0 %v427
        %2267 = vmatprep.subr.mxu0 %v432
        %2268 = vmatpush1.msra.mxu0 %v431
        %2269 = vmatprep.subr.mxu0 %v436
        %2270 = vmatpush1.msra.mxu0 %v435
        %2271 = vmatprep.subr.mxu0 %v440
        %2272 = vmatpush1.msra.mxu0 %v439
        %2273 = vmatprep.subr.mxu0 %v444
        %2274 = vmatpush1.msra.mxu0 %v443
        %2275 = vmatprep.subr.mxu0 %v448
        %2276 = vmatpush1.msra.mxu0 %v447
        %2277 = vmatprep.subr.mxu0 %v452
        %2278 = vmatpush1.msra.mxu0 %v451
        %2279 = vmatprep.subr.mxu0 0.0
        %2280 = vmatpush1.msra.mxu0 0.0
        %2281 = vmatprep.subr.mxu0 0.0
        %2282 = vmatpush1.msra.mxu0 0.0
        %2283 = vmatprep.subr.mxu0 0.0
        %2284 = vmatpush1.msra.mxu0 0.0
        %2285 = vmatprep.subr.mxu0 0.0
        %2286 = vmatpush1.msra.mxu0 0.0
        %2287 = vmatprep.subr.mxu0 0.0
        %2288 = vmatpush1.msra.mxu0 0.0
        %2289 = vmatprep.subr.mxu0 0.0
        %2290 = vmatpush1.msra.mxu0 0.0
        %2291 = vmatprep.subr.mxu0 0.0
        %2292 = vmatpush1.msra.mxu0 0.0
        %2293 = vmatprep.subr.mxu0 0.0
        %2294 = vmatpush1.msra.mxu0 0.0
        %2295 = vmatprep.subr.mxu0 0.0
        %2296 = vmatpush1.msra.mxu0 0.0
        %2297 = vmatprep.subr.mxu0 0.0
        %2298 = vmatpush1.msra.mxu0 0.0
        %2299 = vmatprep.subr.mxu0 0.0
        %2300 = vmatpush1.msra.mxu0 0.0
        %2301 = vmatprep.subr.mxu0 0.0
        %2302 = vmatpush1.msra.mxu0 0.0
        %2303 = vmatprep.subr.mxu0 0.0
        %2304 = vmatpush1.msra.mxu0 0.0
        %2305 = vmatprep.subr.mxu0 0.0
        %2306 = vmatpush1.msra.mxu0 0.0
        %2307 = vmatprep.subr.mxu0 0.0
        %2308 = vmatpush1.msra.mxu0 0.0
        %2309 = vmatprep.subr.mxu0 0.0
        %2310 = vmatpush1.msra.mxu0 0.0
        %2311 = vmatprep.mubr.f32.mxu0 0.0
        %2312 = vmatmul.mubr.f32.gmra.mrb[0].mxu0 %v455
        %v2313 = vpop.f32.mrb[0].mxu0
        %v2314 = vadd.f32 %v970, %v2313
        %v2315 = vpop.f32.mrb[0].mxu0
        %v2316 = vadd.f32 %v970, %v2315
        %2317 = vmatprep.mubr.f32.mxu0 0.0
        %2318 = vmatmul.mubr.f32.gmra.mrb[0].mxu0 %v456
        %v2319 = vpop.f32.mrb[0].mxu0
        %v2320 = vadd.f32 %v975, %v2319
        %v2321 = vpop.f32.mrb[0].mxu0
        %v2322 = vadd.f32 %v975, %v2321
        %2323 = vmatprep.mubr.f32.mxu0 0.0
        %2324 = vmatmul.mubr.f32.gmra.mrb[0].mxu0 %v457
        %v2325 = vpop.f32.mrb[0].mxu0
        %v2326 = vadd.f32 %v980, %v2325
        %v2327 = vpop.f32.mrb[0].mxu0
        %v2328 = vadd.f32 %v980, %v2327
        %2329 = vmatprep.mubr.f32.mxu0 0.0
        %2330 = vmatmul.mubr.f32.gmra.mrb[0].mxu0 %v458
        %v2331 = vpop.f32.mrb[0].mxu0
        %v2332 = vadd.f32 %v985, %v2331
        %v2333 = vpop.f32.mrb[0].mxu0
        %v2334 = vadd.f32 %v985, %v2333
        %2335 = vmatprep.mubr.f32.mxu0 0.0
        %2336 = vmatmul.mubr.f32.gmra.mrb[0].mxu0 %v459
        %v2337 = vpop.f32.mrb[0].mxu0
        %v2338 = vadd.f32 %v990, %v2337
        %v2339 = vpop.f32.mrb[0].mxu0
        %v2340 = vadd.f32 %v990, %v2339
        %2341 = vmatprep.mubr.f32.mxu0 0.0
        %2342 = vmatmul.mubr.f32.gmra.mrb[0].mxu0 %v460
        %v2343 = vpop.f32.mrb[0].mxu0
        %v2344 = vadd.f32 %v995, %v2343
        %v2345 = vpop.f32.mrb[0].mxu0
        %v2346 = vadd.f32 %v995, %v2345
        %2347 = vmatprep.mubr.f32.mxu0 0.0
        %2348 = vmatmul.mubr.f32.gmra.mrb[0].mxu0 %v461
        %v2349 = vpop.f32.mrb[0].mxu0
        %v2350 = vadd.f32 %v1000, %v2349
        %v2351 = vpop.f32.mrb[0].mxu0
        %v2352 = vadd.f32 %v1000, %v2351
        %2353 = vmatprep.mubr.f32.mxu0 0.0
        %2354 = vmatmul.mubr.f32.gmra.mrb[0].mxu0 %v462
        %v2355 = vpop.f32.mrb[0].mxu0
        %v2356 = vadd.f32 %v1005, %v2355
        %v2357 = vpop.f32.mrb[0].mxu0
        %v2358 = vadd.f32 %v1005, %v2357
        %2359 = vmatprep.mubr.f32.mxu0 0.0
        %2360 = vmatmul.mubr.f32.gmra.mrb[0].mxu0 %v463
        %v2361 = vpop.f32.mrb[0].mxu0
        %v2362 = vadd.f32 %v1010, %v2361
        %v2363 = vpop.f32.mrb[0].mxu0
        %v2364 = vadd.f32 %v1010, %v2363
        %2365 = vmatprep.mubr.f32.mxu0 0.0
        %2366 = vmatmul.mubr.f32.gmra.mrb[0].mxu0 %v464
        %v2367 = vpop.f32.mrb[0].mxu0
        %v2368 = vadd.f32 %v1015, %v2367
        %v2369 = vpop.f32.mrb[0].mxu0
        %v2370 = vadd.f32 %v1015, %v2369
        %2371 = vmatprep.mubr.f32.mxu0 0.0
        %2372 = vmatmul.mubr.f32.gmra.mrb[0].mxu0 %v465
        %v2373 = vpop.f32.mrb[0].mxu0
        %v2374 = vadd.f32 %v1020, %v2373
        %v2375 = vpop.f32.mrb[0].mxu0
        %v2376 = vadd.f32 %v1020, %v2375
        %2377 = vmatprep.mubr.f32.mxu0 0.0
        %2378 = vmatmul.mubr.f32.gmra.mrb[0].mxu0 %v466
        %v2379 = vpop.f32.mrb[0].mxu0
        %v2380 = vadd.f32 %v1025, %v2379
        %v2381 = vpop.f32.mrb[0].mxu0
        %v2382 = vadd.f32 %v1025, %v2381
        %2383 = vmatprep.mubr.f32.mxu0 0.0
        %2384 = vmatmul.mubr.f32.gmra.mrb[0].mxu0 %v467
        %v2385 = vpop.f32.mrb[0].mxu0
        %v2386 = vadd.f32 %v1030, %v2385
        %v2387 = vpop.f32.mrb[0].mxu0
        %v2388 = vadd.f32 %v1030, %v2387
        %2389 = vmatprep.mubr.f32.mxu0 0.0
        %2390 = vmatmul.mubr.f32.gmra.mrb[0].mxu0 %v468
        %v2391 = vpop.f32.mrb[0].mxu0
        %v2392 = vadd.f32 %v1035, %v2391
        %v2393 = vpop.f32.mrb[0].mxu0
        %v2394 = vadd.f32 %v1035, %v2393
        %2395 = vmatprep.mubr.f32.mxu0 0.0
        %2396 = vmatmul.mubr.f32.gmra.mrb[0].mxu0 %v469
        %v2397 = vpop.f32.mrb[0].mxu0
        %v2398 = vadd.f32 %v1040, %v2397
        %v2399 = vpop.f32.mrb[0].mxu0
        %v2400 = vadd.f32 %v1040, %v2399
        %2401 = vmatprep.mubr.f32.mxu0 0.0
        %2402 = vmatmul.mubr.f32.gmra.mrb[0].mxu0 %v470
        %v2403 = vpop.f32.mrb[0].mxu0
        %v2404 = vadd.f32 %v1045, %v2403
        %v2405 = vpop.f32.mrb[0].mxu0
        %v2406 = vadd.f32 %v1045, %v2405
        %2407 = vmatprep.mubr.f32.mxu0 0.0
        %2408 = vmatmul.mubr.f32.gmra.mrb[0].mxu0 %v471
        %v2409 = vpop.f32.mrb[0].mxu0
        %v2410 = vadd.f32 %v1050, %v2409
        %v2411 = vpop.f32.mrb[0].mxu0
        %v2412 = vadd.f32 %v1050, %v2411
        %2413 = vmatprep.mubr.f32.mxu0 0.0
        %2414 = vmatmul.mubr.f32.gmra.mrb[0].mxu0 %v472
        %v2415 = vpop.f32.mrb[0].mxu0
        %v2416 = vadd.f32 %v1055, %v2415
        %v2417 = vpop.f32.mrb[0].mxu0
        %v2418 = vadd.f32 %v1055, %v2417
        %2419 = vmatprep.mubr.f32.mxu0 0.0
        %2420 = vmatmul.mubr.f32.gmra.mrb[0].mxu0 %v473
        %v2421 = vpop.f32.mrb[0].mxu0
        %v2422 = vadd.f32 %v1060, %v2421
        %v2423 = vpop.f32.mrb[0].mxu0
        %v2424 = vadd.f32 %v1060, %v2423
        %2425 = vmatprep.mubr.f32.mxu0 0.0
        %2426 = vmatmul.mubr.f32.gmra.mrb[0].mxu0 %v474
        %v2427 = vpop.f32.mrb[0].mxu0
        %v2428 = vadd.f32 %v1065, %v2427
        %v2429 = vpop.f32.mrb[0].mxu0
        %v2430 = vadd.f32 %v1065, %v2429
        %2431 = vmatprep.mubr.f32.mxu0 0.0
        %2432 = vmatmul.mubr.f32.gmra.mrb[0].mxu0 %v475
        %v2433 = vpop.f32.mrb[0].mxu0
        %v2434 = vadd.f32 %v1070, %v2433
        %v2435 = vpop.f32.mrb[0].mxu0
        %v2436 = vadd.f32 %v1070, %v2435
        %2437 = vmatprep.mubr.f32.mxu0 0.0
        %2438 = vmatmul.mubr.f32.gmra.mrb[0].mxu0 %v476
        %v2439 = vpop.f32.mrb[0].mxu0
        %v2440 = vadd.f32 %v1075, %v2439
        %v2441 = vpop.f32.mrb[0].mxu0
        %v2442 = vadd.f32 %v1075, %v2441
        %2443 = vmatprep.mubr.f32.mxu0 0.0
        %2444 = vmatmul.mubr.f32.gmra.mrb[0].mxu0 %v477
        %v2445 = vpop.f32.mrb[0].mxu0
        %v2446 = vadd.f32 %v1080, %v2445
        %v2447 = vpop.f32.mrb[0].mxu0
        %v2448 = vadd.f32 %v1080, %v2447
        %2449 = vmatprep.mubr.f32.mxu0 0.0
        %2450 = vmatmul.mubr.f32.gmra.mrb[0].mxu0 %v478
        %v2451 = vpop.f32.mrb[0].mxu0
        %v2452 = vadd.f32 %v1085, %v2451
        %v2453 = vpop.f32.mrb[0].mxu0
        %v2454 = vadd.f32 %v1085, %v2453
        %2455 = vmatprep.mubr.f32.mxu0 0.0
        %2456 = vmatmul.mubr.f32.gmra.mrb[0].mxu0 %v479
        %v2457 = vpop.f32.mrb[0].mxu0
        %v2458 = vadd.f32 %v1090, %v2457
        %v2459 = vpop.f32.mrb[0].mxu0
        %v2460 = vadd.f32 %v1090, %v2459
        %2461 = vmatprep.mubr.f32.mxu0 0.0
        %2462 = vmatmul.mubr.f32.gmra.mrb[0].mxu0 %v480
        %v2463 = vpop.f32.mrb[0].mxu0
        %v2464 = vadd.f32 %v1095, %v2463
        %v2465 = vpop.f32.mrb[0].mxu0
        %v2466 = vadd.f32 %v1095, %v2465
        %2467 = vmatprep.mubr.f32.mxu0 0.0
        %2468 = vmatmul.mubr.f32.gmra.mrb[0].mxu0 %v481
        %v2469 = vpop.f32.mrb[0].mxu0
        %v2470 = vadd.f32 %v1100, %v2469
        %v2471 = vpop.f32.mrb[0].mxu0
        %v2472 = vadd.f32 %v1100, %v2471
        %2473 = vmatprep.mubr.f32.mxu0 0.0
        %2474 = vmatmul.mubr.f32.gmra.mrb[0].mxu0 %v482
        %v2475 = vpop.f32.mrb[0].mxu0
        %v2476 = vadd.f32 %v1105, %v2475
        %v2477 = vpop.f32.mrb[0].mxu0
        %v2478 = vadd.f32 %v1105, %v2477
        %2479 = vmatprep.mubr.f32.mxu0 0.0
        %2480 = vmatmul.mubr.f32.gmra.mrb[0].mxu0 %v483
        %v2481 = vpop.f32.mrb[0].mxu0
        %v2482 = vadd.f32 %v1110, %v2481
        %v2483 = vpop.f32.mrb[0].mxu0
        %v2484 = vadd.f32 %v1110, %v2483
        %2485 = vmatprep.mubr.f32.mxu0 0.0
        %2486 = vmatmul.mubr.f32.gmra.mrb[0].mxu0 %v484
        %v2487 = vpop.f32.mrb[0].mxu0
        %v2488 = vadd.f32 %v1115, %v2487
        %v2489 = vpop.f32.mrb[0].mxu0
        %v2490 = vadd.f32 %v1115, %v2489
        %2491 = vmatprep.mubr.f32.mxu0 0.0
        %2492 = vmatmul.mubr.f32.gmra.mrb[0].mxu0 %v485
        %v2493 = vpop.f32.mrb[0].mxu0
        %v2494 = vadd.f32 %v1120, %v2493
        %v2495 = vpop.f32.mrb[0].mxu0
        %v2496 = vadd.f32 %v1120, %v2495
        %2497 = vmatprep.mubr.f32.mxu0 0.0
        %2498 = vmatmul.mubr.f32.gmra.mrb[0].mxu0 %v486
        %v2499 = vpop.f32.mrb[0].mxu0
        %v2500 = vadd.f32 %v1125, %v2499
        %v2501 = vpop.f32.mrb[0].mxu0
        %v2502 = vadd.f32 %v1125, %v2501
        %2503 = vmatprep.mubr.f32.mxu0 0.0
        %2504 = vmatmul.mubr.f32.gmra.mrb[0].mxu0 %v487
        %v2505 = vpop.f32.mrb[0].mxu0
        %v2506 = vadd.f32 %v1130, %v2505
        %v2507 = vpop.f32.mrb[0].mxu0
        %v2508 = vadd.f32 %v1130, %v2507
        %2509 = vmatprep.mubr.f32.mxu0 0.0
        %2510 = vmatmul.mubr.f32.gmra.mrb[0].mxu0 %v488
        %v2511 = vpop.f32.mrb[0].mxu0
        %v2512 = vadd.f32 %v1135, %v2511
        %v2513 = vpop.f32.mrb[0].mxu0
        %v2514 = vadd.f32 %v1135, %v2513
        %2515 = vmatprep.mubr.f32.mxu0 0.0
        %2516 = vmatmul.mubr.f32.gmra.mrb[0].mxu0 %v489
        %v2517 = vpop.f32.mrb[0].mxu0
        %v2518 = vadd.f32 %v1140, %v2517
        %v2519 = vpop.f32.mrb[0].mxu0
        %v2520 = vadd.f32 %v1140, %v2519
        %2521 = vmatprep.mubr.f32.mxu0 0.0
        %2522 = vmatmul.mubr.f32.gmra.mrb[0].mxu0 %v490
        %v2523 = vpop.f32.mrb[0].mxu0
        %v2524 = vadd.f32 %v1145, %v2523
        %v2525 = vpop.f32.mrb[0].mxu0
        %v2526 = vadd.f32 %v1145, %v2525
        %2527 = vmatprep.mubr.f32.mxu0 0.0
        %2528 = vmatmul.mubr.f32.gmra.mrb[0].mxu0 %v491
        %v2529 = vpop.f32.mrb[0].mxu0
        %v2530 = vadd.f32 %v1150, %v2529
        %v2531 = vpop.f32.mrb[0].mxu0
        %v2532 = vadd.f32 %v1150, %v2531
        %2533 = vmatprep.mubr.f32.mxu0 0.0
        %2534 = vmatmul.mubr.f32.gmra.mrb[0].mxu0 %v492
        %v2535 = vpop.f32.mrb[0].mxu0
        %v2536 = vadd.f32 %v1155, %v2535
        %v2537 = vpop.f32.mrb[0].mxu0
        %v2538 = vadd.f32 %v1155, %v2537
        %2539 = vmatprep.mubr.f32.mxu0 0.0
        %2540 = vmatmul.mubr.f32.gmra.mrb[0].mxu0 %v493
        %v2541 = vpop.f32.mrb[0].mxu0
        %v2542 = vadd.f32 %v1160, %v2541
        %v2543 = vpop.f32.mrb[0].mxu0
        %v2544 = vadd.f32 %v1160, %v2543
        %2545 = vmatprep.mubr.f32.mxu0 0.0
        %2546 = vmatmul.mubr.f32.gmra.mrb[0].mxu0 %v494
        %v2547 = vpop.f32.mrb[0].mxu0
        %v2548 = vadd.f32 %v1165, %v2547
        %v2549 = vpop.f32.mrb[0].mxu0
        %v2550 = vadd.f32 %v1165, %v2549
        %2551 = vmatprep.mubr.f32.mxu0 0.0
        %2552 = vmatmul.mubr.f32.gmra.mrb[0].mxu0 %v495
        %v2553 = vpop.f32.mrb[0].mxu0
        %v2554 = vadd.f32 %v1170, %v2553
        %v2555 = vpop.f32.mrb[0].mxu0
        %v2556 = vadd.f32 %v1170, %v2555
        %2557 = vmatprep.mubr.f32.mxu0 0.0
        %2558 = vmatmul.mubr.f32.gmra.mrb[0].mxu0 %v496
        %v2559 = vpop.f32.mrb[0].mxu0
        %v2560 = vadd.f32 %v1175, %v2559
        %v2561 = vpop.f32.mrb[0].mxu0
        %v2562 = vadd.f32 %v1175, %v2561
        %2563 = vmatprep.mubr.f32.mxu0 0.0
        %2564 = vmatmul.mubr.f32.gmra.mrb[0].mxu0 %v497
        %v2565 = vpop.f32.mrb[0].mxu0
        %v2566 = vadd.f32 %v1180, %v2565
        %v2567 = vpop.f32.mrb[0].mxu0
        %v2568 = vadd.f32 %v1180, %v2567
        %2569 = vmatprep.mubr.f32.mxu0 0.0
        %2570 = vmatmul.mubr.f32.gmra.mrb[0].mxu0 %v498
        %v2571 = vpop.f32.mrb[0].mxu0
        %v2572 = vadd.f32 %v1185, %v2571
        %v2573 = vpop.f32.mrb[0].mxu0
        %v2574 = vadd.f32 %v1185, %v2573
        %2575 = vmatprep.mubr.f32.mxu0 0.0
        %2576 = vmatmul.mubr.f32.gmra.mrb[0].mxu0 %v499
        %v2577 = vpop.f32.mrb[0].mxu0
        %v2578 = vadd.f32 %v1190, %v2577
        %v2579 = vpop.f32.mrb[0].mxu0
        %v2580 = vadd.f32 %v1190, %v2579
        %2581 = vmatprep.mubr.f32.mxu0 0.0
        %2582 = vmatmul.mubr.f32.gmra.mrb[0].mxu0 %v500
        %v2583 = vpop.f32.mrb[0].mxu0
        %v2584 = vadd.f32 %v1195, %v2583
        %v2585 = vpop.f32.mrb[0].mxu0
        %v2586 = vadd.f32 %v1195, %v2585
        %2587 = vmatprep.mubr.f32.mxu0 0.0
        %2588 = vmatmul.mubr.f32.gmra.mrb[0].mxu0 %v501
        %v2589 = vpop.f32.mrb[0].mxu0
        %v2590 = vadd.f32 %v1200, %v2589
        %v2591 = vpop.f32.mrb[0].mxu0
        %v2592 = vadd.f32 %v1200, %v2591
        %2593 = vmatprep.mubr.f32.mxu0 0.0
        %2594 = vmatmul.mubr.f32.gmra.mrb[0].mxu0 %v502
        %v2595 = vpop.f32.mrb[0].mxu0
        %v2596 = vadd.f32 %v1205, %v2595
        %v2597 = vpop.f32.mrb[0].mxu0
        %v2598 = vadd.f32 %v1205, %v2597
        %2599 = vmatprep.mubr.f32.mxu0 0.0
        %2600 = vmatmul.mubr.f32.gmra.mrb[0].mxu0 %v503
        %v2601 = vpop.f32.mrb[0].mxu0
        %v2602 = vadd.f32 %v1210, %v2601
        %v2603 = vpop.f32.mrb[0].mxu0
        %v2604 = vadd.f32 %v1210, %v2603
        %2605 = vmatprep.mubr.f32.mxu0 0.0
        %2606 = vmatmul.mubr.f32.gmra.mrb[0].mxu0 %v504
        %v2607 = vpop.f32.mrb[0].mxu0
        %v2608 = vadd.f32 %v1215, %v2607
        %v2609 = vpop.f32.mrb[0].mxu0
        %v2610 = vadd.f32 %v1215, %v2609
        %2611 = vmatprep.mubr.f32.mxu0 0.0
        %2612 = vmatmul.mubr.f32.gmra.mrb[0].mxu0 %v505
        %v2613 = vpop.f32.mrb[0].mxu0
        %v2614 = vadd.f32 %v1220, %v2613
        %v2615 = vpop.f32.mrb[0].mxu0
        %v2616 = vadd.f32 %v1220, %v2615
        %2617 = vmatprep.mubr.f32.mxu0 0.0
        %2618 = vmatmul.mubr.f32.gmra.mrb[0].mxu0 %v506
        %v2619 = vpop.f32.mrb[0].mxu0
        %v2620 = vadd.f32 %v1225, %v2619
        %v2621 = vpop.f32.mrb[0].mxu0
        %v2622 = vadd.f32 %v1225, %v2621
        %2623 = vmatprep.mubr.f32.mxu0 0.0
        %2624 = vmatmul.mubr.f32.gmra.mrb[0].mxu0 %v507
        %v2625 = vpop.f32.mrb[0].mxu0
        %v2626 = vadd.f32 %v1230, %v2625
        %v2627 = vpop.f32.mrb[0].mxu0
        %v2628 = vadd.f32 %v1230, %v2627
        %2629 = vmatprep.mubr.f32.mxu0 0.0
        %2630 = vmatmul.mubr.f32.gmra.mrb[0].mxu0 %v508
        %v2631 = vpop.f32.mrb[0].mxu0
        %v2632 = vadd.f32 %v1235, %v2631
        %v2633 = vpop.f32.mrb[0].mxu0
        %v2634 = vadd.f32 %v1235, %v2633
        %2635 = vmatprep.mubr.f32.mxu0 0.0
        %2636 = vmatmul.mubr.f32.gmra.mrb[0].mxu0 %v509
        %v2637 = vpop.f32.mrb[0].mxu0
        %v2638 = vadd.f32 %v1240, %v2637
        %v2639 = vpop.f32.mrb[0].mxu0
        %v2640 = vadd.f32 %v1240, %v2639
        %2641 = vmatprep.mubr.f32.mxu0 0.0
        %2642 = vmatmul.mubr.f32.gmra.mrb[0].mxu0 %v510
        %v2643 = vpop.f32.mrb[0].mxu0
        %v2644 = vadd.f32 %v1245, %v2643
        %v2645 = vpop.f32.mrb[0].mxu0
        %v2646 = vadd.f32 %v1245, %v2645
        %2647 = vmatprep.mubr.f32.mxu0 0.0
        %2648 = vmatmul.mubr.f32.gmra.mrb[0].mxu0 %v511
        %v2649 = vpop.f32.mrb[0].mxu0
        %v2650 = vadd.f32 %v1250, %v2649
        %v2651 = vpop.f32.mrb[0].mxu0
        %v2652 = vadd.f32 %v1250, %v2651
        %2653 = vmatprep.mubr.f32.mxu0 0.0
        %2654 = vmatmul.mubr.f32.gmra.mrb[0].mxu0 %v512
        %v2655 = vpop.f32.mrb[0].mxu0
        %v2656 = vadd.f32 %v1255, %v2655
        %v2657 = vpop.f32.mrb[0].mxu0
        %v2658 = vadd.f32 %v1255, %v2657
        %2659 = vmatprep.mubr.f32.mxu0 0.0
        %2660 = vmatmul.mubr.f32.gmra.mrb[0].mxu0 %v513
        %v2661 = vpop.f32.mrb[0].mxu0
        %v2662 = vadd.f32 %v1260, %v2661
        %v2663 = vpop.f32.mrb[0].mxu0
        %v2664 = vadd.f32 %v1260, %v2663
        %2665 = vmatprep.mubr.f32.mxu0 0.0
        %2666 = vmatmul.mubr.f32.gmra.mrb[0].mxu0 %v514
        %v2667 = vpop.f32.mrb[0].mxu0
        %v2668 = vadd.f32 %v1265, %v2667
        %v2669 = vpop.f32.mrb[0].mxu0
        %v2670 = vadd.f32 %v1265, %v2669
        %2671 = vmatprep.mubr.f32.mxu0 0.0
        %2672 = vmatmul.mubr.f32.gmra.mrb[0].mxu0 %v515
        %v2673 = vpop.f32.mrb[0].mxu0
        %v2674 = vadd.f32 %v1270, %v2673
        %v2675 = vpop.f32.mrb[0].mxu0
        %v2676 = vadd.f32 %v1270, %v2675
        %2677 = vmatprep.mubr.f32.mxu0 0.0
        %2678 = vmatmul.mubr.f32.gmra.mrb[0].mxu0 %v516
        %v2679 = vpop.f32.mrb[0].mxu0
        %v2680 = vadd.f32 %v1275, %v2679
        %v2681 = vpop.f32.mrb[0].mxu0
        %v2682 = vadd.f32 %v1275, %v2681
        %2683 = vmatprep.mubr.f32.mxu0 0.0
        %2684 = vmatmul.mubr.f32.gmra.mrb[0].mxu0 %v517
        %v2685 = vpop.f32.mrb[0].mxu0
        %v2686 = vadd.f32 %v1280, %v2685
        %v2687 = vpop.f32.mrb[0].mxu0
        %v2688 = vadd.f32 %v1280, %v2687
        %2689 = vmatprep.mubr.f32.mxu0 0.0
        %2690 = vmatmul.mubr.f32.gmra.mrb[0].mxu0 %v518
        %v2691 = vpop.f32.mrb[0].mxu0
        %v2692 = vadd.f32 %v1285, %v2691
        %v2693 = vpop.f32.mrb[0].mxu0
        %v2694 = vadd.f32 %v1285, %v2693
        %2695 = vmatprep.mubr.f32.mxu0 0.0
        %2696 = vmatmul.mubr.f32.gmra.mrb[0].mxu0 %v519
        %v2697 = vpop.f32.mrb[0].mxu0
        %v2698 = vadd.f32 %v1290, %v2697
        %v2699 = vpop.f32.mrb[0].mxu0
        %v2700 = vadd.f32 %v1290, %v2699
        %2701 = vmatprep.mubr.f32.mxu0 0.0
        %2702 = vmatmul.mubr.f32.gmra.mrb[0].mxu0 %v520
        %v2703 = vpop.f32.mrb[0].mxu0
        %v2704 = vadd.f32 %v1295, %v2703
        %v2705 = vpop.f32.mrb[0].mxu0
        %v2706 = vadd.f32 %v1295, %v2705
        %2707 = vmatprep.mubr.f32.mxu0 0.0
        %2708 = vmatmul.mubr.f32.gmra.mrb[0].mxu0 %v521
        %v2709 = vpop.f32.mrb[0].mxu0
        %v2710 = vadd.f32 %v1300, %v2709
        %v2711 = vpop.f32.mrb[0].mxu0
        %v2712 = vadd.f32 %v1300, %v2711
        %2713 = vmatprep.mubr.f32.mxu0 0.0
        %2714 = vmatmul.mubr.f32.gmra.mrb[0].mxu0 %v522
        %v2715 = vpop.f32.mrb[0].mxu0
        %v2716 = vadd.f32 %v1305, %v2715
        %v2717 = vpop.f32.mrb[0].mxu0
        %v2718 = vadd.f32 %v1305, %v2717
        %2719 = vmatprep.mubr.f32.mxu0 0.0
        %2720 = vmatmul.mubr.f32.gmra.mrb[0].mxu0 %v523
        %v2721 = vpop.f32.mrb[0].mxu0
        %v2722 = vadd.f32 %v1310, %v2721
        %v2723 = vpop.f32.mrb[0].mxu0
        %v2724 = vadd.f32 %v1310, %v2723
        %2725 = vmatprep.mubr.f32.mxu0 0.0
        %2726 = vmatmul.mubr.f32.gmra.mrb[0].mxu0 %v524
        %v2727 = vpop.f32.mrb[0].mxu0
        %v2728 = vadd.f32 %v1315, %v2727
        %v2729 = vpop.f32.mrb[0].mxu0
        %v2730 = vadd.f32 %v1315, %v2729
        %2731 = vmatprep.mubr.f32.mxu0 0.0
        %2732 = vmatmul.mubr.f32.gmra.mrb[0].mxu0 %v525
        %v2733 = vpop.f32.mrb[0].mxu0
        %v2734 = vadd.f32 %v1320, %v2733
        %v2735 = vpop.f32.mrb[0].mxu0
        %v2736 = vadd.f32 %v1320, %v2735
        %2737 = vmatprep.mubr.f32.mxu0 0.0
        %2738 = vmatmul.mubr.f32.gmra.mrb[0].mxu0 %v526
        %v2739 = vpop.f32.mrb[0].mxu0
        %v2740 = vadd.f32 %v1325, %v2739
        %v2741 = vpop.f32.mrb[0].mxu0
        %v2742 = vadd.f32 %v1325, %v2741
        %2743 = vmatprep.mubr.f32.mxu0 0.0
        %2744 = vmatmul.mubr.f32.gmra.mrb[0].mxu0 %v527
        %v2745 = vpop.f32.mrb[0].mxu0
        %v2746 = vadd.f32 %v1330, %v2745
        %v2747 = vpop.f32.mrb[0].mxu0
        %v2748 = vadd.f32 %v1330, %v2747
        %2749 = vmatprep.mubr.f32.mxu0 0.0
        %2750 = vmatmul.mubr.f32.gmra.mrb[0].mxu0 %v528
        %v2751 = vpop.f32.mrb[0].mxu0
        %v2752 = vadd.f32 %v1335, %v2751
        %v2753 = vpop.f32.mrb[0].mxu0
        %v2754 = vadd.f32 %v1335, %v2753
        %2755 = vmatprep.mubr.f32.mxu0 0.0
        %2756 = vmatmul.mubr.f32.gmra.mrb[0].mxu0 %v529
        %v2757 = vpop.f32.mrb[0].mxu0
        %v2758 = vadd.f32 %v1340, %v2757
        %v2759 = vpop.f32.mrb[0].mxu0
        %v2760 = vadd.f32 %v1340, %v2759
        %2761 = vmatprep.mubr.f32.mxu0 0.0
        %2762 = vmatmul.mubr.f32.gmra.mrb[0].mxu0 %v530
        %v2763 = vpop.f32.mrb[0].mxu0
        %v2764 = vadd.f32 %v1345, %v2763
        %v2765 = vpop.f32.mrb[0].mxu0
        %v2766 = vadd.f32 %v1345, %v2765
        %2767 = vmatprep.mubr.f32.mxu0 0.0
        %2768 = vmatmul.mubr.f32.gmra.mrb[0].mxu0 %v531
        %v2769 = vpop.f32.mrb[0].mxu0
        %v2770 = vadd.f32 %v1350, %v2769
        %v2771 = vpop.f32.mrb[0].mxu0
        %v2772 = vadd.f32 %v1350, %v2771
        %2773 = vmatprep.mubr.f32.mxu0 0.0
        %2774 = vmatmul.mubr.f32.gmra.mrb[0].mxu0 %v532
        %v2775 = vpop.f32.mrb[0].mxu0
        %v2776 = vadd.f32 %v1355, %v2775
        %v2777 = vpop.f32.mrb[0].mxu0
        %v2778 = vadd.f32 %v1355, %v2777
        %2779 = vmatprep.mubr.f32.mxu0 0.0
        %2780 = vmatmul.mubr.f32.gmra.mrb[0].mxu0 %v533
        %v2781 = vpop.f32.mrb[0].mxu0
        %v2782 = vadd.f32 %v1360, %v2781
        %v2783 = vpop.f32.mrb[0].mxu0
        %v2784 = vadd.f32 %v1360, %v2783
        %2785 = vmatprep.mubr.f32.mxu0 0.0
        %2786 = vmatmul.mubr.f32.gmra.mrb[0].mxu0 %v534
        %v2787 = vpop.f32.mrb[0].mxu0
        %v2788 = vadd.f32 %v1365, %v2787
        %v2789 = vpop.f32.mrb[0].mxu0
        %v2790 = vadd.f32 %v1365, %v2789
        %2791 = vmatprep.mubr.f32.mxu0 0.0
        %2792 = vmatmul.mubr.f32.gmra.mrb[0].mxu0 %v535
        %v2793 = vpop.f32.mrb[0].mxu0
        %v2794 = vadd.f32 %v1370, %v2793
        %v2795 = vpop.f32.mrb[0].mxu0
        %v2796 = vadd.f32 %v1370, %v2795
        %2797 = vmatprep.mubr.f32.mxu0 0.0
        %2798 = vmatmul.mubr.f32.gmra.mrb[0].mxu0 %v536
        %v2799 = vpop.f32.mrb[0].mxu0
        %v2800 = vadd.f32 %v1375, %v2799
        %v2801 = vpop.f32.mrb[0].mxu0
        %v2802 = vadd.f32 %v1375, %v2801
        %2803 = vmatprep.mubr.f32.mxu0 0.0
        %2804 = vmatmul.mubr.f32.gmra.mrb[0].mxu0 %v537
        %v2805 = vpop.f32.mrb[0].mxu0
        %v2806 = vadd.f32 %v1380, %v2805
        %v2807 = vpop.f32.mrb[0].mxu0
        %v2808 = vadd.f32 %v1380, %v2807
        %2809 = vmatprep.mubr.f32.mxu0 0.0
        %2810 = vmatmul.mubr.f32.gmra.mrb[0].mxu0 %v538
        %v2811 = vpop.f32.mrb[0].mxu0
        %v2812 = vadd.f32 %v1385, %v2811
        %v2813 = vpop.f32.mrb[0].mxu0
        %v2814 = vadd.f32 %v1385, %v2813
        %2815 = vmatprep.mubr.f32.mxu0 0.0
        %2816 = vmatmul.mubr.f32.gmra.mrb[0].mxu0 %v539
        %v2817 = vpop.f32.mrb[0].mxu0
        %v2818 = vadd.f32 %v1390, %v2817
        %v2819 = vpop.f32.mrb[0].mxu0
        %v2820 = vadd.f32 %v1390, %v2819
        %2821 = vmatprep.mubr.f32.mxu0 0.0
        %2822 = vmatmul.mubr.f32.gmra.mrb[0].mxu0 %v540
        %v2823 = vpop.f32.mrb[0].mxu0
        %v2824 = vadd.f32 %v1395, %v2823
        %v2825 = vpop.f32.mrb[0].mxu0
        %v2826 = vadd.f32 %v1395, %v2825
        %2827 = vmatprep.mubr.f32.mxu0 0.0
        %2828 = vmatmul.mubr.f32.gmra.mrb[0].mxu0 %v541
        %v2829 = vpop.f32.mrb[0].mxu0
        %v2830 = vadd.f32 %v1400, %v2829
        %v2831 = vpop.f32.mrb[0].mxu0
        %v2832 = vadd.f32 %v1400, %v2831
        %2833 = vmatprep.mubr.f32.mxu0 0.0
        %2834 = vmatmul.mubr.f32.gmra.mrb[0].mxu0 %v542
        %v2835 = vpop.f32.mrb[0].mxu0
        %v2836 = vadd.f32 %v1405, %v2835
        %v2837 = vpop.f32.mrb[0].mxu0
        %v2838 = vadd.f32 %v1405, %v2837
        %2839 = vmatprep.mubr.f32.mxu0 0.0
        %2840 = vmatmul.mubr.f32.gmra.mrb[0].mxu0 %v543
        %v2841 = vpop.f32.mrb[0].mxu0
        %v2842 = vadd.f32 %v1410, %v2841
        %v2843 = vpop.f32.mrb[0].mxu0
        %v2844 = vadd.f32 %v1410, %v2843
        %2845 = vmatprep.mubr.f32.mxu0 0.0
        %2846 = vmatmul.mubr.f32.gmra.mrb[0].mxu0 %v544
        %v2847 = vpop.f32.mrb[0].mxu0
        %v2848 = vadd.f32 %v1415, %v2847
        %v2849 = vpop.f32.mrb[0].mxu0
        %v2850 = vadd.f32 %v1415, %v2849
        %2851 = vmatprep.mubr.f32.mxu0 0.0
        %2852 = vmatmul.mubr.f32.gmra.mrb[0].mxu0 %v545
        %v2853 = vpop.f32.mrb[0].mxu0
        %v2854 = vadd.f32 %v1420, %v2853
        %v2855 = vpop.f32.mrb[0].mxu0
        %v2856 = vadd.f32 %v1420, %v2855
        %2857 = vmatprep.mubr.f32.mxu0 0.0
        %2858 = vmatmul.mubr.f32.gmra.mrb[0].mxu0 %v546
        %v2859 = vpop.f32.mrb[0].mxu0
        %v2860 = vadd.f32 %v1425, %v2859
        %v2861 = vpop.f32.mrb[0].mxu0
        %v2862 = vadd.f32 %v1425, %v2861
        %2863 = vmatprep.mubr.f32.mxu0 0.0
        %2864 = vmatmul.mubr.f32.gmra.mrb[0].mxu0 %v547
        %v2865 = vpop.f32.mrb[0].mxu0
        %v2866 = vadd.f32 %v1430, %v2865
        %v2867 = vpop.f32.mrb[0].mxu0
        %v2868 = vadd.f32 %v1430, %v2867
        %2869 = vmatprep.mubr.f32.mxu0 0.0
        %2870 = vmatmul.mubr.f32.gmra.mrb[0].mxu0 %v548
        %v2871 = vpop.f32.mrb[0].mxu0
        %v2872 = vadd.f32 %v1435, %v2871
        %v2873 = vpop.f32.mrb[0].mxu0
        %v2874 = vadd.f32 %v1435, %v2873
        %2875 = vmatprep.mubr.f32.mxu0 0.0
        %2876 = vmatmul.mubr.f32.gmra.mrb[0].mxu0 %v549
        %v2877 = vpop.f32.mrb[0].mxu0
        %v2878 = vadd.f32 %v1440, %v2877
        %v2879 = vpop.f32.mrb[0].mxu0
        %v2880 = vadd.f32 %v1440, %v2879
        %2881 = vmatprep.mubr.f32.mxu0 0.0
        %2882 = vmatmul.mubr.f32.gmra.mrb[0].mxu0 %v550
        %v2883 = vpop.f32.mrb[0].mxu0
        %v2884 = vadd.f32 %v1445, %v2883
        %v2885 = vpop.f32.mrb[0].mxu0
        %v2886 = vadd.f32 %v1445, %v2885
        %2887 = vmatprep.mubr.f32.mxu0 0.0
        %2888 = vmatmul.mubr.f32.gmra.mrb[0].mxu0 %v551
        %v2889 = vpop.f32.mrb[0].mxu0
        %v2890 = vadd.f32 %v1450, %v2889
        %v2891 = vpop.f32.mrb[0].mxu0
        %v2892 = vadd.f32 %v1450, %v2891
        %2893 = vmatprep.mubr.f32.mxu0 0.0
        %2894 = vmatmul.mubr.f32.gmra.mrb[0].mxu0 %v552
        %v2895 = vpop.f32.mrb[0].mxu0
        %v2896 = vadd.f32 %v1455, %v2895
        %v2897 = vpop.f32.mrb[0].mxu0
        %v2898 = vadd.f32 %v1455, %v2897
        %2899 = vmatprep.mubr.f32.mxu0 0.0
        %2900 = vmatmul.mubr.f32.gmra.mrb[0].mxu0 %v553
        %v2901 = vpop.f32.mrb[0].mxu0
        %v2902 = vadd.f32 %v1460, %v2901
        %v2903 = vpop.f32.mrb[0].mxu0
        %v2904 = vadd.f32 %v1460, %v2903
        %2905 = vmatprep.mubr.f32.mxu0 0.0
        %2906 = vmatmul.mubr.f32.gmra.mrb[0].mxu0 %v554
        %v2907 = vpop.f32.mrb[0].mxu0
        %v2908 = vadd.f32 %v1465, %v2907
        %v2909 = vpop.f32.mrb[0].mxu0
        %v2910 = vadd.f32 %v1465, %v2909
        %2911 = vmatprep.mubr.f32.mxu0 0.0
        %2912 = vmatmul.mubr.f32.gmra.mrb[0].mxu0 %v555
        %v2913 = vpop.f32.mrb[0].mxu0
        %v2914 = vadd.f32 %v1470, %v2913
        %v2915 = vpop.f32.mrb[0].mxu0
        %v2916 = vadd.f32 %v1470, %v2915
        %2917 = vmatprep.mubr.f32.mxu0 0.0
        %2918 = vmatmul.mubr.f32.gmra.mrb[0].mxu0 %v556
        %v2919 = vpop.f32.mrb[0].mxu0
        %v2920 = vadd.f32 %v1475, %v2919
        %v2921 = vpop.f32.mrb[0].mxu0
        %v2922 = vadd.f32 %v1475, %v2921
        %2923 = vmatprep.mubr.f32.mxu0 0.0
        %2924 = vmatmul.mubr.f32.gmra.mrb[0].mxu0 %v557
        %v2925 = vpop.f32.mrb[0].mxu0
        %v2926 = vadd.f32 %v1480, %v2925
        %v2927 = vpop.f32.mrb[0].mxu0
        %v2928 = vadd.f32 %v1480, %v2927
        %2929 = vmatprep.mubr.f32.mxu0 0.0
        %2930 = vmatmul.mubr.f32.gmra.mrb[0].mxu0 %v558
        %v2931 = vpop.f32.mrb[0].mxu0
        %v2932 = vadd.f32 %v1485, %v2931
        %v2933 = vpop.f32.mrb[0].mxu0
        %v2934 = vadd.f32 %v1485, %v2933
        %2935 = vmatprep.mubr.f32.mxu0 0.0
        %2936 = vmatmul.mubr.f32.gmra.mrb[0].mxu0 %v559
        %v2937 = vpop.f32.mrb[0].mxu0
        %v2938 = vadd.f32 %v1490, %v2937
        %v2939 = vpop.f32.mrb[0].mxu0
        %v2940 = vadd.f32 %v1490, %v2939
        %2941 = vmatprep.mubr.f32.mxu0 0.0
        %2942 = vmatmul.mubr.f32.gmra.mrb[0].mxu0 %v560
        %v2943 = vpop.f32.mrb[0].mxu0
        %v2944 = vadd.f32 %v1495, %v2943
        %v2945 = vpop.f32.mrb[0].mxu0
        %v2946 = vadd.f32 %v1495, %v2945
        %2947 = vmatprep.mubr.f32.mxu0 0.0
        %2948 = vmatmul.mubr.f32.gmra.mrb[0].mxu0 %v561
        %v2949 = vpop.f32.mrb[0].mxu0
        %v2950 = vadd.f32 %v1500, %v2949
        %v2951 = vpop.f32.mrb[0].mxu0
        %v2952 = vadd.f32 %v1500, %v2951
        %2953 = vmatprep.mubr.f32.mxu0 0.0
        %2954 = vmatmul.mubr.f32.gmra.mrb[0].mxu0 %v562
        %v2955 = vpop.f32.mrb[0].mxu0
        %v2956 = vadd.f32 %v1505, %v2955
        %v2957 = vpop.f32.mrb[0].mxu0
        %v2958 = vadd.f32 %v1505, %v2957
        %2959 = vmatprep.mubr.f32.mxu0 0.0
        %2960 = vmatmul.mubr.f32.gmra.mrb[0].mxu0 %v563
        %v2961 = vpop.f32.mrb[0].mxu0
        %v2962 = vadd.f32 %v1510, %v2961
        %v2963 = vpop.f32.mrb[0].mxu0
        %v2964 = vadd.f32 %v1510, %v2963
        %2965 = vmatprep.mubr.f32.mxu0 0.0
        %2966 = vmatmul.mubr.f32.gmra.mrb[0].mxu0 %v564
        %v2967 = vpop.f32.mrb[0].mxu0
        %v2968 = vadd.f32 %v1515, %v2967
        %v2969 = vpop.f32.mrb[0].mxu0
        %v2970 = vadd.f32 %v1515, %v2969
        %2971 = vmatprep.mubr.f32.mxu0 0.0
        %2972 = vmatmul.mubr.f32.gmra.mrb[0].mxu0 %v565
        %v2973 = vpop.f32.mrb[0].mxu0
        %v2974 = vadd.f32 %v1520, %v2973
        %v2975 = vpop.f32.mrb[0].mxu0
        %v2976 = vadd.f32 %v1520, %v2975
        %2977 = vmatprep.mubr.f32.mxu0 0.0
        %2978 = vmatmul.mubr.f32.gmra.mrb[0].mxu0 %v566
        %v2979 = vpop.f32.mrb[0].mxu0
        %v2980 = vadd.f32 %v1525, %v2979
        %v2981 = vpop.f32.mrb[0].mxu0
        %v2982 = vadd.f32 %v1525, %v2981
        %2983 = vmatprep.mubr.f32.mxu0 0.0
        %2984 = vmatmul.mubr.f32.gmra.mrb[0].mxu0 %v567
        %v2985 = vpop.f32.mrb[0].mxu0
        %v2986 = vadd.f32 %v1530, %v2985
        %v2987 = vpop.f32.mrb[0].mxu0
        %v2988 = vadd.f32 %v1530, %v2987
        %2989 = vmatprep.mubr.f32.mxu0 0.0
        %2990 = vmatmul.mubr.f32.gmra.mrb[0].mxu0 %v568
        %v2991 = vpop.f32.mrb[0].mxu0
        %v2992 = vadd.f32 %v1535, %v2991
        %v2993 = vpop.f32.mrb[0].mxu0
        %v2994 = vadd.f32 %v1535, %v2993
        %2995 = vmatprep.mubr.f32.mxu0 0.0
        %2996 = vmatmul.mubr.f32.gmra.mrb[0].mxu0 %v569
        %v2997 = vpop.f32.mrb[0].mxu0
        %v2998 = vadd.f32 %v1540, %v2997
        %v2999 = vpop.f32.mrb[0].mxu0
        %v3000 = vadd.f32 %v1540, %v2999
        %3001 = vmatprep.mubr.f32.mxu0 0.0
        %3002 = vmatmul.mubr.f32.gmra.mrb[0].mxu0 %v570
        %v3003 = vpop.f32.mrb[0].mxu0
        %v3004 = vadd.f32 %v1545, %v3003
        %v3005 = vpop.f32.mrb[0].mxu0
        %v3006 = vadd.f32 %v1545, %v3005
        %3007 = vmatprep.mubr.f32.mxu0 0.0
        %3008 = vmatmul.mubr.f32.gmra.mrb[0].mxu0 %v571
        %v3009 = vpop.f32.mrb[0].mxu0
        %v3010 = vadd.f32 %v1550, %v3009
        %v3011 = vpop.f32.mrb[0].mxu0
        %v3012 = vadd.f32 %v1550, %v3011
        %3013 = vmatprep.mubr.f32.mxu0 0.0
        %3014 = vmatmul.mubr.f32.gmra.mrb[0].mxu0 %v572
        %v3015 = vpop.f32.mrb[0].mxu0
        %v3016 = vadd.f32 %v1555, %v3015
        %v3017 = vpop.f32.mrb[0].mxu0
        %v3018 = vadd.f32 %v1555, %v3017
        %3019 = vmatprep.mubr.f32.mxu0 0.0
        %3020 = vmatmul.mubr.f32.gmra.mrb[0].mxu0 %v573
        %v3021 = vpop.f32.mrb[0].mxu0
        %v3022 = vadd.f32 %v1560, %v3021
        %v3023 = vpop.f32.mrb[0].mxu0
        %v3024 = vadd.f32 %v1560, %v3023
        %3025 = vmatprep.mubr.f32.mxu0 0.0
        %3026 = vmatmul.mubr.f32.gmra.mrb[0].mxu0 %v574
        %v3027 = vpop.f32.mrb[0].mxu0
        %v3028 = vadd.f32 %v1565, %v3027
        %v3029 = vpop.f32.mrb[0].mxu0
        %v3030 = vadd.f32 %v1565, %v3029
        %3031 = vmatprep.mubr.f32.mxu0 0.0
        %3032 = vmatmul.mubr.f32.gmra.mrb[0].mxu0 %v575
        %v3033 = vpop.f32.mrb[0].mxu0
        %v3034 = vadd.f32 %v1570, %v3033
        %v3035 = vpop.f32.mrb[0].mxu0
        %v3036 = vadd.f32 %v1570, %v3035
        %3037 = vmatprep.mubr.f32.mxu0 0.0
        %3038 = vmatmul.mubr.f32.gmra.mrb[0].mxu0 %v576
        %v3039 = vpop.f32.mrb[0].mxu0
        %v3040 = vadd.f32 %v1575, %v3039
        %v3041 = vpop.f32.mrb[0].mxu0
        %v3042 = vadd.f32 %v1575, %v3041
        %3043 = vmatprep.mubr.f32.mxu0 0.0
        %3044 = vmatmul.mubr.f32.gmra.mrb[0].mxu0 %v577
        %v3045 = vpop.f32.mrb[0].mxu0
        %v3046 = vadd.f32 %v1580, %v3045
        %v3047 = vpop.f32.mrb[0].mxu0
        %v3048 = vadd.f32 %v1580, %v3047
        %3049 = vmatprep.mubr.f32.mxu0 0.0
        %3050 = vmatmul.mubr.f32.gmra.mrb[0].mxu0 %v578
        %v3051 = vpop.f32.mrb[0].mxu0
        %v3052 = vadd.f32 %v1585, %v3051
        %v3053 = vpop.f32.mrb[0].mxu0
        %v3054 = vadd.f32 %v1585, %v3053
        %3055 = vmatprep.mubr.f32.mxu0 0.0
        %3056 = vmatmul.mubr.f32.gmra.mrb[0].mxu0 %v579
        %v3057 = vpop.f32.mrb[0].mxu0
        %v3058 = vadd.f32 %v1590, %v3057
        %v3059 = vpop.f32.mrb[0].mxu0
        %v3060 = vadd.f32 %v1590, %v3059
        %3061 = vmatprep.mubr.f32.mxu0 0.0
        %3062 = vmatmul.mubr.f32.gmra.mrb[0].mxu0 %v580
        %v3063 = vpop.f32.mrb[0].mxu0
        %v3064 = vadd.f32 %v1595, %v3063
        %v3065 = vpop.f32.mrb[0].mxu0
        %v3066 = vadd.f32 %v1595, %v3065
        %3067 = vmatprep.mubr.f32.mxu0 0.0
        %3068 = vmatmul.mubr.f32.gmra.mrb[0].mxu0 %v581
        %v3069 = vpop.f32.mrb[0].mxu0
        %v3070 = vadd.f32 %v1600, %v3069
        %v3071 = vpop.f32.mrb[0].mxu0
        %v3072 = vadd.f32 %v1600, %v3071
        %3073 = vmatprep.mubr.f32.mxu0 0.0
        %3074 = vmatmul.mubr.f32.gmra.mrb[0].mxu0 %v582
        %v3075 = vpop.f32.mrb[0].mxu0
        %v3076 = vadd.f32 %v1605, %v3075
        %v3077 = vpop.f32.mrb[0].mxu0
        %v3078 = vadd.f32 %v1605, %v3077
        %3079 = vmatprep.mubr.f32.mxu0 0.0
        %3080 = vmatmul.mubr.f32.gmra.mrb[0].mxu0 %v583
        %v3081 = vpop.f32.mrb[0].mxu0
        %v3082 = vadd.f32 %v1610, %v3081
        %v3083 = vpop.f32.mrb[0].mxu0
        %v3084 = vadd.f32 %v1610, %v3083
        %3085 = vmatprep.mubr.f32.mxu0 0.0
        %3086 = vmatmul.mubr.f32.gmra.mrb[0].mxu0 %v584
        %v3087 = vpop.f32.mrb[0].mxu0
        %v3088 = vadd.f32 %v1615, %v3087
        %v3089 = vpop.f32.mrb[0].mxu0
        %v3090 = vadd.f32 %v1615, %v3089
        %3091 = vmatprep.mubr.f32.mxu0 0.0
        %3092 = vmatmul.mubr.f32.gmra.mrb[0].mxu0 %v585
        %v3093 = vpop.f32.mrb[0].mxu0
        %v3094 = vadd.f32 %v1620, %v3093
        %v3095 = vpop.f32.mrb[0].mxu0
        %v3096 = vadd.f32 %v1620, %v3095
        %3097 = vmatprep.mubr.f32.mxu0 0.0
        %3098 = vmatmul.mubr.f32.gmra.mrb[0].mxu0 %v586
        %v3099 = vpop.f32.mrb[0].mxu0
        %v3100 = vadd.f32 %v1625, %v3099
        %v3101 = vpop.f32.mrb[0].mxu0
        %v3102 = vadd.f32 %v1625, %v3101
        %3103 = vmatprep.mubr.f32.mxu0 0.0
        %3104 = vmatmul.mubr.f32.gmra.mrb[0].mxu0 %v587
        %v3105 = vpop.f32.mrb[0].mxu0
        %v3106 = vadd.f32 %v1630, %v3105
        %v3107 = vpop.f32.mrb[0].mxu0
        %v3108 = vadd.f32 %v1630, %v3107
        %3109 = vmatprep.mubr.f32.mxu0 0.0
        %3110 = vmatmul.mubr.f32.gmra.mrb[0].mxu0 %v588
        %v3111 = vpop.f32.mrb[0].mxu0
        %v3112 = vadd.f32 %v1635, %v3111
        %v3113 = vpop.f32.mrb[0].mxu0
        %v3114 = vadd.f32 %v1635, %v3113
        %3115 = vmatprep.mubr.f32.mxu0 0.0
        %3116 = vmatmul.mubr.f32.gmra.mrb[0].mxu0 %v589
        %v3117 = vpop.f32.mrb[0].mxu0
        %v3118 = vadd.f32 %v1640, %v3117
        %v3119 = vpop.f32.mrb[0].mxu0
        %v3120 = vadd.f32 %v1640, %v3119
        %3121 = vmatprep.mubr.f32.mxu0 0.0
        %3122 = vmatmul.mubr.f32.gmra.mrb[0].mxu0 %v590
        %v3123 = vpop.f32.mrb[0].mxu0
        %v3124 = vadd.f32 %v1645, %v3123
        %v3125 = vpop.f32.mrb[0].mxu0
        %v3126 = vadd.f32 %v1645, %v3125
        %3127 = vmatprep.mubr.f32.mxu0 0.0
        %3128 = vmatmul.mubr.f32.gmra.mrb[0].mxu0 %v591
        %v3129 = vpop.f32.mrb[0].mxu0
        %v3130 = vadd.f32 %v1650, %v3129
        %v3131 = vpop.f32.mrb[0].mxu0
        %v3132 = vadd.f32 %v1650, %v3131
        %3133 = vmatprep.mubr.f32.mxu0 0.0
        %3134 = vmatmul.mubr.f32.gmra.mrb[0].mxu0 %v592
        %v3135 = vpop.f32.mrb[0].mxu0
        %v3136 = vadd.f32 %v1655, %v3135
        %v3137 = vpop.f32.mrb[0].mxu0
        %v3138 = vadd.f32 %v1655, %v3137
        %3139 = vmatprep.mubr.f32.mxu0 0.0
        %3140 = vmatmul.mubr.f32.gmra.mrb[0].mxu0 %v593
        %v3141 = vpop.f32.mrb[0].mxu0
        %v3142 = vadd.f32 %v1660, %v3141
        %v3143 = vpop.f32.mrb[0].mxu0
        %v3144 = vadd.f32 %v1660, %v3143
        %3145 = vmatprep.mubr.f32.mxu0 0.0
        %3146 = vmatmul.mubr.f32.gmra.mrb[0].mxu0 %v594
        %v3147 = vpop.f32.mrb[0].mxu0
        %v3148 = vadd.f32 %v1665, %v3147
        %v3149 = vpop.f32.mrb[0].mxu0
        %v3150 = vadd.f32 %v1665, %v3149
        %3151 = vmatprep.mubr.f32.mxu0 0.0
        %3152 = vmatmul.mubr.f32.gmra.mrb[0].mxu0 %v595
        %v3153 = vpop.f32.mrb[0].mxu0
        %v3154 = vadd.f32 %v1670, %v3153
        %v3155 = vpop.f32.mrb[0].mxu0
        %v3156 = vadd.f32 %v1670, %v3155
        %3157 = vmatprep.mubr.f32.mxu0 0.0
        %3158 = vmatmul.mubr.f32.gmra.mrb[0].mxu0 %v596
        %v3159 = vpop.f32.mrb[0].mxu0
        %v3160 = vadd.f32 %v1675, %v3159
        %v3161 = vpop.f32.mrb[0].mxu0
        %v3162 = vadd.f32 %v1675, %v3161
        %3163 = vmatprep.mubr.f32.mxu0 0.0
        %3164 = vmatmul.mubr.f32.gmra.mrb[0].mxu0 %v597
        %v3165 = vpop.f32.mrb[0].mxu0
        %v3166 = vadd.f32 %v1680, %v3165
        %v3167 = vpop.f32.mrb[0].mxu0
        %v3168 = vadd.f32 %v1680, %v3167
        %3169 = vmatprep.mubr.f32.mxu0 0.0
        %3170 = vmatmul.mubr.f32.gmra.mrb[0].mxu0 %v598
        %v3171 = vpop.f32.mrb[0].mxu0
        %v3172 = vadd.f32 %v1685, %v3171
        %v3173 = vpop.f32.mrb[0].mxu0
        %v3174 = vadd.f32 %v1685, %v3173
        %3175 = vmatprep.mubr.f32.mxu0 0.0
        %3176 = vmatmul.mubr.f32.gmra.mrb[0].mxu0 %v599
        %v3177 = vpop.f32.mrb[0].mxu0
        %v3178 = vadd.f32 %v1690, %v3177
        %v3179 = vpop.f32.mrb[0].mxu0
        %v3180 = vadd.f32 %v1690, %v3179
        %3181 = vmatprep.mubr.f32.mxu0 0.0
        %3182 = vmatmul.mubr.f32.gmra.mrb[0].mxu0 %v600
        %v3183 = vpop.f32.mrb[0].mxu0
        %v3184 = vadd.f32 %v1695, %v3183
        %v3185 = vpop.f32.mrb[0].mxu0
        %v3186 = vadd.f32 %v1695, %v3185
        %3187 = vmatprep.mubr.f32.mxu0 0.0
        %3188 = vmatmul.mubr.f32.gmra.mrb[0].mxu0 %v601
        %v3189 = vpop.f32.mrb[0].mxu0
        %v3190 = vadd.f32 %v1700, %v3189
        %v3191 = vpop.f32.mrb[0].mxu0
        %v3192 = vadd.f32 %v1700, %v3191
        %3193 = vmatprep.mubr.f32.mxu0 0.0
        %3194 = vmatmul.mubr.f32.gmra.mrb[0].mxu0 %v602
        %v3195 = vpop.f32.mrb[0].mxu0
        %v3196 = vadd.f32 %v1705, %v3195
        %v3197 = vpop.f32.mrb[0].mxu0
        %v3198 = vadd.f32 %v1705, %v3197
        %3199 = vmatprep.mubr.f32.mxu0 0.0
        %3200 = vmatmul.mubr.f32.gmra.mrb[0].mxu0 %v603
        %v3201 = vpop.f32.mrb[0].mxu0
        %v3202 = vadd.f32 %v1710, %v3201
        %v3203 = vpop.f32.mrb[0].mxu0
        %v3204 = vadd.f32 %v1710, %v3203
        %3205 = vmatprep.mubr.f32.mxu0 0.0
        %3206 = vmatmul.mubr.f32.gmra.mrb[0].mxu0 %v604
        %v3207 = vpop.f32.mrb[0].mxu0
        %v3208 = vadd.f32 %v1715, %v3207
        %v3209 = vpop.f32.mrb[0].mxu0
        %v3210 = vadd.f32 %v1715, %v3209
        %3211 = vmatprep.mubr.f32.mxu0 0.0
        %3212 = vmatmul.mubr.f32.gmra.mrb[0].mxu0 %v605
        %v3213 = vpop.f32.mrb[0].mxu0
        %v3214 = vadd.f32 %v1720, %v3213
        %v3215 = vpop.f32.mrb[0].mxu0
        %v3216 = vadd.f32 %v1720, %v3215
        %3217 = vmatprep.mubr.f32.mxu0 0.0
        %3218 = vmatmul.mubr.f32.gmra.mrb[0].mxu0 %v606
        %v3219 = vpop.f32.mrb[0].mxu0
        %v3220 = vadd.f32 %v1725, %v3219
        %v3221 = vpop.f32.mrb[0].mxu0
        %v3222 = vadd.f32 %v1725, %v3221
        %3223 = vmatprep.mubr.f32.mxu0 0.0
        %3224 = vmatmul.mubr.f32.gmra.mrb[0].mxu0 %v607
        %v3225 = vpop.f32.mrb[0].mxu0
        %v3226 = vadd.f32 %v1730, %v3225
        %v3227 = vpop.f32.mrb[0].mxu0
        %v3228 = vadd.f32 %v1730, %v3227
        %3229 = vmatprep.mubr.f32.mxu0 0.0
        %3230 = vmatmul.mubr.f32.gmra.mrb[0].mxu0 %v608
        %v3231 = vpop.f32.mrb[0].mxu0
        %v3232 = vadd.f32 %v1735, %v3231
        %v3233 = vpop.f32.mrb[0].mxu0
        %v3234 = vadd.f32 %v1735, %v3233
        %3235 = vmatprep.mubr.f32.mxu0 0.0
        %3236 = vmatmul.mubr.f32.gmra.mrb[0].mxu0 %v609
        %v3237 = vpop.f32.mrb[0].mxu0
        %v3238 = vadd.f32 %v1740, %v3237
        %v3239 = vpop.f32.mrb[0].mxu0
        %v3240 = vadd.f32 %v1740, %v3239
        %3241 = vmatprep.mubr.f32.mxu0 0.0
        %3242 = vmatmul.mubr.f32.gmra.mrb[0].mxu0 %v610
        %v3243 = vpop.f32.mrb[0].mxu0
        %v3244 = vadd.f32 %v1745, %v3243
        %v3245 = vpop.f32.mrb[0].mxu0
        %v3246 = vadd.f32 %v1745, %v3245
        %3247 = vmatprep.mubr.f32.mxu0 0.0
        %3248 = vmatmul.mubr.f32.gmra.mrb[0].mxu0 %v611
        %v3249 = vpop.f32.mrb[0].mxu0
        %v3250 = vadd.f32 %v1750, %v3249
        %v3251 = vpop.f32.mrb[0].mxu0
        %v3252 = vadd.f32 %v1750, %v3251
        %3253 = vmatprep.mubr.f32.mxu0 0.0
        %3254 = vmatmul.mubr.f32.gmra.mrb[0].mxu0 %v612
        %v3255 = vpop.f32.mrb[0].mxu0
        %v3256 = vadd.f32 %v1755, %v3255
        %v3257 = vpop.f32.mrb[0].mxu0
        %v3258 = vadd.f32 %v1755, %v3257
        %3259 = vmatprep.mubr.f32.mxu0 0.0
        %3260 = vmatmul.mubr.f32.gmra.mrb[0].mxu0 %v613
        %v3261 = vpop.f32.mrb[0].mxu0
        %v3262 = vadd.f32 %v1760, %v3261
        %v3263 = vpop.f32.mrb[0].mxu0
        %v3264 = vadd.f32 %v1760, %v3263
        %3265 = vmatprep.mubr.f32.mxu0 0.0
        %3266 = vmatmul.mubr.f32.gmra.mrb[0].mxu0 %v614
        %v3267 = vpop.f32.mrb[0].mxu0
        %v3268 = vadd.f32 %v1765, %v3267
        %v3269 = vpop.f32.mrb[0].mxu0
        %v3270 = vadd.f32 %v1765, %v3269
        %3271 = vmatprep.mubr.f32.mxu0 0.0
        %3272 = vmatmul.mubr.f32.gmra.mrb[0].mxu0 %v615
        %v3273 = vpop.f32.mrb[0].mxu0
        %v3274 = vadd.f32 %v1770, %v3273
        %v3275 = vpop.f32.mrb[0].mxu0
        %v3276 = vadd.f32 %v1770, %v3275
        %3277 = vmatprep.mubr.f32.mxu0 0.0
        %3278 = vmatmul.mubr.f32.gmra.mrb[0].mxu0 %v616
        %v3279 = vpop.f32.mrb[0].mxu0
        %v3280 = vadd.f32 %v1775, %v3279
        %v3281 = vpop.f32.mrb[0].mxu0
        %v3282 = vadd.f32 %v1775, %v3281
        %3283 = vmatprep.mubr.f32.mxu0 0.0
        %3284 = vmatmul.mubr.f32.gmra.mrb[0].mxu0 %v617
        %v3285 = vpop.f32.mrb[0].mxu0
        %v3286 = vadd.f32 %v1780, %v3285
        %v3287 = vpop.f32.mrb[0].mxu0
        %v3288 = vadd.f32 %v1780, %v3287
        %3289 = vmatprep.mubr.f32.mxu0 0.0
        %3290 = vmatmul.mubr.f32.gmra.mrb[0].mxu0 %v618
        %v3291 = vpop.f32.mrb[0].mxu0
        %v3292 = vadd.f32 %v1785, %v3291
        %v3293 = vpop.f32.mrb[0].mxu0
        %v3294 = vadd.f32 %v1785, %v3293
        %3295 = vmatprep.mubr.f32.mxu0 0.0
        %3296 = vmatmul.mubr.f32.gmra.mrb[0].mxu0 %v619
        %v3297 = vpop.f32.mrb[0].mxu0
        %v3298 = vadd.f32 %v1790, %v3297
        %v3299 = vpop.f32.mrb[0].mxu0
        %v3300 = vadd.f32 %v1790, %v3299
        %3301 = vmatprep.mubr.f32.mxu0 0.0
        %3302 = vmatmul.mubr.f32.gmra.mrb[0].mxu0 %v620
        %v3303 = vpop.f32.mrb[0].mxu0
        %v3304 = vadd.f32 %v1795, %v3303
        %v3305 = vpop.f32.mrb[0].mxu0
        %v3306 = vadd.f32 %v1795, %v3305
        %3307 = vmatprep.mubr.f32.mxu0 0.0
        %3308 = vmatmul.mubr.f32.gmra.mrb[0].mxu0 %v621
        %v3309 = vpop.f32.mrb[0].mxu0
        %v3310 = vadd.f32 %v1800, %v3309
        %v3311 = vpop.f32.mrb[0].mxu0
        %v3312 = vadd.f32 %v1800, %v3311
        %3313 = vmatprep.mubr.f32.mxu0 0.0
        %3314 = vmatmul.mubr.f32.gmra.mrb[0].mxu0 %v622
        %v3315 = vpop.f32.mrb[0].mxu0
        %v3316 = vadd.f32 %v1805, %v3315
        %v3317 = vpop.f32.mrb[0].mxu0
        %v3318 = vadd.f32 %v1805, %v3317
        %3319 = vmatprep.mubr.f32.mxu0 0.0
        %3320 = vmatmul.mubr.f32.gmra.mrb[0].mxu0 %v623
        %v3321 = vpop.f32.mrb[0].mxu0
        %v3322 = vadd.f32 %v1810, %v3321
        %v3323 = vpop.f32.mrb[0].mxu0
        %v3324 = vadd.f32 %v1810, %v3323
        %3325 = vmatprep.mubr.f32.mxu0 0.0
        %3326 = vmatmul.mubr.f32.gmra.mrb[0].mxu0 %v624
        %v3327 = vpop.f32.mrb[0].mxu0
        %v3328 = vadd.f32 %v1815, %v3327
        %v3329 = vpop.f32.mrb[0].mxu0
        %v3330 = vadd.f32 %v1815, %v3329
        %3331 = vmatprep.mubr.f32.mxu0 0.0
        %3332 = vmatmul.mubr.f32.gmra.mrb[0].mxu0 %v625
        %v3333 = vpop.f32.mrb[0].mxu0
        %v3334 = vadd.f32 %v1820, %v3333
        %v3335 = vpop.f32.mrb[0].mxu0
        %v3336 = vadd.f32 %v1820, %v3335
        %3337 = vmatprep.mubr.f32.mxu0 0.0
        %3338 = vmatmul.mubr.f32.gmra.mrb[0].mxu0 %v626
        %v3339 = vpop.f32.mrb[0].mxu0
        %v3340 = vadd.f32 %v1825, %v3339
        %v3341 = vpop.f32.mrb[0].mxu0
        %v3342 = vadd.f32 %v1825, %v3341
        %3343 = vmatprep.mubr.f32.mxu0 0.0
        %3344 = vmatmul.mubr.f32.gmra.mrb[0].mxu0 %v627
        %v3345 = vpop.f32.mrb[0].mxu0
        %v3346 = vadd.f32 %v1830, %v3345
        %v3347 = vpop.f32.mrb[0].mxu0
        %v3348 = vadd.f32 %v1830, %v3347
        %3349 = vmatprep.mubr.f32.mxu0 0.0
        %3350 = vmatmul.mubr.f32.gmra.mrb[0].mxu0 %v628
        %v3351 = vpop.f32.mrb[0].mxu0
        %v3352 = vadd.f32 %v1835, %v3351
        %v3353 = vpop.f32.mrb[0].mxu0
        %v3354 = vadd.f32 %v1835, %v3353
        %3355 = vmatprep.mubr.f32.mxu0 0.0
        %3356 = vmatmul.mubr.f32.gmra.mrb[0].mxu0 %v629
        %v3357 = vpop.f32.mrb[0].mxu0
        %v3358 = vadd.f32 %v1840, %v3357
        %v3359 = vpop.f32.mrb[0].mxu0
        %v3360 = vadd.f32 %v1840, %v3359
        %3361 = vmatprep.mubr.f32.mxu0 0.0
        %3362 = vmatmul.mubr.f32.gmra.mrb[0].mxu0 %v630
        %v3363 = vpop.f32.mrb[0].mxu0
        %v3364 = vadd.f32 %v1845, %v3363
        %v3365 = vpop.f32.mrb[0].mxu0
        %v3366 = vadd.f32 %v1845, %v3365
        %3367 = vmatprep.mubr.f32.mxu0 0.0
        %3368 = vmatmul.mubr.f32.gmra.mrb[0].mxu0 %v631
        %v3369 = vpop.f32.mrb[0].mxu0
        %v3370 = vadd.f32 %v1850, %v3369
        %v3371 = vpop.f32.mrb[0].mxu0
        %v3372 = vadd.f32 %v1850, %v3371
        %3373 = vmatprep.mubr.f32.mxu0 0.0
        %3374 = vmatmul.mubr.f32.gmra.mrb[0].mxu0 %v632
        %v3375 = vpop.f32.mrb[0].mxu0
        %v3376 = vadd.f32 %v1855, %v3375
        %v3377 = vpop.f32.mrb[0].mxu0
        %v3378 = vadd.f32 %v1855, %v3377
        %3379 = vmatprep.mubr.f32.mxu0 0.0
        %3380 = vmatmul.mubr.f32.gmra.mrb[0].mxu0 %v633
        %v3381 = vpop.f32.mrb[0].mxu0
        %v3382 = vadd.f32 %v1860, %v3381
        %v3383 = vpop.f32.mrb[0].mxu0
        %v3384 = vadd.f32 %v1860, %v3383
        %3385 = vmatprep.mubr.f32.mxu0 0.0
        %3386 = vmatmul.mubr.f32.gmra.mrb[0].mxu0 %v634
        %v3387 = vpop.f32.mrb[0].mxu0
        %v3388 = vadd.f32 %v1865, %v3387
        %v3389 = vpop.f32.mrb[0].mxu0
        %v3390 = vadd.f32 %v1865, %v3389
        %3391 = vmatprep.mubr.f32.mxu0 0.0
        %3392 = vmatmul.mubr.f32.gmra.mrb[0].mxu0 %v635
        %v3393 = vpop.f32.mrb[0].mxu0
        %v3394 = vadd.f32 %v1870, %v3393
        %v3395 = vpop.f32.mrb[0].mxu0
        %v3396 = vadd.f32 %v1870, %v3395
        %3397 = vmatprep.mubr.f32.mxu0 0.0
        %3398 = vmatmul.mubr.f32.gmra.mrb[0].mxu0 %v636
        %v3399 = vpop.f32.mrb[0].mxu0
        %v3400 = vadd.f32 %v1875, %v3399
        %v3401 = vpop.f32.mrb[0].mxu0
        %v3402 = vadd.f32 %v1875, %v3401
        %3403 = vmatprep.mubr.f32.mxu0 0.0
        %3404 = vmatmul.mubr.f32.gmra.mrb[0].mxu0 %v637
        %v3405 = vpop.f32.mrb[0].mxu0
        %v3406 = vadd.f32 %v1880, %v3405
        %v3407 = vpop.f32.mrb[0].mxu0
        %v3408 = vadd.f32 %v1880, %v3407
        %3409 = vmatprep.mubr.f32.mxu0 0.0
        %3410 = vmatmul.mubr.f32.gmra.mrb[0].mxu0 %v638
        %v3411 = vpop.f32.mrb[0].mxu0
        %v3412 = vadd.f32 %v1885, %v3411
        %v3413 = vpop.f32.mrb[0].mxu0
        %v3414 = vadd.f32 %v1885, %v3413
        %3415 = vmatprep.mubr.f32.mxu0 0.0
        %3416 = vmatmul.mubr.f32.gmra.mrb[0].mxu0 %v639
        %v3417 = vpop.f32.mrb[0].mxu0
        %v3418 = vadd.f32 %v1890, %v3417
        %v3419 = vpop.f32.mrb[0].mxu0
        %v3420 = vadd.f32 %v1890, %v3419
        %3421 = vmatprep.mubr.f32.mxu0 0.0
        %3422 = vmatmul.mubr.f32.gmra.mrb[0].mxu0 %v640
        %v3423 = vpop.f32.mrb[0].mxu0
        %v3424 = vadd.f32 %v1895, %v3423
        %v3425 = vpop.f32.mrb[0].mxu0
        %v3426 = vadd.f32 %v1895, %v3425
        %3427 = vmatprep.mubr.f32.mxu0 0.0
        %3428 = vmatmul.mubr.f32.gmra.mrb[0].mxu0 %v641
        %v3429 = vpop.f32.mrb[0].mxu0
        %v3430 = vadd.f32 %v1900, %v3429
        %v3431 = vpop.f32.mrb[0].mxu0
        %v3432 = vadd.f32 %v1900, %v3431
        %3433 = vmatprep.mubr.f32.mxu0 0.0
        %3434 = vmatmul.mubr.f32.gmra.mrb[0].mxu0 %v642
        %v3435 = vpop.f32.mrb[0].mxu0
        %v3436 = vadd.f32 %v1905, %v3435
        %v3437 = vpop.f32.mrb[0].mxu0
        %v3438 = vadd.f32 %v1905, %v3437
        %3439 = vmatprep.mubr.f32.mxu0 0.0
        %3440 = vmatmul.mubr.f32.gmra.mrb[0].mxu0 %v643
        %v3441 = vpop.f32.mrb[0].mxu0
        %v3442 = vadd.f32 %v1910, %v3441
        %v3443 = vpop.f32.mrb[0].mxu0
        %v3444 = vadd.f32 %v1910, %v3443
        %3445 = vmatprep.mubr.f32.mxu0 0.0
        %3446 = vmatmul.mubr.f32.gmra.mrb[0].mxu0 %v644
        %v3447 = vpop.f32.mrb[0].mxu0
        %v3448 = vadd.f32 %v1915, %v3447
        %v3449 = vpop.f32.mrb[0].mxu0
        %v3450 = vadd.f32 %v1915, %v3449
        %3451 = vmatprep.mubr.f32.mxu0 0.0
        %3452 = vmatmul.mubr.f32.gmra.mrb[0].mxu0 %v645
        %v3453 = vpop.f32.mrb[0].mxu0
        %v3454 = vadd.f32 %v1920, %v3453
        %v3455 = vpop.f32.mrb[0].mxu0
        %v3456 = vadd.f32 %v1920, %v3455
        %3457 = vmatprep.mubr.f32.mxu0 0.0
        %3458 = vmatmul.mubr.f32.gmra.mrb[0].mxu0 %v646
        %v3459 = vpop.f32.mrb[0].mxu0
        %v3460 = vadd.f32 %v1925, %v3459
        %v3461 = vpop.f32.mrb[0].mxu0
        %v3462 = vadd.f32 %v1925, %v3461
        %3463 = vmatprep.mubr.f32.mxu0 0.0
        %3464 = vmatmul.mubr.f32.gmra.mrb[0].mxu0 %v647
        %v3465 = vpop.f32.mrb[0].mxu0
        %v3466 = vadd.f32 %v1930, %v3465
        %v3467 = vpop.f32.mrb[0].mxu0
        %v3468 = vadd.f32 %v1930, %v3467
        %3469 = vmatprep.mubr.f32.mxu0 0.0
        %3470 = vmatmul.mubr.f32.gmra.mrb[0].mxu0 %v648
        %v3471 = vpop.f32.mrb[0].mxu0
        %v3472 = vadd.f32 %v1935, %v3471
        %v3473 = vpop.f32.mrb[0].mxu0
        %v3474 = vadd.f32 %v1935, %v3473
        %3475 = vmatprep.mubr.f32.mxu0 0.0
        %3476 = vmatmul.mubr.f32.gmra.mrb[0].mxu0 %v649
        %v3477 = vpop.f32.mrb[0].mxu0
        %v3478 = vadd.f32 %v1940, %v3477
        %v3479 = vpop.f32.mrb[0].mxu0
        %v3480 = vadd.f32 %v1940, %v3479
        %3481 = vmatprep.mubr.f32.mxu0 0.0
        %3482 = vmatmul.mubr.f32.gmra.mrb[0].mxu0 %v650
        %v3483 = vpop.f32.mrb[0].mxu0
        %v3484 = vadd.f32 %v1945, %v3483
        %v3485 = vpop.f32.mrb[0].mxu0
        %v3486 = vadd.f32 %v1945, %v3485
        %3487 = vmatprep.mubr.f32.mxu0 0.0
        %3488 = vmatmul.mubr.f32.gmra.mrb[0].mxu0 %v651
        %v3489 = vpop.f32.mrb[0].mxu0
        %v3490 = vadd.f32 %v1950, %v3489
        %v3491 = vpop.f32.mrb[0].mxu0
        %v3492 = vadd.f32 %v1950, %v3491
        %3493 = vmatprep.mubr.f32.mxu0 0.0
        %3494 = vmatmul.mubr.f32.gmra.mrb[0].mxu0 %v652
        %v3495 = vpop.f32.mrb[0].mxu0
        %v3496 = vadd.f32 %v1955, %v3495
        %v3497 = vpop.f32.mrb[0].mxu0
        %v3498 = vadd.f32 %v1955, %v3497
        %3499 = vmatprep.mubr.f32.mxu0 0.0
        %3500 = vmatmul.mubr.f32.gmra.mrb[0].mxu0 %v653
        %v3501 = vpop.f32.mrb[0].mxu0
        %v3502 = vadd.f32 %v1960, %v3501
        %v3503 = vpop.f32.mrb[0].mxu0
        %v3504 = vadd.f32 %v1960, %v3503
        %3505 = vmatprep.mubr.f32.mxu0 0.0
        %3506 = vmatmul.mubr.f32.gmra.mrb[0].mxu0 %v654
        %v3507 = vpop.f32.mrb[0].mxu0
        %v3508 = vadd.f32 %v1965, %v3507
        %v3509 = vpop.f32.mrb[0].mxu0
        %v3510 = vadd.f32 %v1965, %v3509
        %3511 = vmatprep.mubr.f32.mxu0 0.0
        %3512 = vmatmul.mubr.f32.gmra.mrb[0].mxu0 %v655
        %v3513 = vpop.f32.mrb[0].mxu0
        %v3514 = vadd.f32 %v1970, %v3513
        %v3515 = vpop.f32.mrb[0].mxu0
        %v3516 = vadd.f32 %v1970, %v3515
        %3517 = vmatprep.mubr.f32.mxu0 0.0
        %3518 = vmatmul.mubr.f32.gmra.mrb[0].mxu0 %v656
        %v3519 = vpop.f32.mrb[0].mxu0
        %v3520 = vadd.f32 %v1975, %v3519
        %v3521 = vpop.f32.mrb[0].mxu0
        %v3522 = vadd.f32 %v1975, %v3521
        %3523 = vmatprep.mubr.f32.mxu0 0.0
        %3524 = vmatmul.mubr.f32.gmra.mrb[0].mxu0 %v657
        %v3525 = vpop.f32.mrb[0].mxu0
        %v3526 = vadd.f32 %v1980, %v3525
        %v3527 = vpop.f32.mrb[0].mxu0
        %v3528 = vadd.f32 %v1980, %v3527
        %3529 = vmatprep.mubr.f32.mxu0 0.0
        %3530 = vmatmul.mubr.f32.gmra.mrb[0].mxu0 %v658
        %v3531 = vpop.f32.mrb[0].mxu0
        %v3532 = vadd.f32 %v1985, %v3531
        %v3533 = vpop.f32.mrb[0].mxu0
        %v3534 = vadd.f32 %v1985, %v3533
        %3535 = vmatprep.mubr.f32.mxu0 0.0
        %3536 = vmatmul.mubr.f32.gmra.mrb[0].mxu0 %v659
        %v3537 = vpop.f32.mrb[0].mxu0
        %v3538 = vadd.f32 %v1990, %v3537
        %v3539 = vpop.f32.mrb[0].mxu0
        %v3540 = vadd.f32 %v1990, %v3539
        %3541 = vmatprep.mubr.f32.mxu0 0.0
        %3542 = vmatmul.mubr.f32.gmra.mrb[0].mxu0 %v660
        %v3543 = vpop.f32.mrb[0].mxu0
        %v3544 = vadd.f32 %v1995, %v3543
        %v3545 = vpop.f32.mrb[0].mxu0
        %v3546 = vadd.f32 %v1995, %v3545
        %3547 = vmatprep.mubr.f32.mxu0 0.0
        %3548 = vmatmul.mubr.f32.gmra.mrb[0].mxu0 %v661
        %v3549 = vpop.f32.mrb[0].mxu0
        %v3550 = vadd.f32 %v2000, %v3549
        %v3551 = vpop.f32.mrb[0].mxu0
        %v3552 = vadd.f32 %v2000, %v3551
        %3553 = vmatprep.mubr.f32.mxu0 0.0
        %3554 = vmatmul.mubr.f32.gmra.mrb[0].mxu0 %v662
        %v3555 = vpop.f32.mrb[0].mxu0
        %v3556 = vadd.f32 %v2005, %v3555
        %v3557 = vpop.f32.mrb[0].mxu0
        %v3558 = vadd.f32 %v2005, %v3557
        %3559 = vmatprep.mubr.f32.mxu0 0.0
        %3560 = vmatmul.mubr.f32.gmra.mrb[0].mxu0 %v663
        %v3561 = vpop.f32.mrb[0].mxu0
        %v3562 = vadd.f32 %v2010, %v3561
        %v3563 = vpop.f32.mrb[0].mxu0
        %v3564 = vadd.f32 %v2010, %v3563
        %3565 = vmatprep.mubr.f32.mxu0 0.0
        %3566 = vmatmul.mubr.f32.gmra.mrb[0].mxu0 %v664
        %v3567 = vpop.f32.mrb[0].mxu0
        %v3568 = vadd.f32 %v2015, %v3567
        %v3569 = vpop.f32.mrb[0].mxu0
        %v3570 = vadd.f32 %v2015, %v3569
        %3571 = vmatprep.mubr.f32.mxu0 0.0
        %3572 = vmatmul.mubr.f32.gmra.mrb[0].mxu0 %v665
        %v3573 = vpop.f32.mrb[0].mxu0
        %v3574 = vadd.f32 %v2020, %v3573
        %v3575 = vpop.f32.mrb[0].mxu0
        %v3576 = vadd.f32 %v2020, %v3575
        %3577 = vmatprep.mubr.f32.mxu0 0.0
        %3578 = vmatmul.mubr.f32.gmra.mrb[0].mxu0 %v666
        %v3579 = vpop.f32.mrb[0].mxu0
        %v3580 = vadd.f32 %v2025, %v3579
        %v3581 = vpop.f32.mrb[0].mxu0
        %v3582 = vadd.f32 %v2025, %v3581
        %3583 = vmatprep.mubr.f32.mxu0 0.0
        %3584 = vmatmul.mubr.f32.gmra.mrb[0].mxu0 %v667
        %v3585 = vpop.f32.mrb[0].mxu0
        %v3586 = vadd.f32 %v2030, %v3585
        %v3587 = vpop.f32.mrb[0].mxu0
        %v3588 = vadd.f32 %v2030, %v3587
        %3589 = vmatprep.mubr.f32.mxu0 0.0
        %3590 = vmatmul.mubr.f32.gmra.mrb[0].mxu0 %v668
        %v3591 = vpop.f32.mrb[0].mxu0
        %v3592 = vadd.f32 %v2035, %v3591
        %v3593 = vpop.f32.mrb[0].mxu0
        %v3594 = vadd.f32 %v2035, %v3593
        %3595 = vmatprep.mubr.f32.mxu0 0.0
        %3596 = vmatmul.mubr.f32.gmra.mrb[0].mxu0 %v669
        %v3597 = vpop.f32.mrb[0].mxu0
        %v3598 = vadd.f32 %v2040, %v3597
        %v3599 = vpop.f32.mrb[0].mxu0
        %v3600 = vadd.f32 %v2040, %v3599
        %3601 = vmatprep.mubr.f32.mxu0 0.0
        %3602 = vmatmul.mubr.f32.gmra.mrb[0].mxu0 %v670
        %v3603 = vpop.f32.mrb[0].mxu0
        %v3604 = vadd.f32 %v2045, %v3603
        %v3605 = vpop.f32.mrb[0].mxu0
        %v3606 = vadd.f32 %v2045, %v3605
        %3607 = vmatprep.mubr.f32.mxu0 0.0
        %3608 = vmatmul.mubr.f32.gmra.mrb[0].mxu0 %v671
        %v3609 = vpop.f32.mrb[0].mxu0
        %v3610 = vadd.f32 %v2050, %v3609
        %v3611 = vpop.f32.mrb[0].mxu0
        %v3612 = vadd.f32 %v2050, %v3611
        %3613 = vmatprep.mubr.f32.mxu0 0.0
        %3614 = vmatmul.mubr.f32.gmra.mrb[0].mxu0 %v672
        %v3615 = vpop.f32.mrb[0].mxu0
        %v3616 = vadd.f32 %v2055, %v3615
        %v3617 = vpop.f32.mrb[0].mxu0
        %v3618 = vadd.f32 %v2055, %v3617
        %3619 = vmatprep.mubr.f32.mxu0 0.0
        %3620 = vmatmul.mubr.f32.gmra.mrb[0].mxu0 %v673
        %v3621 = vpop.f32.mrb[0].mxu0
        %v3622 = vadd.f32 %v2060, %v3621
        %v3623 = vpop.f32.mrb[0].mxu0
        %v3624 = vadd.f32 %v2060, %v3623
        %3625 = vmatprep.mubr.f32.mxu0 0.0
        %3626 = vmatmul.mubr.f32.gmra.mrb[0].mxu0 %v674
        %v3627 = vpop.f32.mrb[0].mxu0
        %v3628 = vadd.f32 %v2065, %v3627
        %v3629 = vpop.f32.mrb[0].mxu0
        %v3630 = vadd.f32 %v2065, %v3629
        %3631 = vmatprep.mubr.f32.mxu0 0.0
        %3632 = vmatmul.mubr.f32.gmra.mrb[0].mxu0 %v675
        %v3633 = vpop.f32.mrb[0].mxu0
        %v3634 = vadd.f32 %v2070, %v3633
        %v3635 = vpop.f32.mrb[0].mxu0
        %v3636 = vadd.f32 %v2070, %v3635
        %3637 = vmatprep.mubr.f32.mxu0 0.0
        %3638 = vmatmul.mubr.f32.gmra.mrb[0].mxu0 %v676
        %v3639 = vpop.f32.mrb[0].mxu0
        %v3640 = vadd.f32 %v2075, %v3639
        %v3641 = vpop.f32.mrb[0].mxu0
        %v3642 = vadd.f32 %v2075, %v3641
        %3643 = vmatprep.mubr.f32.mxu0 0.0
        %3644 = vmatmul.mubr.f32.gmra.mrb[0].mxu0 %v677
        %v3645 = vpop.f32.mrb[0].mxu0
        %v3646 = vadd.f32 %v2080, %v3645
        %v3647 = vpop.f32.mrb[0].mxu0
        %v3648 = vadd.f32 %v2080, %v3647
        %3649 = vmatprep.mubr.f32.mxu0 0.0
        %3650 = vmatmul.mubr.f32.gmra.mrb[0].mxu0 %v678
        %v3651 = vpop.f32.mrb[0].mxu0
        %v3652 = vadd.f32 %v2085, %v3651
        %v3653 = vpop.f32.mrb[0].mxu0
        %v3654 = vadd.f32 %v2085, %v3653
        %3655 = vmatprep.mubr.f32.mxu0 0.0
        %3656 = vmatmul.mubr.f32.gmra.mrb[0].mxu0 %v679
        %v3657 = vpop.f32.mrb[0].mxu0
        %v3658 = vadd.f32 %v2090, %v3657
        %v3659 = vpop.f32.mrb[0].mxu0
        %v3660 = vadd.f32 %v2090, %v3659
        %3661 = vmatprep.mubr.f32.mxu0 0.0
        %3662 = vmatmul.mubr.f32.gmra.mrb[0].mxu0 %v680
        %v3663 = vpop.f32.mrb[0].mxu0
        %v3664 = vadd.f32 %v2095, %v3663
        %v3665 = vpop.f32.mrb[0].mxu0
        %v3666 = vadd.f32 %v2095, %v3665
        %3667 = vmatprep.mubr.f32.mxu0 0.0
        %3668 = vmatmul.mubr.f32.gmra.mrb[0].mxu0 %v681
        %v3669 = vpop.f32.mrb[0].mxu0
        %v3670 = vadd.f32 %v2100, %v3669
        %v3671 = vpop.f32.mrb[0].mxu0
        %v3672 = vadd.f32 %v2100, %v3671
        %3673 = vmatprep.mubr.f32.mxu0 0.0
        %3674 = vmatmul.mubr.f32.gmra.mrb[0].mxu0 %v682
        %v3675 = vpop.f32.mrb[0].mxu0
        %v3676 = vadd.f32 %v2105, %v3675
        %v3677 = vpop.f32.mrb[0].mxu0
        %v3678 = vadd.f32 %v2105, %v3677
        %3679 = vmatprep.mubr.f32.mxu0 0.0
        %3680 = vmatmul.mubr.f32.gmra.mrb[0].mxu0 %v683
        %v3681 = vpop.f32.mrb[0].mxu0
        %v3682 = vadd.f32 %v2110, %v3681
        %v3683 = vpop.f32.mrb[0].mxu0
        %v3684 = vadd.f32 %v2110, %v3683
        %3685 = vmatprep.mubr.f32.mxu0 0.0
        %3686 = vmatmul.mubr.f32.gmra.mrb[0].mxu0 %v684
        %v3687 = vpop.f32.mrb[0].mxu0
        %v3688 = vadd.f32 %v2115, %v3687
        %v3689 = vpop.f32.mrb[0].mxu0
        %v3690 = vadd.f32 %v2115, %v3689
        %3691 = vmatprep.mubr.f32.mxu0 0.0
        %3692 = vmatmul.mubr.f32.gmra.mrb[0].mxu0 %v685
        %v3693 = vpop.f32.mrb[0].mxu0
        %v3694 = vadd.f32 %v2120, %v3693
        %v3695 = vpop.f32.mrb[0].mxu0
        %v3696 = vadd.f32 %v2120, %v3695
        %3697 = vmatprep.mubr.f32.mxu0 0.0
        %3698 = vmatmul.mubr.f32.gmra.mrb[0].mxu0 %v686
        %v3699 = vpop.f32.mrb[0].mxu0
        %v3700 = vadd.f32 %v2125, %v3699
        %v3701 = vpop.f32.mrb[0].mxu0
        %v3702 = vadd.f32 %v2125, %v3701
        %3703 = vmatprep.mubr.f32.mxu0 0.0
        %3704 = vmatmul.mubr.f32.gmra.mrb[0].mxu0 %v687
        %v3705 = vpop.f32.mrb[0].mxu0
        %v3706 = vadd.f32 %v2130, %v3705
        %v3707 = vpop.f32.mrb[0].mxu0
        %v3708 = vadd.f32 %v2130, %v3707
        %3709 = vmatprep.mubr.f32.mxu0 0.0
        %3710 = vmatmul.mubr.f32.gmra.mrb[0].mxu0 %v688
        %v3711 = vpop.f32.mrb[0].mxu0
        %v3712 = vadd.f32 %v2135, %v3711
        %v3713 = vpop.f32.mrb[0].mxu0
        %v3714 = vadd.f32 %v2135, %v3713
        %3715 = vmatprep.mubr.f32.mxu0 0.0
        %3716 = vmatmul.mubr.f32.gmra.mrb[0].mxu0 %v689
        %v3717 = vpop.f32.mrb[0].mxu0
        %v3718 = vadd.f32 %v2140, %v3717
        %v3719 = vpop.f32.mrb[0].mxu0
        %v3720 = vadd.f32 %v2140, %v3719
        %3721 = vmatprep.mubr.f32.mxu0 0.0
        %3722 = vmatmul.mubr.f32.gmra.mrb[0].mxu0 %v690
        %v3723 = vpop.f32.mrb[0].mxu0
        %v3724 = vadd.f32 %v2145, %v3723
        %v3725 = vpop.f32.mrb[0].mxu0
        %v3726 = vadd.f32 %v2145, %v3725
        %3727 = vmatprep.mubr.f32.mxu0 0.0
        %3728 = vmatmul.mubr.f32.gmra.mrb[0].mxu0 %v691
        %v3729 = vpop.f32.mrb[0].mxu0
        %v3730 = vadd.f32 %v2150, %v3729
        %v3731 = vpop.f32.mrb[0].mxu0
        %v3732 = vadd.f32 %v2150, %v3731
        %3733 = vmatprep.mubr.f32.mxu0 0.0
        %3734 = vmatmul.mubr.f32.gmra.mrb[0].mxu0 %v692
        %v3735 = vpop.f32.mrb[0].mxu0
        %v3736 = vadd.f32 %v2155, %v3735
        %v3737 = vpop.f32.mrb[0].mxu0
        %v3738 = vadd.f32 %v2155, %v3737
        %3739 = vmatprep.mubr.f32.mxu0 0.0
        %3740 = vmatmul.mubr.f32.gmra.mrb[0].mxu0 %v693
        %v3741 = vpop.f32.mrb[0].mxu0
        %v3742 = vadd.f32 %v2160, %v3741
        %v3743 = vpop.f32.mrb[0].mxu0
        %v3744 = vadd.f32 %v2160, %v3743
        %3745 = vmatprep.mubr.f32.mxu0 0.0
        %3746 = vmatmul.mubr.f32.gmra.mrb[0].mxu0 %v694
        %v3747 = vpop.f32.mrb[0].mxu0
        %v3748 = vadd.f32 %v2165, %v3747
        %v3749 = vpop.f32.mrb[0].mxu0
        %v3750 = vadd.f32 %v2165, %v3749
        %3751 = vmatprep.mubr.f32.mxu0 0.0
        %3752 = vmatmul.mubr.f32.gmra.mrb[0].mxu0 %v695
        %v3753 = vpop.f32.mrb[0].mxu0
        %v3754 = vadd.f32 %v2170, %v3753
        %v3755 = vpop.f32.mrb[0].mxu0
        %v3756 = vadd.f32 %v2170, %v3755
        %3757 = vmatprep.mubr.f32.mxu0 0.0
        %3758 = vmatmul.mubr.f32.gmra.mrb[0].mxu0 %v696
        %v3759 = vpop.f32.mrb[0].mxu0
        %v3760 = vadd.f32 %v2175, %v3759
        %v3761 = vpop.f32.mrb[0].mxu0
        %v3762 = vadd.f32 %v2175, %v3761
        %3763 = vmatprep.mubr.f32.mxu0 0.0
        %3764 = vmatmul.mubr.f32.gmra.mrb[0].mxu0 %v697
        %v3765 = vpop.f32.mrb[0].mxu0
        %v3766 = vadd.f32 %v2180, %v3765
        %v3767 = vpop.f32.mrb[0].mxu0
        %v3768 = vadd.f32 %v2180, %v3767
        %3769 = vmatprep.mubr.f32.mxu0 0.0
        %3770 = vmatmul.mubr.f32.gmra.mrb[0].mxu0 %v698
        %v3771 = vpop.f32.mrb[0].mxu0
        %v3772 = vadd.f32 %v2185, %v3771
        %v3773 = vpop.f32.mrb[0].mxu0
        %v3774 = vadd.f32 %v2185, %v3773
        %3775 = vmatprep.mubr.f32.mxu0 0.0
        %3776 = vmatmul.mubr.f32.gmra.mrb[0].mxu0 %v699
        %v3777 = vpop.f32.mrb[0].mxu0
        %v3778 = vadd.f32 %v2190, %v3777
        %v3779 = vpop.f32.mrb[0].mxu0
        %v3780 = vadd.f32 %v2190, %v3779
        %3781 = vmatprep.mubr.f32.mxu0 0.0
        %3782 = vmatmul.mubr.f32.gmra.mrb[0].mxu0 %v700
        %v3783 = vpop.f32.mrb[0].mxu0
        %v3784 = vadd.f32 %v2195, %v3783
        %v3785 = vpop.f32.mrb[0].mxu0
        %v3786 = vadd.f32 %v2195, %v3785
        %3787 = vmatprep.mubr.f32.mxu0 0.0
        %3788 = vmatmul.mubr.f32.gmra.mrb[0].mxu0 %v701
        %v3789 = vpop.f32.mrb[0].mxu0
        %v3790 = vadd.f32 %v2200, %v3789
        %v3791 = vpop.f32.mrb[0].mxu0
        %v3792 = vadd.f32 %v2200, %v3791
        %3793 = vmatprep.mubr.f32.mxu0 0.0
        %3794 = vmatmul.mubr.f32.gmra.mrb[0].mxu0 %v702
        %v3795 = vpop.f32.mrb[0].mxu0
        %v3796 = vadd.f32 %v2205, %v3795
        %v3797 = vpop.f32.mrb[0].mxu0
        %v3798 = vadd.f32 %v2205, %v3797
        %3799 = vmatprep.mubr.f32.mxu0 0.0
        %3800 = vmatmul.mubr.f32.gmra.mrb[0].mxu0 %v703
        %v3801 = vpop.f32.mrb[0].mxu0
        %v3802 = vadd.f32 %v2210, %v3801
        %v3803 = vpop.f32.mrb[0].mxu0
        %v3804 = vadd.f32 %v2210, %v3803
        %3805 = vmatprep.mubr.f32.mxu0 0.0
        %3806 = vmatmul.mubr.f32.gmra.mrb[0].mxu0 %v704
        %v3807 = vpop.f32.mrb[0].mxu0
        %v3808 = vadd.f32 %v2215, %v3807
        %v3809 = vpop.f32.mrb[0].mxu0
        %v3810 = vadd.f32 %v2215, %v3809
        %3811 = vmatprep.mubr.f32.mxu0 0.0
        %3812 = vmatmul.mubr.f32.gmra.mrb[0].mxu0 %v705
        %v3813 = vpop.f32.mrb[0].mxu0
        %v3814 = vadd.f32 %v2220, %v3813
        %v3815 = vpop.f32.mrb[0].mxu0
        %v3816 = vadd.f32 %v2220, %v3815
        %3817 = vmatprep.mubr.f32.mxu0 0.0
        %3818 = vmatmul.mubr.f32.gmra.mrb[0].mxu0 %v706
        %v3819 = vpop.f32.mrb[0].mxu0
        %v3820 = vadd.f32 %v2225, %v3819
        %v3821 = vpop.f32.mrb[0].mxu0
        %v3822 = vadd.f32 %v2225, %v3821
        %3823 = vmatprep.mubr.f32.mxu0 0.0
        %3824 = vmatmul.mubr.f32.gmra.mrb[0].mxu0 %v707
        %v3825 = vpop.f32.mrb[0].mxu0
        %v3826 = vadd.f32 %v2230, %v3825
        %v3827 = vpop.f32.mrb[0].mxu0
        %v3828 = vadd.f32 %v2230, %v3827
        %3829 = vmatprep.mubr.f32.mxu0 0.0
        %3830 = vmatmul.mubr.f32.gmra.mrb[0].mxu0 %v708
        %v3831 = vpop.f32.mrb[0].mxu0
        %v3832 = vadd.f32 %v2235, %v3831
        %v3833 = vpop.f32.mrb[0].mxu0
        %v3834 = vadd.f32 %v2235, %v3833
        %3835 = vmatprep.mubr.f32.mxu0 0.0
        %3836 = vmatmul.mubr.f32.gmra.mrb[0].mxu0 %v709
        %v3837 = vpop.f32.mrb[0].mxu0
        %v3838 = vadd.f32 %v2240, %v3837
        %v3839 = vpop.f32.mrb[0].mxu0
        %v3840 = vadd.f32 %v2240, %v3839
        %3841 = vmatprep.mubr.f32.mxu0 0.0
        %3842 = vmatmul.mubr.f32.gmra.mrb[0].mxu0 %v710
        %v3843 = vpop.f32.mrb[0].mxu0
        %v3844 = vadd.f32 %v2245, %v3843
        %v3845 = vpop.f32.mrb[0].mxu0
        %v3846 = vadd.f32 %v2245, %v3845
        %3847 = vdwg.mxu0
        %3848 = vmatprep.subr.mxu0 %v394
        %3849 = vmatpush1.msra.mxu0 %v393
        %3850 = vmatprep.subr.mxu0 %v398
        %3851 = vmatpush1.msra.mxu0 %v397
        %3852 = vmatprep.subr.mxu0 %v402
        %3853 = vmatpush1.msra.mxu0 %v401
        %3854 = vmatprep.subr.mxu0 %v406
        %3855 = vmatpush1.msra.mxu0 %v405
        %3856 = vmatprep.subr.mxu0 %v410
        %3857 = vmatpush1.msra.mxu0 %v409
        %3858 = vmatprep.subr.mxu0 %v414
        %3859 = vmatpush1.msra.mxu0 %v413
        %3860 = vmatprep.subr.mxu0 %v418
        %3861 = vmatpush1.msra.mxu0 %v417
        %3862 = vmatprep.subr.mxu0 %v422
        %3863 = vmatpush1.msra.mxu0 %v421
        %3864 = vmatprep.subr.mxu0 %v426
        %3865 = vmatpush1.msra.mxu0 %v425
        %3866 = vmatprep.subr.mxu0 %v430
        %3867 = vmatpush1.msra.mxu0 %v429
        %3868 = vmatprep.subr.mxu0 %v434
        %3869 = vmatpush1.msra.mxu0 %v433
        %3870 = vmatprep.subr.mxu0 %v438
        %3871 = vmatpush1.msra.mxu0 %v437
        %3872 = vmatprep.subr.mxu0 %v442
        %3873 = vmatpush1.msra.mxu0 %v441
        %3874 = vmatprep.subr.mxu0 %v446
        %3875 = vmatpush1.msra.mxu0 %v445
        %3876 = vmatprep.subr.mxu0 %v450
        %3877 = vmatpush1.msra.mxu0 %v449
        %3878 = vmatprep.subr.mxu0 %v454
        %3879 = vmatpush1.msra.mxu0 %v453
        %3880 = vmatprep.subr.mxu0 0.0
        %3881 = vmatpush1.msra.mxu0 0.0
        %3882 = vmatprep.subr.mxu0 0.0
        %3883 = vmatpush1.msra.mxu0 0.0
        %3884 = vmatprep.subr.mxu0 0.0
        %3885 = vmatpush1.msra.mxu0 0.0
        %3886 = vmatprep.subr.mxu0 0.0
        %3887 = vmatpush1.msra.mxu0 0.0
        %3888 = vmatprep.subr.mxu0 0.0
        %3889 = vmatpush1.msra.mxu0 0.0
        %3890 = vmatprep.subr.mxu0 0.0
        %3891 = vmatpush1.msra.mxu0 0.0
        %3892 = vmatprep.subr.mxu0 0.0
        %3893 = vmatpush1.msra.mxu0 0.0
        %3894 = vmatprep.subr.mxu0 0.0
        %3895 = vmatpush1.msra.mxu0 0.0
        %3896 = vmatprep.subr.mxu0 0.0
        %3897 = vmatpush1.msra.mxu0 0.0
        %3898 = vmatprep.subr.mxu0 0.0
        %3899 = vmatpush1.msra.mxu0 0.0
        %3900 = vmatprep.subr.mxu0 0.0
        %3901 = vmatpush1.msra.mxu0 0.0
        %3902 = vmatprep.subr.mxu0 0.0
        %3903 = vmatpush1.msra.mxu0 0.0
        %3904 = vmatprep.subr.mxu0 0.0
        %3905 = vmatpush1.msra.mxu0 0.0
        %3906 = vmatprep.subr.mxu0 0.0
        %3907 = vmatpush1.msra.mxu0 0.0
        %3908 = vmatprep.subr.mxu0 0.0
        %3909 = vmatpush1.msra.mxu0 0.0
        %3910 = vmatprep.subr.mxu0 0.0
        %3911 = vmatpush1.msra.mxu0 0.0
        %3912 = vmatprep.mubr.f32.mxu0 0.0
        %3913 = vmatmul.mubr.f32.gmra.mrb[0].mxu0 %v455
        %v3914 = vpop.f32.mrb[0].mxu0
        %v3915 = vadd.f32 %v970, %v3914
        %v3916 = vpop.f32.mrb[0].mxu0
        %v3917 = vadd.f32 %v970, %v3916
        %3918 = vmatprep.mubr.f32.mxu0 0.0
        %3919 = vmatmul.mubr.f32.gmra.mrb[0].mxu0 %v456
        %v3920 = vpop.f32.mrb[0].mxu0
        %v3921 = vadd.f32 %v975, %v3920
        %v3922 = vpop.f32.mrb[0].mxu0
        %v3923 = vadd.f32 %v975, %v3922
        %3924 = vmatprep.mubr.f32.mxu0 0.0
        %3925 = vmatmul.mubr.f32.gmra.mrb[0].mxu0 %v457
        %v3926 = vpop.f32.mrb[0].mxu0
        %v3927 = vadd.f32 %v980, %v3926
        %v3928 = vpop.f32.mrb[0].mxu0
        %v3929 = vadd.f32 %v980, %v3928
        %3930 = vmatprep.mubr.f32.mxu0 0.0
        %3931 = vmatmul.mubr.f32.gmra.mrb[0].mxu0 %v458
        %v3932 = vpop.f32.mrb[0].mxu0
        %v3933 = vadd.f32 %v985, %v3932
        %v3934 = vpop.f32.mrb[0].mxu0
        %v3935 = vadd.f32 %v985, %v3934
        %3936 = vmatprep.mubr.f32.mxu0 0.0
        %3937 = vmatmul.mubr.f32.gmra.mrb[0].mxu0 %v459
        %v3938 = vpop.f32.mrb[0].mxu0
        %v3939 = vadd.f32 %v990, %v3938
        %v3940 = vpop.f32.mrb[0].mxu0
        %v3941 = vadd.f32 %v990, %v3940
        %3942 = vmatprep.mubr.f32.mxu0 0.0
        %3943 = vmatmul.mubr.f32.gmra.mrb[0].mxu0 %v460
        %v3944 = vpop.f32.mrb[0].mxu0
        %v3945 = vadd.f32 %v995, %v3944
        %v3946 = vpop.f32.mrb[0].mxu0
        %v3947 = vadd.f32 %v995, %v3946
        %3948 = vmatprep.mubr.f32.mxu0 0.0
        %3949 = vmatmul.mubr.f32.gmra.mrb[0].mxu0 %v461
        %v3950 = vpop.f32.mrb[0].mxu0
        %v3951 = vadd.f32 %v1000, %v3950
        %v3952 = vpop.f32.mrb[0].mxu0
        %v3953 = vadd.f32 %v1000, %v3952
        %3954 = vmatprep.mubr.f32.mxu0 0.0
        %3955 = vmatmul.mubr.f32.gmra.mrb[0].mxu0 %v462
        %v3956 = vpop.f32.mrb[0].mxu0
        %v3957 = vadd.f32 %v1005, %v3956
        %v3958 = vpop.f32.mrb[0].mxu0
        %v3959 = vadd.f32 %v1005, %v3958
        %3960 = vmatprep.mubr.f32.mxu0 0.0
        %3961 = vmatmul.mubr.f32.gmra.mrb[0].mxu0 %v463
        %v3962 = vpop.f32.mrb[0].mxu0
        %v3963 = vadd.f32 %v1010, %v3962
        %v3964 = vpop.f32.mrb[0].mxu0
        %v3965 = vadd.f32 %v1010, %v3964
        %3966 = vmatprep.mubr.f32.mxu0 0.0
        %3967 = vmatmul.mubr.f32.gmra.mrb[0].mxu0 %v464
        %v3968 = vpop.f32.mrb[0].mxu0
        %v3969 = vadd.f32 %v1015, %v3968
        %v3970 = vpop.f32.mrb[0].mxu0
        %v3971 = vadd.f32 %v1015, %v3970
        %3972 = vmatprep.mubr.f32.mxu0 0.0
        %3973 = vmatmul.mubr.f32.gmra.mrb[0].mxu0 %v465
        %v3974 = vpop.f32.mrb[0].mxu0
        %v3975 = vadd.f32 %v1020, %v3974
        %v3976 = vpop.f32.mrb[0].mxu0
        %v3977 = vadd.f32 %v1020, %v3976
        %3978 = vmatprep.mubr.f32.mxu0 0.0
        %3979 = vmatmul.mubr.f32.gmra.mrb[0].mxu0 %v466
        %v3980 = vpop.f32.mrb[0].mxu0
        %v3981 = vadd.f32 %v1025, %v3980
        %v3982 = vpop.f32.mrb[0].mxu0
        %v3983 = vadd.f32 %v1025, %v3982
        %3984 = vmatprep.mubr.f32.mxu0 0.0
        %3985 = vmatmul.mubr.f32.gmra.mrb[0].mxu0 %v467
        %v3986 = vpop.f32.mrb[0].mxu0
        %v3987 = vadd.f32 %v1030, %v3986
        %v3988 = vpop.f32.mrb[0].mxu0
        %v3989 = vadd.f32 %v1030, %v3988
        %3990 = vmatprep.mubr.f32.mxu0 0.0
        %3991 = vmatmul.mubr.f32.gmra.mrb[0].mxu0 %v468
        %v3992 = vpop.f32.mrb[0].mxu0
        %v3993 = vadd.f32 %v1035, %v3992
        %v3994 = vpop.f32.mrb[0].mxu0
        %v3995 = vadd.f32 %v1035, %v3994
        %3996 = vmatprep.mubr.f32.mxu0 0.0
        %3997 = vmatmul.mubr.f32.gmra.mrb[0].mxu0 %v469
        %v3998 = vpop.f32.mrb[0].mxu0
        %v3999 = vadd.f32 %v1040, %v3998
        %v4000 = vpop.f32.mrb[0].mxu0
        %v4001 = vadd.f32 %v1040, %v4000
        %4002 = vmatprep.mubr.f32.mxu0 0.0
        %4003 = vmatmul.mubr.f32.gmra.mrb[0].mxu0 %v470
        %v4004 = vpop.f32.mrb[0].mxu0
        %v4005 = vadd.f32 %v1045, %v4004
        %v4006 = vpop.f32.mrb[0].mxu0
        %v4007 = vadd.f32 %v1045, %v4006
        %4008 = vmatprep.mubr.f32.mxu0 0.0
        %4009 = vmatmul.mubr.f32.gmra.mrb[0].mxu0 %v471
        %v4010 = vpop.f32.mrb[0].mxu0
        %v4011 = vadd.f32 %v1050, %v4010
        %v4012 = vpop.f32.mrb[0].mxu0
        %v4013 = vadd.f32 %v1050, %v4012
        %4014 = vmatprep.mubr.f32.mxu0 0.0
        %4015 = vmatmul.mubr.f32.gmra.mrb[0].mxu0 %v472
        %v4016 = vpop.f32.mrb[0].mxu0
        %v4017 = vadd.f32 %v1055, %v4016
        %v4018 = vpop.f32.mrb[0].mxu0
        %v4019 = vadd.f32 %v1055, %v4018
        %4020 = vmatprep.mubr.f32.mxu0 0.0
        %4021 = vmatmul.mubr.f32.gmra.mrb[0].mxu0 %v473
        %v4022 = vpop.f32.mrb[0].mxu0
        %v4023 = vadd.f32 %v1060, %v4022
        %v4024 = vpop.f32.mrb[0].mxu0
        %v4025 = vadd.f32 %v1060, %v4024
        %4026 = vmatprep.mubr.f32.mxu0 0.0
        %4027 = vmatmul.mubr.f32.gmra.mrb[0].mxu0 %v474
        %v4028 = vpop.f32.mrb[0].mxu0
        %v4029 = vadd.f32 %v1065, %v4028
        %v4030 = vpop.f32.mrb[0].mxu0
        %v4031 = vadd.f32 %v1065, %v4030
        %4032 = vmatprep.mubr.f32.mxu0 0.0
        %4033 = vmatmul.mubr.f32.gmra.mrb[0].mxu0 %v475
        %v4034 = vpop.f32.mrb[0].mxu0
        %v4035 = vadd.f32 %v1070, %v4034
        %v4036 = vpop.f32.mrb[0].mxu0
        %v4037 = vadd.f32 %v1070, %v4036
        %4038 = vmatprep.mubr.f32.mxu0 0.0
        %4039 = vmatmul.mubr.f32.gmra.mrb[0].mxu0 %v476
        %v4040 = vpop.f32.mrb[0].mxu0
        %v4041 = vadd.f32 %v1075, %v4040
        %v4042 = vpop.f32.mrb[0].mxu0
        %v4043 = vadd.f32 %v1075, %v4042
        %4044 = vmatprep.mubr.f32.mxu0 0.0
        %4045 = vmatmul.mubr.f32.gmra.mrb[0].mxu0 %v477
        %v4046 = vpop.f32.mrb[0].mxu0
        %v4047 = vadd.f32 %v1080, %v4046
        %v4048 = vpop.f32.mrb[0].mxu0
        %v4049 = vadd.f32 %v1080, %v4048
        %4050 = vmatprep.mubr.f32.mxu0 0.0
        %4051 = vmatmul.mubr.f32.gmra.mrb[0].mxu0 %v478
        %v4052 = vpop.f32.mrb[0].mxu0
        %v4053 = vadd.f32 %v1085, %v4052
        %v4054 = vpop.f32.mrb[0].mxu0
        %v4055 = vadd.f32 %v1085, %v4054
        %4056 = vmatprep.mubr.f32.mxu0 0.0
        %4057 = vmatmul.mubr.f32.gmra.mrb[0].mxu0 %v479
        %v4058 = vpop.f32.mrb[0].mxu0
        %v4059 = vadd.f32 %v1090, %v4058
        %v4060 = vpop.f32.mrb[0].mxu0
        %v4061 = vadd.f32 %v1090, %v4060
        %4062 = vmatprep.mubr.f32.mxu0 0.0
        %4063 = vmatmul.mubr.f32.gmra.mrb[0].mxu0 %v480
        %v4064 = vpop.f32.mrb[0].mxu0
        %v4065 = vadd.f32 %v1095, %v4064
        %v4066 = vpop.f32.mrb[0].mxu0
        %v4067 = vadd.f32 %v1095, %v4066
        %4068 = vmatprep.mubr.f32.mxu0 0.0
        %4069 = vmatmul.mubr.f32.gmra.mrb[0].mxu0 %v481
        %v4070 = vpop.f32.mrb[0].mxu0
        %v4071 = vadd.f32 %v1100, %v4070
        %v4072 = vpop.f32.mrb[0].mxu0
        %v4073 = vadd.f32 %v1100, %v4072
        %4074 = vmatprep.mubr.f32.mxu0 0.0
        %4075 = vmatmul.mubr.f32.gmra.mrb[0].mxu0 %v482
        %v4076 = vpop.f32.mrb[0].mxu0
        %v4077 = vadd.f32 %v1105, %v4076
        %v4078 = vpop.f32.mrb[0].mxu0
        %v4079 = vadd.f32 %v1105, %v4078
        %4080 = vmatprep.mubr.f32.mxu0 0.0
        %4081 = vmatmul.mubr.f32.gmra.mrb[0].mxu0 %v483
        %v4082 = vpop.f32.mrb[0].mxu0
        %v4083 = vadd.f32 %v1110, %v4082
        %v4084 = vpop.f32.mrb[0].mxu0
        %v4085 = vadd.f32 %v1110, %v4084
        %4086 = vmatprep.mubr.f32.mxu0 0.0
        %4087 = vmatmul.mubr.f32.gmra.mrb[0].mxu0 %v484
        %v4088 = vpop.f32.mrb[0].mxu0
        %v4089 = vadd.f32 %v1115, %v4088
        %v4090 = vpop.f32.mrb[0].mxu0
        %v4091 = vadd.f32 %v1115, %v4090
        %4092 = vmatprep.mubr.f32.mxu0 0.0
        %4093 = vmatmul.mubr.f32.gmra.mrb[0].mxu0 %v485
        %v4094 = vpop.f32.mrb[0].mxu0
        %v4095 = vadd.f32 %v1120, %v4094
        %v4096 = vpop.f32.mrb[0].mxu0
        %v4097 = vadd.f32 %v1120, %v4096
        %4098 = vmatprep.mubr.f32.mxu0 0.0
        %4099 = vmatmul.mubr.f32.gmra.mrb[0].mxu0 %v486
        %v4100 = vpop.f32.mrb[0].mxu0
        %v4101 = vadd.f32 %v1125, %v4100
        %v4102 = vpop.f32.mrb[0].mxu0
        %v4103 = vadd.f32 %v1125, %v4102
        %4104 = vmatprep.mubr.f32.mxu0 0.0
        %4105 = vmatmul.mubr.f32.gmra.mrb[0].mxu0 %v487
        %v4106 = vpop.f32.mrb[0].mxu0
        %v4107 = vadd.f32 %v1130, %v4106
        %v4108 = vpop.f32.mrb[0].mxu0
        %v4109 = vadd.f32 %v1130, %v4108
        %4110 = vmatprep.mubr.f32.mxu0 0.0
        %4111 = vmatmul.mubr.f32.gmra.mrb[0].mxu0 %v488
        %v4112 = vpop.f32.mrb[0].mxu0
        %v4113 = vadd.f32 %v1135, %v4112
        %v4114 = vpop.f32.mrb[0].mxu0
        %v4115 = vadd.f32 %v1135, %v4114
        %4116 = vmatprep.mubr.f32.mxu0 0.0
        %4117 = vmatmul.mubr.f32.gmra.mrb[0].mxu0 %v489
        %v4118 = vpop.f32.mrb[0].mxu0
        %v4119 = vadd.f32 %v1140, %v4118
        %v4120 = vpop.f32.mrb[0].mxu0
        %v4121 = vadd.f32 %v1140, %v4120
        %4122 = vmatprep.mubr.f32.mxu0 0.0
        %4123 = vmatmul.mubr.f32.gmra.mrb[0].mxu0 %v490
        %v4124 = vpop.f32.mrb[0].mxu0
        %v4125 = vadd.f32 %v1145, %v4124
        %v4126 = vpop.f32.mrb[0].mxu0
        %v4127 = vadd.f32 %v1145, %v4126
        %4128 = vmatprep.mubr.f32.mxu0 0.0
        %4129 = vmatmul.mubr.f32.gmra.mrb[0].mxu0 %v491
        %v4130 = vpop.f32.mrb[0].mxu0
        %v4131 = vadd.f32 %v1150, %v4130
        %v4132 = vpop.f32.mrb[0].mxu0
        %v4133 = vadd.f32 %v1150, %v4132
        %4134 = vmatprep.mubr.f32.mxu0 0.0
        %4135 = vmatmul.mubr.f32.gmra.mrb[0].mxu0 %v492
        %v4136 = vpop.f32.mrb[0].mxu0
        %v4137 = vadd.f32 %v1155, %v4136
        %v4138 = vpop.f32.mrb[0].mxu0
        %v4139 = vadd.f32 %v1155, %v4138
        %4140 = vmatprep.mubr.f32.mxu0 0.0
        %4141 = vmatmul.mubr.f32.gmra.mrb[0].mxu0 %v493
        %v4142 = vpop.f32.mrb[0].mxu0
        %v4143 = vadd.f32 %v1160, %v4142
        %v4144 = vpop.f32.mrb[0].mxu0
        %v4145 = vadd.f32 %v1160, %v4144
        %4146 = vmatprep.mubr.f32.mxu0 0.0
        %4147 = vmatmul.mubr.f32.gmra.mrb[0].mxu0 %v494
        %v4148 = vpop.f32.mrb[0].mxu0
        %v4149 = vadd.f32 %v1165, %v4148
        %v4150 = vpop.f32.mrb[0].mxu0
        %v4151 = vadd.f32 %v1165, %v4150
        %4152 = vmatprep.mubr.f32.mxu0 0.0
        %4153 = vmatmul.mubr.f32.gmra.mrb[0].mxu0 %v495
        %v4154 = vpop.f32.mrb[0].mxu0
        %v4155 = vadd.f32 %v1170, %v4154
        %v4156 = vpop.f32.mrb[0].mxu0
        %v4157 = vadd.f32 %v1170, %v4156
        %4158 = vmatprep.mubr.f32.mxu0 0.0
        %4159 = vmatmul.mubr.f32.gmra.mrb[0].mxu0 %v496
        %v4160 = vpop.f32.mrb[0].mxu0
        %v4161 = vadd.f32 %v1175, %v4160
        %v4162 = vpop.f32.mrb[0].mxu0
        %v4163 = vadd.f32 %v1175, %v4162
        %4164 = vmatprep.mubr.f32.mxu0 0.0
        %4165 = vmatmul.mubr.f32.gmra.mrb[0].mxu0 %v497
        %v4166 = vpop.f32.mrb[0].mxu0
        %v4167 = vadd.f32 %v1180, %v4166
        %v4168 = vpop.f32.mrb[0].mxu0
        %v4169 = vadd.f32 %v1180, %v4168
        %4170 = vmatprep.mubr.f32.mxu0 0.0
        %4171 = vmatmul.mubr.f32.gmra.mrb[0].mxu0 %v498
        %v4172 = vpop.f32.mrb[0].mxu0
        %v4173 = vadd.f32 %v1185, %v4172
        %v4174 = vpop.f32.mrb[0].mxu0
        %v4175 = vadd.f32 %v1185, %v4174
        %4176 = vmatprep.mubr.f32.mxu0 0.0
        %4177 = vmatmul.mubr.f32.gmra.mrb[0].mxu0 %v499
        %v4178 = vpop.f32.mrb[0].mxu0
        %v4179 = vadd.f32 %v1190, %v4178
        %v4180 = vpop.f32.mrb[0].mxu0
        %v4181 = vadd.f32 %v1190, %v4180
        %4182 = vmatprep.mubr.f32.mxu0 0.0
        %4183 = vmatmul.mubr.f32.gmra.mrb[0].mxu0 %v500
        %v4184 = vpop.f32.mrb[0].mxu0
        %v4185 = vadd.f32 %v1195, %v4184
        %v4186 = vpop.f32.mrb[0].mxu0
        %v4187 = vadd.f32 %v1195, %v4186
        %4188 = vmatprep.mubr.f32.mxu0 0.0
        %4189 = vmatmul.mubr.f32.gmra.mrb[0].mxu0 %v501
        %v4190 = vpop.f32.mrb[0].mxu0
        %v4191 = vadd.f32 %v1200, %v4190
        %v4192 = vpop.f32.mrb[0].mxu0
        %v4193 = vadd.f32 %v1200, %v4192
        %4194 = vmatprep.mubr.f32.mxu0 0.0
        %4195 = vmatmul.mubr.f32.gmra.mrb[0].mxu0 %v502
        %v4196 = vpop.f32.mrb[0].mxu0
        %v4197 = vadd.f32 %v1205, %v4196
        %v4198 = vpop.f32.mrb[0].mxu0
        %v4199 = vadd.f32 %v1205, %v4198
        %4200 = vmatprep.mubr.f32.mxu0 0.0
        %4201 = vmatmul.mubr.f32.gmra.mrb[0].mxu0 %v503
        %v4202 = vpop.f32.mrb[0].mxu0
        %v4203 = vadd.f32 %v1210, %v4202
        %v4204 = vpop.f32.mrb[0].mxu0
        %v4205 = vadd.f32 %v1210, %v4204
        %4206 = vmatprep.mubr.f32.mxu0 0.0
        %4207 = vmatmul.mubr.f32.gmra.mrb[0].mxu0 %v504
        %v4208 = vpop.f32.mrb[0].mxu0
        %v4209 = vadd.f32 %v1215, %v4208
        %v4210 = vpop.f32.mrb[0].mxu0
        %v4211 = vadd.f32 %v1215, %v4210
        %4212 = vmatprep.mubr.f32.mxu0 0.0
        %4213 = vmatmul.mubr.f32.gmra.mrb[0].mxu0 %v505
        %v4214 = vpop.f32.mrb[0].mxu0
        %v4215 = vadd.f32 %v1220, %v4214
        %v4216 = vpop.f32.mrb[0].mxu0
        %v4217 = vadd.f32 %v1220, %v4216
        %4218 = vmatprep.mubr.f32.mxu0 0.0
        %4219 = vmatmul.mubr.f32.gmra.mrb[0].mxu0 %v506
        %v4220 = vpop.f32.mrb[0].mxu0
        %v4221 = vadd.f32 %v1225, %v4220
        %v4222 = vpop.f32.mrb[0].mxu0
        %v4223 = vadd.f32 %v1225, %v4222
        %4224 = vmatprep.mubr.f32.mxu0 0.0
        %4225 = vmatmul.mubr.f32.gmra.mrb[0].mxu0 %v507
        %v4226 = vpop.f32.mrb[0].mxu0
        %v4227 = vadd.f32 %v1230, %v4226
        %v4228 = vpop.f32.mrb[0].mxu0
        %v4229 = vadd.f32 %v1230, %v4228
        %4230 = vmatprep.mubr.f32.mxu0 0.0
        %4231 = vmatmul.mubr.f32.gmra.mrb[0].mxu0 %v508
        %v4232 = vpop.f32.mrb[0].mxu0
        %v4233 = vadd.f32 %v1235, %v4232
        %v4234 = vpop.f32.mrb[0].mxu0
        %v4235 = vadd.f32 %v1235, %v4234
        %4236 = vmatprep.mubr.f32.mxu0 0.0
        %4237 = vmatmul.mubr.f32.gmra.mrb[0].mxu0 %v509
        %v4238 = vpop.f32.mrb[0].mxu0
        %v4239 = vadd.f32 %v1240, %v4238
        %v4240 = vpop.f32.mrb[0].mxu0
        %v4241 = vadd.f32 %v1240, %v4240
        %4242 = vmatprep.mubr.f32.mxu0 0.0
        %4243 = vmatmul.mubr.f32.gmra.mrb[0].mxu0 %v510
        %v4244 = vpop.f32.mrb[0].mxu0
        %v4245 = vadd.f32 %v1245, %v4244
        %v4246 = vpop.f32.mrb[0].mxu0
        %v4247 = vadd.f32 %v1245, %v4246
        %4248 = vmatprep.mubr.f32.mxu0 0.0
        %4249 = vmatmul.mubr.f32.gmra.mrb[0].mxu0 %v511
        %v4250 = vpop.f32.mrb[0].mxu0
        %v4251 = vadd.f32 %v1250, %v4250
        %v4252 = vpop.f32.mrb[0].mxu0
        %v4253 = vadd.f32 %v1250, %v4252
        %4254 = vmatprep.mubr.f32.mxu0 0.0
        %4255 = vmatmul.mubr.f32.gmra.mrb[0].mxu0 %v512
        %v4256 = vpop.f32.mrb[0].mxu0
        %v4257 = vadd.f32 %v1255, %v4256
        %v4258 = vpop.f32.mrb[0].mxu0
        %v4259 = vadd.f32 %v1255, %v4258
        %4260 = vmatprep.mubr.f32.mxu0 0.0
        %4261 = vmatmul.mubr.f32.gmra.mrb[0].mxu0 %v513
        %v4262 = vpop.f32.mrb[0].mxu0
        %v4263 = vadd.f32 %v1260, %v4262
        %v4264 = vpop.f32.mrb[0].mxu0
        %v4265 = vadd.f32 %v1260, %v4264
        %4266 = vmatprep.mubr.f32.mxu0 0.0
        %4267 = vmatmul.mubr.f32.gmra.mrb[0].mxu0 %v514
        %v4268 = vpop.f32.mrb[0].mxu0
        %v4269 = vadd.f32 %v1265, %v4268
        %v4270 = vpop.f32.mrb[0].mxu0
        %v4271 = vadd.f32 %v1265, %v4270
        %4272 = vmatprep.mubr.f32.mxu0 0.0
        %4273 = vmatmul.mubr.f32.gmra.mrb[0].mxu0 %v515
        %v4274 = vpop.f32.mrb[0].mxu0
        %v4275 = vadd.f32 %v1270, %v4274
        %v4276 = vpop.f32.mrb[0].mxu0
        %v4277 = vadd.f32 %v1270, %v4276
        %4278 = vmatprep.mubr.f32.mxu0 0.0
        %4279 = vmatmul.mubr.f32.gmra.mrb[0].mxu0 %v516
        %v4280 = vpop.f32.mrb[0].mxu0
        %v4281 = vadd.f32 %v1275, %v4280
        %v4282 = vpop.f32.mrb[0].mxu0
        %v4283 = vadd.f32 %v1275, %v4282
        %4284 = vmatprep.mubr.f32.mxu0 0.0
        %4285 = vmatmul.mubr.f32.gmra.mrb[0].mxu0 %v517
        %v4286 = vpop.f32.mrb[0].mxu0
        %v4287 = vadd.f32 %v1280, %v4286
        %v4288 = vpop.f32.mrb[0].mxu0
        %v4289 = vadd.f32 %v1280, %v4288
        %4290 = vmatprep.mubr.f32.mxu0 0.0
        %4291 = vmatmul.mubr.f32.gmra.mrb[0].mxu0 %v518
        %v4292 = vpop.f32.mrb[0].mxu0
        %v4293 = vadd.f32 %v1285, %v4292
        %v4294 = vpop.f32.mrb[0].mxu0
        %v4295 = vadd.f32 %v1285, %v4294
        %4296 = vmatprep.mubr.f32.mxu0 0.0
        %4297 = vmatmul.mubr.f32.gmra.mrb[0].mxu0 %v519
        %v4298 = vpop.f32.mrb[0].mxu0
        %v4299 = vadd.f32 %v1290, %v4298
        %v4300 = vpop.f32.mrb[0].mxu0
        %v4301 = vadd.f32 %v1290, %v4300
        %4302 = vmatprep.mubr.f32.mxu0 0.0
        %4303 = vmatmul.mubr.f32.gmra.mrb[0].mxu0 %v520
        %v4304 = vpop.f32.mrb[0].mxu0
        %v4305 = vadd.f32 %v1295, %v4304
        %v4306 = vpop.f32.mrb[0].mxu0
        %v4307 = vadd.f32 %v1295, %v4306
        %4308 = vmatprep.mubr.f32.mxu0 0.0
        %4309 = vmatmul.mubr.f32.gmra.mrb[0].mxu0 %v521
        %v4310 = vpop.f32.mrb[0].mxu0
        %v4311 = vadd.f32 %v1300, %v4310
        %v4312 = vpop.f32.mrb[0].mxu0
        %v4313 = vadd.f32 %v1300, %v4312
        %4314 = vmatprep.mubr.f32.mxu0 0.0
        %4315 = vmatmul.mubr.f32.gmra.mrb[0].mxu0 %v522
        %v4316 = vpop.f32.mrb[0].mxu0
        %v4317 = vadd.f32 %v1305, %v4316
        %v4318 = vpop.f32.mrb[0].mxu0
        %v4319 = vadd.f32 %v1305, %v4318
        %4320 = vmatprep.mubr.f32.mxu0 0.0
        %4321 = vmatmul.mubr.f32.gmra.mrb[0].mxu0 %v523
        %v4322 = vpop.f32.mrb[0].mxu0
        %v4323 = vadd.f32 %v1310, %v4322
        %v4324 = vpop.f32.mrb[0].mxu0
        %v4325 = vadd.f32 %v1310, %v4324
        %4326 = vmatprep.mubr.f32.mxu0 0.0
        %4327 = vmatmul.mubr.f32.gmra.mrb[0].mxu0 %v524
        %v4328 = vpop.f32.mrb[0].mxu0
        %v4329 = vadd.f32 %v1315, %v4328
        %v4330 = vpop.f32.mrb[0].mxu0
        %v4331 = vadd.f32 %v1315, %v4330
        %4332 = vmatprep.mubr.f32.mxu0 0.0
        %4333 = vmatmul.mubr.f32.gmra.mrb[0].mxu0 %v525
        %v4334 = vpop.f32.mrb[0].mxu0
        %v4335 = vadd.f32 %v1320, %v4334
        %v4336 = vpop.f32.mrb[0].mxu0
        %v4337 = vadd.f32 %v1320, %v4336
        %4338 = vmatprep.mubr.f32.mxu0 0.0
        %4339 = vmatmul.mubr.f32.gmra.mrb[0].mxu0 %v526
        %v4340 = vpop.f32.mrb[0].mxu0
        %v4341 = vadd.f32 %v1325, %v4340
        %v4342 = vpop.f32.mrb[0].mxu0
        %v4343 = vadd.f32 %v1325, %v4342
        %4344 = vmatprep.mubr.f32.mxu0 0.0
        %4345 = vmatmul.mubr.f32.gmra.mrb[0].mxu0 %v527
        %v4346 = vpop.f32.mrb[0].mxu0
        %v4347 = vadd.f32 %v1330, %v4346
        %v4348 = vpop.f32.mrb[0].mxu0
        %v4349 = vadd.f32 %v1330, %v4348
        %4350 = vmatprep.mubr.f32.mxu0 0.0
        %4351 = vmatmul.mubr.f32.gmra.mrb[0].mxu0 %v528
        %v4352 = vpop.f32.mrb[0].mxu0
        %v4353 = vadd.f32 %v1335, %v4352
        %v4354 = vpop.f32.mrb[0].mxu0
        %v4355 = vadd.f32 %v1335, %v4354
        %4356 = vmatprep.mubr.f32.mxu0 0.0
        %4357 = vmatmul.mubr.f32.gmra.mrb[0].mxu0 %v529
        %v4358 = vpop.f32.mrb[0].mxu0
        %v4359 = vadd.f32 %v1340, %v4358
        %v4360 = vpop.f32.mrb[0].mxu0
        %v4361 = vadd.f32 %v1340, %v4360
        %4362 = vmatprep.mubr.f32.mxu0 0.0
        %4363 = vmatmul.mubr.f32.gmra.mrb[0].mxu0 %v530
        %v4364 = vpop.f32.mrb[0].mxu0
        %v4365 = vadd.f32 %v1345, %v4364
        %v4366 = vpop.f32.mrb[0].mxu0
        %v4367 = vadd.f32 %v1345, %v4366
        %4368 = vmatprep.mubr.f32.mxu0 0.0
        %4369 = vmatmul.mubr.f32.gmra.mrb[0].mxu0 %v531
        %v4370 = vpop.f32.mrb[0].mxu0
        %v4371 = vadd.f32 %v1350, %v4370
        %v4372 = vpop.f32.mrb[0].mxu0
        %v4373 = vadd.f32 %v1350, %v4372
        %4374 = vmatprep.mubr.f32.mxu0 0.0
        %4375 = vmatmul.mubr.f32.gmra.mrb[0].mxu0 %v532
        %v4376 = vpop.f32.mrb[0].mxu0
        %v4377 = vadd.f32 %v1355, %v4376
        %v4378 = vpop.f32.mrb[0].mxu0
        %v4379 = vadd.f32 %v1355, %v4378
        %4380 = vmatprep.mubr.f32.mxu0 0.0
        %4381 = vmatmul.mubr.f32.gmra.mrb[0].mxu0 %v533
        %v4382 = vpop.f32.mrb[0].mxu0
        %v4383 = vadd.f32 %v1360, %v4382
        %v4384 = vpop.f32.mrb[0].mxu0
        %v4385 = vadd.f32 %v1360, %v4384
        %4386 = vmatprep.mubr.f32.mxu0 0.0
        %4387 = vmatmul.mubr.f32.gmra.mrb[0].mxu0 %v534
        %v4388 = vpop.f32.mrb[0].mxu0
        %v4389 = vadd.f32 %v1365, %v4388
        %v4390 = vpop.f32.mrb[0].mxu0
        %v4391 = vadd.f32 %v1365, %v4390
        %4392 = vmatprep.mubr.f32.mxu0 0.0
        %4393 = vmatmul.mubr.f32.gmra.mrb[0].mxu0 %v535
        %v4394 = vpop.f32.mrb[0].mxu0
        %v4395 = vadd.f32 %v1370, %v4394
        %v4396 = vpop.f32.mrb[0].mxu0
        %v4397 = vadd.f32 %v1370, %v4396
        %4398 = vmatprep.mubr.f32.mxu0 0.0
        %4399 = vmatmul.mubr.f32.gmra.mrb[0].mxu0 %v536
        %v4400 = vpop.f32.mrb[0].mxu0
        %v4401 = vadd.f32 %v1375, %v4400
        %v4402 = vpop.f32.mrb[0].mxu0
        %v4403 = vadd.f32 %v1375, %v4402
        %4404 = vmatprep.mubr.f32.mxu0 0.0
        %4405 = vmatmul.mubr.f32.gmra.mrb[0].mxu0 %v537
        %v4406 = vpop.f32.mrb[0].mxu0
        %v4407 = vadd.f32 %v1380, %v4406
        %v4408 = vpop.f32.mrb[0].mxu0
        %v4409 = vadd.f32 %v1380, %v4408
        %4410 = vmatprep.mubr.f32.mxu0 0.0
        %4411 = vmatmul.mubr.f32.gmra.mrb[0].mxu0 %v538
        %v4412 = vpop.f32.mrb[0].mxu0
        %v4413 = vadd.f32 %v1385, %v4412
        %v4414 = vpop.f32.mrb[0].mxu0
        %v4415 = vadd.f32 %v1385, %v4414
        %4416 = vmatprep.mubr.f32.mxu0 0.0
        %4417 = vmatmul.mubr.f32.gmra.mrb[0].mxu0 %v539
        %v4418 = vpop.f32.mrb[0].mxu0
        %v4419 = vadd.f32 %v1390, %v4418
        %v4420 = vpop.f32.mrb[0].mxu0
        %v4421 = vadd.f32 %v1390, %v4420
        %4422 = vmatprep.mubr.f32.mxu0 0.0
        %4423 = vmatmul.mubr.f32.gmra.mrb[0].mxu0 %v540
        %v4424 = vpop.f32.mrb[0].mxu0
        %v4425 = vadd.f32 %v1395, %v4424
        %v4426 = vpop.f32.mrb[0].mxu0
        %v4427 = vadd.f32 %v1395, %v4426
        %4428 = vmatprep.mubr.f32.mxu0 0.0
        %4429 = vmatmul.mubr.f32.gmra.mrb[0].mxu0 %v541
        %v4430 = vpop.f32.mrb[0].mxu0
        %v4431 = vadd.f32 %v1400, %v4430
        %v4432 = vpop.f32.mrb[0].mxu0
        %v4433 = vadd.f32 %v1400, %v4432
        %4434 = vmatprep.mubr.f32.mxu0 0.0
        %4435 = vmatmul.mubr.f32.gmra.mrb[0].mxu0 %v542
        %v4436 = vpop.f32.mrb[0].mxu0
        %v4437 = vadd.f32 %v1405, %v4436
        %v4438 = vpop.f32.mrb[0].mxu0
        %v4439 = vadd.f32 %v1405, %v4438
        %4440 = vmatprep.mubr.f32.mxu0 0.0
        %4441 = vmatmul.mubr.f32.gmra.mrb[0].mxu0 %v543
        %v4442 = vpop.f32.mrb[0].mxu0
        %v4443 = vadd.f32 %v1410, %v4442
        %v4444 = vpop.f32.mrb[0].mxu0
        %v4445 = vadd.f32 %v1410, %v4444
        %4446 = vmatprep.mubr.f32.mxu0 0.0
        %4447 = vmatmul.mubr.f32.gmra.mrb[0].mxu0 %v544
        %v4448 = vpop.f32.mrb[0].mxu0
        %v4449 = vadd.f32 %v1415, %v4448
        %v4450 = vpop.f32.mrb[0].mxu0
        %v4451 = vadd.f32 %v1415, %v4450
        %4452 = vmatprep.mubr.f32.mxu0 0.0
        %4453 = vmatmul.mubr.f32.gmra.mrb[0].mxu0 %v545
        %v4454 = vpop.f32.mrb[0].mxu0
        %v4455 = vadd.f32 %v1420, %v4454
        %v4456 = vpop.f32.mrb[0].mxu0
        %v4457 = vadd.f32 %v1420, %v4456
        %4458 = vmatprep.mubr.f32.mxu0 0.0
        %4459 = vmatmul.mubr.f32.gmra.mrb[0].mxu0 %v546
        %v4460 = vpop.f32.mrb[0].mxu0
        %v4461 = vadd.f32 %v1425, %v4460
        %v4462 = vpop.f32.mrb[0].mxu0
        %v4463 = vadd.f32 %v1425, %v4462
        %4464 = vmatprep.mubr.f32.mxu0 0.0
        %4465 = vmatmul.mubr.f32.gmra.mrb[0].mxu0 %v547
        %v4466 = vpop.f32.mrb[0].mxu0
        %v4467 = vadd.f32 %v1430, %v4466
        %v4468 = vpop.f32.mrb[0].mxu0
        %v4469 = vadd.f32 %v1430, %v4468
        %4470 = vmatprep.mubr.f32.mxu0 0.0
        %4471 = vmatmul.mubr.f32.gmra.mrb[0].mxu0 %v548
        %v4472 = vpop.f32.mrb[0].mxu0
        %v4473 = vadd.f32 %v1435, %v4472
        %v4474 = vpop.f32.mrb[0].mxu0
        %v4475 = vadd.f32 %v1435, %v4474
        %4476 = vmatprep.mubr.f32.mxu0 0.0
        %4477 = vmatmul.mubr.f32.gmra.mrb[0].mxu0 %v549
        %v4478 = vpop.f32.mrb[0].mxu0
        %v4479 = vadd.f32 %v1440, %v4478
        %v4480 = vpop.f32.mrb[0].mxu0
        %v4481 = vadd.f32 %v1440, %v4480
        %4482 = vmatprep.mubr.f32.mxu0 0.0
        %4483 = vmatmul.mubr.f32.gmra.mrb[0].mxu0 %v550
        %v4484 = vpop.f32.mrb[0].mxu0
        %v4485 = vadd.f32 %v1445, %v4484
        %v4486 = vpop.f32.mrb[0].mxu0
        %v4487 = vadd.f32 %v1445, %v4486
        %4488 = vmatprep.mubr.f32.mxu0 0.0
        %4489 = vmatmul.mubr.f32.gmra.mrb[0].mxu0 %v551
        %v4490 = vpop.f32.mrb[0].mxu0
        %v4491 = vadd.f32 %v1450, %v4490
        %v4492 = vpop.f32.mrb[0].mxu0
        %v4493 = vadd.f32 %v1450, %v4492
        %4494 = vmatprep.mubr.f32.mxu0 0.0
        %4495 = vmatmul.mubr.f32.gmra.mrb[0].mxu0 %v552
        %v4496 = vpop.f32.mrb[0].mxu0
        %v4497 = vadd.f32 %v1455, %v4496
        %v4498 = vpop.f32.mrb[0].mxu0
        %v4499 = vadd.f32 %v1455, %v4498
        %4500 = vmatprep.mubr.f32.mxu0 0.0
        %4501 = vmatmul.mubr.f32.gmra.mrb[0].mxu0 %v553
        %v4502 = vpop.f32.mrb[0].mxu0
        %v4503 = vadd.f32 %v1460, %v4502
        %v4504 = vpop.f32.mrb[0].mxu0
        %v4505 = vadd.f32 %v1460, %v4504
        %4506 = vmatprep.mubr.f32.mxu0 0.0
        %4507 = vmatmul.mubr.f32.gmra.mrb[0].mxu0 %v554
        %v4508 = vpop.f32.mrb[0].mxu0
        %v4509 = vadd.f32 %v1465, %v4508
        %v4510 = vpop.f32.mrb[0].mxu0
        %v4511 = vadd.f32 %v1465, %v4510
        %4512 = vmatprep.mubr.f32.mxu0 0.0
        %4513 = vmatmul.mubr.f32.gmra.mrb[0].mxu0 %v555
        %v4514 = vpop.f32.mrb[0].mxu0
        %v4515 = vadd.f32 %v1470, %v4514
        %v4516 = vpop.f32.mrb[0].mxu0
        %v4517 = vadd.f32 %v1470, %v4516
        %4518 = vmatprep.mubr.f32.mxu0 0.0
        %4519 = vmatmul.mubr.f32.gmra.mrb[0].mxu0 %v556
        %v4520 = vpop.f32.mrb[0].mxu0
        %v4521 = vadd.f32 %v1475, %v4520
        %v4522 = vpop.f32.mrb[0].mxu0
        %v4523 = vadd.f32 %v1475, %v4522
        %4524 = vmatprep.mubr.f32.mxu0 0.0
        %4525 = vmatmul.mubr.f32.gmra.mrb[0].mxu0 %v557
        %v4526 = vpop.f32.mrb[0].mxu0
        %v4527 = vadd.f32 %v1480, %v4526
        %v4528 = vpop.f32.mrb[0].mxu0
        %v4529 = vadd.f32 %v1480, %v4528
        %4530 = vmatprep.mubr.f32.mxu0 0.0
        %4531 = vmatmul.mubr.f32.gmra.mrb[0].mxu0 %v558
        %v4532 = vpop.f32.mrb[0].mxu0
        %v4533 = vadd.f32 %v1485, %v4532
        %v4534 = vpop.f32.mrb[0].mxu0
        %v4535 = vadd.f32 %v1485, %v4534
        %4536 = vmatprep.mubr.f32.mxu0 0.0
        %4537 = vmatmul.mubr.f32.gmra.mrb[0].mxu0 %v559
        %v4538 = vpop.f32.mrb[0].mxu0
        %v4539 = vadd.f32 %v1490, %v4538
        %v4540 = vpop.f32.mrb[0].mxu0
        %v4541 = vadd.f32 %v1490, %v4540
        %4542 = vmatprep.mubr.f32.mxu0 0.0
        %4543 = vmatmul.mubr.f32.gmra.mrb[0].mxu0 %v560
        %v4544 = vpop.f32.mrb[0].mxu0
        %v4545 = vadd.f32 %v1495, %v4544
        %v4546 = vpop.f32.mrb[0].mxu0
        %v4547 = vadd.f32 %v1495, %v4546
        %4548 = vmatprep.mubr.f32.mxu0 0.0
        %4549 = vmatmul.mubr.f32.gmra.mrb[0].mxu0 %v561
        %v4550 = vpop.f32.mrb[0].mxu0
        %v4551 = vadd.f32 %v1500, %v4550
        %v4552 = vpop.f32.mrb[0].mxu0
        %v4553 = vadd.f32 %v1500, %v4552
        %4554 = vmatprep.mubr.f32.mxu0 0.0
        %4555 = vmatmul.mubr.f32.gmra.mrb[0].mxu0 %v562
        %v4556 = vpop.f32.mrb[0].mxu0
        %v4557 = vadd.f32 %v1505, %v4556
        %v4558 = vpop.f32.mrb[0].mxu0
        %v4559 = vadd.f32 %v1505, %v4558
        %4560 = vmatprep.mubr.f32.mxu0 0.0
        %4561 = vmatmul.mubr.f32.gmra.mrb[0].mxu0 %v563
        %v4562 = vpop.f32.mrb[0].mxu0
        %v4563 = vadd.f32 %v1510, %v4562
        %v4564 = vpop.f32.mrb[0].mxu0
        %v4565 = vadd.f32 %v1510, %v4564
        %4566 = vmatprep.mubr.f32.mxu0 0.0
        %4567 = vmatmul.mubr.f32.gmra.mrb[0].mxu0 %v564
        %v4568 = vpop.f32.mrb[0].mxu0
        %v4569 = vadd.f32 %v1515, %v4568
        %v4570 = vpop.f32.mrb[0].mxu0
        %v4571 = vadd.f32 %v1515, %v4570
        %4572 = vmatprep.mubr.f32.mxu0 0.0
        %4573 = vmatmul.mubr.f32.gmra.mrb[0].mxu0 %v565
        %v4574 = vpop.f32.mrb[0].mxu0
        %v4575 = vadd.f32 %v1520, %v4574
        %v4576 = vpop.f32.mrb[0].mxu0
        %v4577 = vadd.f32 %v1520, %v4576
        %4578 = vmatprep.mubr.f32.mxu0 0.0
        %4579 = vmatmul.mubr.f32.gmra.mrb[0].mxu0 %v566
        %v4580 = vpop.f32.mrb[0].mxu0
        %v4581 = vadd.f32 %v1525, %v4580
        %v4582 = vpop.f32.mrb[0].mxu0
        %v4583 = vadd.f32 %v1525, %v4582
        %4584 = vmatprep.mubr.f32.mxu0 0.0
        %4585 = vmatmul.mubr.f32.gmra.mrb[0].mxu0 %v567
        %v4586 = vpop.f32.mrb[0].mxu0
        %v4587 = vadd.f32 %v1530, %v4586
        %v4588 = vpop.f32.mrb[0].mxu0
        %v4589 = vadd.f32 %v1530, %v4588
        %4590 = vmatprep.mubr.f32.mxu0 0.0
        %4591 = vmatmul.mubr.f32.gmra.mrb[0].mxu0 %v568
        %v4592 = vpop.f32.mrb[0].mxu0
        %v4593 = vadd.f32 %v1535, %v4592
        %v4594 = vpop.f32.mrb[0].mxu0
        %v4595 = vadd.f32 %v1535, %v4594
        %4596 = vmatprep.mubr.f32.mxu0 0.0
        %4597 = vmatmul.mubr.f32.gmra.mrb[0].mxu0 %v569
        %v4598 = vpop.f32.mrb[0].mxu0
        %v4599 = vadd.f32 %v1540, %v4598
        %v4600 = vpop.f32.mrb[0].mxu0
        %v4601 = vadd.f32 %v1540, %v4600
        %4602 = vmatprep.mubr.f32.mxu0 0.0
        %4603 = vmatmul.mubr.f32.gmra.mrb[0].mxu0 %v570
        %v4604 = vpop.f32.mrb[0].mxu0
        %v4605 = vadd.f32 %v1545, %v4604
        %v4606 = vpop.f32.mrb[0].mxu0
        %v4607 = vadd.f32 %v1545, %v4606
        %4608 = vmatprep.mubr.f32.mxu0 0.0
        %4609 = vmatmul.mubr.f32.gmra.mrb[0].mxu0 %v571
        %v4610 = vpop.f32.mrb[0].mxu0
        %v4611 = vadd.f32 %v1550, %v4610
        %v4612 = vpop.f32.mrb[0].mxu0
        %v4613 = vadd.f32 %v1550, %v4612
        %4614 = vmatprep.mubr.f32.mxu0 0.0
        %4615 = vmatmul.mubr.f32.gmra.mrb[0].mxu0 %v572
        %v4616 = vpop.f32.mrb[0].mxu0
        %v4617 = vadd.f32 %v1555, %v4616
        %v4618 = vpop.f32.mrb[0].mxu0
        %v4619 = vadd.f32 %v1555, %v4618
        %4620 = vmatprep.mubr.f32.mxu0 0.0
        %4621 = vmatmul.mubr.f32.gmra.mrb[0].mxu0 %v573
        %v4622 = vpop.f32.mrb[0].mxu0
        %v4623 = vadd.f32 %v1560, %v4622
        %v4624 = vpop.f32.mrb[0].mxu0
        %v4625 = vadd.f32 %v1560, %v4624
        %4626 = vmatprep.mubr.f32.mxu0 0.0
        %4627 = vmatmul.mubr.f32.gmra.mrb[0].mxu0 %v574
        %v4628 = vpop.f32.mrb[0].mxu0
        %v4629 = vadd.f32 %v1565, %v4628
        %v4630 = vpop.f32.mrb[0].mxu0
        %v4631 = vadd.f32 %v1565, %v4630
        %4632 = vmatprep.mubr.f32.mxu0 0.0
        %4633 = vmatmul.mubr.f32.gmra.mrb[0].mxu0 %v575
        %v4634 = vpop.f32.mrb[0].mxu0
        %v4635 = vadd.f32 %v1570, %v4634
        %v4636 = vpop.f32.mrb[0].mxu0
        %v4637 = vadd.f32 %v1570, %v4636
        %4638 = vmatprep.mubr.f32.mxu0 0.0
        %4639 = vmatmul.mubr.f32.gmra.mrb[0].mxu0 %v576
        %v4640 = vpop.f32.mrb[0].mxu0
        %v4641 = vadd.f32 %v1575, %v4640
        %v4642 = vpop.f32.mrb[0].mxu0
        %v4643 = vadd.f32 %v1575, %v4642
        %4644 = vmatprep.mubr.f32.mxu0 0.0
        %4645 = vmatmul.mubr.f32.gmra.mrb[0].mxu0 %v577
        %v4646 = vpop.f32.mrb[0].mxu0
        %v4647 = vadd.f32 %v1580, %v4646
        %v4648 = vpop.f32.mrb[0].mxu0
        %v4649 = vadd.f32 %v1580, %v4648
        %4650 = vmatprep.mubr.f32.mxu0 0.0
        %4651 = vmatmul.mubr.f32.gmra.mrb[0].mxu0 %v578
        %v4652 = vpop.f32.mrb[0].mxu0
        %v4653 = vadd.f32 %v1585, %v4652
        %v4654 = vpop.f32.mrb[0].mxu0
        %v4655 = vadd.f32 %v1585, %v4654
        %4656 = vmatprep.mubr.f32.mxu0 0.0
        %4657 = vmatmul.mubr.f32.gmra.mrb[0].mxu0 %v579
        %v4658 = vpop.f32.mrb[0].mxu0
        %v4659 = vadd.f32 %v1590, %v4658
        %v4660 = vpop.f32.mrb[0].mxu0
        %v4661 = vadd.f32 %v1590, %v4660
        %4662 = vmatprep.mubr.f32.mxu0 0.0
        %4663 = vmatmul.mubr.f32.gmra.mrb[0].mxu0 %v580
        %v4664 = vpop.f32.mrb[0].mxu0
        %v4665 = vadd.f32 %v1595, %v4664
        %v4666 = vpop.f32.mrb[0].mxu0
        %v4667 = vadd.f32 %v1595, %v4666
        %4668 = vmatprep.mubr.f32.mxu0 0.0
        %4669 = vmatmul.mubr.f32.gmra.mrb[0].mxu0 %v581
        %v4670 = vpop.f32.mrb[0].mxu0
        %v4671 = vadd.f32 %v1600, %v4670
        %v4672 = vpop.f32.mrb[0].mxu0
        %v4673 = vadd.f32 %v1600, %v4672
        %4674 = vmatprep.mubr.f32.mxu0 0.0
        %4675 = vmatmul.mubr.f32.gmra.mrb[0].mxu0 %v582
        %v4676 = vpop.f32.mrb[0].mxu0
        %v4677 = vadd.f32 %v1605, %v4676
        %v4678 = vpop.f32.mrb[0].mxu0
        %v4679 = vadd.f32 %v1605, %v4678
        %4680 = vmatprep.mubr.f32.mxu0 0.0
        %4681 = vmatmul.mubr.f32.gmra.mrb[0].mxu0 %v583
        %v4682 = vpop.f32.mrb[0].mxu0
        %v4683 = vadd.f32 %v1610, %v4682
        %v4684 = vpop.f32.mrb[0].mxu0
        %v4685 = vadd.f32 %v1610, %v4684
        %4686 = vmatprep.mubr.f32.mxu0 0.0
        %4687 = vmatmul.mubr.f32.gmra.mrb[0].mxu0 %v584
        %v4688 = vpop.f32.mrb[0].mxu0
        %v4689 = vadd.f32 %v1615, %v4688
        %v4690 = vpop.f32.mrb[0].mxu0
        %v4691 = vadd.f32 %v1615, %v4690
        %4692 = vmatprep.mubr.f32.mxu0 0.0
        %4693 = vmatmul.mubr.f32.gmra.mrb[0].mxu0 %v585
        %v4694 = vpop.f32.mrb[0].mxu0
        %v4695 = vadd.f32 %v1620, %v4694
        %v4696 = vpop.f32.mrb[0].mxu0
        %v4697 = vadd.f32 %v1620, %v4696
        %4698 = vmatprep.mubr.f32.mxu0 0.0
        %4699 = vmatmul.mubr.f32.gmra.mrb[0].mxu0 %v586
        %v4700 = vpop.f32.mrb[0].mxu0
        %v4701 = vadd.f32 %v1625, %v4700
        %v4702 = vpop.f32.mrb[0].mxu0
        %v4703 = vadd.f32 %v1625, %v4702
        %4704 = vmatprep.mubr.f32.mxu0 0.0
        %4705 = vmatmul.mubr.f32.gmra.mrb[0].mxu0 %v587
        %v4706 = vpop.f32.mrb[0].mxu0
        %v4707 = vadd.f32 %v1630, %v4706
        %v4708 = vpop.f32.mrb[0].mxu0
        %v4709 = vadd.f32 %v1630, %v4708
        %4710 = vmatprep.mubr.f32.mxu0 0.0
        %4711 = vmatmul.mubr.f32.gmra.mrb[0].mxu0 %v588
        %v4712 = vpop.f32.mrb[0].mxu0
        %v4713 = vadd.f32 %v1635, %v4712
        %v4714 = vpop.f32.mrb[0].mxu0
        %v4715 = vadd.f32 %v1635, %v4714
        %4716 = vmatprep.mubr.f32.mxu0 0.0
        %4717 = vmatmul.mubr.f32.gmra.mrb[0].mxu0 %v589
        %v4718 = vpop.f32.mrb[0].mxu0
        %v4719 = vadd.f32 %v1640, %v4718
        %v4720 = vpop.f32.mrb[0].mxu0
        %v4721 = vadd.f32 %v1640, %v4720
        %4722 = vmatprep.mubr.f32.mxu0 0.0
        %4723 = vmatmul.mubr.f32.gmra.mrb[0].mxu0 %v590
        %v4724 = vpop.f32.mrb[0].mxu0
        %v4725 = vadd.f32 %v1645, %v4724
        %v4726 = vpop.f32.mrb[0].mxu0
        %v4727 = vadd.f32 %v1645, %v4726
        %4728 = vmatprep.mubr.f32.mxu0 0.0
        %4729 = vmatmul.mubr.f32.gmra.mrb[0].mxu0 %v591
        %v4730 = vpop.f32.mrb[0].mxu0
        %v4731 = vadd.f32 %v1650, %v4730
        %v4732 = vpop.f32.mrb[0].mxu0
        %v4733 = vadd.f32 %v1650, %v4732
        %4734 = vmatprep.mubr.f32.mxu0 0.0
        %4735 = vmatmul.mubr.f32.gmra.mrb[0].mxu0 %v592
        %v4736 = vpop.f32.mrb[0].mxu0
        %v4737 = vadd.f32 %v1655, %v4736
        %v4738 = vpop.f32.mrb[0].mxu0
        %v4739 = vadd.f32 %v1655, %v4738
        %4740 = vmatprep.mubr.f32.mxu0 0.0
        %4741 = vmatmul.mubr.f32.gmra.mrb[0].mxu0 %v593
        %v4742 = vpop.f32.mrb[0].mxu0
        %v4743 = vadd.f32 %v1660, %v4742
        %v4744 = vpop.f32.mrb[0].mxu0
        %v4745 = vadd.f32 %v1660, %v4744
        %4746 = vmatprep.mubr.f32.mxu0 0.0
        %4747 = vmatmul.mubr.f32.gmra.mrb[0].mxu0 %v594
        %v4748 = vpop.f32.mrb[0].mxu0
        %v4749 = vadd.f32 %v1665, %v4748
        %v4750 = vpop.f32.mrb[0].mxu0
        %v4751 = vadd.f32 %v1665, %v4750
        %4752 = vmatprep.mubr.f32.mxu0 0.0
        %4753 = vmatmul.mubr.f32.gmra.mrb[0].mxu0 %v595
        %v4754 = vpop.f32.mrb[0].mxu0
        %v4755 = vadd.f32 %v1670, %v4754
        %v4756 = vpop.f32.mrb[0].mxu0
        %v4757 = vadd.f32 %v1670, %v4756
        %4758 = vmatprep.mubr.f32.mxu0 0.0
        %4759 = vmatmul.mubr.f32.gmra.mrb[0].mxu0 %v596
        %v4760 = vpop.f32.mrb[0].mxu0
        %v4761 = vadd.f32 %v1675, %v4760
        %v4762 = vpop.f32.mrb[0].mxu0
        %v4763 = vadd.f32 %v1675, %v4762
        %4764 = vmatprep.mubr.f32.mxu0 0.0
        %4765 = vmatmul.mubr.f32.gmra.mrb[0].mxu0 %v597
        %v4766 = vpop.f32.mrb[0].mxu0
        %v4767 = vadd.f32 %v1680, %v4766
        %v4768 = vpop.f32.mrb[0].mxu0
        %v4769 = vadd.f32 %v1680, %v4768
        %4770 = vmatprep.mubr.f32.mxu0 0.0
        %4771 = vmatmul.mubr.f32.gmra.mrb[0].mxu0 %v598
        %v4772 = vpop.f32.mrb[0].mxu0
        %v4773 = vadd.f32 %v1685, %v4772
        %v4774 = vpop.f32.mrb[0].mxu0
        %v4775 = vadd.f32 %v1685, %v4774
        %4776 = vmatprep.mubr.f32.mxu0 0.0
        %4777 = vmatmul.mubr.f32.gmra.mrb[0].mxu0 %v599
        %v4778 = vpop.f32.mrb[0].mxu0
        %v4779 = vadd.f32 %v1690, %v4778
        %v4780 = vpop.f32.mrb[0].mxu0
        %v4781 = vadd.f32 %v1690, %v4780
        %4782 = vmatprep.mubr.f32.mxu0 0.0
        %4783 = vmatmul.mubr.f32.gmra.mrb[0].mxu0 %v600
        %v4784 = vpop.f32.mrb[0].mxu0
        %v4785 = vadd.f32 %v1695, %v4784
        %v4786 = vpop.f32.mrb[0].mxu0
        %v4787 = vadd.f32 %v1695, %v4786
        %4788 = vmatprep.mubr.f32.mxu0 0.0
        %4789 = vmatmul.mubr.f32.gmra.mrb[0].mxu0 %v601
        %v4790 = vpop.f32.mrb[0].mxu0
        %v4791 = vadd.f32 %v1700, %v4790
        %v4792 = vpop.f32.mrb[0].mxu0
        %v4793 = vadd.f32 %v1700, %v4792
        %4794 = vmatprep.mubr.f32.mxu0 0.0
        %4795 = vmatmul.mubr.f32.gmra.mrb[0].mxu0 %v602
        %v4796 = vpop.f32.mrb[0].mxu0
        %v4797 = vadd.f32 %v1705, %v4796
        %v4798 = vpop.f32.mrb[0].mxu0
        %v4799 = vadd.f32 %v1705, %v4798
        %4800 = vmatprep.mubr.f32.mxu0 0.0
        %4801 = vmatmul.mubr.f32.gmra.mrb[0].mxu0 %v603
        %v4802 = vpop.f32.mrb[0].mxu0
        %v4803 = vadd.f32 %v1710, %v4802
        %v4804 = vpop.f32.mrb[0].mxu0
        %v4805 = vadd.f32 %v1710, %v4804
        %4806 = vmatprep.mubr.f32.mxu0 0.0
        %4807 = vmatmul.mubr.f32.gmra.mrb[0].mxu0 %v604
        %v4808 = vpop.f32.mrb[0].mxu0
        %v4809 = vadd.f32 %v1715, %v4808
        %v4810 = vpop.f32.mrb[0].mxu0
        %v4811 = vadd.f32 %v1715, %v4810
        %4812 = vmatprep.mubr.f32.mxu0 0.0
        %4813 = vmatmul.mubr.f32.gmra.mrb[0].mxu0 %v605
        %v4814 = vpop.f32.mrb[0].mxu0
        %v4815 = vadd.f32 %v1720, %v4814
        %v4816 = vpop.f32.mrb[0].mxu0
        %v4817 = vadd.f32 %v1720, %v4816
        %4818 = vmatprep.mubr.f32.mxu0 0.0
        %4819 = vmatmul.mubr.f32.gmra.mrb[0].mxu0 %v606
        %v4820 = vpop.f32.mrb[0].mxu0
        %v4821 = vadd.f32 %v1725, %v4820
        %v4822 = vpop.f32.mrb[0].mxu0
        %v4823 = vadd.f32 %v1725, %v4822
        %4824 = vmatprep.mubr.f32.mxu0 0.0
        %4825 = vmatmul.mubr.f32.gmra.mrb[0].mxu0 %v607
        %v4826 = vpop.f32.mrb[0].mxu0
        %v4827 = vadd.f32 %v1730, %v4826
        %v4828 = vpop.f32.mrb[0].mxu0
        %v4829 = vadd.f32 %v1730, %v4828
        %4830 = vmatprep.mubr.f32.mxu0 0.0
        %4831 = vmatmul.mubr.f32.gmra.mrb[0].mxu0 %v608
        %v4832 = vpop.f32.mrb[0].mxu0
        %v4833 = vadd.f32 %v1735, %v4832
        %v4834 = vpop.f32.mrb[0].mxu0
        %v4835 = vadd.f32 %v1735, %v4834
        %4836 = vmatprep.mubr.f32.mxu0 0.0
        %4837 = vmatmul.mubr.f32.gmra.mrb[0].mxu0 %v609
        %v4838 = vpop.f32.mrb[0].mxu0
        %v4839 = vadd.f32 %v1740, %v4838
        %v4840 = vpop.f32.mrb[0].mxu0
        %v4841 = vadd.f32 %v1740, %v4840
        %4842 = vmatprep.mubr.f32.mxu0 0.0
        %4843 = vmatmul.mubr.f32.gmra.mrb[0].mxu0 %v610
        %v4844 = vpop.f32.mrb[0].mxu0
        %v4845 = vadd.f32 %v1745, %v4844
        %v4846 = vpop.f32.mrb[0].mxu0
        %v4847 = vadd.f32 %v1745, %v4846
        %4848 = vmatprep.mubr.f32.mxu0 0.0
        %4849 = vmatmul.mubr.f32.gmra.mrb[0].mxu0 %v611
        %v4850 = vpop.f32.mrb[0].mxu0
        %v4851 = vadd.f32 %v1750, %v4850
        %v4852 = vpop.f32.mrb[0].mxu0
        %v4853 = vadd.f32 %v1750, %v4852
        %4854 = vmatprep.mubr.f32.mxu0 0.0
        %4855 = vmatmul.mubr.f32.gmra.mrb[0].mxu0 %v612
        %v4856 = vpop.f32.mrb[0].mxu0
        %v4857 = vadd.f32 %v1755, %v4856
        %v4858 = vpop.f32.mrb[0].mxu0
        %v4859 = vadd.f32 %v1755, %v4858
        %4860 = vmatprep.mubr.f32.mxu0 0.0
        %4861 = vmatmul.mubr.f32.gmra.mrb[0].mxu0 %v613
        %v4862 = vpop.f32.mrb[0].mxu0
        %v4863 = vadd.f32 %v1760, %v4862
        %v4864 = vpop.f32.mrb[0].mxu0
        %v4865 = vadd.f32 %v1760, %v4864
        %4866 = vmatprep.mubr.f32.mxu0 0.0
        %4867 = vmatmul.mubr.f32.gmra.mrb[0].mxu0 %v614
        %v4868 = vpop.f32.mrb[0].mxu0
        %v4869 = vadd.f32 %v1765, %v4868
        %v4870 = vpop.f32.mrb[0].mxu0
        %v4871 = vadd.f32 %v1765, %v4870
        %4872 = vmatprep.mubr.f32.mxu0 0.0
        %4873 = vmatmul.mubr.f32.gmra.mrb[0].mxu0 %v615
        %v4874 = vpop.f32.mrb[0].mxu0
        %v4875 = vadd.f32 %v1770, %v4874
        %v4876 = vpop.f32.mrb[0].mxu0
        %v4877 = vadd.f32 %v1770, %v4876
        %4878 = vmatprep.mubr.f32.mxu0 0.0
        %4879 = vmatmul.mubr.f32.gmra.mrb[0].mxu0 %v616
        %v4880 = vpop.f32.mrb[0].mxu0
        %v4881 = vadd.f32 %v1775, %v4880
        %v4882 = vpop.f32.mrb[0].mxu0
        %v4883 = vadd.f32 %v1775, %v4882
        %4884 = vmatprep.mubr.f32.mxu0 0.0
        %4885 = vmatmul.mubr.f32.gmra.mrb[0].mxu0 %v617
        %v4886 = vpop.f32.mrb[0].mxu0
        %v4887 = vadd.f32 %v1780, %v4886
        %v4888 = vpop.f32.mrb[0].mxu0
        %v4889 = vadd.f32 %v1780, %v4888
        %4890 = vmatprep.mubr.f32.mxu0 0.0
        %4891 = vmatmul.mubr.f32.gmra.mrb[0].mxu0 %v618
        %v4892 = vpop.f32.mrb[0].mxu0
        %v4893 = vadd.f32 %v1785, %v4892
        %v4894 = vpop.f32.mrb[0].mxu0
        %v4895 = vadd.f32 %v1785, %v4894
        %4896 = vmatprep.mubr.f32.mxu0 0.0
        %4897 = vmatmul.mubr.f32.gmra.mrb[0].mxu0 %v619
        %v4898 = vpop.f32.mrb[0].mxu0
        %v4899 = vadd.f32 %v1790, %v4898
        %v4900 = vpop.f32.mrb[0].mxu0
        %v4901 = vadd.f32 %v1790, %v4900
        %4902 = vmatprep.mubr.f32.mxu0 0.0
        %4903 = vmatmul.mubr.f32.gmra.mrb[0].mxu0 %v620
        %v4904 = vpop.f32.mrb[0].mxu0
        %v4905 = vadd.f32 %v1795, %v4904
        %v4906 = vpop.f32.mrb[0].mxu0
        %v4907 = vadd.f32 %v1795, %v4906
        %4908 = vmatprep.mubr.f32.mxu0 0.0
        %4909 = vmatmul.mubr.f32.gmra.mrb[0].mxu0 %v621
        %v4910 = vpop.f32.mrb[0].mxu0
        %v4911 = vadd.f32 %v1800, %v4910
        %v4912 = vpop.f32.mrb[0].mxu0
        %v4913 = vadd.f32 %v1800, %v4912
        %4914 = vmatprep.mubr.f32.mxu0 0.0
        %4915 = vmatmul.mubr.f32.gmra.mrb[0].mxu0 %v622
        %v4916 = vpop.f32.mrb[0].mxu0
        %v4917 = vadd.f32 %v1805, %v4916
        %v4918 = vpop.f32.mrb[0].mxu0
        %v4919 = vadd.f32 %v1805, %v4918
        %4920 = vmatprep.mubr.f32.mxu0 0.0
        %4921 = vmatmul.mubr.f32.gmra.mrb[0].mxu0 %v623
        %v4922 = vpop.f32.mrb[0].mxu0
        %v4923 = vadd.f32 %v1810, %v4922
        %v4924 = vpop.f32.mrb[0].mxu0
        %v4925 = vadd.f32 %v1810, %v4924
        %4926 = vmatprep.mubr.f32.mxu0 0.0
        %4927 = vmatmul.mubr.f32.gmra.mrb[0].mxu0 %v624
        %v4928 = vpop.f32.mrb[0].mxu0
        %v4929 = vadd.f32 %v1815, %v4928
        %v4930 = vpop.f32.mrb[0].mxu0
        %v4931 = vadd.f32 %v1815, %v4930
        %4932 = vmatprep.mubr.f32.mxu0 0.0
        %4933 = vmatmul.mubr.f32.gmra.mrb[0].mxu0 %v625
        %v4934 = vpop.f32.mrb[0].mxu0
        %v4935 = vadd.f32 %v1820, %v4934
        %v4936 = vpop.f32.mrb[0].mxu0
        %v4937 = vadd.f32 %v1820, %v4936
        %4938 = vmatprep.mubr.f32.mxu0 0.0
        %4939 = vmatmul.mubr.f32.gmra.mrb[0].mxu0 %v626
        %v4940 = vpop.f32.mrb[0].mxu0
        %v4941 = vadd.f32 %v1825, %v4940
        %v4942 = vpop.f32.mrb[0].mxu0
        %v4943 = vadd.f32 %v1825, %v4942
        %4944 = vmatprep.mubr.f32.mxu0 0.0
        %4945 = vmatmul.mubr.f32.gmra.mrb[0].mxu0 %v627
        %v4946 = vpop.f32.mrb[0].mxu0
        %v4947 = vadd.f32 %v1830, %v4946
        %v4948 = vpop.f32.mrb[0].mxu0
        %v4949 = vadd.f32 %v1830, %v4948
        %4950 = vmatprep.mubr.f32.mxu0 0.0
        %4951 = vmatmul.mubr.f32.gmra.mrb[0].mxu0 %v628
        %v4952 = vpop.f32.mrb[0].mxu0
        %v4953 = vadd.f32 %v1835, %v4952
        %v4954 = vpop.f32.mrb[0].mxu0
        %v4955 = vadd.f32 %v1835, %v4954
        %4956 = vmatprep.mubr.f32.mxu0 0.0
        %4957 = vmatmul.mubr.f32.gmra.mrb[0].mxu0 %v629
        %v4958 = vpop.f32.mrb[0].mxu0
        %v4959 = vadd.f32 %v1840, %v4958
        %v4960 = vpop.f32.mrb[0].mxu0
        %v4961 = vadd.f32 %v1840, %v4960
        %4962 = vmatprep.mubr.f32.mxu0 0.0
        %4963 = vmatmul.mubr.f32.gmra.mrb[0].mxu0 %v630
        %v4964 = vpop.f32.mrb[0].mxu0
        %v4965 = vadd.f32 %v1845, %v4964
        %v4966 = vpop.f32.mrb[0].mxu0
        %v4967 = vadd.f32 %v1845, %v4966
        %4968 = vmatprep.mubr.f32.mxu0 0.0
        %4969 = vmatmul.mubr.f32.gmra.mrb[0].mxu0 %v631
        %v4970 = vpop.f32.mrb[0].mxu0
        %v4971 = vadd.f32 %v1850, %v4970
        %v4972 = vpop.f32.mrb[0].mxu0
        %v4973 = vadd.f32 %v1850, %v4972
        %4974 = vmatprep.mubr.f32.mxu0 0.0
        %4975 = vmatmul.mubr.f32.gmra.mrb[0].mxu0 %v632
        %v4976 = vpop.f32.mrb[0].mxu0
        %v4977 = vadd.f32 %v1855, %v4976
        %v4978 = vpop.f32.mrb[0].mxu0
        %v4979 = vadd.f32 %v1855, %v4978
        %4980 = vmatprep.mubr.f32.mxu0 0.0
        %4981 = vmatmul.mubr.f32.gmra.mrb[0].mxu0 %v633
        %v4982 = vpop.f32.mrb[0].mxu0
        %v4983 = vadd.f32 %v1860, %v4982
        %v4984 = vpop.f32.mrb[0].mxu0
        %v4985 = vadd.f32 %v1860, %v4984
        %4986 = vmatprep.mubr.f32.mxu0 0.0
        %4987 = vmatmul.mubr.f32.gmra.mrb[0].mxu0 %v634
        %v4988 = vpop.f32.mrb[0].mxu0
        %v4989 = vadd.f32 %v1865, %v4988
        %v4990 = vpop.f32.mrb[0].mxu0
        %v4991 = vadd.f32 %v1865, %v4990
        %4992 = vmatprep.mubr.f32.mxu0 0.0
        %4993 = vmatmul.mubr.f32.gmra.mrb[0].mxu0 %v635
        %v4994 = vpop.f32.mrb[0].mxu0
        %v4995 = vadd.f32 %v1870, %v4994
        %v4996 = vpop.f32.mrb[0].mxu0
        %v4997 = vadd.f32 %v1870, %v4996
        %4998 = vmatprep.mubr.f32.mxu0 0.0
        %4999 = vmatmul.mubr.f32.gmra.mrb[0].mxu0 %v636
        %v5000 = vpop.f32.mrb[0].mxu0
        %v5001 = vadd.f32 %v1875, %v5000
        %v5002 = vpop.f32.mrb[0].mxu0
        %v5003 = vadd.f32 %v1875, %v5002
        %5004 = vmatprep.mubr.f32.mxu0 0.0
        %5005 = vmatmul.mubr.f32.gmra.mrb[0].mxu0 %v637
        %v5006 = vpop.f32.mrb[0].mxu0
        %v5007 = vadd.f32 %v1880, %v5006
        %v5008 = vpop.f32.mrb[0].mxu0
        %v5009 = vadd.f32 %v1880, %v5008
        %5010 = vmatprep.mubr.f32.mxu0 0.0
        %5011 = vmatmul.mubr.f32.gmra.mrb[0].mxu0 %v638
        %v5012 = vpop.f32.mrb[0].mxu0
        %v5013 = vadd.f32 %v1885, %v5012
        %v5014 = vpop.f32.mrb[0].mxu0
        %v5015 = vadd.f32 %v1885, %v5014
        %5016 = vmatprep.mubr.f32.mxu0 0.0
        %5017 = vmatmul.mubr.f32.gmra.mrb[0].mxu0 %v639
        %v5018 = vpop.f32.mrb[0].mxu0
        %v5019 = vadd.f32 %v1890, %v5018
        %v5020 = vpop.f32.mrb[0].mxu0
        %v5021 = vadd.f32 %v1890, %v5020
        %5022 = vmatprep.mubr.f32.mxu0 0.0
        %5023 = vmatmul.mubr.f32.gmra.mrb[0].mxu0 %v640
        %v5024 = vpop.f32.mrb[0].mxu0
        %v5025 = vadd.f32 %v1895, %v5024
        %v5026 = vpop.f32.mrb[0].mxu0
        %v5027 = vadd.f32 %v1895, %v5026
        %5028 = vmatprep.mubr.f32.mxu0 0.0
        %5029 = vmatmul.mubr.f32.gmra.mrb[0].mxu0 %v641
        %v5030 = vpop.f32.mrb[0].mxu0
        %v5031 = vadd.f32 %v1900, %v5030
        %v5032 = vpop.f32.mrb[0].mxu0
        %v5033 = vadd.f32 %v1900, %v5032
        %5034 = vmatprep.mubr.f32.mxu0 0.0
        %5035 = vmatmul.mubr.f32.gmra.mrb[0].mxu0 %v642
        %v5036 = vpop.f32.mrb[0].mxu0
        %v5037 = vadd.f32 %v1905, %v5036
        %v5038 = vpop.f32.mrb[0].mxu0
        %v5039 = vadd.f32 %v1905, %v5038
        %5040 = vmatprep.mubr.f32.mxu0 0.0
        %5041 = vmatmul.mubr.f32.gmra.mrb[0].mxu0 %v643
        %v5042 = vpop.f32.mrb[0].mxu0
        %v5043 = vadd.f32 %v1910, %v5042
        %v5044 = vpop.f32.mrb[0].mxu0
        %v5045 = vadd.f32 %v1910, %v5044
        %5046 = vmatprep.mubr.f32.mxu0 0.0
        %5047 = vmatmul.mubr.f32.gmra.mrb[0].mxu0 %v644
        %v5048 = vpop.f32.mrb[0].mxu0
        %v5049 = vadd.f32 %v1915, %v5048
        %v5050 = vpop.f32.mrb[0].mxu0
        %v5051 = vadd.f32 %v1915, %v5050
        %5052 = vmatprep.mubr.f32.mxu0 0.0
        %5053 = vmatmul.mubr.f32.gmra.mrb[0].mxu0 %v645
        %v5054 = vpop.f32.mrb[0].mxu0
        %v5055 = vadd.f32 %v1920, %v5054
        %v5056 = vpop.f32.mrb[0].mxu0
        %v5057 = vadd.f32 %v1920, %v5056
        %5058 = vmatprep.mubr.f32.mxu0 0.0
        %5059 = vmatmul.mubr.f32.gmra.mrb[0].mxu0 %v646
        %v5060 = vpop.f32.mrb[0].mxu0
        %v5061 = vadd.f32 %v1925, %v5060
        %v5062 = vpop.f32.mrb[0].mxu0
        %v5063 = vadd.f32 %v1925, %v5062
        %5064 = vmatprep.mubr.f32.mxu0 0.0
        %5065 = vmatmul.mubr.f32.gmra.mrb[0].mxu0 %v647
        %v5066 = vpop.f32.mrb[0].mxu0
        %v5067 = vadd.f32 %v1930, %v5066
        %v5068 = vpop.f32.mrb[0].mxu0
        %v5069 = vadd.f32 %v1930, %v5068
        %5070 = vmatprep.mubr.f32.mxu0 0.0
        %5071 = vmatmul.mubr.f32.gmra.mrb[0].mxu0 %v648
        %v5072 = vpop.f32.mrb[0].mxu0
        %v5073 = vadd.f32 %v1935, %v5072
        %v5074 = vpop.f32.mrb[0].mxu0
        %v5075 = vadd.f32 %v1935, %v5074
        %5076 = vmatprep.mubr.f32.mxu0 0.0
        %5077 = vmatmul.mubr.f32.gmra.mrb[0].mxu0 %v649
        %v5078 = vpop.f32.mrb[0].mxu0
        %v5079 = vadd.f32 %v1940, %v5078
        %v5080 = vpop.f32.mrb[0].mxu0
        %v5081 = vadd.f32 %v1940, %v5080
        %5082 = vmatprep.mubr.f32.mxu0 0.0
        %5083 = vmatmul.mubr.f32.gmra.mrb[0].mxu0 %v650
        %v5084 = vpop.f32.mrb[0].mxu0
        %v5085 = vadd.f32 %v1945, %v5084
        %v5086 = vpop.f32.mrb[0].mxu0
        %v5087 = vadd.f32 %v1945, %v5086
        %5088 = vmatprep.mubr.f32.mxu0 0.0
        %5089 = vmatmul.mubr.f32.gmra.mrb[0].mxu0 %v651
        %v5090 = vpop.f32.mrb[0].mxu0
        %v5091 = vadd.f32 %v1950, %v5090
        %v5092 = vpop.f32.mrb[0].mxu0
        %v5093 = vadd.f32 %v1950, %v5092
        %5094 = vmatprep.mubr.f32.mxu0 0.0
        %5095 = vmatmul.mubr.f32.gmra.mrb[0].mxu0 %v652
        %v5096 = vpop.f32.mrb[0].mxu0
        %v5097 = vadd.f32 %v1955, %v5096
        %v5098 = vpop.f32.mrb[0].mxu0
        %v5099 = vadd.f32 %v1955, %v5098
        %5100 = vmatprep.mubr.f32.mxu0 0.0
        %5101 = vmatmul.mubr.f32.gmra.mrb[0].mxu0 %v653
        %v5102 = vpop.f32.mrb[0].mxu0
        %v5103 = vadd.f32 %v1960, %v5102
        %v5104 = vpop.f32.mrb[0].mxu0
        %v5105 = vadd.f32 %v1960, %v5104
        %5106 = vmatprep.mubr.f32.mxu0 0.0
        %5107 = vmatmul.mubr.f32.gmra.mrb[0].mxu0 %v654
        %v5108 = vpop.f32.mrb[0].mxu0
        %v5109 = vadd.f32 %v1965, %v5108
        %v5110 = vpop.f32.mrb[0].mxu0
        %v5111 = vadd.f32 %v1965, %v5110
        %5112 = vmatprep.mubr.f32.mxu0 0.0
        %5113 = vmatmul.mubr.f32.gmra.mrb[0].mxu0 %v655
        %v5114 = vpop.f32.mrb[0].mxu0
        %v5115 = vadd.f32 %v1970, %v5114
        %v5116 = vpop.f32.mrb[0].mxu0
        %v5117 = vadd.f32 %v1970, %v5116
        %5118 = vmatprep.mubr.f32.mxu0 0.0
        %5119 = vmatmul.mubr.f32.gmra.mrb[0].mxu0 %v656
        %v5120 = vpop.f32.mrb[0].mxu0
        %v5121 = vadd.f32 %v1975, %v5120
        %v5122 = vpop.f32.mrb[0].mxu0
        %v5123 = vadd.f32 %v1975, %v5122
        %5124 = vmatprep.mubr.f32.mxu0 0.0
        %5125 = vmatmul.mubr.f32.gmra.mrb[0].mxu0 %v657
        %v5126 = vpop.f32.mrb[0].mxu0
        %v5127 = vadd.f32 %v1980, %v5126
        %v5128 = vpop.f32.mrb[0].mxu0
        %v5129 = vadd.f32 %v1980, %v5128
        %5130 = vmatprep.mubr.f32.mxu0 0.0
        %5131 = vmatmul.mubr.f32.gmra.mrb[0].mxu0 %v658
        %v5132 = vpop.f32.mrb[0].mxu0
        %v5133 = vadd.f32 %v1985, %v5132
        %v5134 = vpop.f32.mrb[0].mxu0
        %v5135 = vadd.f32 %v1985, %v5134
        %5136 = vmatprep.mubr.f32.mxu0 0.0
        %5137 = vmatmul.mubr.f32.gmra.mrb[0].mxu0 %v659
        %v5138 = vpop.f32.mrb[0].mxu0
        %v5139 = vadd.f32 %v1990, %v5138
        %v5140 = vpop.f32.mrb[0].mxu0
        %v5141 = vadd.f32 %v1990, %v5140
        %5142 = vmatprep.mubr.f32.mxu0 0.0
        %5143 = vmatmul.mubr.f32.gmra.mrb[0].mxu0 %v660
        %v5144 = vpop.f32.mrb[0].mxu0
        %v5145 = vadd.f32 %v1995, %v5144
        %v5146 = vpop.f32.mrb[0].mxu0
        %v5147 = vadd.f32 %v1995, %v5146
        %5148 = vmatprep.mubr.f32.mxu0 0.0
        %5149 = vmatmul.mubr.f32.gmra.mrb[0].mxu0 %v661
        %v5150 = vpop.f32.mrb[0].mxu0
        %v5151 = vadd.f32 %v2000, %v5150
        %v5152 = vpop.f32.mrb[0].mxu0
        %v5153 = vadd.f32 %v2000, %v5152
        %5154 = vmatprep.mubr.f32.mxu0 0.0
        %5155 = vmatmul.mubr.f32.gmra.mrb[0].mxu0 %v662
        %v5156 = vpop.f32.mrb[0].mxu0
        %v5157 = vadd.f32 %v2005, %v5156
        %v5158 = vpop.f32.mrb[0].mxu0
        %v5159 = vadd.f32 %v2005, %v5158
        %5160 = vmatprep.mubr.f32.mxu0 0.0
        %5161 = vmatmul.mubr.f32.gmra.mrb[0].mxu0 %v663
        %v5162 = vpop.f32.mrb[0].mxu0
        %v5163 = vadd.f32 %v2010, %v5162
        %v5164 = vpop.f32.mrb[0].mxu0
        %v5165 = vadd.f32 %v2010, %v5164
        %5166 = vmatprep.mubr.f32.mxu0 0.0
        %5167 = vmatmul.mubr.f32.gmra.mrb[0].mxu0 %v664
        %v5168 = vpop.f32.mrb[0].mxu0
        %v5169 = vadd.f32 %v2015, %v5168
        %v5170 = vpop.f32.mrb[0].mxu0
        %v5171 = vadd.f32 %v2015, %v5170
        %5172 = vmatprep.mubr.f32.mxu0 0.0
        %5173 = vmatmul.mubr.f32.gmra.mrb[0].mxu0 %v665
        %v5174 = vpop.f32.mrb[0].mxu0
        %v5175 = vadd.f32 %v2020, %v5174
        %v5176 = vpop.f32.mrb[0].mxu0
        %v5177 = vadd.f32 %v2020, %v5176
        %5178 = vmatprep.mubr.f32.mxu0 0.0
        %5179 = vmatmul.mubr.f32.gmra.mrb[0].mxu0 %v666
        %v5180 = vpop.f32.mrb[0].mxu0
        %v5181 = vadd.f32 %v2025, %v5180
        %v5182 = vpop.f32.mrb[0].mxu0
        %v5183 = vadd.f32 %v2025, %v5182
        %5184 = vmatprep.mubr.f32.mxu0 0.0
        %5185 = vmatmul.mubr.f32.gmra.mrb[0].mxu0 %v667
        %v5186 = vpop.f32.mrb[0].mxu0
        %v5187 = vadd.f32 %v2030, %v5186
        %v5188 = vpop.f32.mrb[0].mxu0
        %v5189 = vadd.f32 %v2030, %v5188
        %5190 = vmatprep.mubr.f32.mxu0 0.0
        %5191 = vmatmul.mubr.f32.gmra.mrb[0].mxu0 %v668
        %v5192 = vpop.f32.mrb[0].mxu0
        %v5193 = vadd.f32 %v2035, %v5192
        %v5194 = vpop.f32.mrb[0].mxu0
        %v5195 = vadd.f32 %v2035, %v5194
        %5196 = vmatprep.mubr.f32.mxu0 0.0
        %5197 = vmatmul.mubr.f32.gmra.mrb[0].mxu0 %v669
        %v5198 = vpop.f32.mrb[0].mxu0
        %v5199 = vadd.f32 %v2040, %v5198
        %v5200 = vpop.f32.mrb[0].mxu0
        %v5201 = vadd.f32 %v2040, %v5200
        %5202 = vmatprep.mubr.f32.mxu0 0.0
        %5203 = vmatmul.mubr.f32.gmra.mrb[0].mxu0 %v670
        %v5204 = vpop.f32.mrb[0].mxu0
        %v5205 = vadd.f32 %v2045, %v5204
        %v5206 = vpop.f32.mrb[0].mxu0
        %v5207 = vadd.f32 %v2045, %v5206
        %5208 = vmatprep.mubr.f32.mxu0 0.0
        %5209 = vmatmul.mubr.f32.gmra.mrb[0].mxu0 %v671
        %v5210 = vpop.f32.mrb[0].mxu0
        %v5211 = vadd.f32 %v2050, %v5210
        %v5212 = vpop.f32.mrb[0].mxu0
        %v5213 = vadd.f32 %v2050, %v5212
        %5214 = vmatprep.mubr.f32.mxu0 0.0
        %5215 = vmatmul.mubr.f32.gmra.mrb[0].mxu0 %v672
        %v5216 = vpop.f32.mrb[0].mxu0
        %v5217 = vadd.f32 %v2055, %v5216
        %v5218 = vpop.f32.mrb[0].mxu0
        %v5219 = vadd.f32 %v2055, %v5218
        %5220 = vmatprep.mubr.f32.mxu0 0.0
        %5221 = vmatmul.mubr.f32.gmra.mrb[0].mxu0 %v673
        %v5222 = vpop.f32.mrb[0].mxu0
        %v5223 = vadd.f32 %v2060, %v5222
        %v5224 = vpop.f32.mrb[0].mxu0
        %v5225 = vadd.f32 %v2060, %v5224
        %5226 = vmatprep.mubr.f32.mxu0 0.0
        %5227 = vmatmul.mubr.f32.gmra.mrb[0].mxu0 %v674
        %v5228 = vpop.f32.mrb[0].mxu0
        %v5229 = vadd.f32 %v2065, %v5228
        %v5230 = vpop.f32.mrb[0].mxu0
        %v5231 = vadd.f32 %v2065, %v5230
        %5232 = vmatprep.mubr.f32.mxu0 0.0
        %5233 = vmatmul.mubr.f32.gmra.mrb[0].mxu0 %v675
        %v5234 = vpop.f32.mrb[0].mxu0
        %v5235 = vadd.f32 %v2070, %v5234
        %v5236 = vpop.f32.mrb[0].mxu0
        %v5237 = vadd.f32 %v2070, %v5236
        %5238 = vmatprep.mubr.f32.mxu0 0.0
        %5239 = vmatmul.mubr.f32.gmra.mrb[0].mxu0 %v676
        %v5240 = vpop.f32.mrb[0].mxu0
        %v5241 = vadd.f32 %v2075, %v5240
        %v5242 = vpop.f32.mrb[0].mxu0
        %v5243 = vadd.f32 %v2075, %v5242
        %5244 = vmatprep.mubr.f32.mxu0 0.0
        %5245 = vmatmul.mubr.f32.gmra.mrb[0].mxu0 %v677
        %v5246 = vpop.f32.mrb[0].mxu0
        %v5247 = vadd.f32 %v2080, %v5246
        %v5248 = vpop.f32.mrb[0].mxu0
        %v5249 = vadd.f32 %v2080, %v5248
        %5250 = vmatprep.mubr.f32.mxu0 0.0
        %5251 = vmatmul.mubr.f32.gmra.mrb[0].mxu0 %v678
        %v5252 = vpop.f32.mrb[0].mxu0
        %v5253 = vadd.f32 %v2085, %v5252
        %v5254 = vpop.f32.mrb[0].mxu0
        %v5255 = vadd.f32 %v2085, %v5254
        %5256 = vmatprep.mubr.f32.mxu0 0.0
        %5257 = vmatmul.mubr.f32.gmra.mrb[0].mxu0 %v679
        %v5258 = vpop.f32.mrb[0].mxu0
        %v5259 = vadd.f32 %v2090, %v5258
        %v5260 = vpop.f32.mrb[0].mxu0
        %v5261 = vadd.f32 %v2090, %v5260
        %5262 = vmatprep.mubr.f32.mxu0 0.0
        %5263 = vmatmul.mubr.f32.gmra.mrb[0].mxu0 %v680
        %v5264 = vpop.f32.mrb[0].mxu0
        %v5265 = vadd.f32 %v2095, %v5264
        %v5266 = vpop.f32.mrb[0].mxu0
        %v5267 = vadd.f32 %v2095, %v5266
        %5268 = vmatprep.mubr.f32.mxu0 0.0
        %5269 = vmatmul.mubr.f32.gmra.mrb[0].mxu0 %v681
        %v5270 = vpop.f32.mrb[0].mxu0
        %v5271 = vadd.f32 %v2100, %v5270
        %v5272 = vpop.f32.mrb[0].mxu0
        %v5273 = vadd.f32 %v2100, %v5272
        %5274 = vmatprep.mubr.f32.mxu0 0.0
        %5275 = vmatmul.mubr.f32.gmra.mrb[0].mxu0 %v682
        %v5276 = vpop.f32.mrb[0].mxu0
        %v5277 = vadd.f32 %v2105, %v5276
        %v5278 = vpop.f32.mrb[0].mxu0
        %v5279 = vadd.f32 %v2105, %v5278
        %5280 = vmatprep.mubr.f32.mxu0 0.0
        %5281 = vmatmul.mubr.f32.gmra.mrb[0].mxu0 %v683
        %v5282 = vpop.f32.mrb[0].mxu0
        %v5283 = vadd.f32 %v2110, %v5282
        %v5284 = vpop.f32.mrb[0].mxu0
        %v5285 = vadd.f32 %v2110, %v5284
        %5286 = vmatprep.mubr.f32.mxu0 0.0
        %5287 = vmatmul.mubr.f32.gmra.mrb[0].mxu0 %v684
        %v5288 = vpop.f32.mrb[0].mxu0
        %v5289 = vadd.f32 %v2115, %v5288
        %v5290 = vpop.f32.mrb[0].mxu0
        %v5291 = vadd.f32 %v2115, %v5290
        %5292 = vmatprep.mubr.f32.mxu0 0.0
        %5293 = vmatmul.mubr.f32.gmra.mrb[0].mxu0 %v685
        %v5294 = vpop.f32.mrb[0].mxu0
        %v5295 = vadd.f32 %v2120, %v5294
        %v5296 = vpop.f32.mrb[0].mxu0
        %v5297 = vadd.f32 %v2120, %v5296
        %5298 = vmatprep.mubr.f32.mxu0 0.0
        %5299 = vmatmul.mubr.f32.gmra.mrb[0].mxu0 %v686
        %v5300 = vpop.f32.mrb[0].mxu0
        %v5301 = vadd.f32 %v2125, %v5300
        %v5302 = vpop.f32.mrb[0].mxu0
        %v5303 = vadd.f32 %v2125, %v5302
        %5304 = vmatprep.mubr.f32.mxu0 0.0
        %5305 = vmatmul.mubr.f32.gmra.mrb[0].mxu0 %v687
        %v5306 = vpop.f32.mrb[0].mxu0
        %v5307 = vadd.f32 %v2130, %v5306
        %v5308 = vpop.f32.mrb[0].mxu0
        %v5309 = vadd.f32 %v2130, %v5308
        %5310 = vmatprep.mubr.f32.mxu0 0.0
        %5311 = vmatmul.mubr.f32.gmra.mrb[0].mxu0 %v688
        %v5312 = vpop.f32.mrb[0].mxu0
        %v5313 = vadd.f32 %v2135, %v5312
        %v5314 = vpop.f32.mrb[0].mxu0
        %v5315 = vadd.f32 %v2135, %v5314
        %5316 = vmatprep.mubr.f32.mxu0 0.0
        %5317 = vmatmul.mubr.f32.gmra.mrb[0].mxu0 %v689
        %v5318 = vpop.f32.mrb[0].mxu0
        %v5319 = vadd.f32 %v2140, %v5318
        %v5320 = vpop.f32.mrb[0].mxu0
        %v5321 = vadd.f32 %v2140, %v5320
        %5322 = vmatprep.mubr.f32.mxu0 0.0
        %5323 = vmatmul.mubr.f32.gmra.mrb[0].mxu0 %v690
        %v5324 = vpop.f32.mrb[0].mxu0
        %v5325 = vadd.f32 %v2145, %v5324
        %v5326 = vpop.f32.mrb[0].mxu0
        %v5327 = vadd.f32 %v2145, %v5326
        %5328 = vmatprep.mubr.f32.mxu0 0.0
        %5329 = vmatmul.mubr.f32.gmra.mrb[0].mxu0 %v691
        %v5330 = vpop.f32.mrb[0].mxu0
        %v5331 = vadd.f32 %v2150, %v5330
        %v5332 = vpop.f32.mrb[0].mxu0
        %v5333 = vadd.f32 %v2150, %v5332
        %5334 = vmatprep.mubr.f32.mxu0 0.0
        %5335 = vmatmul.mubr.f32.gmra.mrb[0].mxu0 %v692
        %v5336 = vpop.f32.mrb[0].mxu0
        %v5337 = vadd.f32 %v2155, %v5336
        %v5338 = vpop.f32.mrb[0].mxu0
        %v5339 = vadd.f32 %v2155, %v5338
        %5340 = vmatprep.mubr.f32.mxu0 0.0
        %5341 = vmatmul.mubr.f32.gmra.mrb[0].mxu0 %v693
        %v5342 = vpop.f32.mrb[0].mxu0
        %v5343 = vadd.f32 %v2160, %v5342
        %v5344 = vpop.f32.mrb[0].mxu0
        %v5345 = vadd.f32 %v2160, %v5344
        %5346 = vmatprep.mubr.f32.mxu0 0.0
        %5347 = vmatmul.mubr.f32.gmra.mrb[0].mxu0 %v694
        %v5348 = vpop.f32.mrb[0].mxu0
        %v5349 = vadd.f32 %v2165, %v5348
        %v5350 = vpop.f32.mrb[0].mxu0
        %v5351 = vadd.f32 %v2165, %v5350
        %5352 = vmatprep.mubr.f32.mxu0 0.0
        %5353 = vmatmul.mubr.f32.gmra.mrb[0].mxu0 %v695
        %v5354 = vpop.f32.mrb[0].mxu0
        %v5355 = vadd.f32 %v2170, %v5354
        %v5356 = vpop.f32.mrb[0].mxu0
        %v5357 = vadd.f32 %v2170, %v5356
        %5358 = vmatprep.mubr.f32.mxu0 0.0
        %5359 = vmatmul.mubr.f32.gmra.mrb[0].mxu0 %v696
        %v5360 = vpop.f32.mrb[0].mxu0
        %v5361 = vadd.f32 %v2175, %v5360
        %v5362 = vpop.f32.mrb[0].mxu0
        %v5363 = vadd.f32 %v2175, %v5362
        %5364 = vmatprep.mubr.f32.mxu0 0.0
        %5365 = vmatmul.mubr.f32.gmra.mrb[0].mxu0 %v697
        %v5366 = vpop.f32.mrb[0].mxu0
        %v5367 = vadd.f32 %v2180, %v5366
        %v5368 = vpop.f32.mrb[0].mxu0
        %v5369 = vadd.f32 %v2180, %v5368
        %5370 = vmatprep.mubr.f32.mxu0 0.0
        %5371 = vmatmul.mubr.f32.gmra.mrb[0].mxu0 %v698
        %v5372 = vpop.f32.mrb[0].mxu0
        %v5373 = vadd.f32 %v2185, %v5372
        %v5374 = vpop.f32.mrb[0].mxu0
        %v5375 = vadd.f32 %v2185, %v5374
        %5376 = vmatprep.mubr.f32.mxu0 0.0
        %5377 = vmatmul.mubr.f32.gmra.mrb[0].mxu0 %v699
        %v5378 = vpop.f32.mrb[0].mxu0
        %v5379 = vadd.f32 %v2190, %v5378
        %v5380 = vpop.f32.mrb[0].mxu0
        %v5381 = vadd.f32 %v2190, %v5380
        %5382 = vmatprep.mubr.f32.mxu0 0.0
        %5383 = vmatmul.mubr.f32.gmra.mrb[0].mxu0 %v700
        %v5384 = vpop.f32.mrb[0].mxu0
        %v5385 = vadd.f32 %v2195, %v5384
        %v5386 = vpop.f32.mrb[0].mxu0
        %v5387 = vadd.f32 %v2195, %v5386
        %5388 = vmatprep.mubr.f32.mxu0 0.0
        %5389 = vmatmul.mubr.f32.gmra.mrb[0].mxu0 %v701
        %v5390 = vpop.f32.mrb[0].mxu0
        %v5391 = vadd.f32 %v2200, %v5390
        %v5392 = vpop.f32.mrb[0].mxu0
        %v5393 = vadd.f32 %v2200, %v5392
        %5394 = vmatprep.mubr.f32.mxu0 0.0
        %5395 = vmatmul.mubr.f32.gmra.mrb[0].mxu0 %v702
        %v5396 = vpop.f32.mrb[0].mxu0
        %v5397 = vadd.f32 %v2205, %v5396
        %v5398 = vpop.f32.mrb[0].mxu0
        %v5399 = vadd.f32 %v2205, %v5398
        %5400 = vmatprep.mubr.f32.mxu0 0.0
        %5401 = vmatmul.mubr.f32.gmra.mrb[0].mxu0 %v703
        %v5402 = vpop.f32.mrb[0].mxu0
        %v5403 = vadd.f32 %v2210, %v5402
        %v5404 = vpop.f32.mrb[0].mxu0
        %v5405 = vadd.f32 %v2210, %v5404
        %5406 = vmatprep.mubr.f32.mxu0 0.0
        %5407 = vmatmul.mubr.f32.gmra.mrb[0].mxu0 %v704
        %v5408 = vpop.f32.mrb[0].mxu0
        %v5409 = vadd.f32 %v2215, %v5408
        %v5410 = vpop.f32.mrb[0].mxu0
        %v5411 = vadd.f32 %v2215, %v5410
        %5412 = vmatprep.mubr.f32.mxu0 0.0
        %5413 = vmatmul.mubr.f32.gmra.mrb[0].mxu0 %v705
        %v5414 = vpop.f32.mrb[0].mxu0
        %v5415 = vadd.f32 %v2220, %v5414
        %v5416 = vpop.f32.mrb[0].mxu0
        %v5417 = vadd.f32 %v2220, %v5416
        %5418 = vmatprep.mubr.f32.mxu0 0.0
        %5419 = vmatmul.mubr.f32.gmra.mrb[0].mxu0 %v706
        %v5420 = vpop.f32.mrb[0].mxu0
        %v5421 = vadd.f32 %v2225, %v5420
        %v5422 = vpop.f32.mrb[0].mxu0
        %v5423 = vadd.f32 %v2225, %v5422
        %5424 = vmatprep.mubr.f32.mxu0 0.0
        %5425 = vmatmul.mubr.f32.gmra.mrb[0].mxu0 %v707
        %v5426 = vpop.f32.mrb[0].mxu0
        %v5427 = vadd.f32 %v2230, %v5426
        %v5428 = vpop.f32.mrb[0].mxu0
        %v5429 = vadd.f32 %v2230, %v5428
        %5430 = vmatprep.mubr.f32.mxu0 0.0
        %5431 = vmatmul.mubr.f32.gmra.mrb[0].mxu0 %v708
        %v5432 = vpop.f32.mrb[0].mxu0
        %v5433 = vadd.f32 %v2235, %v5432
        %v5434 = vpop.f32.mrb[0].mxu0
        %v5435 = vadd.f32 %v2235, %v5434
        %5436 = vmatprep.mubr.f32.mxu0 0.0
        %5437 = vmatmul.mubr.f32.gmra.mrb[0].mxu0 %v709
        %v5438 = vpop.f32.mrb[0].mxu0
        %v5439 = vadd.f32 %v2240, %v5438
        %v5440 = vpop.f32.mrb[0].mxu0
        %v5441 = vadd.f32 %v2240, %v5440
        %5442 = vmatprep.mubr.f32.mxu0 0.0
        %5443 = vmatmul.mubr.f32.gmra.mrb[0].mxu0 %v710
        %v5444 = vpop.f32.mrb[0].mxu0
        %v5445 = vadd.f32 %v2245, %v5444
        %v5446 = vpop.f32.mrb[0].mxu0
        %v5447 = vadd.f32 %v2245, %v5446
        %5448 = vdwg.mxu0
        %v5449 = vmax.f32 %v2314, 0.0
        %v5450 = vmax.f32 %v2316, 0.0
        %v5451 = vmax.f32 %v3915, 0.0
        %v5452 = vmax.f32 %v3917, 0.0
        %v5453 = vmax.f32 %v2320, 0.0
        %v5454 = vmax.f32 %v2322, 0.0
        %v5455 = vmax.f32 %v3921, 0.0
        %v5456 = vmax.f32 %v3923, 0.0
        %v5457 = vmax.f32 %v2326, 0.0
        %v5458 = vmax.f32 %v2328, 0.0
        %v5459 = vmax.f32 %v3927, 0.0
        %v5460 = vmax.f32 %v3929, 0.0
        %v5461 = vmax.f32 %v2332, 0.0
        %v5462 = vmax.f32 %v2334, 0.0
        %v5463 = vmax.f32 %v3933, 0.0
        %v5464 = vmax.f32 %v3935, 0.0
        %v5465 = vmax.f32 %v2338, 0.0
        %v5466 = vmax.f32 %v2340, 0.0
        %v5467 = vmax.f32 %v3939, 0.0
        %v5468 = vmax.f32 %v3941, 0.0
        %v5469 = vmax.f32 %v2344, 0.0
        %v5470 = vmax.f32 %v2346, 0.0
        %v5471 = vmax.f32 %v3945, 0.0
        %v5472 = vmax.f32 %v3947, 0.0
        %v5473 = vmax.f32 %v2350, 0.0
        %v5474 = vmax.f32 %v2352, 0.0
        %v5475 = vmax.f32 %v3951, 0.0
        %v5476 = vmax.f32 %v3953, 0.0
        %v5477 = vmax.f32 %v2356, 0.0
        %v5478 = vmax.f32 %v2358, 0.0
        %v5479 = vmax.f32 %v3957, 0.0
        %v5480 = vmax.f32 %v3959, 0.0
        %v5481 = vmax.f32 %v2362, 0.0
        %v5482 = vmax.f32 %v2364, 0.0
        %v5483 = vmax.f32 %v3963, 0.0
        %v5484 = vmax.f32 %v3965, 0.0
        %v5485 = vmax.f32 %v2368, 0.0
        %v5486 = vmax.f32 %v2370, 0.0
        %v5487 = vmax.f32 %v3969, 0.0
        %v5488 = vmax.f32 %v3971, 0.0
        %v5489 = vmax.f32 %v2374, 0.0
        %v5490 = vmax.f32 %v2376, 0.0
        %v5491 = vmax.f32 %v3975, 0.0
        %v5492 = vmax.f32 %v3977, 0.0
        %v5493 = vmax.f32 %v2380, 0.0
        %v5494 = vmax.f32 %v2382, 0.0
        %v5495 = vmax.f32 %v3981, 0.0
        %v5496 = vmax.f32 %v3983, 0.0
        %v5497 = vmax.f32 %v2386, 0.0
        %v5498 = vmax.f32 %v2388, 0.0
        %v5499 = vmax.f32 %v3987, 0.0
        %v5500 = vmax.f32 %v3989, 0.0
        %v5501 = vmax.f32 %v2392, 0.0
        %v5502 = vmax.f32 %v2394, 0.0
        %v5503 = vmax.f32 %v3993, 0.0
        %v5504 = vmax.f32 %v3995, 0.0
        %v5505 = vmax.f32 %v2398, 0.0
        %v5506 = vmax.f32 %v2400, 0.0
        %v5507 = vmax.f32 %v3999, 0.0
        %v5508 = vmax.f32 %v4001, 0.0
        %v5509 = vmax.f32 %v2404, 0.0
        %v5510 = vmax.f32 %v2406, 0.0
        %v5511 = vmax.f32 %v4005, 0.0
        %v5512 = vmax.f32 %v4007, 0.0
        %v5513 = vmax.f32 %v2410, 0.0
        %v5514 = vmax.f32 %v2412, 0.0
        %v5515 = vmax.f32 %v4011, 0.0
        %v5516 = vmax.f32 %v4013, 0.0
        %v5517 = vmax.f32 %v2416, 0.0
        %v5518 = vmax.f32 %v2418, 0.0
        %v5519 = vmax.f32 %v4017, 0.0
        %v5520 = vmax.f32 %v4019, 0.0
        %v5521 = vmax.f32 %v2422, 0.0
        %v5522 = vmax.f32 %v2424, 0.0
        %v5523 = vmax.f32 %v4023, 0.0
        %v5524 = vmax.f32 %v4025, 0.0
        %v5525 = vmax.f32 %v2428, 0.0
        %v5526 = vmax.f32 %v2430, 0.0
        %v5527 = vmax.f32 %v4029, 0.0
        %v5528 = vmax.f32 %v4031, 0.0
        %v5529 = vmax.f32 %v2434, 0.0
        %v5530 = vmax.f32 %v2436, 0.0
        %v5531 = vmax.f32 %v4035, 0.0
        %v5532 = vmax.f32 %v4037, 0.0
        %v5533 = vmax.f32 %v2440, 0.0
        %v5534 = vmax.f32 %v2442, 0.0
        %v5535 = vmax.f32 %v4041, 0.0
        %v5536 = vmax.f32 %v4043, 0.0
        %v5537 = vmax.f32 %v2446, 0.0
        %v5538 = vmax.f32 %v2448, 0.0
        %v5539 = vmax.f32 %v4047, 0.0
        %v5540 = vmax.f32 %v4049, 0.0
        %v5541 = vmax.f32 %v2452, 0.0
        %v5542 = vmax.f32 %v2454, 0.0
        %v5543 = vmax.f32 %v4053, 0.0
        %v5544 = vmax.f32 %v4055, 0.0
        %v5545 = vmax.f32 %v2458, 0.0
        %v5546 = vmax.f32 %v2460, 0.0
        %v5547 = vmax.f32 %v4059, 0.0
        %v5548 = vmax.f32 %v4061, 0.0
        %v5549 = vmax.f32 %v2464, 0.0
        %v5550 = vmax.f32 %v2466, 0.0
        %v5551 = vmax.f32 %v4065, 0.0
        %v5552 = vmax.f32 %v4067, 0.0
        %v5553 = vmax.f32 %v2470, 0.0
        %v5554 = vmax.f32 %v2472, 0.0
        %v5555 = vmax.f32 %v4071, 0.0
        %v5556 = vmax.f32 %v4073, 0.0
        %v5557 = vmax.f32 %v2476, 0.0
        %v5558 = vmax.f32 %v2478, 0.0
        %v5559 = vmax.f32 %v4077, 0.0
        %v5560 = vmax.f32 %v4079, 0.0
        %v5561 = vmax.f32 %v2482, 0.0
        %v5562 = vmax.f32 %v2484, 0.0
        %v5563 = vmax.f32 %v4083, 0.0
        %v5564 = vmax.f32 %v4085, 0.0
        %v5565 = vmax.f32 %v2488, 0.0
        %v5566 = vmax.f32 %v2490, 0.0
        %v5567 = vmax.f32 %v4089, 0.0
        %v5568 = vmax.f32 %v4091, 0.0
        %v5569 = vmax.f32 %v2494, 0.0
        %v5570 = vmax.f32 %v2496, 0.0
        %v5571 = vmax.f32 %v4095, 0.0
        %v5572 = vmax.f32 %v4097, 0.0
        %v5573 = vmax.f32 %v2500, 0.0
        %v5574 = vmax.f32 %v2502, 0.0
        %v5575 = vmax.f32 %v4101, 0.0
        %v5576 = vmax.f32 %v4103, 0.0
        %v5577 = vmax.f32 %v2506, 0.0
        %v5578 = vmax.f32 %v2508, 0.0
        %v5579 = vmax.f32 %v4107, 0.0
        %v5580 = vmax.f32 %v4109, 0.0
        %v5581 = vmax.f32 %v2512, 0.0
        %v5582 = vmax.f32 %v2514, 0.0
        %v5583 = vmax.f32 %v4113, 0.0
        %v5584 = vmax.f32 %v4115, 0.0
        %v5585 = vmax.f32 %v2518, 0.0
        %v5586 = vmax.f32 %v2520, 0.0
        %v5587 = vmax.f32 %v4119, 0.0
        %v5588 = vmax.f32 %v4121, 0.0
        %v5589 = vmax.f32 %v2524, 0.0
        %v5590 = vmax.f32 %v2526, 0.0
        %v5591 = vmax.f32 %v4125, 0.0
        %v5592 = vmax.f32 %v4127, 0.0
        %v5593 = vmax.f32 %v2530, 0.0
        %v5594 = vmax.f32 %v2532, 0.0
        %v5595 = vmax.f32 %v4131, 0.0
        %v5596 = vmax.f32 %v4133, 0.0
        %v5597 = vmax.f32 %v2536, 0.0
        %v5598 = vmax.f32 %v2538, 0.0
        %v5599 = vmax.f32 %v4137, 0.0
        %v5600 = vmax.f32 %v4139, 0.0
        %v5601 = vmax.f32 %v2542, 0.0
        %v5602 = vmax.f32 %v2544, 0.0
        %v5603 = vmax.f32 %v4143, 0.0
        %v5604 = vmax.f32 %v4145, 0.0
        %v5605 = vmax.f32 %v2548, 0.0
        %v5606 = vmax.f32 %v2550, 0.0
        %v5607 = vmax.f32 %v4149, 0.0
        %v5608 = vmax.f32 %v4151, 0.0
        %v5609 = vmax.f32 %v2554, 0.0
        %v5610 = vmax.f32 %v2556, 0.0
        %v5611 = vmax.f32 %v4155, 0.0
        %v5612 = vmax.f32 %v4157, 0.0
        %v5613 = vmax.f32 %v2560, 0.0
        %v5614 = vmax.f32 %v2562, 0.0
        %v5615 = vmax.f32 %v4161, 0.0
        %v5616 = vmax.f32 %v4163, 0.0
        %v5617 = vmax.f32 %v2566, 0.0
        %v5618 = vmax.f32 %v2568, 0.0
        %v5619 = vmax.f32 %v4167, 0.0
        %v5620 = vmax.f32 %v4169, 0.0
        %v5621 = vmax.f32 %v2572, 0.0
        %v5622 = vmax.f32 %v2574, 0.0
        %v5623 = vmax.f32 %v4173, 0.0
        %v5624 = vmax.f32 %v4175, 0.0
        %v5625 = vmax.f32 %v2578, 0.0
        %v5626 = vmax.f32 %v2580, 0.0
        %v5627 = vmax.f32 %v4179, 0.0
        %v5628 = vmax.f32 %v4181, 0.0
        %v5629 = vmax.f32 %v2584, 0.0
        %v5630 = vmax.f32 %v2586, 0.0
        %v5631 = vmax.f32 %v4185, 0.0
        %v5632 = vmax.f32 %v4187, 0.0
        %v5633 = vmax.f32 %v2590, 0.0
        %v5634 = vmax.f32 %v2592, 0.0
        %v5635 = vmax.f32 %v4191, 0.0
        %v5636 = vmax.f32 %v4193, 0.0
        %v5637 = vmax.f32 %v2596, 0.0
        %v5638 = vmax.f32 %v2598, 0.0
        %v5639 = vmax.f32 %v4197, 0.0
        %v5640 = vmax.f32 %v4199, 0.0
        %v5641 = vmax.f32 %v2602, 0.0
        %v5642 = vmax.f32 %v2604, 0.0
        %v5643 = vmax.f32 %v4203, 0.0
        %v5644 = vmax.f32 %v4205, 0.0
        %v5645 = vmax.f32 %v2608, 0.0
        %v5646 = vmax.f32 %v2610, 0.0
        %v5647 = vmax.f32 %v4209, 0.0
        %v5648 = vmax.f32 %v4211, 0.0
        %v5649 = vmax.f32 %v2614, 0.0
        %v5650 = vmax.f32 %v2616, 0.0
        %v5651 = vmax.f32 %v4215, 0.0
        %v5652 = vmax.f32 %v4217, 0.0
        %v5653 = vmax.f32 %v2620, 0.0
        %v5654 = vmax.f32 %v2622, 0.0
        %v5655 = vmax.f32 %v4221, 0.0
        %v5656 = vmax.f32 %v4223, 0.0
        %v5657 = vmax.f32 %v2626, 0.0
        %v5658 = vmax.f32 %v2628, 0.0
        %v5659 = vmax.f32 %v4227, 0.0
        %v5660 = vmax.f32 %v4229, 0.0
        %v5661 = vmax.f32 %v2632, 0.0
        %v5662 = vmax.f32 %v2634, 0.0
        %v5663 = vmax.f32 %v4233, 0.0
        %v5664 = vmax.f32 %v4235, 0.0
        %v5665 = vmax.f32 %v2638, 0.0
        %v5666 = vmax.f32 %v2640, 0.0
        %v5667 = vmax.f32 %v4239, 0.0
        %v5668 = vmax.f32 %v4241, 0.0
        %v5669 = vmax.f32 %v2644, 0.0
        %v5670 = vmax.f32 %v2646, 0.0
        %v5671 = vmax.f32 %v4245, 0.0
        %v5672 = vmax.f32 %v4247, 0.0
        %v5673 = vmax.f32 %v2650, 0.0
        %v5674 = vmax.f32 %v2652, 0.0
        %v5675 = vmax.f32 %v4251, 0.0
        %v5676 = vmax.f32 %v4253, 0.0
        %v5677 = vmax.f32 %v2656, 0.0
        %v5678 = vmax.f32 %v2658, 0.0
        %v5679 = vmax.f32 %v4257, 0.0
        %v5680 = vmax.f32 %v4259, 0.0
        %v5681 = vmax.f32 %v2662, 0.0
        %v5682 = vmax.f32 %v2664, 0.0
        %v5683 = vmax.f32 %v4263, 0.0
        %v5684 = vmax.f32 %v4265, 0.0
        %v5685 = vmax.f32 %v2668, 0.0
        %v5686 = vmax.f32 %v2670, 0.0
        %v5687 = vmax.f32 %v4269, 0.0
        %v5688 = vmax.f32 %v4271, 0.0
        %v5689 = vmax.f32 %v2674, 0.0
        %v5690 = vmax.f32 %v2676, 0.0
        %v5691 = vmax.f32 %v4275, 0.0
        %v5692 = vmax.f32 %v4277, 0.0
        %v5693 = vmax.f32 %v2680, 0.0
        %v5694 = vmax.f32 %v2682, 0.0
        %v5695 = vmax.f32 %v4281, 0.0
        %v5696 = vmax.f32 %v4283, 0.0
        %v5697 = vmax.f32 %v2686, 0.0
        %v5698 = vmax.f32 %v2688, 0.0
        %v5699 = vmax.f32 %v4287, 0.0
        %v5700 = vmax.f32 %v4289, 0.0
        %v5701 = vmax.f32 %v2692, 0.0
        %v5702 = vmax.f32 %v2694, 0.0
        %v5703 = vmax.f32 %v4293, 0.0
        %v5704 = vmax.f32 %v4295, 0.0
        %v5705 = vmax.f32 %v2698, 0.0
        %v5706 = vmax.f32 %v2700, 0.0
        %v5707 = vmax.f32 %v4299, 0.0
        %v5708 = vmax.f32 %v4301, 0.0
        %v5709 = vmax.f32 %v2704, 0.0
        %v5710 = vmax.f32 %v2706, 0.0
        %v5711 = vmax.f32 %v4305, 0.0
        %v5712 = vmax.f32 %v4307, 0.0
        %v5713 = vmax.f32 %v2710, 0.0
        %v5714 = vmax.f32 %v2712, 0.0
        %v5715 = vmax.f32 %v4311, 0.0
        %v5716 = vmax.f32 %v4313, 0.0
        %v5717 = vmax.f32 %v2716, 0.0
        %v5718 = vmax.f32 %v2718, 0.0
        %v5719 = vmax.f32 %v4317, 0.0
        %v5720 = vmax.f32 %v4319, 0.0
        %v5721 = vmax.f32 %v2722, 0.0
        %v5722 = vmax.f32 %v2724, 0.0
        %v5723 = vmax.f32 %v4323, 0.0
        %v5724 = vmax.f32 %v4325, 0.0
        %v5725 = vmax.f32 %v2728, 0.0
        %v5726 = vmax.f32 %v2730, 0.0
        %v5727 = vmax.f32 %v4329, 0.0
        %v5728 = vmax.f32 %v4331, 0.0
        %v5729 = vmax.f32 %v2734, 0.0
        %v5730 = vmax.f32 %v2736, 0.0
        %v5731 = vmax.f32 %v4335, 0.0
        %v5732 = vmax.f32 %v4337, 0.0
        %v5733 = vmax.f32 %v2740, 0.0
        %v5734 = vmax.f32 %v2742, 0.0
        %v5735 = vmax.f32 %v4341, 0.0
        %v5736 = vmax.f32 %v4343, 0.0
        %v5737 = vmax.f32 %v2746, 0.0
        %v5738 = vmax.f32 %v2748, 0.0
        %v5739 = vmax.f32 %v4347, 0.0
        %v5740 = vmax.f32 %v4349, 0.0
        %v5741 = vmax.f32 %v2752, 0.0
        %v5742 = vmax.f32 %v2754, 0.0
        %v5743 = vmax.f32 %v4353, 0.0
        %v5744 = vmax.f32 %v4355, 0.0
        %v5745 = vmax.f32 %v2758, 0.0
        %v5746 = vmax.f32 %v2760, 0.0
        %v5747 = vmax.f32 %v4359, 0.0
        %v5748 = vmax.f32 %v4361, 0.0
        %v5749 = vmax.f32 %v2764, 0.0
        %v5750 = vmax.f32 %v2766, 0.0
        %v5751 = vmax.f32 %v4365, 0.0
        %v5752 = vmax.f32 %v4367, 0.0
        %v5753 = vmax.f32 %v2770, 0.0
        %v5754 = vmax.f32 %v2772, 0.0
        %v5755 = vmax.f32 %v4371, 0.0
        %v5756 = vmax.f32 %v4373, 0.0
        %v5757 = vmax.f32 %v2776, 0.0
        %v5758 = vmax.f32 %v2778, 0.0
        %v5759 = vmax.f32 %v4377, 0.0
        %v5760 = vmax.f32 %v4379, 0.0
        %v5761 = vmax.f32 %v2782, 0.0
        %v5762 = vmax.f32 %v2784, 0.0
        %v5763 = vmax.f32 %v4383, 0.0
        %v5764 = vmax.f32 %v4385, 0.0
        %v5765 = vmax.f32 %v2788, 0.0
        %v5766 = vmax.f32 %v2790, 0.0
        %v5767 = vmax.f32 %v4389, 0.0
        %v5768 = vmax.f32 %v4391, 0.0
        %v5769 = vmax.f32 %v2794, 0.0
        %v5770 = vmax.f32 %v2796, 0.0
        %v5771 = vmax.f32 %v4395, 0.0
        %v5772 = vmax.f32 %v4397, 0.0
        %v5773 = vmax.f32 %v2800, 0.0
        %v5774 = vmax.f32 %v2802, 0.0
        %v5775 = vmax.f32 %v4401, 0.0
        %v5776 = vmax.f32 %v4403, 0.0
        %v5777 = vmax.f32 %v2806, 0.0
        %v5778 = vmax.f32 %v2808, 0.0
        %v5779 = vmax.f32 %v4407, 0.0
        %v5780 = vmax.f32 %v4409, 0.0
        %v5781 = vmax.f32 %v2812, 0.0
        %v5782 = vmax.f32 %v2814, 0.0
        %v5783 = vmax.f32 %v4413, 0.0
        %v5784 = vmax.f32 %v4415, 0.0
        %v5785 = vmax.f32 %v2818, 0.0
        %v5786 = vmax.f32 %v2820, 0.0
        %v5787 = vmax.f32 %v4419, 0.0
        %v5788 = vmax.f32 %v4421, 0.0
        %v5789 = vmax.f32 %v2824, 0.0
        %v5790 = vmax.f32 %v2826, 0.0
        %v5791 = vmax.f32 %v4425, 0.0
        %v5792 = vmax.f32 %v4427, 0.0
        %v5793 = vmax.f32 %v2830, 0.0
        %v5794 = vmax.f32 %v2832, 0.0
        %v5795 = vmax.f32 %v4431, 0.0
        %v5796 = vmax.f32 %v4433, 0.0
        %v5797 = vmax.f32 %v2836, 0.0
        %v5798 = vmax.f32 %v2838, 0.0
        %v5799 = vmax.f32 %v4437, 0.0
        %v5800 = vmax.f32 %v4439, 0.0
        %v5801 = vmax.f32 %v2842, 0.0
        %v5802 = vmax.f32 %v2844, 0.0
        %v5803 = vmax.f32 %v4443, 0.0
        %v5804 = vmax.f32 %v4445, 0.0
        %v5805 = vmax.f32 %v2848, 0.0
        %v5806 = vmax.f32 %v2850, 0.0
        %v5807 = vmax.f32 %v4449, 0.0
        %v5808 = vmax.f32 %v4451, 0.0
        %v5809 = vmax.f32 %v2854, 0.0
        %v5810 = vmax.f32 %v2856, 0.0
        %v5811 = vmax.f32 %v4455, 0.0
        %v5812 = vmax.f32 %v4457, 0.0
        %v5813 = vmax.f32 %v2860, 0.0
        %v5814 = vmax.f32 %v2862, 0.0
        %v5815 = vmax.f32 %v4461, 0.0
        %v5816 = vmax.f32 %v4463, 0.0
        %v5817 = vmax.f32 %v2866, 0.0
        %v5818 = vmax.f32 %v2868, 0.0
        %v5819 = vmax.f32 %v4467, 0.0
        %v5820 = vmax.f32 %v4469, 0.0
        %v5821 = vmax.f32 %v2872, 0.0
        %v5822 = vmax.f32 %v2874, 0.0
        %v5823 = vmax.f32 %v4473, 0.0
        %v5824 = vmax.f32 %v4475, 0.0
        %v5825 = vmax.f32 %v2878, 0.0
        %v5826 = vmax.f32 %v2880, 0.0
        %v5827 = vmax.f32 %v4479, 0.0
        %v5828 = vmax.f32 %v4481, 0.0
        %v5829 = vmax.f32 %v2884, 0.0
        %v5830 = vmax.f32 %v2886, 0.0
        %v5831 = vmax.f32 %v4485, 0.0
        %v5832 = vmax.f32 %v4487, 0.0
        %v5833 = vmax.f32 %v2890, 0.0
        %v5834 = vmax.f32 %v2892, 0.0
        %v5835 = vmax.f32 %v4491, 0.0
        %v5836 = vmax.f32 %v4493, 0.0
        %v5837 = vmax.f32 %v2896, 0.0
        %v5838 = vmax.f32 %v2898, 0.0
        %v5839 = vmax.f32 %v4497, 0.0
        %v5840 = vmax.f32 %v4499, 0.0
        %v5841 = vmax.f32 %v2902, 0.0
        %v5842 = vmax.f32 %v2904, 0.0
        %v5843 = vmax.f32 %v4503, 0.0
        %v5844 = vmax.f32 %v4505, 0.0
        %v5845 = vmax.f32 %v2908, 0.0
        %v5846 = vmax.f32 %v2910, 0.0
        %v5847 = vmax.f32 %v4509, 0.0
        %v5848 = vmax.f32 %v4511, 0.0
        %v5849 = vmax.f32 %v2914, 0.0
        %v5850 = vmax.f32 %v2916, 0.0
        %v5851 = vmax.f32 %v4515, 0.0
        %v5852 = vmax.f32 %v4517, 0.0
        %v5853 = vmax.f32 %v2920, 0.0
        %v5854 = vmax.f32 %v2922, 0.0
        %v5855 = vmax.f32 %v4521, 0.0
        %v5856 = vmax.f32 %v4523, 0.0
        %v5857 = vmax.f32 %v2926, 0.0
        %v5858 = vmax.f32 %v2928, 0.0
        %v5859 = vmax.f32 %v4527, 0.0
        %v5860 = vmax.f32 %v4529, 0.0
        %v5861 = vmax.f32 %v2932, 0.0
        %v5862 = vmax.f32 %v2934, 0.0
        %v5863 = vmax.f32 %v4533, 0.0
        %v5864 = vmax.f32 %v4535, 0.0
        %v5865 = vmax.f32 %v2938, 0.0
        %v5866 = vmax.f32 %v2940, 0.0
        %v5867 = vmax.f32 %v4539, 0.0
        %v5868 = vmax.f32 %v4541, 0.0
        %v5869 = vmax.f32 %v2944, 0.0
        %v5870 = vmax.f32 %v2946, 0.0
        %v5871 = vmax.f32 %v4545, 0.0
        %v5872 = vmax.f32 %v4547, 0.0
        %v5873 = vmax.f32 %v2950, 0.0
        %v5874 = vmax.f32 %v2952, 0.0
        %v5875 = vmax.f32 %v4551, 0.0
        %v5876 = vmax.f32 %v4553, 0.0
        %v5877 = vmax.f32 %v2956, 0.0
        %v5878 = vmax.f32 %v2958, 0.0
        %v5879 = vmax.f32 %v4557, 0.0
        %v5880 = vmax.f32 %v4559, 0.0
        %v5881 = vmax.f32 %v2962, 0.0
        %v5882 = vmax.f32 %v2964, 0.0
        %v5883 = vmax.f32 %v4563, 0.0
        %v5884 = vmax.f32 %v4565, 0.0
        %v5885 = vmax.f32 %v2968, 0.0
        %v5886 = vmax.f32 %v2970, 0.0
        %v5887 = vmax.f32 %v4569, 0.0
        %v5888 = vmax.f32 %v4571, 0.0
        %v5889 = vmax.f32 %v2974, 0.0
        %v5890 = vmax.f32 %v2976, 0.0
        %v5891 = vmax.f32 %v4575, 0.0
        %v5892 = vmax.f32 %v4577, 0.0
        %v5893 = vmax.f32 %v2980, 0.0
        %v5894 = vmax.f32 %v2982, 0.0
        %v5895 = vmax.f32 %v4581, 0.0
        %v5896 = vmax.f32 %v4583, 0.0
        %v5897 = vmax.f32 %v2986, 0.0
        %v5898 = vmax.f32 %v2988, 0.0
        %v5899 = vmax.f32 %v4587, 0.0
        %v5900 = vmax.f32 %v4589, 0.0
        %v5901 = vmax.f32 %v2992, 0.0
        %v5902 = vmax.f32 %v2994, 0.0
        %v5903 = vmax.f32 %v4593, 0.0
        %v5904 = vmax.f32 %v4595, 0.0
        %v5905 = vmax.f32 %v2998, 0.0
        %v5906 = vmax.f32 %v3000, 0.0
        %v5907 = vmax.f32 %v4599, 0.0
        %v5908 = vmax.f32 %v4601, 0.0
        %v5909 = vmax.f32 %v3004, 0.0
        %v5910 = vmax.f32 %v3006, 0.0
        %v5911 = vmax.f32 %v4605, 0.0
        %v5912 = vmax.f32 %v4607, 0.0
        %v5913 = vmax.f32 %v3010, 0.0
        %v5914 = vmax.f32 %v3012, 0.0
        %v5915 = vmax.f32 %v4611, 0.0
        %v5916 = vmax.f32 %v4613, 0.0
        %v5917 = vmax.f32 %v3016, 0.0
        %v5918 = vmax.f32 %v3018, 0.0
        %v5919 = vmax.f32 %v4617, 0.0
        %v5920 = vmax.f32 %v4619, 0.0
        %v5921 = vmax.f32 %v3022, 0.0
        %v5922 = vmax.f32 %v3024, 0.0
        %v5923 = vmax.f32 %v4623, 0.0
        %v5924 = vmax.f32 %v4625, 0.0
        %v5925 = vmax.f32 %v3028, 0.0
        %v5926 = vmax.f32 %v3030, 0.0
        %v5927 = vmax.f32 %v4629, 0.0
        %v5928 = vmax.f32 %v4631, 0.0
        %v5929 = vmax.f32 %v3034, 0.0
        %v5930 = vmax.f32 %v3036, 0.0
        %v5931 = vmax.f32 %v4635, 0.0
        %v5932 = vmax.f32 %v4637, 0.0
        %v5933 = vmax.f32 %v3040, 0.0
        %v5934 = vmax.f32 %v3042, 0.0
        %v5935 = vmax.f32 %v4641, 0.0
        %v5936 = vmax.f32 %v4643, 0.0
        %v5937 = vmax.f32 %v3046, 0.0
        %v5938 = vmax.f32 %v3048, 0.0
        %v5939 = vmax.f32 %v4647, 0.0
        %v5940 = vmax.f32 %v4649, 0.0
        %v5941 = vmax.f32 %v3052, 0.0
        %v5942 = vmax.f32 %v3054, 0.0
        %v5943 = vmax.f32 %v4653, 0.0
        %v5944 = vmax.f32 %v4655, 0.0
        %v5945 = vmax.f32 %v3058, 0.0
        %v5946 = vmax.f32 %v3060, 0.0
        %v5947 = vmax.f32 %v4659, 0.0
        %v5948 = vmax.f32 %v4661, 0.0
        %v5949 = vmax.f32 %v3064, 0.0
        %v5950 = vmax.f32 %v3066, 0.0
        %v5951 = vmax.f32 %v4665, 0.0
        %v5952 = vmax.f32 %v4667, 0.0
        %v5953 = vmax.f32 %v3070, 0.0
        %v5954 = vmax.f32 %v3072, 0.0
        %v5955 = vmax.f32 %v4671, 0.0
        %v5956 = vmax.f32 %v4673, 0.0
        %v5957 = vmax.f32 %v3076, 0.0
        %v5958 = vmax.f32 %v3078, 0.0
        %v5959 = vmax.f32 %v4677, 0.0
        %v5960 = vmax.f32 %v4679, 0.0
        %v5961 = vmax.f32 %v3082, 0.0
        %v5962 = vmax.f32 %v3084, 0.0
        %v5963 = vmax.f32 %v4683, 0.0
        %v5964 = vmax.f32 %v4685, 0.0
        %v5965 = vmax.f32 %v3088, 0.0
        %v5966 = vmax.f32 %v3090, 0.0
        %v5967 = vmax.f32 %v4689, 0.0
        %v5968 = vmax.f32 %v4691, 0.0
        %v5969 = vmax.f32 %v3094, 0.0
        %v5970 = vmax.f32 %v3096, 0.0
        %v5971 = vmax.f32 %v4695, 0.0
        %v5972 = vmax.f32 %v4697, 0.0
        %v5973 = vmax.f32 %v3100, 0.0
        %v5974 = vmax.f32 %v3102, 0.0
        %v5975 = vmax.f32 %v4701, 0.0
        %v5976 = vmax.f32 %v4703, 0.0
        %v5977 = vmax.f32 %v3106, 0.0
        %v5978 = vmax.f32 %v3108, 0.0
        %v5979 = vmax.f32 %v4707, 0.0
        %v5980 = vmax.f32 %v4709, 0.0
        %v5981 = vmax.f32 %v3112, 0.0
        %v5982 = vmax.f32 %v3114, 0.0
        %v5983 = vmax.f32 %v4713, 0.0
        %v5984 = vmax.f32 %v4715, 0.0
        %v5985 = vmax.f32 %v3118, 0.0
        %v5986 = vmax.f32 %v3120, 0.0
        %v5987 = vmax.f32 %v4719, 0.0
        %v5988 = vmax.f32 %v4721, 0.0
        %v5989 = vmax.f32 %v3124, 0.0
        %v5990 = vmax.f32 %v3126, 0.0
        %v5991 = vmax.f32 %v4725, 0.0
        %v5992 = vmax.f32 %v4727, 0.0
        %v5993 = vmax.f32 %v3130, 0.0
        %v5994 = vmax.f32 %v3132, 0.0
        %v5995 = vmax.f32 %v4731, 0.0
        %v5996 = vmax.f32 %v4733, 0.0
        %v5997 = vmax.f32 %v3136, 0.0
        %v5998 = vmax.f32 %v3138, 0.0
        %v5999 = vmax.f32 %v4737, 0.0
        %v6000 = vmax.f32 %v4739, 0.0
        %v6001 = vmax.f32 %v3142, 0.0
        %v6002 = vmax.f32 %v3144, 0.0
        %v6003 = vmax.f32 %v4743, 0.0
        %v6004 = vmax.f32 %v4745, 0.0
        %v6005 = vmax.f32 %v3148, 0.0
        %v6006 = vmax.f32 %v3150, 0.0
        %v6007 = vmax.f32 %v4749, 0.0
        %v6008 = vmax.f32 %v4751, 0.0
        %v6009 = vmax.f32 %v3154, 0.0
        %v6010 = vmax.f32 %v3156, 0.0
        %v6011 = vmax.f32 %v4755, 0.0
        %v6012 = vmax.f32 %v4757, 0.0
        %v6013 = vmax.f32 %v3160, 0.0
        %v6014 = vmax.f32 %v3162, 0.0
        %v6015 = vmax.f32 %v4761, 0.0
        %v6016 = vmax.f32 %v4763, 0.0
        %v6017 = vmax.f32 %v3166, 0.0
        %v6018 = vmax.f32 %v3168, 0.0
        %v6019 = vmax.f32 %v4767, 0.0
        %v6020 = vmax.f32 %v4769, 0.0
        %v6021 = vmax.f32 %v3172, 0.0
        %v6022 = vmax.f32 %v3174, 0.0
        %v6023 = vmax.f32 %v4773, 0.0
        %v6024 = vmax.f32 %v4775, 0.0
        %v6025 = vmax.f32 %v3178, 0.0
        %v6026 = vmax.f32 %v3180, 0.0
        %v6027 = vmax.f32 %v4779, 0.0
        %v6028 = vmax.f32 %v4781, 0.0
        %v6029 = vmax.f32 %v3184, 0.0
        %v6030 = vmax.f32 %v3186, 0.0
        %v6031 = vmax.f32 %v4785, 0.0
        %v6032 = vmax.f32 %v4787, 0.0
        %v6033 = vmax.f32 %v3190, 0.0
        %v6034 = vmax.f32 %v3192, 0.0
        %v6035 = vmax.f32 %v4791, 0.0
        %v6036 = vmax.f32 %v4793, 0.0
        %v6037 = vmax.f32 %v3196, 0.0
        %v6038 = vmax.f32 %v3198, 0.0
        %v6039 = vmax.f32 %v4797, 0.0
        %v6040 = vmax.f32 %v4799, 0.0
        %v6041 = vmax.f32 %v3202, 0.0
        %v6042 = vmax.f32 %v3204, 0.0
        %v6043 = vmax.f32 %v4803, 0.0
        %v6044 = vmax.f32 %v4805, 0.0
        %v6045 = vmax.f32 %v3208, 0.0
        %v6046 = vmax.f32 %v3210, 0.0
        %v6047 = vmax.f32 %v4809, 0.0
        %v6048 = vmax.f32 %v4811, 0.0
        %v6049 = vmax.f32 %v3214, 0.0
        %v6050 = vmax.f32 %v3216, 0.0
        %v6051 = vmax.f32 %v4815, 0.0
        %v6052 = vmax.f32 %v4817, 0.0
        %v6053 = vmax.f32 %v3220, 0.0
        %v6054 = vmax.f32 %v3222, 0.0
        %v6055 = vmax.f32 %v4821, 0.0
        %v6056 = vmax.f32 %v4823, 0.0
        %v6057 = vmax.f32 %v3226, 0.0
        %v6058 = vmax.f32 %v3228, 0.0
        %v6059 = vmax.f32 %v4827, 0.0
        %v6060 = vmax.f32 %v4829, 0.0
        %v6061 = vmax.f32 %v3232, 0.0
        %v6062 = vmax.f32 %v3234, 0.0
        %v6063 = vmax.f32 %v4833, 0.0
        %v6064 = vmax.f32 %v4835, 0.0
        %v6065 = vmax.f32 %v3238, 0.0
        %v6066 = vmax.f32 %v3240, 0.0
        %v6067 = vmax.f32 %v4839, 0.0
        %v6068 = vmax.f32 %v4841, 0.0
        %v6069 = vmax.f32 %v3244, 0.0
        %v6070 = vmax.f32 %v3246, 0.0
        %v6071 = vmax.f32 %v4845, 0.0
        %v6072 = vmax.f32 %v4847, 0.0
        %v6073 = vmax.f32 %v3250, 0.0
        %v6074 = vmax.f32 %v3252, 0.0
        %v6075 = vmax.f32 %v4851, 0.0
        %v6076 = vmax.f32 %v4853, 0.0
        %v6077 = vmax.f32 %v3256, 0.0
        %v6078 = vmax.f32 %v3258, 0.0
        %v6079 = vmax.f32 %v4857, 0.0
        %v6080 = vmax.f32 %v4859, 0.0
        %v6081 = vmax.f32 %v3262, 0.0
        %v6082 = vmax.f32 %v3264, 0.0
        %v6083 = vmax.f32 %v4863, 0.0
        %v6084 = vmax.f32 %v4865, 0.0
        %v6085 = vmax.f32 %v3268, 0.0
        %v6086 = vmax.f32 %v3270, 0.0
        %v6087 = vmax.f32 %v4869, 0.0
        %v6088 = vmax.f32 %v4871, 0.0
        %v6089 = vmax.f32 %v3274, 0.0
        %v6090 = vmax.f32 %v3276, 0.0
        %v6091 = vmax.f32 %v4875, 0.0
        %v6092 = vmax.f32 %v4877, 0.0
        %v6093 = vmax.f32 %v3280, 0.0
        %v6094 = vmax.f32 %v3282, 0.0
        %v6095 = vmax.f32 %v4881, 0.0
        %v6096 = vmax.f32 %v4883, 0.0
        %v6097 = vmax.f32 %v3286, 0.0
        %v6098 = vmax.f32 %v3288, 0.0
        %v6099 = vmax.f32 %v4887, 0.0
        %v6100 = vmax.f32 %v4889, 0.0
        %v6101 = vmax.f32 %v3292, 0.0
        %v6102 = vmax.f32 %v3294, 0.0
        %v6103 = vmax.f32 %v4893, 0.0
        %v6104 = vmax.f32 %v4895, 0.0
        %v6105 = vmax.f32 %v3298, 0.0
        %v6106 = vmax.f32 %v3300, 0.0
        %v6107 = vmax.f32 %v4899, 0.0
        %v6108 = vmax.f32 %v4901, 0.0
        %v6109 = vmax.f32 %v3304, 0.0
        %v6110 = vmax.f32 %v3306, 0.0
        %v6111 = vmax.f32 %v4905, 0.0
        %v6112 = vmax.f32 %v4907, 0.0
        %v6113 = vmax.f32 %v3310, 0.0
        %v6114 = vmax.f32 %v3312, 0.0
        %v6115 = vmax.f32 %v4911, 0.0
        %v6116 = vmax.f32 %v4913, 0.0
        %v6117 = vmax.f32 %v3316, 0.0
        %v6118 = vmax.f32 %v3318, 0.0
        %v6119 = vmax.f32 %v4917, 0.0
        %v6120 = vmax.f32 %v4919, 0.0
        %v6121 = vmax.f32 %v3322, 0.0
        %v6122 = vmax.f32 %v3324, 0.0
        %v6123 = vmax.f32 %v4923, 0.0
        %v6124 = vmax.f32 %v4925, 0.0
        %v6125 = vmax.f32 %v3328, 0.0
        %v6126 = vmax.f32 %v3330, 0.0
        %v6127 = vmax.f32 %v4929, 0.0
        %v6128 = vmax.f32 %v4931, 0.0
        %v6129 = vmax.f32 %v3334, 0.0
        %v6130 = vmax.f32 %v3336, 0.0
        %v6131 = vmax.f32 %v4935, 0.0
        %v6132 = vmax.f32 %v4937, 0.0
        %v6133 = vmax.f32 %v3340, 0.0
        %v6134 = vmax.f32 %v3342, 0.0
        %v6135 = vmax.f32 %v4941, 0.0
        %v6136 = vmax.f32 %v4943, 0.0
        %v6137 = vmax.f32 %v3346, 0.0
        %v6138 = vmax.f32 %v3348, 0.0
        %v6139 = vmax.f32 %v4947, 0.0
        %v6140 = vmax.f32 %v4949, 0.0
        %v6141 = vmax.f32 %v3352, 0.0
        %v6142 = vmax.f32 %v3354, 0.0
        %v6143 = vmax.f32 %v4953, 0.0
        %v6144 = vmax.f32 %v4955, 0.0
        %v6145 = vmax.f32 %v3358, 0.0
        %v6146 = vmax.f32 %v3360, 0.0
        %v6147 = vmax.f32 %v4959, 0.0
        %v6148 = vmax.f32 %v4961, 0.0
        %v6149 = vmax.f32 %v3364, 0.0
        %v6150 = vmax.f32 %v3366, 0.0
        %v6151 = vmax.f32 %v4965, 0.0
        %v6152 = vmax.f32 %v4967, 0.0
        %v6153 = vmax.f32 %v3370, 0.0
        %v6154 = vmax.f32 %v3372, 0.0
        %v6155 = vmax.f32 %v4971, 0.0
        %v6156 = vmax.f32 %v4973, 0.0
        %v6157 = vmax.f32 %v3376, 0.0
        %v6158 = vmax.f32 %v3378, 0.0
        %v6159 = vmax.f32 %v4977, 0.0
        %v6160 = vmax.f32 %v4979, 0.0
        %v6161 = vmax.f32 %v3382, 0.0
        %v6162 = vmax.f32 %v3384, 0.0
        %v6163 = vmax.f32 %v4983, 0.0
        %v6164 = vmax.f32 %v4985, 0.0
        %v6165 = vmax.f32 %v3388, 0.0
        %v6166 = vmax.f32 %v3390, 0.0
        %v6167 = vmax.f32 %v4989, 0.0
        %v6168 = vmax.f32 %v4991, 0.0
        %v6169 = vmax.f32 %v3394, 0.0
        %v6170 = vmax.f32 %v3396, 0.0
        %v6171 = vmax.f32 %v4995, 0.0
        %v6172 = vmax.f32 %v4997, 0.0
        %v6173 = vmax.f32 %v3400, 0.0
        %v6174 = vmax.f32 %v3402, 0.0
        %v6175 = vmax.f32 %v5001, 0.0
        %v6176 = vmax.f32 %v5003, 0.0
        %v6177 = vmax.f32 %v3406, 0.0
        %v6178 = vmax.f32 %v3408, 0.0
        %v6179 = vmax.f32 %v5007, 0.0
        %v6180 = vmax.f32 %v5009, 0.0
        %v6181 = vmax.f32 %v3412, 0.0
        %v6182 = vmax.f32 %v3414, 0.0
        %v6183 = vmax.f32 %v5013, 0.0
        %v6184 = vmax.f32 %v5015, 0.0
        %v6185 = vmax.f32 %v3418, 0.0
        %v6186 = vmax.f32 %v3420, 0.0
        %v6187 = vmax.f32 %v5019, 0.0
        %v6188 = vmax.f32 %v5021, 0.0
        %v6189 = vmax.f32 %v3424, 0.0
        %v6190 = vmax.f32 %v3426, 0.0
        %v6191 = vmax.f32 %v5025, 0.0
        %v6192 = vmax.f32 %v5027, 0.0
        %v6193 = vmax.f32 %v3430, 0.0
        %v6194 = vmax.f32 %v3432, 0.0
        %v6195 = vmax.f32 %v5031, 0.0
        %v6196 = vmax.f32 %v5033, 0.0
        %v6197 = vmax.f32 %v3436, 0.0
        %v6198 = vmax.f32 %v3438, 0.0
        %v6199 = vmax.f32 %v5037, 0.0
        %v6200 = vmax.f32 %v5039, 0.0
        %v6201 = vmax.f32 %v3442, 0.0
        %v6202 = vmax.f32 %v3444, 0.0
        %v6203 = vmax.f32 %v5043, 0.0
        %v6204 = vmax.f32 %v5045, 0.0
        %v6205 = vmax.f32 %v3448, 0.0
        %v6206 = vmax.f32 %v3450, 0.0
        %v6207 = vmax.f32 %v5049, 0.0
        %v6208 = vmax.f32 %v5051, 0.0
        %v6209 = vmax.f32 %v3454, 0.0
        %v6210 = vmax.f32 %v3456, 0.0
        %v6211 = vmax.f32 %v5055, 0.0
        %v6212 = vmax.f32 %v5057, 0.0
        %v6213 = vmax.f32 %v3460, 0.0
        %v6214 = vmax.f32 %v3462, 0.0
        %v6215 = vmax.f32 %v5061, 0.0
        %v6216 = vmax.f32 %v5063, 0.0
        %v6217 = vmax.f32 %v3466, 0.0
        %v6218 = vmax.f32 %v3468, 0.0
        %v6219 = vmax.f32 %v5067, 0.0
        %v6220 = vmax.f32 %v5069, 0.0
        %v6221 = vmax.f32 %v3472, 0.0
        %v6222 = vmax.f32 %v3474, 0.0
        %v6223 = vmax.f32 %v5073, 0.0
        %v6224 = vmax.f32 %v5075, 0.0
        %v6225 = vmax.f32 %v3478, 0.0
        %v6226 = vmax.f32 %v3480, 0.0
        %v6227 = vmax.f32 %v5079, 0.0
        %v6228 = vmax.f32 %v5081, 0.0
        %v6229 = vmax.f32 %v3484, 0.0
        %v6230 = vmax.f32 %v3486, 0.0
        %v6231 = vmax.f32 %v5085, 0.0
        %v6232 = vmax.f32 %v5087, 0.0
        %v6233 = vmax.f32 %v3490, 0.0
        %v6234 = vmax.f32 %v3492, 0.0
        %v6235 = vmax.f32 %v5091, 0.0
        %v6236 = vmax.f32 %v5093, 0.0
        %v6237 = vmax.f32 %v3496, 0.0
        %v6238 = vmax.f32 %v3498, 0.0
        %v6239 = vmax.f32 %v5097, 0.0
        %v6240 = vmax.f32 %v5099, 0.0
        %v6241 = vmax.f32 %v3502, 0.0
        %v6242 = vmax.f32 %v3504, 0.0
        %v6243 = vmax.f32 %v5103, 0.0
        %v6244 = vmax.f32 %v5105, 0.0
        %v6245 = vmax.f32 %v3508, 0.0
        %v6246 = vmax.f32 %v3510, 0.0
        %v6247 = vmax.f32 %v5109, 0.0
        %v6248 = vmax.f32 %v5111, 0.0
        %v6249 = vmax.f32 %v3514, 0.0
        %v6250 = vmax.f32 %v3516, 0.0
        %v6251 = vmax.f32 %v5115, 0.0
        %v6252 = vmax.f32 %v5117, 0.0
        %v6253 = vmax.f32 %v3520, 0.0
        %v6254 = vmax.f32 %v3522, 0.0
        %v6255 = vmax.f32 %v5121, 0.0
        %v6256 = vmax.f32 %v5123, 0.0
        %v6257 = vmax.f32 %v3526, 0.0
        %v6258 = vmax.f32 %v3528, 0.0
        %v6259 = vmax.f32 %v5127, 0.0
        %v6260 = vmax.f32 %v5129, 0.0
        %v6261 = vmax.f32 %v3532, 0.0
        %v6262 = vmax.f32 %v3534, 0.0
        %v6263 = vmax.f32 %v5133, 0.0
        %v6264 = vmax.f32 %v5135, 0.0
        %v6265 = vmax.f32 %v3538, 0.0
        %v6266 = vmax.f32 %v3540, 0.0
        %v6267 = vmax.f32 %v5139, 0.0
        %v6268 = vmax.f32 %v5141, 0.0
        %v6269 = vmax.f32 %v3544, 0.0
        %v6270 = vmax.f32 %v3546, 0.0
        %v6271 = vmax.f32 %v5145, 0.0
        %v6272 = vmax.f32 %v5147, 0.0
        %v6273 = vmax.f32 %v3550, 0.0
        %v6274 = vmax.f32 %v3552, 0.0
        %v6275 = vmax.f32 %v5151, 0.0
        %v6276 = vmax.f32 %v5153, 0.0
        %v6277 = vmax.f32 %v3556, 0.0
        %v6278 = vmax.f32 %v3558, 0.0
        %v6279 = vmax.f32 %v5157, 0.0
        %v6280 = vmax.f32 %v5159, 0.0
        %v6281 = vmax.f32 %v3562, 0.0
        %v6282 = vmax.f32 %v3564, 0.0
        %v6283 = vmax.f32 %v5163, 0.0
        %v6284 = vmax.f32 %v5165, 0.0
        %v6285 = vmax.f32 %v3568, 0.0
        %v6286 = vmax.f32 %v3570, 0.0
        %v6287 = vmax.f32 %v5169, 0.0
        %v6288 = vmax.f32 %v5171, 0.0
        %v6289 = vmax.f32 %v3574, 0.0
        %v6290 = vmax.f32 %v3576, 0.0
        %v6291 = vmax.f32 %v5175, 0.0
        %v6292 = vmax.f32 %v5177, 0.0
        %v6293 = vmax.f32 %v3580, 0.0
        %v6294 = vmax.f32 %v3582, 0.0
        %v6295 = vmax.f32 %v5181, 0.0
        %v6296 = vmax.f32 %v5183, 0.0
        %v6297 = vmax.f32 %v3586, 0.0
        %v6298 = vmax.f32 %v3588, 0.0
        %v6299 = vmax.f32 %v5187, 0.0
        %v6300 = vmax.f32 %v5189, 0.0
        %v6301 = vmax.f32 %v3592, 0.0
        %v6302 = vmax.f32 %v3594, 0.0
        %v6303 = vmax.f32 %v5193, 0.0
        %v6304 = vmax.f32 %v5195, 0.0
        %v6305 = vmax.f32 %v3598, 0.0
        %v6306 = vmax.f32 %v3600, 0.0
        %v6307 = vmax.f32 %v5199, 0.0
        %v6308 = vmax.f32 %v5201, 0.0
        %v6309 = vmax.f32 %v3604, 0.0
        %v6310 = vmax.f32 %v3606, 0.0
        %v6311 = vmax.f32 %v5205, 0.0
        %v6312 = vmax.f32 %v5207, 0.0
        %v6313 = vmax.f32 %v3610, 0.0
        %v6314 = vmax.f32 %v3612, 0.0
        %v6315 = vmax.f32 %v5211, 0.0
        %v6316 = vmax.f32 %v5213, 0.0
        %v6317 = vmax.f32 %v3616, 0.0
        %v6318 = vmax.f32 %v3618, 0.0
        %v6319 = vmax.f32 %v5217, 0.0
        %v6320 = vmax.f32 %v5219, 0.0
        %v6321 = vmax.f32 %v3622, 0.0
        %v6322 = vmax.f32 %v3624, 0.0
        %v6323 = vmax.f32 %v5223, 0.0
        %v6324 = vmax.f32 %v5225, 0.0
        %v6325 = vmax.f32 %v3628, 0.0
        %v6326 = vmax.f32 %v3630, 0.0
        %v6327 = vmax.f32 %v5229, 0.0
        %v6328 = vmax.f32 %v5231, 0.0
        %v6329 = vmax.f32 %v3634, 0.0
        %v6330 = vmax.f32 %v3636, 0.0
        %v6331 = vmax.f32 %v5235, 0.0
        %v6332 = vmax.f32 %v5237, 0.0
        %v6333 = vmax.f32 %v3640, 0.0
        %v6334 = vmax.f32 %v3642, 0.0
        %v6335 = vmax.f32 %v5241, 0.0
        %v6336 = vmax.f32 %v5243, 0.0
        %v6337 = vmax.f32 %v3646, 0.0
        %v6338 = vmax.f32 %v3648, 0.0
        %v6339 = vmax.f32 %v5247, 0.0
        %v6340 = vmax.f32 %v5249, 0.0
        %v6341 = vmax.f32 %v3652, 0.0
        %v6342 = vmax.f32 %v3654, 0.0
        %v6343 = vmax.f32 %v5253, 0.0
        %v6344 = vmax.f32 %v5255, 0.0
        %v6345 = vmax.f32 %v3658, 0.0
        %v6346 = vmax.f32 %v3660, 0.0
        %v6347 = vmax.f32 %v5259, 0.0
        %v6348 = vmax.f32 %v5261, 0.0
        %v6349 = vmax.f32 %v3664, 0.0
        %v6350 = vmax.f32 %v3666, 0.0
        %v6351 = vmax.f32 %v5265, 0.0
        %v6352 = vmax.f32 %v5267, 0.0
        %v6353 = vmax.f32 %v3670, 0.0
        %v6354 = vmax.f32 %v3672, 0.0
        %v6355 = vmax.f32 %v5271, 0.0
        %v6356 = vmax.f32 %v5273, 0.0
        %v6357 = vmax.f32 %v3676, 0.0
        %v6358 = vmax.f32 %v3678, 0.0
        %v6359 = vmax.f32 %v5277, 0.0
        %v6360 = vmax.f32 %v5279, 0.0
        %v6361 = vmax.f32 %v3682, 0.0
        %v6362 = vmax.f32 %v3684, 0.0
        %v6363 = vmax.f32 %v5283, 0.0
        %v6364 = vmax.f32 %v5285, 0.0
        %v6365 = vmax.f32 %v3688, 0.0
        %v6366 = vmax.f32 %v3690, 0.0
        %v6367 = vmax.f32 %v5289, 0.0
        %v6368 = vmax.f32 %v5291, 0.0
        %v6369 = vmax.f32 %v3694, 0.0
        %v6370 = vmax.f32 %v3696, 0.0
        %v6371 = vmax.f32 %v5295, 0.0
        %v6372 = vmax.f32 %v5297, 0.0
        %v6373 = vmax.f32 %v3700, 0.0
        %v6374 = vmax.f32 %v3702, 0.0
        %v6375 = vmax.f32 %v5301, 0.0
        %v6376 = vmax.f32 %v5303, 0.0
        %v6377 = vmax.f32 %v3706, 0.0
        %v6378 = vmax.f32 %v3708, 0.0
        %v6379 = vmax.f32 %v5307, 0.0
        %v6380 = vmax.f32 %v5309, 0.0
        %v6381 = vmax.f32 %v3712, 0.0
        %v6382 = vmax.f32 %v3714, 0.0
        %v6383 = vmax.f32 %v5313, 0.0
        %v6384 = vmax.f32 %v5315, 0.0
        %v6385 = vmax.f32 %v3718, 0.0
        %v6386 = vmax.f32 %v3720, 0.0
        %v6387 = vmax.f32 %v5319, 0.0
        %v6388 = vmax.f32 %v5321, 0.0
        %v6389 = vmax.f32 %v3724, 0.0
        %v6390 = vmax.f32 %v3726, 0.0
        %v6391 = vmax.f32 %v5325, 0.0
        %v6392 = vmax.f32 %v5327, 0.0
        %v6393 = vmax.f32 %v3730, 0.0
        %v6394 = vmax.f32 %v3732, 0.0
        %v6395 = vmax.f32 %v5331, 0.0
        %v6396 = vmax.f32 %v5333, 0.0
        %v6397 = vmax.f32 %v3736, 0.0
        %v6398 = vmax.f32 %v3738, 0.0
        %v6399 = vmax.f32 %v5337, 0.0
        %v6400 = vmax.f32 %v5339, 0.0
        %v6401 = vmax.f32 %v3742, 0.0
        %v6402 = vmax.f32 %v3744, 0.0
        %v6403 = vmax.f32 %v5343, 0.0
        %v6404 = vmax.f32 %v5345, 0.0
        %v6405 = vmax.f32 %v3748, 0.0
        %v6406 = vmax.f32 %v3750, 0.0
        %v6407 = vmax.f32 %v5349, 0.0
        %v6408 = vmax.f32 %v5351, 0.0
        %v6409 = vmax.f32 %v3754, 0.0
        %v6410 = vmax.f32 %v3756, 0.0
        %v6411 = vmax.f32 %v5355, 0.0
        %v6412 = vmax.f32 %v5357, 0.0
        %v6413 = vmax.f32 %v3760, 0.0
        %v6414 = vmax.f32 %v3762, 0.0
        %v6415 = vmax.f32 %v5361, 0.0
        %v6416 = vmax.f32 %v5363, 0.0
        %v6417 = vmax.f32 %v3766, 0.0
        %v6418 = vmax.f32 %v3768, 0.0
        %v6419 = vmax.f32 %v5367, 0.0
        %v6420 = vmax.f32 %v5369, 0.0
        %v6421 = vmax.f32 %v3772, 0.0
        %v6422 = vmax.f32 %v3774, 0.0
        %v6423 = vmax.f32 %v5373, 0.0
        %v6424 = vmax.f32 %v5375, 0.0
        %v6425 = vmax.f32 %v3778, 0.0
        %v6426 = vmax.f32 %v3780, 0.0
        %v6427 = vmax.f32 %v5379, 0.0
        %v6428 = vmax.f32 %v5381, 0.0
        %v6429 = vmax.f32 %v3784, 0.0
        %v6430 = vmax.f32 %v3786, 0.0
        %v6431 = vmax.f32 %v5385, 0.0
        %v6432 = vmax.f32 %v5387, 0.0
        %v6433 = vmax.f32 %v3790, 0.0
        %v6434 = vmax.f32 %v3792, 0.0
        %v6435 = vmax.f32 %v5391, 0.0
        %v6436 = vmax.f32 %v5393, 0.0
        %v6437 = vmax.f32 %v3796, 0.0
        %v6438 = vmax.f32 %v3798, 0.0
        %v6439 = vmax.f32 %v5397, 0.0
        %v6440 = vmax.f32 %v5399, 0.0
        %v6441 = vmax.f32 %v3802, 0.0
        %v6442 = vmax.f32 %v3804, 0.0
        %v6443 = vmax.f32 %v5403, 0.0
        %v6444 = vmax.f32 %v5405, 0.0
        %v6445 = vmax.f32 %v3808, 0.0
        %v6446 = vmax.f32 %v3810, 0.0
        %v6447 = vmax.f32 %v5409, 0.0
        %v6448 = vmax.f32 %v5411, 0.0
        %v6449 = vmax.f32 %v3814, 0.0
        %v6450 = vmax.f32 %v3816, 0.0
        %v6451 = vmax.f32 %v5415, 0.0
        %v6452 = vmax.f32 %v5417, 0.0
        %v6453 = vmax.f32 %v3820, 0.0
        %v6454 = vmax.f32 %v3822, 0.0
        %v6455 = vmax.f32 %v5421, 0.0
        %v6456 = vmax.f32 %v5423, 0.0
        %v6457 = vmax.f32 %v3826, 0.0
        %v6458 = vmax.f32 %v3828, 0.0
        %v6459 = vmax.f32 %v5427, 0.0
        %v6460 = vmax.f32 %v5429, 0.0
        %v6461 = vmax.f32 %v3832, 0.0
        %v6462 = vmax.f32 %v3834, 0.0
        %v6463 = vmax.f32 %v5433, 0.0
        %v6464 = vmax.f32 %v5435, 0.0
        %v6465 = vmax.f32 %v3838, 0.0
        %v6466 = vmax.f32 %v3840, 0.0
        %v6467 = vmax.f32 %v5439, 0.0
        %v6468 = vmax.f32 %v5441, 0.0
        %v6469 = vmax.f32 %v3844, 0.0
        %v6470 = vmax.f32 %v3846, 0.0
        %v6471 = vmax.f32 %v5445, 0.0
        %v6472 = vmax.f32 %v5447, 0.0
        %v6473 = vld [vmem:[%s3] sm:$0xff]
        %v6474 = vld [vmem:[%s3 + $0x8] sm:$0xff]
        %v6475 = vld [vmem:[%s3 + $0x10] sm:$0xff]
        %v6476 = vld [vmem:[%s3 + $0x18] sm:$0xff]
        %v6477 = vld [vmem:[%s3 + $0x20] sm:$0xff]
        %v6478 = vld [vmem:[%s3 + $0x28] sm:$0xff]
        %v6479 = vld [vmem:[%s3 + $0x30] sm:$0xff]
        %v6480 = vld [vmem:[%s3 + $0x38] sm:$0xff]
        %v6481 = vld [vmem:[%s3 + $0x40] sm:$0xff]
        %v6482 = vld [vmem:[%s3 + $0x48] sm:$0xff]
        %v6483 = vld [vmem:[%s3 + $0x50] sm:$0xff]
        %v6484 = vld [vmem:[%s3 + $0x58] sm:$0xff]
        %v6485 = vld [vmem:[%s3 + $0x60] sm:$0xff]
        %v6486 = vld [vmem:[%s3 + $0x68] sm:$0xff]
        %v6487 = vld [vmem:[%s3 + $0x70] sm:$0xff]
        %v6488 = vld [vmem:[%s3 + $0x78] sm:$0xff]
        %v6489 = vld [vmem:[%s3 + $0x80] sm:$0xff]
        %v6490 = vld [vmem:[%s3 + $0x88] sm:$0xff]
        %v6491 = vld [vmem:[%s3 + $0x90] sm:$0xff]
        %v6492 = vld [vmem:[%s3 + $0x98] sm:$0xff]
        %v6493 = vld [vmem:[%s3 + $0xa0] sm:$0xff]
        %v6494 = vld [vmem:[%s3 + $0xa8] sm:$0xff]
        %v6495 = vld [vmem:[%s3 + $0xb0] sm:$0xff]
        %v6496 = vld [vmem:[%s3 + $0xb8] sm:$0xff]
        %v6497 = vld [vmem:[%s3 + $0xc0] sm:$0xff]
        %v6498 = vld [vmem:[%s3 + $0xc8] sm:$0xff]
        %v6499 = vld [vmem:[%s3 + $0xd0] sm:$0xff]
        %v6500 = vld [vmem:[%s3 + $0xd8] sm:$0xff]
        %v6501 = vld [vmem:[%s3 + $0xe0] sm:$0xff]
        %v6502 = vld [vmem:[%s3 + $0xe8] sm:$0xff]
        %v6503 = vld [vmem:[%s3 + $0xf0] sm:$0xff]
        %v6504 = vld [vmem:[%s3 + $0xf8] sm:$0xff]
        %v6505 = vld [vmem:[%s3 + $0x100] sm:$0xff]
        %v6506 = vld [vmem:[%s3 + $0x108] sm:$0xff]
        %v6507 = vld [vmem:[%s3 + $0x110] sm:$0xff]
        %v6508 = vld [vmem:[%s3 + $0x118] sm:$0xff]
        %v6509 = vld [vmem:[%s3 + $0x120] sm:$0xff]
        %v6510 = vld [vmem:[%s3 + $0x128] sm:$0xff]
        %v6511 = vld [vmem:[%s3 + $0x130] sm:$0xff]
        %v6512 = vld [vmem:[%s3 + $0x138] sm:$0xff]
        %v6513 = vld [vmem:[%s3 + $0x140] sm:$0xff]
        %v6514 = vld [vmem:[%s3 + $0x148] sm:$0xff]
        %v6515 = vld [vmem:[%s3 + $0x150] sm:$0xff]
        %v6516 = vld [vmem:[%s3 + $0x158] sm:$0xff]
        %v6517 = vld [vmem:[%s3 + $0x160] sm:$0xff]
        %v6518 = vld [vmem:[%s3 + $0x168] sm:$0xff]
        %v6519 = vld [vmem:[%s3 + $0x170] sm:$0xff]
        %v6520 = vld [vmem:[%s3 + $0x178] sm:$0xff]
        %v6521 = vld [vmem:[%s3 + $0x180] sm:$0xff]
        %v6522 = vld [vmem:[%s3 + $0x188] sm:$0xff]
        %v6523 = vld [vmem:[%s3 + $0x190] sm:$0xff]
        %v6524 = vld [vmem:[%s3 + $0x198] sm:$0xff]
        %v6525 = vld [vmem:[%s3 + $0x1a0] sm:$0xff]
        %v6526 = vld [vmem:[%s3 + $0x1a8] sm:$0xff]
        %v6527 = vld [vmem:[%s3 + $0x1b0] sm:$0xff]
        %v6528 = vld [vmem:[%s3 + $0x1b8] sm:$0xff]
        %v6529 = vld [vmem:[%s3 + $0x1c0] sm:$0xff]
        %v6530 = vld [vmem:[%s3 + $0x1c8] sm:$0xff]
        %v6531 = vld [vmem:[%s3 + $0x1d0] sm:$0xff]
        %v6532 = vld [vmem:[%s3 + $0x1d8] sm:$0xff]
        %v6533 = vld [vmem:[%s3 + $0x1e0] sm:$0xff]
        %v6534 = vld [vmem:[%s3 + $0x1e8] sm:$0xff]
        %v6535 = vld [vmem:[%s3 + $0x1f0] sm:$0xff]
        %v6536 = vld [vmem:[%s3 + $0x1f8] sm:$0xff]
        %v6537 = vld [vmem:[%s3 + $0x200] sm:$0xff]
        %v6538 = vld [vmem:[%s3 + $0x208] sm:$0xff]
        %v6539 = vld [vmem:[%s3 + $0x210] sm:$0xff]
        %v6540 = vld [vmem:[%s3 + $0x218] sm:$0xff]
        %v6541 = vld [vmem:[%s3 + $0x220] sm:$0xff]
        %v6542 = vld [vmem:[%s3 + $0x228] sm:$0xff]
        %v6543 = vld [vmem:[%s3 + $0x230] sm:$0xff]
        %v6544 = vld [vmem:[%s3 + $0x238] sm:$0xff]
        %v6545 = vld [vmem:[%s3 + $0x240] sm:$0xff]
        %v6546 = vld [vmem:[%s3 + $0x248] sm:$0xff]
        %v6547 = vld [vmem:[%s3 + $0x250] sm:$0xff]
        %v6548 = vld [vmem:[%s3 + $0x258] sm:$0xff]
        %v6549 = vld [vmem:[%s3 + $0x260] sm:$0xff]
        %v6550 = vld [vmem:[%s3 + $0x268] sm:$0xff]
        %v6551 = vld [vmem:[%s3 + $0x270] sm:$0xff]
        %v6552 = vld [vmem:[%s3 + $0x278] sm:$0xff]
        %v6553 = vld [vmem:[%s3 + $0x280] sm:$0xff]
        %v6554 = vld [vmem:[%s3 + $0x288] sm:$0xff]
        %v6555 = vld [vmem:[%s3 + $0x290] sm:$0xff]
        %v6556 = vld [vmem:[%s3 + $0x298] sm:$0xff]
        %v6557 = vld [vmem:[%s3 + $0x2a0] sm:$0xff]
        %v6558 = vld [vmem:[%s3 + $0x2a8] sm:$0xff]
        %v6559 = vld [vmem:[%s3 + $0x2b0] sm:$0xff]
        %v6560 = vld [vmem:[%s3 + $0x2b8] sm:$0xff]
        %v6561 = vld [vmem:[%s3 + $0x2c0] sm:$0xff]
        %v6562 = vld [vmem:[%s3 + $0x2c8] sm:$0xff]
        %v6563 = vld [vmem:[%s3 + $0x2d0] sm:$0xff]
        %v6564 = vld [vmem:[%s3 + $0x2d8] sm:$0xff]
        %v6565 = vld [vmem:[%s3 + $0x2e0] sm:$0xff]
        %v6566 = vld [vmem:[%s3 + $0x2e8] sm:$0xff]
        %v6567 = vld [vmem:[%s3 + $0x2f0] sm:$0xff]
        %v6568 = vld [vmem:[%s3 + $0x2f8] sm:$0xff]
        %v6569 = vld [vmem:[%s3 + $0x300] sm:$0xff]
        %v6570 = vld [vmem:[%s3 + $0x308] sm:$0xff]
        %v6571 = vld [vmem:[%s3 + $0x310] sm:$0xff]
        %v6572 = vld [vmem:[%s3 + $0x318] sm:$0xff]
        %v6573 = vld [vmem:[%s3 + $0x320] sm:$0xff]
        %v6574 = vld [vmem:[%s3 + $0x328] sm:$0xff]
        %v6575 = vld [vmem:[%s3 + $0x330] sm:$0xff]
        %v6576 = vld [vmem:[%s3 + $0x338] sm:$0xff]
        %v6577 = vld [vmem:[%s3 + $0x340] sm:$0xff]
        %v6578 = vld [vmem:[%s3 + $0x348] sm:$0xff]
        %v6579 = vld [vmem:[%s3 + $0x350] sm:$0xff]
        %v6580 = vld [vmem:[%s3 + $0x358] sm:$0xff]
        %v6581 = vld [vmem:[%s3 + $0x360] sm:$0xff]
        %v6582 = vld [vmem:[%s3 + $0x368] sm:$0xff]
        %v6583 = vld [vmem:[%s3 + $0x370] sm:$0xff]
        %v6584 = vld [vmem:[%s3 + $0x378] sm:$0xff]
        %v6585 = vld [vmem:[%s3 + $0x380] sm:$0xff]
        %v6586 = vld [vmem:[%s3 + $0x388] sm:$0xff]
        %v6587 = vld [vmem:[%s3 + $0x390] sm:$0xff]
        %v6588 = vld [vmem:[%s3 + $0x398] sm:$0xff]
        %v6589 = vld [vmem:[%s3 + $0x3a0] sm:$0xff]
        %v6590 = vld [vmem:[%s3 + $0x3a8] sm:$0xff]
        %v6591 = vld [vmem:[%s3 + $0x3b0] sm:$0xff]
        %v6592 = vld [vmem:[%s3 + $0x3b8] sm:$0xff]
        %v6593 = vld [vmem:[%s3 + $0x3c0] sm:$0xff]
        %v6594 = vld [vmem:[%s3 + $0x3c8] sm:$0xff]
        %v6595 = vld [vmem:[%s3 + $0x3d0] sm:$0xff]
        %v6596 = vld [vmem:[%s3 + $0x3d8] sm:$0xff]
        %v6597 = vld [vmem:[%s3 + $0x3e0] sm:$0xff]
        %v6598 = vld [vmem:[%s3 + $0x3e8] sm:$0xff]
        %v6599 = vld [vmem:[%s3 + $0x3f0] sm:$0xff]
        %v6600 = vld [vmem:[%s3 + $0x3f8] sm:$0xff]
        %v6601 = vld [vmem:[%s3 + $0x400] sm:$0xff]
        %v6602 = vld [vmem:[%s3 + $0x408] sm:$0xff]
        %v6603 = vld [vmem:[%s3 + $0x410] sm:$0xff]
        %v6604 = vld [vmem:[%s3 + $0x418] sm:$0xff]
        %v6605 = vld [vmem:[%s3 + $0x420] sm:$0xff]
        %v6606 = vld [vmem:[%s3 + $0x428] sm:$0xff]
        %v6607 = vld [vmem:[%s3 + $0x430] sm:$0xff]
        %v6608 = vld [vmem:[%s3 + $0x438] sm:$0xff]
        %v6609 = vld [vmem:[%s3 + $0x440] sm:$0xff]
        %v6610 = vld [vmem:[%s3 + $0x448] sm:$0xff]
        %v6611 = vld [vmem:[%s3 + $0x450] sm:$0xff]
        %v6612 = vld [vmem:[%s3 + $0x458] sm:$0xff]
        %v6613 = vld [vmem:[%s3 + $0x460] sm:$0xff]
        %v6614 = vld [vmem:[%s3 + $0x468] sm:$0xff]
        %v6615 = vld [vmem:[%s3 + $0x470] sm:$0xff]
        %v6616 = vld [vmem:[%s3 + $0x478] sm:$0xff]
        %v6617 = vld [vmem:[%s3 + $0x480] sm:$0xff]
        %v6618 = vld [vmem:[%s3 + $0x488] sm:$0xff]
        %v6619 = vld [vmem:[%s3 + $0x490] sm:$0xff]
        %v6620 = vld [vmem:[%s3 + $0x498] sm:$0xff]
        %v6621 = vld [vmem:[%s3 + $0x4a0] sm:$0xff]
        %v6622 = vld [vmem:[%s3 + $0x4a8] sm:$0xff]
        %v6623 = vld [vmem:[%s3 + $0x4b0] sm:$0xff]
        %v6624 = vld [vmem:[%s3 + $0x4b8] sm:$0xff]
        %v6625 = vld [vmem:[%s3 + $0x4c0] sm:$0xff]
        %v6626 = vld [vmem:[%s3 + $0x4c8] sm:$0xff]
        %v6627 = vld [vmem:[%s3 + $0x4d0] sm:$0xff]
        %v6628 = vld [vmem:[%s3 + $0x4d8] sm:$0xff]
        %v6629 = vld [vmem:[%s3 + $0x4e0] sm:$0xff]
        %v6630 = vld [vmem:[%s3 + $0x4e8] sm:$0xff]
        %v6631 = vld [vmem:[%s3 + $0x4f0] sm:$0xff]
        %v6632 = vld [vmem:[%s3 + $0x4f8] sm:$0xff]
        %v6633 = vld [vmem:[%s3 + $0x500] sm:$0xff]
        %v6634 = vld [vmem:[%s3 + $0x508] sm:$0xff]
        %v6635 = vld [vmem:[%s3 + $0x510] sm:$0xff]
        %v6636 = vld [vmem:[%s3 + $0x518] sm:$0xff]
        %v6637 = vld [vmem:[%s3 + $0x520] sm:$0xff]
        %v6638 = vld [vmem:[%s3 + $0x528] sm:$0xff]
        %v6639 = vld [vmem:[%s3 + $0x530] sm:$0xff]
        %v6640 = vld [vmem:[%s3 + $0x538] sm:$0xff]
        %v6641 = vld [vmem:[%s3 + $0x540] sm:$0xff]
        %v6642 = vld [vmem:[%s3 + $0x548] sm:$0xff]
        %v6643 = vld [vmem:[%s3 + $0x550] sm:$0xff]
        %v6644 = vld [vmem:[%s3 + $0x558] sm:$0xff]
        %v6645 = vld [vmem:[%s3 + $0x560] sm:$0xff]
        %v6646 = vld [vmem:[%s3 + $0x568] sm:$0xff]
        %v6647 = vld [vmem:[%s3 + $0x570] sm:$0xff]
        %v6648 = vld [vmem:[%s3 + $0x578] sm:$0xff]
        %v6649 = vld [vmem:[%s3 + $0x580] sm:$0xff]
        %v6650 = vld [vmem:[%s3 + $0x588] sm:$0xff]
        %v6651 = vld [vmem:[%s3 + $0x590] sm:$0xff]
        %v6652 = vld [vmem:[%s3 + $0x598] sm:$0xff]
        %v6653 = vld [vmem:[%s3 + $0x5a0] sm:$0xff]
        %v6654 = vld [vmem:[%s3 + $0x5a8] sm:$0xff]
        %v6655 = vld [vmem:[%s3 + $0x5b0] sm:$0xff]
        %v6656 = vld [vmem:[%s3 + $0x5b8] sm:$0xff]
        %v6657 = vld [vmem:[%s3 + $0x5c0] sm:$0xff]
        %v6658 = vld [vmem:[%s3 + $0x5c8] sm:$0xff]
        %v6659 = vld [vmem:[%s3 + $0x5d0] sm:$0xff]
        %v6660 = vld [vmem:[%s3 + $0x5d8] sm:$0xff]
        %v6661 = vld [vmem:[%s3 + $0x5e0] sm:$0xff]
        %v6662 = vld [vmem:[%s3 + $0x5e8] sm:$0xff]
        %v6663 = vld [vmem:[%s3 + $0x5f0] sm:$0xff]
        %v6664 = vld [vmem:[%s3 + $0x5f8] sm:$0xff]
        %v6665 = vld [vmem:[%s3 + $0x600] sm:$0xff]
        %v6666 = vld [vmem:[%s3 + $0x608] sm:$0xff]
        %v6667 = vld [vmem:[%s3 + $0x610] sm:$0xff]
        %v6668 = vld [vmem:[%s3 + $0x618] sm:$0xff]
        %v6669 = vld [vmem:[%s3 + $0x620] sm:$0xff]
        %v6670 = vld [vmem:[%s3 + $0x628] sm:$0xff]
        %v6671 = vld [vmem:[%s3 + $0x630] sm:$0xff]
        %v6672 = vld [vmem:[%s3 + $0x638] sm:$0xff]
        %v6673 = vld [vmem:[%s3 + $0x640] sm:$0xff]
        %v6674 = vld [vmem:[%s3 + $0x648] sm:$0xff]
        %v6675 = vld [vmem:[%s3 + $0x650] sm:$0xff]
        %v6676 = vld [vmem:[%s3 + $0x658] sm:$0xff]
        %v6677 = vld [vmem:[%s3 + $0x660] sm:$0xff]
        %v6678 = vld [vmem:[%s3 + $0x668] sm:$0xff]
        %v6679 = vld [vmem:[%s3 + $0x670] sm:$0xff]
        %v6680 = vld [vmem:[%s3 + $0x678] sm:$0xff]
        %v6681 = vld [vmem:[%s3 + $0x680] sm:$0xff]
        %v6682 = vld [vmem:[%s3 + $0x688] sm:$0xff]
        %v6683 = vld [vmem:[%s3 + $0x690] sm:$0xff]
        %v6684 = vld [vmem:[%s3 + $0x698] sm:$0xff]
        %v6685 = vld [vmem:[%s3 + $0x6a0] sm:$0xff]
        %v6686 = vld [vmem:[%s3 + $0x6a8] sm:$0xff]
        %v6687 = vld [vmem:[%s3 + $0x6b0] sm:$0xff]
        %v6688 = vld [vmem:[%s3 + $0x6b8] sm:$0xff]
        %v6689 = vld [vmem:[%s3 + $0x6c0] sm:$0xff]
        %v6690 = vld [vmem:[%s3 + $0x6c8] sm:$0xff]
        %v6691 = vld [vmem:[%s3 + $0x6d0] sm:$0xff]
        %v6692 = vld [vmem:[%s3 + $0x6d8] sm:$0xff]
        %v6693 = vld [vmem:[%s3 + $0x6e0] sm:$0xff]
        %v6694 = vld [vmem:[%s3 + $0x6e8] sm:$0xff]
        %v6695 = vld [vmem:[%s3 + $0x6f0] sm:$0xff]
        %v6696 = vld [vmem:[%s3 + $0x6f8] sm:$0xff]
        %v6697 = vld [vmem:[%s3 + $0x700] sm:$0xff]
        %v6698 = vld [vmem:[%s3 + $0x708] sm:$0xff]
        %v6699 = vld [vmem:[%s3 + $0x710] sm:$0xff]
        %v6700 = vld [vmem:[%s3 + $0x718] sm:$0xff]
        %v6701 = vld [vmem:[%s3 + $0x720] sm:$0xff]
        %v6702 = vld [vmem:[%s3 + $0x728] sm:$0xff]
        %v6703 = vld [vmem:[%s3 + $0x730] sm:$0xff]
        %v6704 = vld [vmem:[%s3 + $0x738] sm:$0xff]
        %v6705 = vld [vmem:[%s3 + $0x740] sm:$0xff]
        %v6706 = vld [vmem:[%s3 + $0x748] sm:$0xff]
        %v6707 = vld [vmem:[%s3 + $0x750] sm:$0xff]
        %v6708 = vld [vmem:[%s3 + $0x758] sm:$0xff]
        %v6709 = vld [vmem:[%s3 + $0x760] sm:$0xff]
        %v6710 = vld [vmem:[%s3 + $0x768] sm:$0xff]
        %v6711 = vld [vmem:[%s3 + $0x770] sm:$0xff]
        %v6712 = vld [vmem:[%s3 + $0x778] sm:$0xff]
        %v6713 = vld [vmem:[%s3 + $0x780] sm:$0xff]
        %v6714 = vld [vmem:[%s3 + $0x788] sm:$0xff]
        %v6715 = vld [vmem:[%s3 + $0x790] sm:$0xff]
        %v6716 = vld [vmem:[%s3 + $0x798] sm:$0xff]
        %v6717 = vld [vmem:[%s3 + $0x7a0] sm:$0xff]
        %v6718 = vld [vmem:[%s3 + $0x7a8] sm:$0xff]
        %v6719 = vld [vmem:[%s3 + $0x7b0] sm:$0xff]
        %v6720 = vld [vmem:[%s3 + $0x7b8] sm:$0xff]
        %v6721 = vld [vmem:[%s3 + $0x7c0] sm:$0xff]
        %v6722 = vld [vmem:[%s3 + $0x7c8] sm:$0xff]
        %v6723 = vld [vmem:[%s3 + $0x7d0] sm:$0xff]
        %v6724 = vld [vmem:[%s3 + $0x7d8] sm:$0xff]
        %v6725 = vld [vmem:[%s3 + $0x7e0] sm:$0xff]
        %v6726 = vld [vmem:[%s3 + $0x7e8] sm:$0xff]
        %v6727 = vld [vmem:[%s3 + $0x7f0] sm:$0xff]
        %v6728 = vld [vmem:[%s3 + $0x7f8] sm:$0xff]
        %6730 = vset.pattern.permute.xlu0 0
        %6731 = vperm.xlu0 %6730, %v6473
        %v6732 = vpop.permute.xlu0 %6731
        %6735 = vset.pattern.permute.xlu0 0
        %6736 = vperm.xlu0 %6735, %v6474
        %v6737 = vpop.permute.xlu0 %6736
        %6740 = vset.pattern.permute.xlu0 0
        %6741 = vperm.xlu0 %6740, %v6475
        %v6742 = vpop.permute.xlu0 %6741
        %6745 = vset.pattern.permute.xlu0 0
        %6746 = vperm.xlu0 %6745, %v6476
        %v6747 = vpop.permute.xlu0 %6746
        %6750 = vset.pattern.permute.xlu0 0
        %6751 = vperm.xlu0 %6750, %v6477
        %v6752 = vpop.permute.xlu0 %6751
        %6755 = vset.pattern.permute.xlu0 0
        %6756 = vperm.xlu0 %6755, %v6478
        %v6757 = vpop.permute.xlu0 %6756
        %6760 = vset.pattern.permute.xlu0 0
        %6761 = vperm.xlu0 %6760, %v6479
        %v6762 = vpop.permute.xlu0 %6761
        %6765 = vset.pattern.permute.xlu0 0
        %6766 = vperm.xlu0 %6765, %v6480
        %v6767 = vpop.permute.xlu0 %6766
        %6770 = vset.pattern.permute.xlu0 0
        %6771 = vperm.xlu0 %6770, %v6481
        %v6772 = vpop.permute.xlu0 %6771
        %6775 = vset.pattern.permute.xlu0 0
        %6776 = vperm.xlu0 %6775, %v6482
        %v6777 = vpop.permute.xlu0 %6776
        %6780 = vset.pattern.permute.xlu0 0
        %6781 = vperm.xlu0 %6780, %v6483
        %v6782 = vpop.permute.xlu0 %6781
        %6785 = vset.pattern.permute.xlu0 0
        %6786 = vperm.xlu0 %6785, %v6484
        %v6787 = vpop.permute.xlu0 %6786
        %6790 = vset.pattern.permute.xlu0 0
        %6791 = vperm.xlu0 %6790, %v6485
        %v6792 = vpop.permute.xlu0 %6791
        %6795 = vset.pattern.permute.xlu0 0
        %6796 = vperm.xlu0 %6795, %v6486
        %v6797 = vpop.permute.xlu0 %6796
        %6800 = vset.pattern.permute.xlu0 0
        %6801 = vperm.xlu0 %6800, %v6487
        %v6802 = vpop.permute.xlu0 %6801
        %6805 = vset.pattern.permute.xlu0 0
        %6806 = vperm.xlu0 %6805, %v6488
        %v6807 = vpop.permute.xlu0 %6806
        %6810 = vset.pattern.permute.xlu0 0
        %6811 = vperm.xlu0 %6810, %v6489
        %v6812 = vpop.permute.xlu0 %6811
        %6815 = vset.pattern.permute.xlu0 0
        %6816 = vperm.xlu0 %6815, %v6490
        %v6817 = vpop.permute.xlu0 %6816
        %6820 = vset.pattern.permute.xlu0 0
        %6821 = vperm.xlu0 %6820, %v6491
        %v6822 = vpop.permute.xlu0 %6821
        %6825 = vset.pattern.permute.xlu0 0
        %6826 = vperm.xlu0 %6825, %v6492
        %v6827 = vpop.permute.xlu0 %6826
        %6830 = vset.pattern.permute.xlu0 0
        %6831 = vperm.xlu0 %6830, %v6493
        %v6832 = vpop.permute.xlu0 %6831
        %6835 = vset.pattern.permute.xlu0 0
        %6836 = vperm.xlu0 %6835, %v6494
        %v6837 = vpop.permute.xlu0 %6836
        %6840 = vset.pattern.permute.xlu0 0
        %6841 = vperm.xlu0 %6840, %v6495
        %v6842 = vpop.permute.xlu0 %6841
        %6845 = vset.pattern.permute.xlu0 0
        %6846 = vperm.xlu0 %6845, %v6496
        %v6847 = vpop.permute.xlu0 %6846
        %6850 = vset.pattern.permute.xlu0 0
        %6851 = vperm.xlu0 %6850, %v6497
        %v6852 = vpop.permute.xlu0 %6851
        %6855 = vset.pattern.permute.xlu0 0
        %6856 = vperm.xlu0 %6855, %v6498
        %v6857 = vpop.permute.xlu0 %6856
        %6860 = vset.pattern.permute.xlu0 0
        %6861 = vperm.xlu0 %6860, %v6499
        %v6862 = vpop.permute.xlu0 %6861
        %6865 = vset.pattern.permute.xlu0 0
        %6866 = vperm.xlu0 %6865, %v6500
        %v6867 = vpop.permute.xlu0 %6866
        %6870 = vset.pattern.permute.xlu0 0
        %6871 = vperm.xlu0 %6870, %v6501
        %v6872 = vpop.permute.xlu0 %6871
        %6875 = vset.pattern.permute.xlu0 0
        %6876 = vperm.xlu0 %6875, %v6502
        %v6877 = vpop.permute.xlu0 %6876
        %6880 = vset.pattern.permute.xlu0 0
        %6881 = vperm.xlu0 %6880, %v6503
        %v6882 = vpop.permute.xlu0 %6881
        %6885 = vset.pattern.permute.xlu0 0
        %6886 = vperm.xlu0 %6885, %v6504
        %v6887 = vpop.permute.xlu0 %6886
        %6890 = vset.pattern.permute.xlu0 0
        %6891 = vperm.xlu0 %6890, %v6505
        %v6892 = vpop.permute.xlu0 %6891
        %6895 = vset.pattern.permute.xlu0 0
        %6896 = vperm.xlu0 %6895, %v6506
        %v6897 = vpop.permute.xlu0 %6896
        %6900 = vset.pattern.permute.xlu0 0
        %6901 = vperm.xlu0 %6900, %v6507
        %v6902 = vpop.permute.xlu0 %6901
        %6905 = vset.pattern.permute.xlu0 0
        %6906 = vperm.xlu0 %6905, %v6508
        %v6907 = vpop.permute.xlu0 %6906
        %6910 = vset.pattern.permute.xlu0 0
        %6911 = vperm.xlu0 %6910, %v6509
        %v6912 = vpop.permute.xlu0 %6911
        %6915 = vset.pattern.permute.xlu0 0
        %6916 = vperm.xlu0 %6915, %v6510
        %v6917 = vpop.permute.xlu0 %6916
        %6920 = vset.pattern.permute.xlu0 0
        %6921 = vperm.xlu0 %6920, %v6511
        %v6922 = vpop.permute.xlu0 %6921
        %6925 = vset.pattern.permute.xlu0 0
        %6926 = vperm.xlu0 %6925, %v6512
        %v6927 = vpop.permute.xlu0 %6926
        %6930 = vset.pattern.permute.xlu0 0
        %6931 = vperm.xlu0 %6930, %v6513
        %v6932 = vpop.permute.xlu0 %6931
        %6935 = vset.pattern.permute.xlu0 0
        %6936 = vperm.xlu0 %6935, %v6514
        %v6937 = vpop.permute.xlu0 %6936
        %6940 = vset.pattern.permute.xlu0 0
        %6941 = vperm.xlu0 %6940, %v6515
        %v6942 = vpop.permute.xlu0 %6941
        %6945 = vset.pattern.permute.xlu0 0
        %6946 = vperm.xlu0 %6945, %v6516
        %v6947 = vpop.permute.xlu0 %6946
        %6950 = vset.pattern.permute.xlu0 0
        %6951 = vperm.xlu0 %6950, %v6517
        %v6952 = vpop.permute.xlu0 %6951
        %6955 = vset.pattern.permute.xlu0 0
        %6956 = vperm.xlu0 %6955, %v6518
        %v6957 = vpop.permute.xlu0 %6956
        %6960 = vset.pattern.permute.xlu0 0
        %6961 = vperm.xlu0 %6960, %v6519
        %v6962 = vpop.permute.xlu0 %6961
        %6965 = vset.pattern.permute.xlu0 0
        %6966 = vperm.xlu0 %6965, %v6520
        %v6967 = vpop.permute.xlu0 %6966
        %6970 = vset.pattern.permute.xlu0 0
        %6971 = vperm.xlu0 %6970, %v6521
        %v6972 = vpop.permute.xlu0 %6971
        %6975 = vset.pattern.permute.xlu0 0
        %6976 = vperm.xlu0 %6975, %v6522
        %v6977 = vpop.permute.xlu0 %6976
        %6980 = vset.pattern.permute.xlu0 0
        %6981 = vperm.xlu0 %6980, %v6523
        %v6982 = vpop.permute.xlu0 %6981
        %6985 = vset.pattern.permute.xlu0 0
        %6986 = vperm.xlu0 %6985, %v6524
        %v6987 = vpop.permute.xlu0 %6986
        %6990 = vset.pattern.permute.xlu0 0
        %6991 = vperm.xlu0 %6990, %v6525
        %v6992 = vpop.permute.xlu0 %6991
        %6995 = vset.pattern.permute.xlu0 0
        %6996 = vperm.xlu0 %6995, %v6526
        %v6997 = vpop.permute.xlu0 %6996
        %7000 = vset.pattern.permute.xlu0 0
        %7001 = vperm.xlu0 %7000, %v6527
        %v7002 = vpop.permute.xlu0 %7001
        %7005 = vset.pattern.permute.xlu0 0
        %7006 = vperm.xlu0 %7005, %v6528
        %v7007 = vpop.permute.xlu0 %7006
        %7010 = vset.pattern.permute.xlu0 0
        %7011 = vperm.xlu0 %7010, %v6529
        %v7012 = vpop.permute.xlu0 %7011
        %7015 = vset.pattern.permute.xlu0 0
        %7016 = vperm.xlu0 %7015, %v6530
        %v7017 = vpop.permute.xlu0 %7016
        %7020 = vset.pattern.permute.xlu0 0
        %7021 = vperm.xlu0 %7020, %v6531
        %v7022 = vpop.permute.xlu0 %7021
        %7025 = vset.pattern.permute.xlu0 0
        %7026 = vperm.xlu0 %7025, %v6532
        %v7027 = vpop.permute.xlu0 %7026
        %7030 = vset.pattern.permute.xlu0 0
        %7031 = vperm.xlu0 %7030, %v6533
        %v7032 = vpop.permute.xlu0 %7031
        %7035 = vset.pattern.permute.xlu0 0
        %7036 = vperm.xlu0 %7035, %v6534
        %v7037 = vpop.permute.xlu0 %7036
        %7040 = vset.pattern.permute.xlu0 0
        %7041 = vperm.xlu0 %7040, %v6535
        %v7042 = vpop.permute.xlu0 %7041
        %7045 = vset.pattern.permute.xlu0 0
        %7046 = vperm.xlu0 %7045, %v6536
        %v7047 = vpop.permute.xlu0 %7046
        %7050 = vset.pattern.permute.xlu0 0
        %7051 = vperm.xlu0 %7050, %v6537
        %v7052 = vpop.permute.xlu0 %7051
        %7055 = vset.pattern.permute.xlu0 0
        %7056 = vperm.xlu0 %7055, %v6538
        %v7057 = vpop.permute.xlu0 %7056
        %7060 = vset.pattern.permute.xlu0 0
        %7061 = vperm.xlu0 %7060, %v6539
        %v7062 = vpop.permute.xlu0 %7061
        %7065 = vset.pattern.permute.xlu0 0
        %7066 = vperm.xlu0 %7065, %v6540
        %v7067 = vpop.permute.xlu0 %7066
        %7070 = vset.pattern.permute.xlu0 0
        %7071 = vperm.xlu0 %7070, %v6541
        %v7072 = vpop.permute.xlu0 %7071
        %7075 = vset.pattern.permute.xlu0 0
        %7076 = vperm.xlu0 %7075, %v6542
        %v7077 = vpop.permute.xlu0 %7076
        %7080 = vset.pattern.permute.xlu0 0
        %7081 = vperm.xlu0 %7080, %v6543
        %v7082 = vpop.permute.xlu0 %7081
        %7085 = vset.pattern.permute.xlu0 0
        %7086 = vperm.xlu0 %7085, %v6544
        %v7087 = vpop.permute.xlu0 %7086
        %7090 = vset.pattern.permute.xlu0 0
        %7091 = vperm.xlu0 %7090, %v6545
        %v7092 = vpop.permute.xlu0 %7091
        %7095 = vset.pattern.permute.xlu0 0
        %7096 = vperm.xlu0 %7095, %v6546
        %v7097 = vpop.permute.xlu0 %7096
        %7100 = vset.pattern.permute.xlu0 0
        %7101 = vperm.xlu0 %7100, %v6547
        %v7102 = vpop.permute.xlu0 %7101
        %7105 = vset.pattern.permute.xlu0 0
        %7106 = vperm.xlu0 %7105, %v6548
        %v7107 = vpop.permute.xlu0 %7106
        %7110 = vset.pattern.permute.xlu0 0
        %7111 = vperm.xlu0 %7110, %v6549
        %v7112 = vpop.permute.xlu0 %7111
        %7115 = vset.pattern.permute.xlu0 0
        %7116 = vperm.xlu0 %7115, %v6550
        %v7117 = vpop.permute.xlu0 %7116
        %7120 = vset.pattern.permute.xlu0 0
        %7121 = vperm.xlu0 %7120, %v6551
        %v7122 = vpop.permute.xlu0 %7121
        %7125 = vset.pattern.permute.xlu0 0
        %7126 = vperm.xlu0 %7125, %v6552
        %v7127 = vpop.permute.xlu0 %7126
        %7130 = vset.pattern.permute.xlu0 0
        %7131 = vperm.xlu0 %7130, %v6553
        %v7132 = vpop.permute.xlu0 %7131
        %7135 = vset.pattern.permute.xlu0 0
        %7136 = vperm.xlu0 %7135, %v6554
        %v7137 = vpop.permute.xlu0 %7136
        %7140 = vset.pattern.permute.xlu0 0
        %7141 = vperm.xlu0 %7140, %v6555
        %v7142 = vpop.permute.xlu0 %7141
        %7145 = vset.pattern.permute.xlu0 0
        %7146 = vperm.xlu0 %7145, %v6556
        %v7147 = vpop.permute.xlu0 %7146
        %7150 = vset.pattern.permute.xlu0 0
        %7151 = vperm.xlu0 %7150, %v6557
        %v7152 = vpop.permute.xlu0 %7151
        %7155 = vset.pattern.permute.xlu0 0
        %7156 = vperm.xlu0 %7155, %v6558
        %v7157 = vpop.permute.xlu0 %7156
        %7160 = vset.pattern.permute.xlu0 0
        %7161 = vperm.xlu0 %7160, %v6559
        %v7162 = vpop.permute.xlu0 %7161
        %7165 = vset.pattern.permute.xlu0 0
        %7166 = vperm.xlu0 %7165, %v6560
        %v7167 = vpop.permute.xlu0 %7166
        %7170 = vset.pattern.permute.xlu0 0
        %7171 = vperm.xlu0 %7170, %v6561
        %v7172 = vpop.permute.xlu0 %7171
        %7175 = vset.pattern.permute.xlu0 0
        %7176 = vperm.xlu0 %7175, %v6562
        %v7177 = vpop.permute.xlu0 %7176
        %7180 = vset.pattern.permute.xlu0 0
        %7181 = vperm.xlu0 %7180, %v6563
        %v7182 = vpop.permute.xlu0 %7181
        %7185 = vset.pattern.permute.xlu0 0
        %7186 = vperm.xlu0 %7185, %v6564
        %v7187 = vpop.permute.xlu0 %7186
        %7190 = vset.pattern.permute.xlu0 0
        %7191 = vperm.xlu0 %7190, %v6565
        %v7192 = vpop.permute.xlu0 %7191
        %7195 = vset.pattern.permute.xlu0 0
        %7196 = vperm.xlu0 %7195, %v6566
        %v7197 = vpop.permute.xlu0 %7196
        %7200 = vset.pattern.permute.xlu0 0
        %7201 = vperm.xlu0 %7200, %v6567
        %v7202 = vpop.permute.xlu0 %7201
        %7205 = vset.pattern.permute.xlu0 0
        %7206 = vperm.xlu0 %7205, %v6568
        %v7207 = vpop.permute.xlu0 %7206
        %7210 = vset.pattern.permute.xlu0 0
        %7211 = vperm.xlu0 %7210, %v6569
        %v7212 = vpop.permute.xlu0 %7211
        %7215 = vset.pattern.permute.xlu0 0
        %7216 = vperm.xlu0 %7215, %v6570
        %v7217 = vpop.permute.xlu0 %7216
        %7220 = vset.pattern.permute.xlu0 0
        %7221 = vperm.xlu0 %7220, %v6571
        %v7222 = vpop.permute.xlu0 %7221
        %7225 = vset.pattern.permute.xlu0 0
        %7226 = vperm.xlu0 %7225, %v6572
        %v7227 = vpop.permute.xlu0 %7226
        %7230 = vset.pattern.permute.xlu0 0
        %7231 = vperm.xlu0 %7230, %v6573
        %v7232 = vpop.permute.xlu0 %7231
        %7235 = vset.pattern.permute.xlu0 0
        %7236 = vperm.xlu0 %7235, %v6574
        %v7237 = vpop.permute.xlu0 %7236
        %7240 = vset.pattern.permute.xlu0 0
        %7241 = vperm.xlu0 %7240, %v6575
        %v7242 = vpop.permute.xlu0 %7241
        %7245 = vset.pattern.permute.xlu0 0
        %7246 = vperm.xlu0 %7245, %v6576
        %v7247 = vpop.permute.xlu0 %7246
        %7250 = vset.pattern.permute.xlu0 0
        %7251 = vperm.xlu0 %7250, %v6577
        %v7252 = vpop.permute.xlu0 %7251
        %7255 = vset.pattern.permute.xlu0 0
        %7256 = vperm.xlu0 %7255, %v6578
        %v7257 = vpop.permute.xlu0 %7256
        %7260 = vset.pattern.permute.xlu0 0
        %7261 = vperm.xlu0 %7260, %v6579
        %v7262 = vpop.permute.xlu0 %7261
        %7265 = vset.pattern.permute.xlu0 0
        %7266 = vperm.xlu0 %7265, %v6580
        %v7267 = vpop.permute.xlu0 %7266
        %7270 = vset.pattern.permute.xlu0 0
        %7271 = vperm.xlu0 %7270, %v6581
        %v7272 = vpop.permute.xlu0 %7271
        %7275 = vset.pattern.permute.xlu0 0
        %7276 = vperm.xlu0 %7275, %v6582
        %v7277 = vpop.permute.xlu0 %7276
        %7280 = vset.pattern.permute.xlu0 0
        %7281 = vperm.xlu0 %7280, %v6583
        %v7282 = vpop.permute.xlu0 %7281
        %7285 = vset.pattern.permute.xlu0 0
        %7286 = vperm.xlu0 %7285, %v6584
        %v7287 = vpop.permute.xlu0 %7286
        %7290 = vset.pattern.permute.xlu0 0
        %7291 = vperm.xlu0 %7290, %v6585
        %v7292 = vpop.permute.xlu0 %7291
        %7295 = vset.pattern.permute.xlu0 0
        %7296 = vperm.xlu0 %7295, %v6586
        %v7297 = vpop.permute.xlu0 %7296
        %7300 = vset.pattern.permute.xlu0 0
        %7301 = vperm.xlu0 %7300, %v6587
        %v7302 = vpop.permute.xlu0 %7301
        %7305 = vset.pattern.permute.xlu0 0
        %7306 = vperm.xlu0 %7305, %v6588
        %v7307 = vpop.permute.xlu0 %7306
        %7310 = vset.pattern.permute.xlu0 0
        %7311 = vperm.xlu0 %7310, %v6589
        %v7312 = vpop.permute.xlu0 %7311
        %7315 = vset.pattern.permute.xlu0 0
        %7316 = vperm.xlu0 %7315, %v6590
        %v7317 = vpop.permute.xlu0 %7316
        %7320 = vset.pattern.permute.xlu0 0
        %7321 = vperm.xlu0 %7320, %v6591
        %v7322 = vpop.permute.xlu0 %7321
        %7325 = vset.pattern.permute.xlu0 0
        %7326 = vperm.xlu0 %7325, %v6592
        %v7327 = vpop.permute.xlu0 %7326
        %7330 = vset.pattern.permute.xlu0 0
        %7331 = vperm.xlu0 %7330, %v6593
        %v7332 = vpop.permute.xlu0 %7331
        %7335 = vset.pattern.permute.xlu0 0
        %7336 = vperm.xlu0 %7335, %v6594
        %v7337 = vpop.permute.xlu0 %7336
        %7340 = vset.pattern.permute.xlu0 0
        %7341 = vperm.xlu0 %7340, %v6595
        %v7342 = vpop.permute.xlu0 %7341
        %7345 = vset.pattern.permute.xlu0 0
        %7346 = vperm.xlu0 %7345, %v6596
        %v7347 = vpop.permute.xlu0 %7346
        %7350 = vset.pattern.permute.xlu0 0
        %7351 = vperm.xlu0 %7350, %v6597
        %v7352 = vpop.permute.xlu0 %7351
        %7355 = vset.pattern.permute.xlu0 0
        %7356 = vperm.xlu0 %7355, %v6598
        %v7357 = vpop.permute.xlu0 %7356
        %7360 = vset.pattern.permute.xlu0 0
        %7361 = vperm.xlu0 %7360, %v6599
        %v7362 = vpop.permute.xlu0 %7361
        %7365 = vset.pattern.permute.xlu0 0
        %7366 = vperm.xlu0 %7365, %v6600
        %v7367 = vpop.permute.xlu0 %7366
        %7370 = vset.pattern.permute.xlu0 0
        %7371 = vperm.xlu0 %7370, %v6601
        %v7372 = vpop.permute.xlu0 %7371
        %7375 = vset.pattern.permute.xlu0 0
        %7376 = vperm.xlu0 %7375, %v6602
        %v7377 = vpop.permute.xlu0 %7376
        %7380 = vset.pattern.permute.xlu0 0
        %7381 = vperm.xlu0 %7380, %v6603
        %v7382 = vpop.permute.xlu0 %7381
        %7385 = vset.pattern.permute.xlu0 0
        %7386 = vperm.xlu0 %7385, %v6604
        %v7387 = vpop.permute.xlu0 %7386
        %7390 = vset.pattern.permute.xlu0 0
        %7391 = vperm.xlu0 %7390, %v6605
        %v7392 = vpop.permute.xlu0 %7391
        %7395 = vset.pattern.permute.xlu0 0
        %7396 = vperm.xlu0 %7395, %v6606
        %v7397 = vpop.permute.xlu0 %7396
        %7400 = vset.pattern.permute.xlu0 0
        %7401 = vperm.xlu0 %7400, %v6607
        %v7402 = vpop.permute.xlu0 %7401
        %7405 = vset.pattern.permute.xlu0 0
        %7406 = vperm.xlu0 %7405, %v6608
        %v7407 = vpop.permute.xlu0 %7406
        %7410 = vset.pattern.permute.xlu0 0
        %7411 = vperm.xlu0 %7410, %v6609
        %v7412 = vpop.permute.xlu0 %7411
        %7415 = vset.pattern.permute.xlu0 0
        %7416 = vperm.xlu0 %7415, %v6610
        %v7417 = vpop.permute.xlu0 %7416
        %7420 = vset.pattern.permute.xlu0 0
        %7421 = vperm.xlu0 %7420, %v6611
        %v7422 = vpop.permute.xlu0 %7421
        %7425 = vset.pattern.permute.xlu0 0
        %7426 = vperm.xlu0 %7425, %v6612
        %v7427 = vpop.permute.xlu0 %7426
        %7430 = vset.pattern.permute.xlu0 0
        %7431 = vperm.xlu0 %7430, %v6613
        %v7432 = vpop.permute.xlu0 %7431
        %7435 = vset.pattern.permute.xlu0 0
        %7436 = vperm.xlu0 %7435, %v6614
        %v7437 = vpop.permute.xlu0 %7436
        %7440 = vset.pattern.permute.xlu0 0
        %7441 = vperm.xlu0 %7440, %v6615
        %v7442 = vpop.permute.xlu0 %7441
        %7445 = vset.pattern.permute.xlu0 0
        %7446 = vperm.xlu0 %7445, %v6616
        %v7447 = vpop.permute.xlu0 %7446
        %7450 = vset.pattern.permute.xlu0 0
        %7451 = vperm.xlu0 %7450, %v6617
        %v7452 = vpop.permute.xlu0 %7451
        %7455 = vset.pattern.permute.xlu0 0
        %7456 = vperm.xlu0 %7455, %v6618
        %v7457 = vpop.permute.xlu0 %7456
        %7460 = vset.pattern.permute.xlu0 0
        %7461 = vperm.xlu0 %7460, %v6619
        %v7462 = vpop.permute.xlu0 %7461
        %7465 = vset.pattern.permute.xlu0 0
        %7466 = vperm.xlu0 %7465, %v6620
        %v7467 = vpop.permute.xlu0 %7466
        %7470 = vset.pattern.permute.xlu0 0
        %7471 = vperm.xlu0 %7470, %v6621
        %v7472 = vpop.permute.xlu0 %7471
        %7475 = vset.pattern.permute.xlu0 0
        %7476 = vperm.xlu0 %7475, %v6622
        %v7477 = vpop.permute.xlu0 %7476
        %7480 = vset.pattern.permute.xlu0 0
        %7481 = vperm.xlu0 %7480, %v6623
        %v7482 = vpop.permute.xlu0 %7481
        %7485 = vset.pattern.permute.xlu0 0
        %7486 = vperm.xlu0 %7485, %v6624
        %v7487 = vpop.permute.xlu0 %7486
        %7490 = vset.pattern.permute.xlu0 0
        %7491 = vperm.xlu0 %7490, %v6625
        %v7492 = vpop.permute.xlu0 %7491
        %7495 = vset.pattern.permute.xlu0 0
        %7496 = vperm.xlu0 %7495, %v6626
        %v7497 = vpop.permute.xlu0 %7496
        %7500 = vset.pattern.permute.xlu0 0
        %7501 = vperm.xlu0 %7500, %v6627
        %v7502 = vpop.permute.xlu0 %7501
        %7505 = vset.pattern.permute.xlu0 0
        %7506 = vperm.xlu0 %7505, %v6628
        %v7507 = vpop.permute.xlu0 %7506
        %7510 = vset.pattern.permute.xlu0 0
        %7511 = vperm.xlu0 %7510, %v6629
        %v7512 = vpop.permute.xlu0 %7511
        %7515 = vset.pattern.permute.xlu0 0
        %7516 = vperm.xlu0 %7515, %v6630
        %v7517 = vpop.permute.xlu0 %7516
        %7520 = vset.pattern.permute.xlu0 0
        %7521 = vperm.xlu0 %7520, %v6631
        %v7522 = vpop.permute.xlu0 %7521
        %7525 = vset.pattern.permute.xlu0 0
        %7526 = vperm.xlu0 %7525, %v6632
        %v7527 = vpop.permute.xlu0 %7526
        %7530 = vset.pattern.permute.xlu0 0
        %7531 = vperm.xlu0 %7530, %v6633
        %v7532 = vpop.permute.xlu0 %7531
        %7535 = vset.pattern.permute.xlu0 0
        %7536 = vperm.xlu0 %7535, %v6634
        %v7537 = vpop.permute.xlu0 %7536
        %7540 = vset.pattern.permute.xlu0 0
        %7541 = vperm.xlu0 %7540, %v6635
        %v7542 = vpop.permute.xlu0 %7541
        %7545 = vset.pattern.permute.xlu0 0
        %7546 = vperm.xlu0 %7545, %v6636
        %v7547 = vpop.permute.xlu0 %7546
        %7550 = vset.pattern.permute.xlu0 0
        %7551 = vperm.xlu0 %7550, %v6637
        %v7552 = vpop.permute.xlu0 %7551
        %7555 = vset.pattern.permute.xlu0 0
        %7556 = vperm.xlu0 %7555, %v6638
        %v7557 = vpop.permute.xlu0 %7556
        %7560 = vset.pattern.permute.xlu0 0
        %7561 = vperm.xlu0 %7560, %v6639
        %v7562 = vpop.permute.xlu0 %7561
        %7565 = vset.pattern.permute.xlu0 0
        %7566 = vperm.xlu0 %7565, %v6640
        %v7567 = vpop.permute.xlu0 %7566
        %7570 = vset.pattern.permute.xlu0 0
        %7571 = vperm.xlu0 %7570, %v6641
        %v7572 = vpop.permute.xlu0 %7571
        %7575 = vset.pattern.permute.xlu0 0
        %7576 = vperm.xlu0 %7575, %v6642
        %v7577 = vpop.permute.xlu0 %7576
        %7580 = vset.pattern.permute.xlu0 0
        %7581 = vperm.xlu0 %7580, %v6643
        %v7582 = vpop.permute.xlu0 %7581
        %7585 = vset.pattern.permute.xlu0 0
        %7586 = vperm.xlu0 %7585, %v6644
        %v7587 = vpop.permute.xlu0 %7586
        %7590 = vset.pattern.permute.xlu0 0
        %7591 = vperm.xlu0 %7590, %v6645
        %v7592 = vpop.permute.xlu0 %7591
        %7595 = vset.pattern.permute.xlu0 0
        %7596 = vperm.xlu0 %7595, %v6646
        %v7597 = vpop.permute.xlu0 %7596
        %7600 = vset.pattern.permute.xlu0 0
        %7601 = vperm.xlu0 %7600, %v6647
        %v7602 = vpop.permute.xlu0 %7601
        %7605 = vset.pattern.permute.xlu0 0
        %7606 = vperm.xlu0 %7605, %v6648
        %v7607 = vpop.permute.xlu0 %7606
        %7610 = vset.pattern.permute.xlu0 0
        %7611 = vperm.xlu0 %7610, %v6649
        %v7612 = vpop.permute.xlu0 %7611
        %7615 = vset.pattern.permute.xlu0 0
        %7616 = vperm.xlu0 %7615, %v6650
        %v7617 = vpop.permute.xlu0 %7616
        %7620 = vset.pattern.permute.xlu0 0
        %7621 = vperm.xlu0 %7620, %v6651
        %v7622 = vpop.permute.xlu0 %7621
        %7625 = vset.pattern.permute.xlu0 0
        %7626 = vperm.xlu0 %7625, %v6652
        %v7627 = vpop.permute.xlu0 %7626
        %7630 = vset.pattern.permute.xlu0 0
        %7631 = vperm.xlu0 %7630, %v6653
        %v7632 = vpop.permute.xlu0 %7631
        %7635 = vset.pattern.permute.xlu0 0
        %7636 = vperm.xlu0 %7635, %v6654
        %v7637 = vpop.permute.xlu0 %7636
        %7640 = vset.pattern.permute.xlu0 0
        %7641 = vperm.xlu0 %7640, %v6655
        %v7642 = vpop.permute.xlu0 %7641
        %7645 = vset.pattern.permute.xlu0 0
        %7646 = vperm.xlu0 %7645, %v6656
        %v7647 = vpop.permute.xlu0 %7646
        %7650 = vset.pattern.permute.xlu0 0
        %7651 = vperm.xlu0 %7650, %v6657
        %v7652 = vpop.permute.xlu0 %7651
        %7655 = vset.pattern.permute.xlu0 0
        %7656 = vperm.xlu0 %7655, %v6658
        %v7657 = vpop.permute.xlu0 %7656
        %7660 = vset.pattern.permute.xlu0 0
        %7661 = vperm.xlu0 %7660, %v6659
        %v7662 = vpop.permute.xlu0 %7661
        %7665 = vset.pattern.permute.xlu0 0
        %7666 = vperm.xlu0 %7665, %v6660
        %v7667 = vpop.permute.xlu0 %7666
        %7670 = vset.pattern.permute.xlu0 0
        %7671 = vperm.xlu0 %7670, %v6661
        %v7672 = vpop.permute.xlu0 %7671
        %7675 = vset.pattern.permute.xlu0 0
        %7676 = vperm.xlu0 %7675, %v6662
        %v7677 = vpop.permute.xlu0 %7676
        %7680 = vset.pattern.permute.xlu0 0
        %7681 = vperm.xlu0 %7680, %v6663
        %v7682 = vpop.permute.xlu0 %7681
        %7685 = vset.pattern.permute.xlu0 0
        %7686 = vperm.xlu0 %7685, %v6664
        %v7687 = vpop.permute.xlu0 %7686
        %7690 = vset.pattern.permute.xlu0 0
        %7691 = vperm.xlu0 %7690, %v6665
        %v7692 = vpop.permute.xlu0 %7691
        %7695 = vset.pattern.permute.xlu0 0
        %7696 = vperm.xlu0 %7695, %v6666
        %v7697 = vpop.permute.xlu0 %7696
        %7700 = vset.pattern.permute.xlu0 0
        %7701 = vperm.xlu0 %7700, %v6667
        %v7702 = vpop.permute.xlu0 %7701
        %7705 = vset.pattern.permute.xlu0 0
        %7706 = vperm.xlu0 %7705, %v6668
        %v7707 = vpop.permute.xlu0 %7706
        %7710 = vset.pattern.permute.xlu0 0
        %7711 = vperm.xlu0 %7710, %v6669
        %v7712 = vpop.permute.xlu0 %7711
        %7715 = vset.pattern.permute.xlu0 0
        %7716 = vperm.xlu0 %7715, %v6670
        %v7717 = vpop.permute.xlu0 %7716
        %7720 = vset.pattern.permute.xlu0 0
        %7721 = vperm.xlu0 %7720, %v6671
        %v7722 = vpop.permute.xlu0 %7721
        %7725 = vset.pattern.permute.xlu0 0
        %7726 = vperm.xlu0 %7725, %v6672
        %v7727 = vpop.permute.xlu0 %7726
        %7730 = vset.pattern.permute.xlu0 0
        %7731 = vperm.xlu0 %7730, %v6673
        %v7732 = vpop.permute.xlu0 %7731
        %7735 = vset.pattern.permute.xlu0 0
        %7736 = vperm.xlu0 %7735, %v6674
        %v7737 = vpop.permute.xlu0 %7736
        %7740 = vset.pattern.permute.xlu0 0
        %7741 = vperm.xlu0 %7740, %v6675
        %v7742 = vpop.permute.xlu0 %7741
        %7745 = vset.pattern.permute.xlu0 0
        %7746 = vperm.xlu0 %7745, %v6676
        %v7747 = vpop.permute.xlu0 %7746
        %7750 = vset.pattern.permute.xlu0 0
        %7751 = vperm.xlu0 %7750, %v6677
        %v7752 = vpop.permute.xlu0 %7751
        %7755 = vset.pattern.permute.xlu0 0
        %7756 = vperm.xlu0 %7755, %v6678
        %v7757 = vpop.permute.xlu0 %7756
        %7760 = vset.pattern.permute.xlu0 0
        %7761 = vperm.xlu0 %7760, %v6679
        %v7762 = vpop.permute.xlu0 %7761
        %7765 = vset.pattern.permute.xlu0 0
        %7766 = vperm.xlu0 %7765, %v6680
        %v7767 = vpop.permute.xlu0 %7766
        %7770 = vset.pattern.permute.xlu0 0
        %7771 = vperm.xlu0 %7770, %v6681
        %v7772 = vpop.permute.xlu0 %7771
        %7775 = vset.pattern.permute.xlu0 0
        %7776 = vperm.xlu0 %7775, %v6682
        %v7777 = vpop.permute.xlu0 %7776
        %7780 = vset.pattern.permute.xlu0 0
        %7781 = vperm.xlu0 %7780, %v6683
        %v7782 = vpop.permute.xlu0 %7781
        %7785 = vset.pattern.permute.xlu0 0
        %7786 = vperm.xlu0 %7785, %v6684
        %v7787 = vpop.permute.xlu0 %7786
        %7790 = vset.pattern.permute.xlu0 0
        %7791 = vperm.xlu0 %7790, %v6685
        %v7792 = vpop.permute.xlu0 %7791
        %7795 = vset.pattern.permute.xlu0 0
        %7796 = vperm.xlu0 %7795, %v6686
        %v7797 = vpop.permute.xlu0 %7796
        %7800 = vset.pattern.permute.xlu0 0
        %7801 = vperm.xlu0 %7800, %v6687
        %v7802 = vpop.permute.xlu0 %7801
        %7805 = vset.pattern.permute.xlu0 0
        %7806 = vperm.xlu0 %7805, %v6688
        %v7807 = vpop.permute.xlu0 %7806
        %7810 = vset.pattern.permute.xlu0 0
        %7811 = vperm.xlu0 %7810, %v6689
        %v7812 = vpop.permute.xlu0 %7811
        %7815 = vset.pattern.permute.xlu0 0
        %7816 = vperm.xlu0 %7815, %v6690
        %v7817 = vpop.permute.xlu0 %7816
        %7820 = vset.pattern.permute.xlu0 0
        %7821 = vperm.xlu0 %7820, %v6691
        %v7822 = vpop.permute.xlu0 %7821
        %7825 = vset.pattern.permute.xlu0 0
        %7826 = vperm.xlu0 %7825, %v6692
        %v7827 = vpop.permute.xlu0 %7826
        %7830 = vset.pattern.permute.xlu0 0
        %7831 = vperm.xlu0 %7830, %v6693
        %v7832 = vpop.permute.xlu0 %7831
        %7835 = vset.pattern.permute.xlu0 0
        %7836 = vperm.xlu0 %7835, %v6694
        %v7837 = vpop.permute.xlu0 %7836
        %7840 = vset.pattern.permute.xlu0 0
        %7841 = vperm.xlu0 %7840, %v6695
        %v7842 = vpop.permute.xlu0 %7841
        %7845 = vset.pattern.permute.xlu0 0
        %7846 = vperm.xlu0 %7845, %v6696
        %v7847 = vpop.permute.xlu0 %7846
        %7850 = vset.pattern.permute.xlu0 0
        %7851 = vperm.xlu0 %7850, %v6697
        %v7852 = vpop.permute.xlu0 %7851
        %7855 = vset.pattern.permute.xlu0 0
        %7856 = vperm.xlu0 %7855, %v6698
        %v7857 = vpop.permute.xlu0 %7856
        %7860 = vset.pattern.permute.xlu0 0
        %7861 = vperm.xlu0 %7860, %v6699
        %v7862 = vpop.permute.xlu0 %7861
        %7865 = vset.pattern.permute.xlu0 0
        %7866 = vperm.xlu0 %7865, %v6700
        %v7867 = vpop.permute.xlu0 %7866
        %7870 = vset.pattern.permute.xlu0 0
        %7871 = vperm.xlu0 %7870, %v6701
        %v7872 = vpop.permute.xlu0 %7871
        %7875 = vset.pattern.permute.xlu0 0
        %7876 = vperm.xlu0 %7875, %v6702
        %v7877 = vpop.permute.xlu0 %7876
        %7880 = vset.pattern.permute.xlu0 0
        %7881 = vperm.xlu0 %7880, %v6703
        %v7882 = vpop.permute.xlu0 %7881
        %7885 = vset.pattern.permute.xlu0 0
        %7886 = vperm.xlu0 %7885, %v6704
        %v7887 = vpop.permute.xlu0 %7886
        %7890 = vset.pattern.permute.xlu0 0
        %7891 = vperm.xlu0 %7890, %v6705
        %v7892 = vpop.permute.xlu0 %7891
        %7895 = vset.pattern.permute.xlu0 0
        %7896 = vperm.xlu0 %7895, %v6706
        %v7897 = vpop.permute.xlu0 %7896
        %7900 = vset.pattern.permute.xlu0 0
        %7901 = vperm.xlu0 %7900, %v6707
        %v7902 = vpop.permute.xlu0 %7901
        %7905 = vset.pattern.permute.xlu0 0
        %7906 = vperm.xlu0 %7905, %v6708
        %v7907 = vpop.permute.xlu0 %7906
        %7910 = vset.pattern.permute.xlu0 0
        %7911 = vperm.xlu0 %7910, %v6709
        %v7912 = vpop.permute.xlu0 %7911
        %7915 = vset.pattern.permute.xlu0 0
        %7916 = vperm.xlu0 %7915, %v6710
        %v7917 = vpop.permute.xlu0 %7916
        %7920 = vset.pattern.permute.xlu0 0
        %7921 = vperm.xlu0 %7920, %v6711
        %v7922 = vpop.permute.xlu0 %7921
        %7925 = vset.pattern.permute.xlu0 0
        %7926 = vperm.xlu0 %7925, %v6712
        %v7927 = vpop.permute.xlu0 %7926
        %7930 = vset.pattern.permute.xlu0 0
        %7931 = vperm.xlu0 %7930, %v6713
        %v7932 = vpop.permute.xlu0 %7931
        %7935 = vset.pattern.permute.xlu0 0
        %7936 = vperm.xlu0 %7935, %v6714
        %v7937 = vpop.permute.xlu0 %7936
        %7940 = vset.pattern.permute.xlu0 0
        %7941 = vperm.xlu0 %7940, %v6715
        %v7942 = vpop.permute.xlu0 %7941
        %7945 = vset.pattern.permute.xlu0 0
        %7946 = vperm.xlu0 %7945, %v6716
        %v7947 = vpop.permute.xlu0 %7946
        %7950 = vset.pattern.permute.xlu0 0
        %7951 = vperm.xlu0 %7950, %v6717
        %v7952 = vpop.permute.xlu0 %7951
        %7955 = vset.pattern.permute.xlu0 0
        %7956 = vperm.xlu0 %7955, %v6718
        %v7957 = vpop.permute.xlu0 %7956
        %7960 = vset.pattern.permute.xlu0 0
        %7961 = vperm.xlu0 %7960, %v6719
        %v7962 = vpop.permute.xlu0 %7961
        %7965 = vset.pattern.permute.xlu0 0
        %7966 = vperm.xlu0 %7965, %v6720
        %v7967 = vpop.permute.xlu0 %7966
        %7970 = vset.pattern.permute.xlu0 0
        %7971 = vperm.xlu0 %7970, %v6721
        %v7972 = vpop.permute.xlu0 %7971
        %7975 = vset.pattern.permute.xlu0 0
        %7976 = vperm.xlu0 %7975, %v6722
        %v7977 = vpop.permute.xlu0 %7976
        %7980 = vset.pattern.permute.xlu0 0
        %7981 = vperm.xlu0 %7980, %v6723
        %v7982 = vpop.permute.xlu0 %7981
        %7985 = vset.pattern.permute.xlu0 0
        %7986 = vperm.xlu0 %7985, %v6724
        %v7987 = vpop.permute.xlu0 %7986
        %7990 = vset.pattern.permute.xlu0 0
        %7991 = vperm.xlu0 %7990, %v6725
        %v7992 = vpop.permute.xlu0 %7991
        %7995 = vset.pattern.permute.xlu0 0
        %7996 = vperm.xlu0 %7995, %v6726
        %v7997 = vpop.permute.xlu0 %7996
        %8000 = vset.pattern.permute.xlu0 0
        %8001 = vperm.xlu0 %8000, %v6727
        %v8002 = vpop.permute.xlu0 %8001
        %8005 = vset.pattern.permute.xlu0 0
        %8006 = vperm.xlu0 %8005, %v6728
        %v8007 = vpop.permute.xlu0 %8006
        %v8009 = vmul.f32 %v5449, %v6732
        %v8010 = vmul.f32 %v5450, %v6732
        %v8011 = vmul.f32 %v5451, %v6732
        %v8012 = vmul.f32 %v5452, %v6732
        %v8013 = vmul.f32 %v5453, %v6737
        %v8014 = vmul.f32 %v5454, %v6737
        %v8015 = vmul.f32 %v5455, %v6737
        %v8016 = vmul.f32 %v5456, %v6737
        %v8017 = vmul.f32 %v5457, %v6742
        %v8018 = vmul.f32 %v5458, %v6742
        %v8019 = vmul.f32 %v5459, %v6742
        %v8020 = vmul.f32 %v5460, %v6742
        %v8021 = vmul.f32 %v5461, %v6747
        %v8022 = vmul.f32 %v5462, %v6747
        %v8023 = vmul.f32 %v5463, %v6747
        %v8024 = vmul.f32 %v5464, %v6747
        %v8025 = vmul.f32 %v5465, %v6752
        %v8026 = vmul.f32 %v5466, %v6752
        %v8027 = vmul.f32 %v5467, %v6752
        %v8028 = vmul.f32 %v5468, %v6752
        %v8029 = vmul.f32 %v5469, %v6757
        %v8030 = vmul.f32 %v5470, %v6757
        %v8031 = vmul.f32 %v5471, %v6757
        %v8032 = vmul.f32 %v5472, %v6757
        %v8033 = vmul.f32 %v5473, %v6762
        %v8034 = vmul.f32 %v5474, %v6762
        %v8035 = vmul.f32 %v5475, %v6762
        %v8036 = vmul.f32 %v5476, %v6762
        %v8037 = vmul.f32 %v5477, %v6767
        %v8038 = vmul.f32 %v5478, %v6767
        %v8039 = vmul.f32 %v5479, %v6767
        %v8040 = vmul.f32 %v5480, %v6767
        %v8041 = vmul.f32 %v5481, %v6772
        %v8042 = vmul.f32 %v5482, %v6772
        %v8043 = vmul.f32 %v5483, %v6772
        %v8044 = vmul.f32 %v5484, %v6772
        %v8045 = vmul.f32 %v5485, %v6777
        %v8046 = vmul.f32 %v5486, %v6777
        %v8047 = vmul.f32 %v5487, %v6777
        %v8048 = vmul.f32 %v5488, %v6777
        %v8049 = vmul.f32 %v5489, %v6782
        %v8050 = vmul.f32 %v5490, %v6782
        %v8051 = vmul.f32 %v5491, %v6782
        %v8052 = vmul.f32 %v5492, %v6782
        %v8053 = vmul.f32 %v5493, %v6787
        %v8054 = vmul.f32 %v5494, %v6787
        %v8055 = vmul.f32 %v5495, %v6787
        %v8056 = vmul.f32 %v5496, %v6787
        %v8057 = vmul.f32 %v5497, %v6792
        %v8058 = vmul.f32 %v5498, %v6792
        %v8059 = vmul.f32 %v5499, %v6792
        %v8060 = vmul.f32 %v5500, %v6792
        %v8061 = vmul.f32 %v5501, %v6797
        %v8062 = vmul.f32 %v5502, %v6797
        %v8063 = vmul.f32 %v5503, %v6797
        %v8064 = vmul.f32 %v5504, %v6797
        %v8065 = vmul.f32 %v5505, %v6802
        %v8066 = vmul.f32 %v5506, %v6802
        %v8067 = vmul.f32 %v5507, %v6802
        %v8068 = vmul.f32 %v5508, %v6802
        %v8069 = vmul.f32 %v5509, %v6807
        %v8070 = vmul.f32 %v5510, %v6807
        %v8071 = vmul.f32 %v5511, %v6807
        %v8072 = vmul.f32 %v5512, %v6807
        %v8073 = vmul.f32 %v5513, %v6812
        %v8074 = vmul.f32 %v5514, %v6812
        %v8075 = vmul.f32 %v5515, %v6812
        %v8076 = vmul.f32 %v5516, %v6812
        %v8077 = vmul.f32 %v5517, %v6817
        %v8078 = vmul.f32 %v5518, %v6817
        %v8079 = vmul.f32 %v5519, %v6817
        %v8080 = vmul.f32 %v5520, %v6817
        %v8081 = vmul.f32 %v5521, %v6822
        %v8082 = vmul.f32 %v5522, %v6822
        %v8083 = vmul.f32 %v5523, %v6822
        %v8084 = vmul.f32 %v5524, %v6822
        %v8085 = vmul.f32 %v5525, %v6827
        %v8086 = vmul.f32 %v5526, %v6827
        %v8087 = vmul.f32 %v5527, %v6827
        %v8088 = vmul.f32 %v5528, %v6827
        %v8089 = vmul.f32 %v5529, %v6832
        %v8090 = vmul.f32 %v5530, %v6832
        %v8091 = vmul.f32 %v5531, %v6832
        %v8092 = vmul.f32 %v5532, %v6832
        %v8093 = vmul.f32 %v5533, %v6837
        %v8094 = vmul.f32 %v5534, %v6837
        %v8095 = vmul.f32 %v5535, %v6837
        %v8096 = vmul.f32 %v5536, %v6837
        %v8097 = vmul.f32 %v5537, %v6842
        %v8098 = vmul.f32 %v5538, %v6842
        %v8099 = vmul.f32 %v5539, %v6842
        %v8100 = vmul.f32 %v5540, %v6842
        %v8101 = vmul.f32 %v5541, %v6847
        %v8102 = vmul.f32 %v5542, %v6847
        %v8103 = vmul.f32 %v5543, %v6847
        %v8104 = vmul.f32 %v5544, %v6847
        %v8105 = vmul.f32 %v5545, %v6852
        %v8106 = vmul.f32 %v5546, %v6852
        %v8107 = vmul.f32 %v5547, %v6852
        %v8108 = vmul.f32 %v5548, %v6852
        %v8109 = vmul.f32 %v5549, %v6857
        %v8110 = vmul.f32 %v5550, %v6857
        %v8111 = vmul.f32 %v5551, %v6857
        %v8112 = vmul.f32 %v5552, %v6857
        %v8113 = vmul.f32 %v5553, %v6862
        %v8114 = vmul.f32 %v5554, %v6862
        %v8115 = vmul.f32 %v5555, %v6862
        %v8116 = vmul.f32 %v5556, %v6862
        %v8117 = vmul.f32 %v5557, %v6867
        %v8118 = vmul.f32 %v5558, %v6867
        %v8119 = vmul.f32 %v5559, %v6867
        %v8120 = vmul.f32 %v5560, %v6867
        %v8121 = vmul.f32 %v5561, %v6872
        %v8122 = vmul.f32 %v5562, %v6872
        %v8123 = vmul.f32 %v5563, %v6872
        %v8124 = vmul.f32 %v5564, %v6872
        %v8125 = vmul.f32 %v5565, %v6877
        %v8126 = vmul.f32 %v5566, %v6877
        %v8127 = vmul.f32 %v5567, %v6877
        %v8128 = vmul.f32 %v5568, %v6877
        %v8129 = vmul.f32 %v5569, %v6882
        %v8130 = vmul.f32 %v5570, %v6882
        %v8131 = vmul.f32 %v5571, %v6882
        %v8132 = vmul.f32 %v5572, %v6882
        %v8133 = vmul.f32 %v5573, %v6887
        %v8134 = vmul.f32 %v5574, %v6887
        %v8135 = vmul.f32 %v5575, %v6887
        %v8136 = vmul.f32 %v5576, %v6887
        %v8137 = vmul.f32 %v5577, %v6892
        %v8138 = vmul.f32 %v5578, %v6892
        %v8139 = vmul.f32 %v5579, %v6892
        %v8140 = vmul.f32 %v5580, %v6892
        %v8141 = vmul.f32 %v5581, %v6897
        %v8142 = vmul.f32 %v5582, %v6897
        %v8143 = vmul.f32 %v5583, %v6897
        %v8144 = vmul.f32 %v5584, %v6897
        %v8145 = vmul.f32 %v5585, %v6902
        %v8146 = vmul.f32 %v5586, %v6902
        %v8147 = vmul.f32 %v5587, %v6902
        %v8148 = vmul.f32 %v5588, %v6902
        %v8149 = vmul.f32 %v5589, %v6907
        %v8150 = vmul.f32 %v5590, %v6907
        %v8151 = vmul.f32 %v5591, %v6907
        %v8152 = vmul.f32 %v5592, %v6907
        %v8153 = vmul.f32 %v5593, %v6912
        %v8154 = vmul.f32 %v5594, %v6912
        %v8155 = vmul.f32 %v5595, %v6912
        %v8156 = vmul.f32 %v5596, %v6912
        %v8157 = vmul.f32 %v5597, %v6917
        %v8158 = vmul.f32 %v5598, %v6917
        %v8159 = vmul.f32 %v5599, %v6917
        %v8160 = vmul.f32 %v5600, %v6917
        %v8161 = vmul.f32 %v5601, %v6922
        %v8162 = vmul.f32 %v5602, %v6922
        %v8163 = vmul.f32 %v5603, %v6922
        %v8164 = vmul.f32 %v5604, %v6922
        %v8165 = vmul.f32 %v5605, %v6927
        %v8166 = vmul.f32 %v5606, %v6927
        %v8167 = vmul.f32 %v5607, %v6927
        %v8168 = vmul.f32 %v5608, %v6927
        %v8169 = vmul.f32 %v5609, %v6932
        %v8170 = vmul.f32 %v5610, %v6932
        %v8171 = vmul.f32 %v5611, %v6932
        %v8172 = vmul.f32 %v5612, %v6932
        %v8173 = vmul.f32 %v5613, %v6937
        %v8174 = vmul.f32 %v5614, %v6937
        %v8175 = vmul.f32 %v5615, %v6937
        %v8176 = vmul.f32 %v5616, %v6937
        %v8177 = vmul.f32 %v5617, %v6942
        %v8178 = vmul.f32 %v5618, %v6942
        %v8179 = vmul.f32 %v5619, %v6942
        %v8180 = vmul.f32 %v5620, %v6942
        %v8181 = vmul.f32 %v5621, %v6947
        %v8182 = vmul.f32 %v5622, %v6947
        %v8183 = vmul.f32 %v5623, %v6947
        %v8184 = vmul.f32 %v5624, %v6947
        %v8185 = vmul.f32 %v5625, %v6952
        %v8186 = vmul.f32 %v5626, %v6952
        %v8187 = vmul.f32 %v5627, %v6952
        %v8188 = vmul.f32 %v5628, %v6952
        %v8189 = vmul.f32 %v5629, %v6957
        %v8190 = vmul.f32 %v5630, %v6957
        %v8191 = vmul.f32 %v5631, %v6957
        %v8192 = vmul.f32 %v5632, %v6957
        %v8193 = vmul.f32 %v5633, %v6962
        %v8194 = vmul.f32 %v5634, %v6962
        %v8195 = vmul.f32 %v5635, %v6962
        %v8196 = vmul.f32 %v5636, %v6962
        %v8197 = vmul.f32 %v5637, %v6967
        %v8198 = vmul.f32 %v5638, %v6967
        %v8199 = vmul.f32 %v5639, %v6967
        %v8200 = vmul.f32 %v5640, %v6967
        %v8201 = vmul.f32 %v5641, %v6972
        %v8202 = vmul.f32 %v5642, %v6972
        %v8203 = vmul.f32 %v5643, %v6972
        %v8204 = vmul.f32 %v5644, %v6972
        %v8205 = vmul.f32 %v5645, %v6977
        %v8206 = vmul.f32 %v5646, %v6977
        %v8207 = vmul.f32 %v5647, %v6977
        %v8208 = vmul.f32 %v5648, %v6977
        %v8209 = vmul.f32 %v5649, %v6982
        %v8210 = vmul.f32 %v5650, %v6982
        %v8211 = vmul.f32 %v5651, %v6982
        %v8212 = vmul.f32 %v5652, %v6982
        %v8213 = vmul.f32 %v5653, %v6987
        %v8214 = vmul.f32 %v5654, %v6987
        %v8215 = vmul.f32 %v5655, %v6987
        %v8216 = vmul.f32 %v5656, %v6987
        %v8217 = vmul.f32 %v5657, %v6992
        %v8218 = vmul.f32 %v5658, %v6992
        %v8219 = vmul.f32 %v5659, %v6992
        %v8220 = vmul.f32 %v5660, %v6992
        %v8221 = vmul.f32 %v5661, %v6997
        %v8222 = vmul.f32 %v5662, %v6997
        %v8223 = vmul.f32 %v5663, %v6997
        %v8224 = vmul.f32 %v5664, %v6997
        %v8225 = vmul.f32 %v5665, %v7002
        %v8226 = vmul.f32 %v5666, %v7002
        %v8227 = vmul.f32 %v5667, %v7002
        %v8228 = vmul.f32 %v5668, %v7002
        %v8229 = vmul.f32 %v5669, %v7007
        %v8230 = vmul.f32 %v5670, %v7007
        %v8231 = vmul.f32 %v5671, %v7007
        %v8232 = vmul.f32 %v5672, %v7007
        %v8233 = vmul.f32 %v5673, %v7012
        %v8234 = vmul.f32 %v5674, %v7012
        %v8235 = vmul.f32 %v5675, %v7012
        %v8236 = vmul.f32 %v5676, %v7012
        %v8237 = vmul.f32 %v5677, %v7017
        %v8238 = vmul.f32 %v5678, %v7017
        %v8239 = vmul.f32 %v5679, %v7017
        %v8240 = vmul.f32 %v5680, %v7017
        %v8241 = vmul.f32 %v5681, %v7022
        %v8242 = vmul.f32 %v5682, %v7022
        %v8243 = vmul.f32 %v5683, %v7022
        %v8244 = vmul.f32 %v5684, %v7022
        %v8245 = vmul.f32 %v5685, %v7027
        %v8246 = vmul.f32 %v5686, %v7027
        %v8247 = vmul.f32 %v5687, %v7027
        %v8248 = vmul.f32 %v5688, %v7027
        %v8249 = vmul.f32 %v5689, %v7032
        %v8250 = vmul.f32 %v5690, %v7032
        %v8251 = vmul.f32 %v5691, %v7032
        %v8252 = vmul.f32 %v5692, %v7032
        %v8253 = vmul.f32 %v5693, %v7037
        %v8254 = vmul.f32 %v5694, %v7037
        %v8255 = vmul.f32 %v5695, %v7037
        %v8256 = vmul.f32 %v5696, %v7037
        %v8257 = vmul.f32 %v5697, %v7042
        %v8258 = vmul.f32 %v5698, %v7042
        %v8259 = vmul.f32 %v5699, %v7042
        %v8260 = vmul.f32 %v5700, %v7042
        %v8261 = vmul.f32 %v5701, %v7047
        %v8262 = vmul.f32 %v5702, %v7047
        %v8263 = vmul.f32 %v5703, %v7047
        %v8264 = vmul.f32 %v5704, %v7047
        %v8265 = vmul.f32 %v5705, %v7052
        %v8266 = vmul.f32 %v5706, %v7052
        %v8267 = vmul.f32 %v5707, %v7052
        %v8268 = vmul.f32 %v5708, %v7052
        %v8269 = vmul.f32 %v5709, %v7057
        %v8270 = vmul.f32 %v5710, %v7057
        %v8271 = vmul.f32 %v5711, %v7057
        %v8272 = vmul.f32 %v5712, %v7057
        %v8273 = vmul.f32 %v5713, %v7062
        %v8274 = vmul.f32 %v5714, %v7062
        %v8275 = vmul.f32 %v5715, %v7062
        %v8276 = vmul.f32 %v5716, %v7062
        %v8277 = vmul.f32 %v5717, %v7067
        %v8278 = vmul.f32 %v5718, %v7067
        %v8279 = vmul.f32 %v5719, %v7067
        %v8280 = vmul.f32 %v5720, %v7067
        %v8281 = vmul.f32 %v5721, %v7072
        %v8282 = vmul.f32 %v5722, %v7072
        %v8283 = vmul.f32 %v5723, %v7072
        %v8284 = vmul.f32 %v5724, %v7072
        %v8285 = vmul.f32 %v5725, %v7077
        %v8286 = vmul.f32 %v5726, %v7077
        %v8287 = vmul.f32 %v5727, %v7077
        %v8288 = vmul.f32 %v5728, %v7077
        %v8289 = vmul.f32 %v5729, %v7082
        %v8290 = vmul.f32 %v5730, %v7082
        %v8291 = vmul.f32 %v5731, %v7082
        %v8292 = vmul.f32 %v5732, %v7082
        %v8293 = vmul.f32 %v5733, %v7087
        %v8294 = vmul.f32 %v5734, %v7087
        %v8295 = vmul.f32 %v5735, %v7087
        %v8296 = vmul.f32 %v5736, %v7087
        %v8297 = vmul.f32 %v5737, %v7092
        %v8298 = vmul.f32 %v5738, %v7092
        %v8299 = vmul.f32 %v5739, %v7092
        %v8300 = vmul.f32 %v5740, %v7092
        %v8301 = vmul.f32 %v5741, %v7097
        %v8302 = vmul.f32 %v5742, %v7097
        %v8303 = vmul.f32 %v5743, %v7097
        %v8304 = vmul.f32 %v5744, %v7097
        %v8305 = vmul.f32 %v5745, %v7102
        %v8306 = vmul.f32 %v5746, %v7102
        %v8307 = vmul.f32 %v5747, %v7102
        %v8308 = vmul.f32 %v5748, %v7102
        %v8309 = vmul.f32 %v5749, %v7107
        %v8310 = vmul.f32 %v5750, %v7107
        %v8311 = vmul.f32 %v5751, %v7107
        %v8312 = vmul.f32 %v5752, %v7107
        %v8313 = vmul.f32 %v5753, %v7112
        %v8314 = vmul.f32 %v5754, %v7112
        %v8315 = vmul.f32 %v5755, %v7112
        %v8316 = vmul.f32 %v5756, %v7112
        %v8317 = vmul.f32 %v5757, %v7117
        %v8318 = vmul.f32 %v5758, %v7117
        %v8319 = vmul.f32 %v5759, %v7117
        %v8320 = vmul.f32 %v5760, %v7117
        %v8321 = vmul.f32 %v5761, %v7122
        %v8322 = vmul.f32 %v5762, %v7122
        %v8323 = vmul.f32 %v5763, %v7122
        %v8324 = vmul.f32 %v5764, %v7122
        %v8325 = vmul.f32 %v5765, %v7127
        %v8326 = vmul.f32 %v5766, %v7127
        %v8327 = vmul.f32 %v5767, %v7127
        %v8328 = vmul.f32 %v5768, %v7127
        %v8329 = vmul.f32 %v5769, %v7132
        %v8330 = vmul.f32 %v5770, %v7132
        %v8331 = vmul.f32 %v5771, %v7132
        %v8332 = vmul.f32 %v5772, %v7132
        %v8333 = vmul.f32 %v5773, %v7137
        %v8334 = vmul.f32 %v5774, %v7137
        %v8335 = vmul.f32 %v5775, %v7137
        %v8336 = vmul.f32 %v5776, %v7137
        %v8337 = vmul.f32 %v5777, %v7142
        %v8338 = vmul.f32 %v5778, %v7142
        %v8339 = vmul.f32 %v5779, %v7142
        %v8340 = vmul.f32 %v5780, %v7142
        %v8341 = vmul.f32 %v5781, %v7147
        %v8342 = vmul.f32 %v5782, %v7147
        %v8343 = vmul.f32 %v5783, %v7147
        %v8344 = vmul.f32 %v5784, %v7147
        %v8345 = vmul.f32 %v5785, %v7152
        %v8346 = vmul.f32 %v5786, %v7152
        %v8347 = vmul.f32 %v5787, %v7152
        %v8348 = vmul.f32 %v5788, %v7152
        %v8349 = vmul.f32 %v5789, %v7157
        %v8350 = vmul.f32 %v5790, %v7157
        %v8351 = vmul.f32 %v5791, %v7157
        %v8352 = vmul.f32 %v5792, %v7157
        %v8353 = vmul.f32 %v5793, %v7162
        %v8354 = vmul.f32 %v5794, %v7162
        %v8355 = vmul.f32 %v5795, %v7162
        %v8356 = vmul.f32 %v5796, %v7162
        %v8357 = vmul.f32 %v5797, %v7167
        %v8358 = vmul.f32 %v5798, %v7167
        %v8359 = vmul.f32 %v5799, %v7167
        %v8360 = vmul.f32 %v5800, %v7167
        %v8361 = vmul.f32 %v5801, %v7172
        %v8362 = vmul.f32 %v5802, %v7172
        %v8363 = vmul.f32 %v5803, %v7172
        %v8364 = vmul.f32 %v5804, %v7172
        %v8365 = vmul.f32 %v5805, %v7177
        %v8366 = vmul.f32 %v5806, %v7177
        %v8367 = vmul.f32 %v5807, %v7177
        %v8368 = vmul.f32 %v5808, %v7177
        %v8369 = vmul.f32 %v5809, %v7182
        %v8370 = vmul.f32 %v5810, %v7182
        %v8371 = vmul.f32 %v5811, %v7182
        %v8372 = vmul.f32 %v5812, %v7182
        %v8373 = vmul.f32 %v5813, %v7187
        %v8374 = vmul.f32 %v5814, %v7187
        %v8375 = vmul.f32 %v5815, %v7187
        %v8376 = vmul.f32 %v5816, %v7187
        %v8377 = vmul.f32 %v5817, %v7192
        %v8378 = vmul.f32 %v5818, %v7192
        %v8379 = vmul.f32 %v5819, %v7192
        %v8380 = vmul.f32 %v5820, %v7192
        %v8381 = vmul.f32 %v5821, %v7197
        %v8382 = vmul.f32 %v5822, %v7197
        %v8383 = vmul.f32 %v5823, %v7197
        %v8384 = vmul.f32 %v5824, %v7197
        %v8385 = vmul.f32 %v5825, %v7202
        %v8386 = vmul.f32 %v5826, %v7202
        %v8387 = vmul.f32 %v5827, %v7202
        %v8388 = vmul.f32 %v5828, %v7202
        %v8389 = vmul.f32 %v5829, %v7207
        %v8390 = vmul.f32 %v5830, %v7207
        %v8391 = vmul.f32 %v5831, %v7207
        %v8392 = vmul.f32 %v5832, %v7207
        %v8393 = vmul.f32 %v5833, %v7212
        %v8394 = vmul.f32 %v5834, %v7212
        %v8395 = vmul.f32 %v5835, %v7212
        %v8396 = vmul.f32 %v5836, %v7212
        %v8397 = vmul.f32 %v5837, %v7217
        %v8398 = vmul.f32 %v5838, %v7217
        %v8399 = vmul.f32 %v5839, %v7217
        %v8400 = vmul.f32 %v5840, %v7217
        %v8401 = vmul.f32 %v5841, %v7222
        %v8402 = vmul.f32 %v5842, %v7222
        %v8403 = vmul.f32 %v5843, %v7222
        %v8404 = vmul.f32 %v5844, %v7222
        %v8405 = vmul.f32 %v5845, %v7227
        %v8406 = vmul.f32 %v5846, %v7227
        %v8407 = vmul.f32 %v5847, %v7227
        %v8408 = vmul.f32 %v5848, %v7227
        %v8409 = vmul.f32 %v5849, %v7232
        %v8410 = vmul.f32 %v5850, %v7232
        %v8411 = vmul.f32 %v5851, %v7232
        %v8412 = vmul.f32 %v5852, %v7232
        %v8413 = vmul.f32 %v5853, %v7237
        %v8414 = vmul.f32 %v5854, %v7237
        %v8415 = vmul.f32 %v5855, %v7237
        %v8416 = vmul.f32 %v5856, %v7237
        %v8417 = vmul.f32 %v5857, %v7242
        %v8418 = vmul.f32 %v5858, %v7242
        %v8419 = vmul.f32 %v5859, %v7242
        %v8420 = vmul.f32 %v5860, %v7242
        %v8421 = vmul.f32 %v5861, %v7247
        %v8422 = vmul.f32 %v5862, %v7247
        %v8423 = vmul.f32 %v5863, %v7247
        %v8424 = vmul.f32 %v5864, %v7247
        %v8425 = vmul.f32 %v5865, %v7252
        %v8426 = vmul.f32 %v5866, %v7252
        %v8427 = vmul.f32 %v5867, %v7252
        %v8428 = vmul.f32 %v5868, %v7252
        %v8429 = vmul.f32 %v5869, %v7257
        %v8430 = vmul.f32 %v5870, %v7257
        %v8431 = vmul.f32 %v5871, %v7257
        %v8432 = vmul.f32 %v5872, %v7257
        %v8433 = vmul.f32 %v5873, %v7262
        %v8434 = vmul.f32 %v5874, %v7262
        %v8435 = vmul.f32 %v5875, %v7262
        %v8436 = vmul.f32 %v5876, %v7262
        %v8437 = vmul.f32 %v5877, %v7267
        %v8438 = vmul.f32 %v5878, %v7267
        %v8439 = vmul.f32 %v5879, %v7267
        %v8440 = vmul.f32 %v5880, %v7267
        %v8441 = vmul.f32 %v5881, %v7272
        %v8442 = vmul.f32 %v5882, %v7272
        %v8443 = vmul.f32 %v5883, %v7272
        %v8444 = vmul.f32 %v5884, %v7272
        %v8445 = vmul.f32 %v5885, %v7277
        %v8446 = vmul.f32 %v5886, %v7277
        %v8447 = vmul.f32 %v5887, %v7277
        %v8448 = vmul.f32 %v5888, %v7277
        %v8449 = vmul.f32 %v5889, %v7282
        %v8450 = vmul.f32 %v5890, %v7282
        %v8451 = vmul.f32 %v5891, %v7282
        %v8452 = vmul.f32 %v5892, %v7282
        %v8453 = vmul.f32 %v5893, %v7287
        %v8454 = vmul.f32 %v5894, %v7287
        %v8455 = vmul.f32 %v5895, %v7287
        %v8456 = vmul.f32 %v5896, %v7287
        %v8457 = vmul.f32 %v5897, %v7292
        %v8458 = vmul.f32 %v5898, %v7292
        %v8459 = vmul.f32 %v5899, %v7292
        %v8460 = vmul.f32 %v5900, %v7292
        %v8461 = vmul.f32 %v5901, %v7297
        %v8462 = vmul.f32 %v5902, %v7297
        %v8463 = vmul.f32 %v5903, %v7297
        %v8464 = vmul.f32 %v5904, %v7297
        %v8465 = vmul.f32 %v5905, %v7302
        %v8466 = vmul.f32 %v5906, %v7302
        %v8467 = vmul.f32 %v5907, %v7302
        %v8468 = vmul.f32 %v5908, %v7302
        %v8469 = vmul.f32 %v5909, %v7307
        %v8470 = vmul.f32 %v5910, %v7307
        %v8471 = vmul.f32 %v5911, %v7307
        %v8472 = vmul.f32 %v5912, %v7307
        %v8473 = vmul.f32 %v5913, %v7312
        %v8474 = vmul.f32 %v5914, %v7312
        %v8475 = vmul.f32 %v5915, %v7312
        %v8476 = vmul.f32 %v5916, %v7312
        %v8477 = vmul.f32 %v5917, %v7317
        %v8478 = vmul.f32 %v5918, %v7317
        %v8479 = vmul.f32 %v5919, %v7317
        %v8480 = vmul.f32 %v5920, %v7317
        %v8481 = vmul.f32 %v5921, %v7322
        %v8482 = vmul.f32 %v5922, %v7322
        %v8483 = vmul.f32 %v5923, %v7322
        %v8484 = vmul.f32 %v5924, %v7322
        %v8485 = vmul.f32 %v5925, %v7327
        %v8486 = vmul.f32 %v5926, %v7327
        %v8487 = vmul.f32 %v5927, %v7327
        %v8488 = vmul.f32 %v5928, %v7327
        %v8489 = vmul.f32 %v5929, %v7332
        %v8490 = vmul.f32 %v5930, %v7332
        %v8491 = vmul.f32 %v5931, %v7332
        %v8492 = vmul.f32 %v5932, %v7332
        %v8493 = vmul.f32 %v5933, %v7337
        %v8494 = vmul.f32 %v5934, %v7337
        %v8495 = vmul.f32 %v5935, %v7337
        %v8496 = vmul.f32 %v5936, %v7337
        %v8497 = vmul.f32 %v5937, %v7342
        %v8498 = vmul.f32 %v5938, %v7342
        %v8499 = vmul.f32 %v5939, %v7342
        %v8500 = vmul.f32 %v5940, %v7342
        %v8501 = vmul.f32 %v5941, %v7347
        %v8502 = vmul.f32 %v5942, %v7347
        %v8503 = vmul.f32 %v5943, %v7347
        %v8504 = vmul.f32 %v5944, %v7347
        %v8505 = vmul.f32 %v5945, %v7352
        %v8506 = vmul.f32 %v5946, %v7352
        %v8507 = vmul.f32 %v5947, %v7352
        %v8508 = vmul.f32 %v5948, %v7352
        %v8509 = vmul.f32 %v5949, %v7357
        %v8510 = vmul.f32 %v5950, %v7357
        %v8511 = vmul.f32 %v5951, %v7357
        %v8512 = vmul.f32 %v5952, %v7357
        %v8513 = vmul.f32 %v5953, %v7362
        %v8514 = vmul.f32 %v5954, %v7362
        %v8515 = vmul.f32 %v5955, %v7362
        %v8516 = vmul.f32 %v5956, %v7362
        %v8517 = vmul.f32 %v5957, %v7367
        %v8518 = vmul.f32 %v5958, %v7367
        %v8519 = vmul.f32 %v5959, %v7367
        %v8520 = vmul.f32 %v5960, %v7367
        %v8521 = vmul.f32 %v5961, %v7372
        %v8522 = vmul.f32 %v5962, %v7372
        %v8523 = vmul.f32 %v5963, %v7372
        %v8524 = vmul.f32 %v5964, %v7372
        %v8525 = vmul.f32 %v5965, %v7377
        %v8526 = vmul.f32 %v5966, %v7377
        %v8527 = vmul.f32 %v5967, %v7377
        %v8528 = vmul.f32 %v5968, %v7377
        %v8529 = vmul.f32 %v5969, %v7382
        %v8530 = vmul.f32 %v5970, %v7382
        %v8531 = vmul.f32 %v5971, %v7382
        %v8532 = vmul.f32 %v5972, %v7382
        %v8533 = vmul.f32 %v5973, %v7387
        %v8534 = vmul.f32 %v5974, %v7387
        %v8535 = vmul.f32 %v5975, %v7387
        %v8536 = vmul.f32 %v5976, %v7387
        %v8537 = vmul.f32 %v5977, %v7392
        %v8538 = vmul.f32 %v5978, %v7392
        %v8539 = vmul.f32 %v5979, %v7392
        %v8540 = vmul.f32 %v5980, %v7392
        %v8541 = vmul.f32 %v5981, %v7397
        %v8542 = vmul.f32 %v5982, %v7397
        %v8543 = vmul.f32 %v5983, %v7397
        %v8544 = vmul.f32 %v5984, %v7397
        %v8545 = vmul.f32 %v5985, %v7402
        %v8546 = vmul.f32 %v5986, %v7402
        %v8547 = vmul.f32 %v5987, %v7402
        %v8548 = vmul.f32 %v5988, %v7402
        %v8549 = vmul.f32 %v5989, %v7407
        %v8550 = vmul.f32 %v5990, %v7407
        %v8551 = vmul.f32 %v5991, %v7407
        %v8552 = vmul.f32 %v5992, %v7407
        %v8553 = vmul.f32 %v5993, %v7412
        %v8554 = vmul.f32 %v5994, %v7412
        %v8555 = vmul.f32 %v5995, %v7412
        %v8556 = vmul.f32 %v5996, %v7412
        %v8557 = vmul.f32 %v5997, %v7417
        %v8558 = vmul.f32 %v5998, %v7417
        %v8559 = vmul.f32 %v5999, %v7417
        %v8560 = vmul.f32 %v6000, %v7417
        %v8561 = vmul.f32 %v6001, %v7422
        %v8562 = vmul.f32 %v6002, %v7422
        %v8563 = vmul.f32 %v6003, %v7422
        %v8564 = vmul.f32 %v6004, %v7422
        %v8565 = vmul.f32 %v6005, %v7427
        %v8566 = vmul.f32 %v6006, %v7427
        %v8567 = vmul.f32 %v6007, %v7427
        %v8568 = vmul.f32 %v6008, %v7427
        %v8569 = vmul.f32 %v6009, %v7432
        %v8570 = vmul.f32 %v6010, %v7432
        %v8571 = vmul.f32 %v6011, %v7432
        %v8572 = vmul.f32 %v6012, %v7432
        %v8573 = vmul.f32 %v6013, %v7437
        %v8574 = vmul.f32 %v6014, %v7437
        %v8575 = vmul.f32 %v6015, %v7437
        %v8576 = vmul.f32 %v6016, %v7437
        %v8577 = vmul.f32 %v6017, %v7442
        %v8578 = vmul.f32 %v6018, %v7442
        %v8579 = vmul.f32 %v6019, %v7442
        %v8580 = vmul.f32 %v6020, %v7442
        %v8581 = vmul.f32 %v6021, %v7447
        %v8582 = vmul.f32 %v6022, %v7447
        %v8583 = vmul.f32 %v6023, %v7447
        %v8584 = vmul.f32 %v6024, %v7447
        %v8585 = vmul.f32 %v6025, %v7452
        %v8586 = vmul.f32 %v6026, %v7452
        %v8587 = vmul.f32 %v6027, %v7452
        %v8588 = vmul.f32 %v6028, %v7452
        %v8589 = vmul.f32 %v6029, %v7457
        %v8590 = vmul.f32 %v6030, %v7457
        %v8591 = vmul.f32 %v6031, %v7457
        %v8592 = vmul.f32 %v6032, %v7457
        %v8593 = vmul.f32 %v6033, %v7462
        %v8594 = vmul.f32 %v6034, %v7462
        %v8595 = vmul.f32 %v6035, %v7462
        %v8596 = vmul.f32 %v6036, %v7462
        %v8597 = vmul.f32 %v6037, %v7467
        %v8598 = vmul.f32 %v6038, %v7467
        %v8599 = vmul.f32 %v6039, %v7467
        %v8600 = vmul.f32 %v6040, %v7467
        %v8601 = vmul.f32 %v6041, %v7472
        %v8602 = vmul.f32 %v6042, %v7472
        %v8603 = vmul.f32 %v6043, %v7472
        %v8604 = vmul.f32 %v6044, %v7472
        %v8605 = vmul.f32 %v6045, %v7477
        %v8606 = vmul.f32 %v6046, %v7477
        %v8607 = vmul.f32 %v6047, %v7477
        %v8608 = vmul.f32 %v6048, %v7477
        %v8609 = vmul.f32 %v6049, %v7482
        %v8610 = vmul.f32 %v6050, %v7482
        %v8611 = vmul.f32 %v6051, %v7482
        %v8612 = vmul.f32 %v6052, %v7482
        %v8613 = vmul.f32 %v6053, %v7487
        %v8614 = vmul.f32 %v6054, %v7487
        %v8615 = vmul.f32 %v6055, %v7487
        %v8616 = vmul.f32 %v6056, %v7487
        %v8617 = vmul.f32 %v6057, %v7492
        %v8618 = vmul.f32 %v6058, %v7492
        %v8619 = vmul.f32 %v6059, %v7492
        %v8620 = vmul.f32 %v6060, %v7492
        %v8621 = vmul.f32 %v6061, %v7497
        %v8622 = vmul.f32 %v6062, %v7497
        %v8623 = vmul.f32 %v6063, %v7497
        %v8624 = vmul.f32 %v6064, %v7497
        %v8625 = vmul.f32 %v6065, %v7502
        %v8626 = vmul.f32 %v6066, %v7502
        %v8627 = vmul.f32 %v6067, %v7502
        %v8628 = vmul.f32 %v6068, %v7502
        %v8629 = vmul.f32 %v6069, %v7507
        %v8630 = vmul.f32 %v6070, %v7507
        %v8631 = vmul.f32 %v6071, %v7507
        %v8632 = vmul.f32 %v6072, %v7507
        %v8633 = vmul.f32 %v6073, %v7512
        %v8634 = vmul.f32 %v6074, %v7512
        %v8635 = vmul.f32 %v6075, %v7512
        %v8636 = vmul.f32 %v6076, %v7512
        %v8637 = vmul.f32 %v6077, %v7517
        %v8638 = vmul.f32 %v6078, %v7517
        %v8639 = vmul.f32 %v6079, %v7517
        %v8640 = vmul.f32 %v6080, %v7517
        %v8641 = vmul.f32 %v6081, %v7522
        %v8642 = vmul.f32 %v6082, %v7522
        %v8643 = vmul.f32 %v6083, %v7522
        %v8644 = vmul.f32 %v6084, %v7522
        %v8645 = vmul.f32 %v6085, %v7527
        %v8646 = vmul.f32 %v6086, %v7527
        %v8647 = vmul.f32 %v6087, %v7527
        %v8648 = vmul.f32 %v6088, %v7527
        %v8649 = vmul.f32 %v6089, %v7532
        %v8650 = vmul.f32 %v6090, %v7532
        %v8651 = vmul.f32 %v6091, %v7532
        %v8652 = vmul.f32 %v6092, %v7532
        %v8653 = vmul.f32 %v6093, %v7537
        %v8654 = vmul.f32 %v6094, %v7537
        %v8655 = vmul.f32 %v6095, %v7537
        %v8656 = vmul.f32 %v6096, %v7537
        %v8657 = vmul.f32 %v6097, %v7542
        %v8658 = vmul.f32 %v6098, %v7542
        %v8659 = vmul.f32 %v6099, %v7542
        %v8660 = vmul.f32 %v6100, %v7542
        %v8661 = vmul.f32 %v6101, %v7547
        %v8662 = vmul.f32 %v6102, %v7547
        %v8663 = vmul.f32 %v6103, %v7547
        %v8664 = vmul.f32 %v6104, %v7547
        %v8665 = vmul.f32 %v6105, %v7552
        %v8666 = vmul.f32 %v6106, %v7552
        %v8667 = vmul.f32 %v6107, %v7552
        %v8668 = vmul.f32 %v6108, %v7552
        %v8669 = vmul.f32 %v6109, %v7557
        %v8670 = vmul.f32 %v6110, %v7557
        %v8671 = vmul.f32 %v6111, %v7557
        %v8672 = vmul.f32 %v6112, %v7557
        %v8673 = vmul.f32 %v6113, %v7562
        %v8674 = vmul.f32 %v6114, %v7562
        %v8675 = vmul.f32 %v6115, %v7562
        %v8676 = vmul.f32 %v6116, %v7562
        %v8677 = vmul.f32 %v6117, %v7567
        %v8678 = vmul.f32 %v6118, %v7567
        %v8679 = vmul.f32 %v6119, %v7567
        %v8680 = vmul.f32 %v6120, %v7567
        %v8681 = vmul.f32 %v6121, %v7572
        %v8682 = vmul.f32 %v6122, %v7572
        %v8683 = vmul.f32 %v6123, %v7572
        %v8684 = vmul.f32 %v6124, %v7572
        %v8685 = vmul.f32 %v6125, %v7577
        %v8686 = vmul.f32 %v6126, %v7577
        %v8687 = vmul.f32 %v6127, %v7577
        %v8688 = vmul.f32 %v6128, %v7577
        %v8689 = vmul.f32 %v6129, %v7582
        %v8690 = vmul.f32 %v6130, %v7582
        %v8691 = vmul.f32 %v6131, %v7582
        %v8692 = vmul.f32 %v6132, %v7582
        %v8693 = vmul.f32 %v6133, %v7587
        %v8694 = vmul.f32 %v6134, %v7587
        %v8695 = vmul.f32 %v6135, %v7587
        %v8696 = vmul.f32 %v6136, %v7587
        %v8697 = vmul.f32 %v6137, %v7592
        %v8698 = vmul.f32 %v6138, %v7592
        %v8699 = vmul.f32 %v6139, %v7592
        %v8700 = vmul.f32 %v6140, %v7592
        %v8701 = vmul.f32 %v6141, %v7597
        %v8702 = vmul.f32 %v6142, %v7597
        %v8703 = vmul.f32 %v6143, %v7597
        %v8704 = vmul.f32 %v6144, %v7597
        %v8705 = vmul.f32 %v6145, %v7602
        %v8706 = vmul.f32 %v6146, %v7602
        %v8707 = vmul.f32 %v6147, %v7602
        %v8708 = vmul.f32 %v6148, %v7602
        %v8709 = vmul.f32 %v6149, %v7607
        %v8710 = vmul.f32 %v6150, %v7607
        %v8711 = vmul.f32 %v6151, %v7607
        %v8712 = vmul.f32 %v6152, %v7607
        %v8713 = vmul.f32 %v6153, %v7612
        %v8714 = vmul.f32 %v6154, %v7612
        %v8715 = vmul.f32 %v6155, %v7612
        %v8716 = vmul.f32 %v6156, %v7612
        %v8717 = vmul.f32 %v6157, %v7617
        %v8718 = vmul.f32 %v6158, %v7617
        %v8719 = vmul.f32 %v6159, %v7617
        %v8720 = vmul.f32 %v6160, %v7617
        %v8721 = vmul.f32 %v6161, %v7622
        %v8722 = vmul.f32 %v6162, %v7622
        %v8723 = vmul.f32 %v6163, %v7622
        %v8724 = vmul.f32 %v6164, %v7622
        %v8725 = vmul.f32 %v6165, %v7627
        %v8726 = vmul.f32 %v6166, %v7627
        %v8727 = vmul.f32 %v6167, %v7627
        %v8728 = vmul.f32 %v6168, %v7627
        %v8729 = vmul.f32 %v6169, %v7632
        %v8730 = vmul.f32 %v6170, %v7632
        %v8731 = vmul.f32 %v6171, %v7632
        %v8732 = vmul.f32 %v6172, %v7632
        %v8733 = vmul.f32 %v6173, %v7637
        %v8734 = vmul.f32 %v6174, %v7637
        %v8735 = vmul.f32 %v6175, %v7637
        %v8736 = vmul.f32 %v6176, %v7637
        %v8737 = vmul.f32 %v6177, %v7642
        %v8738 = vmul.f32 %v6178, %v7642
        %v8739 = vmul.f32 %v6179, %v7642
        %v8740 = vmul.f32 %v6180, %v7642
        %v8741 = vmul.f32 %v6181, %v7647
        %v8742 = vmul.f32 %v6182, %v7647
        %v8743 = vmul.f32 %v6183, %v7647
        %v8744 = vmul.f32 %v6184, %v7647
        %v8745 = vmul.f32 %v6185, %v7652
        %v8746 = vmul.f32 %v6186, %v7652
        %v8747 = vmul.f32 %v6187, %v7652
        %v8748 = vmul.f32 %v6188, %v7652
        %v8749 = vmul.f32 %v6189, %v7657
        %v8750 = vmul.f32 %v6190, %v7657
        %v8751 = vmul.f32 %v6191, %v7657
        %v8752 = vmul.f32 %v6192, %v7657
        %v8753 = vmul.f32 %v6193, %v7662
        %v8754 = vmul.f32 %v6194, %v7662
        %v8755 = vmul.f32 %v6195, %v7662
        %v8756 = vmul.f32 %v6196, %v7662
        %v8757 = vmul.f32 %v6197, %v7667
        %v8758 = vmul.f32 %v6198, %v7667
        %v8759 = vmul.f32 %v6199, %v7667
        %v8760 = vmul.f32 %v6200, %v7667
        %v8761 = vmul.f32 %v6201, %v7672
        %v8762 = vmul.f32 %v6202, %v7672
        %v8763 = vmul.f32 %v6203, %v7672
        %v8764 = vmul.f32 %v6204, %v7672
        %v8765 = vmul.f32 %v6205, %v7677
        %v8766 = vmul.f32 %v6206, %v7677
        %v8767 = vmul.f32 %v6207, %v7677
        %v8768 = vmul.f32 %v6208, %v7677
        %v8769 = vmul.f32 %v6209, %v7682
        %v8770 = vmul.f32 %v6210, %v7682
        %v8771 = vmul.f32 %v6211, %v7682
        %v8772 = vmul.f32 %v6212, %v7682
        %v8773 = vmul.f32 %v6213, %v7687
        %v8774 = vmul.f32 %v6214, %v7687
        %v8775 = vmul.f32 %v6215, %v7687
        %v8776 = vmul.f32 %v6216, %v7687
        %v8777 = vmul.f32 %v6217, %v7692
        %v8778 = vmul.f32 %v6218, %v7692
        %v8779 = vmul.f32 %v6219, %v7692
        %v8780 = vmul.f32 %v6220, %v7692
        %v8781 = vmul.f32 %v6221, %v7697
        %v8782 = vmul.f32 %v6222, %v7697
        %v8783 = vmul.f32 %v6223, %v7697
        %v8784 = vmul.f32 %v6224, %v7697
        %v8785 = vmul.f32 %v6225, %v7702
        %v8786 = vmul.f32 %v6226, %v7702
        %v8787 = vmul.f32 %v6227, %v7702
        %v8788 = vmul.f32 %v6228, %v7702
        %v8789 = vmul.f32 %v6229, %v7707
        %v8790 = vmul.f32 %v6230, %v7707
        %v8791 = vmul.f32 %v6231, %v7707
        %v8792 = vmul.f32 %v6232, %v7707
        %v8793 = vmul.f32 %v6233, %v7712
        %v8794 = vmul.f32 %v6234, %v7712
        %v8795 = vmul.f32 %v6235, %v7712
        %v8796 = vmul.f32 %v6236, %v7712
        %v8797 = vmul.f32 %v6237, %v7717
        %v8798 = vmul.f32 %v6238, %v7717
        %v8799 = vmul.f32 %v6239, %v7717
        %v8800 = vmul.f32 %v6240, %v7717
        %v8801 = vmul.f32 %v6241, %v7722
        %v8802 = vmul.f32 %v6242, %v7722
        %v8803 = vmul.f32 %v6243, %v7722
        %v8804 = vmul.f32 %v6244, %v7722
        %v8805 = vmul.f32 %v6245, %v7727
        %v8806 = vmul.f32 %v6246, %v7727
        %v8807 = vmul.f32 %v6247, %v7727
        %v8808 = vmul.f32 %v6248, %v7727
        %v8809 = vmul.f32 %v6249, %v7732
        %v8810 = vmul.f32 %v6250, %v7732
        %v8811 = vmul.f32 %v6251, %v7732
        %v8812 = vmul.f32 %v6252, %v7732
        %v8813 = vmul.f32 %v6253, %v7737
        %v8814 = vmul.f32 %v6254, %v7737
        %v8815 = vmul.f32 %v6255, %v7737
        %v8816 = vmul.f32 %v6256, %v7737
        %v8817 = vmul.f32 %v6257, %v7742
        %v8818 = vmul.f32 %v6258, %v7742
        %v8819 = vmul.f32 %v6259, %v7742
        %v8820 = vmul.f32 %v6260, %v7742
        %v8821 = vmul.f32 %v6261, %v7747
        %v8822 = vmul.f32 %v6262, %v7747
        %v8823 = vmul.f32 %v6263, %v7747
        %v8824 = vmul.f32 %v6264, %v7747
        %v8825 = vmul.f32 %v6265, %v7752
        %v8826 = vmul.f32 %v6266, %v7752
        %v8827 = vmul.f32 %v6267, %v7752
        %v8828 = vmul.f32 %v6268, %v7752
        %v8829 = vmul.f32 %v6269, %v7757
        %v8830 = vmul.f32 %v6270, %v7757
        %v8831 = vmul.f32 %v6271, %v7757
        %v8832 = vmul.f32 %v6272, %v7757
        %v8833 = vmul.f32 %v6273, %v7762
        %v8834 = vmul.f32 %v6274, %v7762
        %v8835 = vmul.f32 %v6275, %v7762
        %v8836 = vmul.f32 %v6276, %v7762
        %v8837 = vmul.f32 %v6277, %v7767
        %v8838 = vmul.f32 %v6278, %v7767
        %v8839 = vmul.f32 %v6279, %v7767
        %v8840 = vmul.f32 %v6280, %v7767
        %v8841 = vmul.f32 %v6281, %v7772
        %v8842 = vmul.f32 %v6282, %v7772
        %v8843 = vmul.f32 %v6283, %v7772
        %v8844 = vmul.f32 %v6284, %v7772
        %v8845 = vmul.f32 %v6285, %v7777
        %v8846 = vmul.f32 %v6286, %v7777
        %v8847 = vmul.f32 %v6287, %v7777
        %v8848 = vmul.f32 %v6288, %v7777
        %v8849 = vmul.f32 %v6289, %v7782
        %v8850 = vmul.f32 %v6290, %v7782
        %v8851 = vmul.f32 %v6291, %v7782
        %v8852 = vmul.f32 %v6292, %v7782
        %v8853 = vmul.f32 %v6293, %v7787
        %v8854 = vmul.f32 %v6294, %v7787
        %v8855 = vmul.f32 %v6295, %v7787
        %v8856 = vmul.f32 %v6296, %v7787
        %v8857 = vmul.f32 %v6297, %v7792
        %v8858 = vmul.f32 %v6298, %v7792
        %v8859 = vmul.f32 %v6299, %v7792
        %v8860 = vmul.f32 %v6300, %v7792
        %v8861 = vmul.f32 %v6301, %v7797
        %v8862 = vmul.f32 %v6302, %v7797
        %v8863 = vmul.f32 %v6303, %v7797
        %v8864 = vmul.f32 %v6304, %v7797
        %v8865 = vmul.f32 %v6305, %v7802
        %v8866 = vmul.f32 %v6306, %v7802
        %v8867 = vmul.f32 %v6307, %v7802
        %v8868 = vmul.f32 %v6308, %v7802
        %v8869 = vmul.f32 %v6309, %v7807
        %v8870 = vmul.f32 %v6310, %v7807
        %v8871 = vmul.f32 %v6311, %v7807
        %v8872 = vmul.f32 %v6312, %v7807
        %v8873 = vmul.f32 %v6313, %v7812
        %v8874 = vmul.f32 %v6314, %v7812
        %v8875 = vmul.f32 %v6315, %v7812
        %v8876 = vmul.f32 %v6316, %v7812
        %v8877 = vmul.f32 %v6317, %v7817
        %v8878 = vmul.f32 %v6318, %v7817
        %v8879 = vmul.f32 %v6319, %v7817
        %v8880 = vmul.f32 %v6320, %v7817
        %v8881 = vmul.f32 %v6321, %v7822
        %v8882 = vmul.f32 %v6322, %v7822
        %v8883 = vmul.f32 %v6323, %v7822
        %v8884 = vmul.f32 %v6324, %v7822
        %v8885 = vmul.f32 %v6325, %v7827
        %v8886 = vmul.f32 %v6326, %v7827
        %v8887 = vmul.f32 %v6327, %v7827
        %v8888 = vmul.f32 %v6328, %v7827
        %v8889 = vmul.f32 %v6329, %v7832
        %v8890 = vmul.f32 %v6330, %v7832
        %v8891 = vmul.f32 %v6331, %v7832
        %v8892 = vmul.f32 %v6332, %v7832
        %v8893 = vmul.f32 %v6333, %v7837
        %v8894 = vmul.f32 %v6334, %v7837
        %v8895 = vmul.f32 %v6335, %v7837
        %v8896 = vmul.f32 %v6336, %v7837
        %v8897 = vmul.f32 %v6337, %v7842
        %v8898 = vmul.f32 %v6338, %v7842
        %v8899 = vmul.f32 %v6339, %v7842
        %v8900 = vmul.f32 %v6340, %v7842
        %v8901 = vmul.f32 %v6341, %v7847
        %v8902 = vmul.f32 %v6342, %v7847
        %v8903 = vmul.f32 %v6343, %v7847
        %v8904 = vmul.f32 %v6344, %v7847
        %v8905 = vmul.f32 %v6345, %v7852
        %v8906 = vmul.f32 %v6346, %v7852
        %v8907 = vmul.f32 %v6347, %v7852
        %v8908 = vmul.f32 %v6348, %v7852
        %v8909 = vmul.f32 %v6349, %v7857
        %v8910 = vmul.f32 %v6350, %v7857
        %v8911 = vmul.f32 %v6351, %v7857
        %v8912 = vmul.f32 %v6352, %v7857
        %v8913 = vmul.f32 %v6353, %v7862
        %v8914 = vmul.f32 %v6354, %v7862
        %v8915 = vmul.f32 %v6355, %v7862
        %v8916 = vmul.f32 %v6356, %v7862
        %v8917 = vmul.f32 %v6357, %v7867
        %v8918 = vmul.f32 %v6358, %v7867
        %v8919 = vmul.f32 %v6359, %v7867
        %v8920 = vmul.f32 %v6360, %v7867
        %v8921 = vmul.f32 %v6361, %v7872
        %v8922 = vmul.f32 %v6362, %v7872
        %v8923 = vmul.f32 %v6363, %v7872
        %v8924 = vmul.f32 %v6364, %v7872
        %v8925 = vmul.f32 %v6365, %v7877
        %v8926 = vmul.f32 %v6366, %v7877
        %v8927 = vmul.f32 %v6367, %v7877
        %v8928 = vmul.f32 %v6368, %v7877
        %v8929 = vmul.f32 %v6369, %v7882
        %v8930 = vmul.f32 %v6370, %v7882
        %v8931 = vmul.f32 %v6371, %v7882
        %v8932 = vmul.f32 %v6372, %v7882
        %v8933 = vmul.f32 %v6373, %v7887
        %v8934 = vmul.f32 %v6374, %v7887
        %v8935 = vmul.f32 %v6375, %v7887
        %v8936 = vmul.f32 %v6376, %v7887
        %v8937 = vmul.f32 %v6377, %v7892
        %v8938 = vmul.f32 %v6378, %v7892
        %v8939 = vmul.f32 %v6379, %v7892
        %v8940 = vmul.f32 %v6380, %v7892
        %v8941 = vmul.f32 %v6381, %v7897
        %v8942 = vmul.f32 %v6382, %v7897
        %v8943 = vmul.f32 %v6383, %v7897
        %v8944 = vmul.f32 %v6384, %v7897
        %v8945 = vmul.f32 %v6385, %v7902
        %v8946 = vmul.f32 %v6386, %v7902
        %v8947 = vmul.f32 %v6387, %v7902
        %v8948 = vmul.f32 %v6388, %v7902
        %v8949 = vmul.f32 %v6389, %v7907
        %v8950 = vmul.f32 %v6390, %v7907
        %v8951 = vmul.f32 %v6391, %v7907
        %v8952 = vmul.f32 %v6392, %v7907
        %v8953 = vmul.f32 %v6393, %v7912
        %v8954 = vmul.f32 %v6394, %v7912
        %v8955 = vmul.f32 %v6395, %v7912
        %v8956 = vmul.f32 %v6396, %v7912
        %v8957 = vmul.f32 %v6397, %v7917
        %v8958 = vmul.f32 %v6398, %v7917
        %v8959 = vmul.f32 %v6399, %v7917
        %v8960 = vmul.f32 %v6400, %v7917
        %v8961 = vmul.f32 %v6401, %v7922
        %v8962 = vmul.f32 %v6402, %v7922
        %v8963 = vmul.f32 %v6403, %v7922
        %v8964 = vmul.f32 %v6404, %v7922
        %v8965 = vmul.f32 %v6405, %v7927
        %v8966 = vmul.f32 %v6406, %v7927
        %v8967 = vmul.f32 %v6407, %v7927
        %v8968 = vmul.f32 %v6408, %v7927
        %v8969 = vmul.f32 %v6409, %v7932
        %v8970 = vmul.f32 %v6410, %v7932
        %v8971 = vmul.f32 %v6411, %v7932
        %v8972 = vmul.f32 %v6412, %v7932
        %v8973 = vmul.f32 %v6413, %v7937
        %v8974 = vmul.f32 %v6414, %v7937
        %v8975 = vmul.f32 %v6415, %v7937
        %v8976 = vmul.f32 %v6416, %v7937
        %v8977 = vmul.f32 %v6417, %v7942
        %v8978 = vmul.f32 %v6418, %v7942
        %v8979 = vmul.f32 %v6419, %v7942
        %v8980 = vmul.f32 %v6420, %v7942
        %v8981 = vmul.f32 %v6421, %v7947
        %v8982 = vmul.f32 %v6422, %v7947
        %v8983 = vmul.f32 %v6423, %v7947
        %v8984 = vmul.f32 %v6424, %v7947
        %v8985 = vmul.f32 %v6425, %v7952
        %v8986 = vmul.f32 %v6426, %v7952
        %v8987 = vmul.f32 %v6427, %v7952
        %v8988 = vmul.f32 %v6428, %v7952
        %v8989 = vmul.f32 %v6429, %v7957
        %v8990 = vmul.f32 %v6430, %v7957
        %v8991 = vmul.f32 %v6431, %v7957
        %v8992 = vmul.f32 %v6432, %v7957
        %v8993 = vmul.f32 %v6433, %v7962
        %v8994 = vmul.f32 %v6434, %v7962
        %v8995 = vmul.f32 %v6435, %v7962
        %v8996 = vmul.f32 %v6436, %v7962
        %v8997 = vmul.f32 %v6437, %v7967
        %v8998 = vmul.f32 %v6438, %v7967
        %v8999 = vmul.f32 %v6439, %v7967
        %v9000 = vmul.f32 %v6440, %v7967
        %v9001 = vmul.f32 %v6441, %v7972
        %v9002 = vmul.f32 %v6442, %v7972
        %v9003 = vmul.f32 %v6443, %v7972
        %v9004 = vmul.f32 %v6444, %v7972
        %v9005 = vmul.f32 %v6445, %v7977
        %v9006 = vmul.f32 %v6446, %v7977
        %v9007 = vmul.f32 %v6447, %v7977
        %v9008 = vmul.f32 %v6448, %v7977
        %v9009 = vmul.f32 %v6449, %v7982
        %v9010 = vmul.f32 %v6450, %v7982
        %v9011 = vmul.f32 %v6451, %v7982
        %v9012 = vmul.f32 %v6452, %v7982
        %v9013 = vmul.f32 %v6453, %v7987
        %v9014 = vmul.f32 %v6454, %v7987
        %v9015 = vmul.f32 %v6455, %v7987
        %v9016 = vmul.f32 %v6456, %v7987
        %v9017 = vmul.f32 %v6457, %v7992
        %v9018 = vmul.f32 %v6458, %v7992
        %v9019 = vmul.f32 %v6459, %v7992
        %v9020 = vmul.f32 %v6460, %v7992
        %v9021 = vmul.f32 %v6461, %v7997
        %v9022 = vmul.f32 %v6462, %v7997
        %v9023 = vmul.f32 %v6463, %v7997
        %v9024 = vmul.f32 %v6464, %v7997
        %v9025 = vmul.f32 %v6465, %v8002
        %v9026 = vmul.f32 %v6466, %v8002
        %v9027 = vmul.f32 %v6467, %v8002
        %v9028 = vmul.f32 %v6468, %v8002
        %v9029 = vmul.f32 %v6469, %v8007
        %v9030 = vmul.f32 %v6470, %v8007
        %v9031 = vmul.f32 %v6471, %v8007
        %v9032 = vmul.f32 %v6472, %v8007
        %v9033 = vadd.f32 %v8009, %v8013
        %v9034 = vadd.f32 %v9033, %v8017
        %v9035 = vadd.f32 %v9034, %v8021
        %v9036 = vadd.f32 %v9035, %v8025
        %v9037 = vadd.f32 %v9036, %v8029
        %v9038 = vadd.f32 %v9037, %v8033
        %v9039 = vadd.f32 %v9038, %v8037
        %v9040 = vadd.f32 %v9039, %v8041
        %v9041 = vadd.f32 %v9040, %v8045
        %v9042 = vadd.f32 %v9041, %v8049
        %v9043 = vadd.f32 %v9042, %v8053
        %v9044 = vadd.f32 %v9043, %v8057
        %v9045 = vadd.f32 %v9044, %v8061
        %v9046 = vadd.f32 %v9045, %v8065
        %v9047 = vadd.f32 %v9046, %v8069
        %v9048 = vrot.slane %v9047, 4
        %v9049 = vadd.f32 %v9047, %v9048
        %v9050 = vrot.slane %v9049, 2
        %v9051 = vadd.f32 %v9049, %v9050
        %v9052 = vrot.slane %v9051, 1
        %v9053 = vadd.f32 %v9051, %v9052
        %v9054 = vadd.f32 %v8010, %v8014
        %v9055 = vadd.f32 %v9054, %v8018
        %v9056 = vadd.f32 %v9055, %v8022
        %v9057 = vadd.f32 %v9056, %v8026
        %v9058 = vadd.f32 %v9057, %v8030
        %v9059 = vadd.f32 %v9058, %v8034
        %v9060 = vadd.f32 %v9059, %v8038
        %v9061 = vadd.f32 %v9060, %v8042
        %v9062 = vadd.f32 %v9061, %v8046
        %v9063 = vadd.f32 %v9062, %v8050
        %v9064 = vadd.f32 %v9063, %v8054
        %v9065 = vadd.f32 %v9064, %v8058
        %v9066 = vadd.f32 %v9065, %v8062
        %v9067 = vadd.f32 %v9066, %v8066
        %v9068 = vadd.f32 %v9067, %v8070
        %v9069 = vrot.slane %v9068, 4
        %v9070 = vadd.f32 %v9068, %v9069
        %v9071 = vrot.slane %v9070, 2
        %v9072 = vadd.f32 %v9070, %v9071
        %v9073 = vrot.slane %v9072, 1
        %v9074 = vadd.f32 %v9072, %v9073
        %v9075 = vadd.f32 %v8011, %v8015
        %v9076 = vadd.f32 %v9075, %v8019
        %v9077 = vadd.f32 %v9076, %v8023
        %v9078 = vadd.f32 %v9077, %v8027
        %v9079 = vadd.f32 %v9078, %v8031
        %v9080 = vadd.f32 %v9079, %v8035
        %v9081 = vadd.f32 %v9080, %v8039
        %v9082 = vadd.f32 %v9081, %v8043
        %v9083 = vadd.f32 %v9082, %v8047
        %v9084 = vadd.f32 %v9083, %v8051
        %v9085 = vadd.f32 %v9084, %v8055
        %v9086 = vadd.f32 %v9085, %v8059
        %v9087 = vadd.f32 %v9086, %v8063
        %v9088 = vadd.f32 %v9087, %v8067
        %v9089 = vadd.f32 %v9088, %v8071
        %v9090 = vrot.slane %v9089, 4
        %v9091 = vadd.f32 %v9089, %v9090
        %v9092 = vrot.slane %v9091, 2
        %v9093 = vadd.f32 %v9091, %v9092
        %v9094 = vrot.slane %v9093, 1
        %v9095 = vadd.f32 %v9093, %v9094
        %v9096 = vadd.f32 %v8012, %v8016
        %v9097 = vadd.f32 %v9096, %v8020
        %v9098 = vadd.f32 %v9097, %v8024
        %v9099 = vadd.f32 %v9098, %v8028
        %v9100 = vadd.f32 %v9099, %v8032
        %v9101 = vadd.f32 %v9100, %v8036
        %v9102 = vadd.f32 %v9101, %v8040
        %v9103 = vadd.f32 %v9102, %v8044
        %v9104 = vadd.f32 %v9103, %v8048
        %v9105 = vadd.f32 %v9104, %v8052
        %v9106 = vadd.f32 %v9105, %v8056
        %v9107 = vadd.f32 %v9106, %v8060
        %v9108 = vadd.f32 %v9107, %v8064
        %v9109 = vadd.f32 %v9108, %v8068
        %v9110 = vadd.f32 %v9109, %v8072
        %v9111 = vrot.slane %v9110, 4
        %v9112 = vadd.f32 %v9110, %v9111
        %v9113 = vrot.slane %v9112, 2
        %v9114 = vadd.f32 %v9112, %v9113
        %v9115 = vrot.slane %v9114, 1
        %v9116 = vadd.f32 %v9114, %v9115
        %v9117 = vadd.f32 %v8073, %v8077
        %v9118 = vadd.f32 %v9117, %v8081
        %v9119 = vadd.f32 %v9118, %v8085
        %v9120 = vadd.f32 %v9119, %v8089
        %v9121 = vadd.f32 %v9120, %v8093
        %v9122 = vadd.f32 %v9121, %v8097
        %v9123 = vadd.f32 %v9122, %v8101
        %v9124 = vadd.f32 %v9123, %v8105
        %v9125 = vadd.f32 %v9124, %v8109
        %v9126 = vadd.f32 %v9125, %v8113
        %v9127 = vadd.f32 %v9126, %v8117
        %v9128 = vadd.f32 %v9127, %v8121
        %v9129 = vadd.f32 %v9128, %v8125
        %v9130 = vadd.f32 %v9129, %v8129
        %v9131 = vadd.f32 %v9130, %v8133
        %v9132 = vrot.slane %v9131, 4
        %v9133 = vadd.f32 %v9131, %v9132
        %v9134 = vrot.slane %v9133, 2
        %v9135 = vadd.f32 %v9133, %v9134
        %v9136 = vrot.slane %v9135, 1
        %v9137 = vadd.f32 %v9135, %v9136
        %v9138 = vadd.f32 %v8074, %v8078
        %v9139 = vadd.f32 %v9138, %v8082
        %v9140 = vadd.f32 %v9139, %v8086
        %v9141 = vadd.f32 %v9140, %v8090
        %v9142 = vadd.f32 %v9141, %v8094
        %v9143 = vadd.f32 %v9142, %v8098
        %v9144 = vadd.f32 %v9143, %v8102
        %v9145 = vadd.f32 %v9144, %v8106
        %v9146 = vadd.f32 %v9145, %v8110
        %v9147 = vadd.f32 %v9146, %v8114
        %v9148 = vadd.f32 %v9147, %v8118
        %v9149 = vadd.f32 %v9148, %v8122
        %v9150 = vadd.f32 %v9149, %v8126
        %v9151 = vadd.f32 %v9150, %v8130
        %v9152 = vadd.f32 %v9151, %v8134
        %v9153 = vrot.slane %v9152, 4
        %v9154 = vadd.f32 %v9152, %v9153
        %v9155 = vrot.slane %v9154, 2
        %v9156 = vadd.f32 %v9154, %v9155
        %v9157 = vrot.slane %v9156, 1
        %v9158 = vadd.f32 %v9156, %v9157
        %v9159 = vadd.f32 %v8075, %v8079
        %v9160 = vadd.f32 %v9159, %v8083
        %v9161 = vadd.f32 %v9160, %v8087
        %v9162 = vadd.f32 %v9161, %v8091
        %v9163 = vadd.f32 %v9162, %v8095
        %v9164 = vadd.f32 %v9163, %v8099
        %v9165 = vadd.f32 %v9164, %v8103
        %v9166 = vadd.f32 %v9165, %v8107
        %v9167 = vadd.f32 %v9166, %v8111
        %v9168 = vadd.f32 %v9167, %v8115
        %v9169 = vadd.f32 %v9168, %v8119
        %v9170 = vadd.f32 %v9169, %v8123
        %v9171 = vadd.f32 %v9170, %v8127
        %v9172 = vadd.f32 %v9171, %v8131
        %v9173 = vadd.f32 %v9172, %v8135
        %v9174 = vrot.slane %v9173, 4
        %v9175 = vadd.f32 %v9173, %v9174
        %v9176 = vrot.slane %v9175, 2
        %v9177 = vadd.f32 %v9175, %v9176
        %v9178 = vrot.slane %v9177, 1
        %v9179 = vadd.f32 %v9177, %v9178
        %v9180 = vadd.f32 %v8076, %v8080
        %v9181 = vadd.f32 %v9180, %v8084
        %v9182 = vadd.f32 %v9181, %v8088
        %v9183 = vadd.f32 %v9182, %v8092
        %v9184 = vadd.f32 %v9183, %v8096
        %v9185 = vadd.f32 %v9184, %v8100
        %v9186 = vadd.f32 %v9185, %v8104
        %v9187 = vadd.f32 %v9186, %v8108
        %v9188 = vadd.f32 %v9187, %v8112
        %v9189 = vadd.f32 %v9188, %v8116
        %v9190 = vadd.f32 %v9189, %v8120
        %v9191 = vadd.f32 %v9190, %v8124
        %v9192 = vadd.f32 %v9191, %v8128
        %v9193 = vadd.f32 %v9192, %v8132
        %v9194 = vadd.f32 %v9193, %v8136
        %v9195 = vrot.slane %v9194, 4
        %v9196 = vadd.f32 %v9194, %v9195
        %v9197 = vrot.slane %v9196, 2
        %v9198 = vadd.f32 %v9196, %v9197
        %v9199 = vrot.slane %v9198, 1
        %v9200 = vadd.f32 %v9198, %v9199
        %v9201 = vadd.f32 %v8137, %v8141
        %v9202 = vadd.f32 %v9201, %v8145
        %v9203 = vadd.f32 %v9202, %v8149
        %v9204 = vadd.f32 %v9203, %v8153
        %v9205 = vadd.f32 %v9204, %v8157
        %v9206 = vadd.f32 %v9205, %v8161
        %v9207 = vadd.f32 %v9206, %v8165
        %v9208 = vadd.f32 %v9207, %v8169
        %v9209 = vadd.f32 %v9208, %v8173
        %v9210 = vadd.f32 %v9209, %v8177
        %v9211 = vadd.f32 %v9210, %v8181
        %v9212 = vadd.f32 %v9211, %v8185
        %v9213 = vadd.f32 %v9212, %v8189
        %v9214 = vadd.f32 %v9213, %v8193
        %v9215 = vadd.f32 %v9214, %v8197
        %v9216 = vrot.slane %v9215, 4
        %v9217 = vadd.f32 %v9215, %v9216
        %v9218 = vrot.slane %v9217, 2
        %v9219 = vadd.f32 %v9217, %v9218
        %v9220 = vrot.slane %v9219, 1
        %v9221 = vadd.f32 %v9219, %v9220
        %v9222 = vadd.f32 %v8138, %v8142
        %v9223 = vadd.f32 %v9222, %v8146
        %v9224 = vadd.f32 %v9223, %v8150
        %v9225 = vadd.f32 %v9224, %v8154
        %v9226 = vadd.f32 %v9225, %v8158
        %v9227 = vadd.f32 %v9226, %v8162
        %v9228 = vadd.f32 %v9227, %v8166
        %v9229 = vadd.f32 %v9228, %v8170
        %v9230 = vadd.f32 %v9229, %v8174
        %v9231 = vadd.f32 %v9230, %v8178
        %v9232 = vadd.f32 %v9231, %v8182
        %v9233 = vadd.f32 %v9232, %v8186
        %v9234 = vadd.f32 %v9233, %v8190
        %v9235 = vadd.f32 %v9234, %v8194
        %v9236 = vadd.f32 %v9235, %v8198
        %v9237 = vrot.slane %v9236, 4
        %v9238 = vadd.f32 %v9236, %v9237
        %v9239 = vrot.slane %v9238, 2
        %v9240 = vadd.f32 %v9238, %v9239
        %v9241 = vrot.slane %v9240, 1
        %v9242 = vadd.f32 %v9240, %v9241
        %v9243 = vadd.f32 %v8139, %v8143
        %v9244 = vadd.f32 %v9243, %v8147
        %v9245 = vadd.f32 %v9244, %v8151
        %v9246 = vadd.f32 %v9245, %v8155
        %v9247 = vadd.f32 %v9246, %v8159
        %v9248 = vadd.f32 %v9247, %v8163
        %v9249 = vadd.f32 %v9248, %v8167
        %v9250 = vadd.f32 %v9249, %v8171
        %v9251 = vadd.f32 %v9250, %v8175
        %v9252 = vadd.f32 %v9251, %v8179
        %v9253 = vadd.f32 %v9252, %v8183
        %v9254 = vadd.f32 %v9253, %v8187
        %v9255 = vadd.f32 %v9254, %v8191
        %v9256 = vadd.f32 %v9255, %v8195
        %v9257 = vadd.f32 %v9256, %v8199
        %v9258 = vrot.slane %v9257, 4
        %v9259 = vadd.f32 %v9257, %v9258
        %v9260 = vrot.slane %v9259, 2
        %v9261 = vadd.f32 %v9259, %v9260
        %v9262 = vrot.slane %v9261, 1
        %v9263 = vadd.f32 %v9261, %v9262
        %v9264 = vadd.f32 %v8140, %v8144
        %v9265 = vadd.f32 %v9264, %v8148
        %v9266 = vadd.f32 %v9265, %v8152
        %v9267 = vadd.f32 %v9266, %v8156
        %v9268 = vadd.f32 %v9267, %v8160
        %v9269 = vadd.f32 %v9268, %v8164
        %v9270 = vadd.f32 %v9269, %v8168
        %v9271 = vadd.f32 %v9270, %v8172
        %v9272 = vadd.f32 %v9271, %v8176
        %v9273 = vadd.f32 %v9272, %v8180
        %v9274 = vadd.f32 %v9273, %v8184
        %v9275 = vadd.f32 %v9274, %v8188
        %v9276 = vadd.f32 %v9275, %v8192
        %v9277 = vadd.f32 %v9276, %v8196
        %v9278 = vadd.f32 %v9277, %v8200
        %v9279 = vrot.slane %v9278, 4
        %v9280 = vadd.f32 %v9278, %v9279
        %v9281 = vrot.slane %v9280, 2
        %v9282 = vadd.f32 %v9280, %v9281
        %v9283 = vrot.slane %v9282, 1
        %v9284 = vadd.f32 %v9282, %v9283
        %v9285 = vadd.f32 %v8201, %v8205
        %v9286 = vadd.f32 %v9285, %v8209
        %v9287 = vadd.f32 %v9286, %v8213
        %v9288 = vadd.f32 %v9287, %v8217
        %v9289 = vadd.f32 %v9288, %v8221
        %v9290 = vadd.f32 %v9289, %v8225
        %v9291 = vadd.f32 %v9290, %v8229
        %v9292 = vadd.f32 %v9291, %v8233
        %v9293 = vadd.f32 %v9292, %v8237
        %v9294 = vadd.f32 %v9293, %v8241
        %v9295 = vadd.f32 %v9294, %v8245
        %v9296 = vadd.f32 %v9295, %v8249
        %v9297 = vadd.f32 %v9296, %v8253
        %v9298 = vadd.f32 %v9297, %v8257
        %v9299 = vadd.f32 %v9298, %v8261
        %v9300 = vrot.slane %v9299, 4
        %v9301 = vadd.f32 %v9299, %v9300
        %v9302 = vrot.slane %v9301, 2
        %v9303 = vadd.f32 %v9301, %v9302
        %v9304 = vrot.slane %v9303, 1
        %v9305 = vadd.f32 %v9303, %v9304
        %v9306 = vadd.f32 %v8202, %v8206
        %v9307 = vadd.f32 %v9306, %v8210
        %v9308 = vadd.f32 %v9307, %v8214
        %v9309 = vadd.f32 %v9308, %v8218
        %v9310 = vadd.f32 %v9309, %v8222
        %v9311 = vadd.f32 %v9310, %v8226
        %v9312 = vadd.f32 %v9311, %v8230
        %v9313 = vadd.f32 %v9312, %v8234
        %v9314 = vadd.f32 %v9313, %v8238
        %v9315 = vadd.f32 %v9314, %v8242
        %v9316 = vadd.f32 %v9315, %v8246
        %v9317 = vadd.f32 %v9316, %v8250
        %v9318 = vadd.f32 %v9317, %v8254
        %v9319 = vadd.f32 %v9318, %v8258
        %v9320 = vadd.f32 %v9319, %v8262
        %v9321 = vrot.slane %v9320, 4
        %v9322 = vadd.f32 %v9320, %v9321
        %v9323 = vrot.slane %v9322, 2
        %v9324 = vadd.f32 %v9322, %v9323
        %v9325 = vrot.slane %v9324, 1
        %v9326 = vadd.f32 %v9324, %v9325
        %v9327 = vadd.f32 %v8203, %v8207
        %v9328 = vadd.f32 %v9327, %v8211
        %v9329 = vadd.f32 %v9328, %v8215
        %v9330 = vadd.f32 %v9329, %v8219
        %v9331 = vadd.f32 %v9330, %v8223
        %v9332 = vadd.f32 %v9331, %v8227
        %v9333 = vadd.f32 %v9332, %v8231
        %v9334 = vadd.f32 %v9333, %v8235
        %v9335 = vadd.f32 %v9334, %v8239
        %v9336 = vadd.f32 %v9335, %v8243
        %v9337 = vadd.f32 %v9336, %v8247
        %v9338 = vadd.f32 %v9337, %v8251
        %v9339 = vadd.f32 %v9338, %v8255
        %v9340 = vadd.f32 %v9339, %v8259
        %v9341 = vadd.f32 %v9340, %v8263
        %v9342 = vrot.slane %v9341, 4
        %v9343 = vadd.f32 %v9341, %v9342
        %v9344 = vrot.slane %v9343, 2
        %v9345 = vadd.f32 %v9343, %v9344
        %v9346 = vrot.slane %v9345, 1
        %v9347 = vadd.f32 %v9345, %v9346
        %v9348 = vadd.f32 %v8204, %v8208
        %v9349 = vadd.f32 %v9348, %v8212
        %v9350 = vadd.f32 %v9349, %v8216
        %v9351 = vadd.f32 %v9350, %v8220
        %v9352 = vadd.f32 %v9351, %v8224
        %v9353 = vadd.f32 %v9352, %v8228
        %v9354 = vadd.f32 %v9353, %v8232
        %v9355 = vadd.f32 %v9354, %v8236
        %v9356 = vadd.f32 %v9355, %v8240
        %v9357 = vadd.f32 %v9356, %v8244
        %v9358 = vadd.f32 %v9357, %v8248
        %v9359 = vadd.f32 %v9358, %v8252
        %v9360 = vadd.f32 %v9359, %v8256
        %v9361 = vadd.f32 %v9360, %v8260
        %v9362 = vadd.f32 %v9361, %v8264
        %v9363 = vrot.slane %v9362, 4
        %v9364 = vadd.f32 %v9362, %v9363
        %v9365 = vrot.slane %v9364, 2
        %v9366 = vadd.f32 %v9364, %v9365
        %v9367 = vrot.slane %v9366, 1
        %v9368 = vadd.f32 %v9366, %v9367
        %v9369 = vadd.f32 %v8265, %v8269
        %v9370 = vadd.f32 %v9369, %v8273
        %v9371 = vadd.f32 %v9370, %v8277
        %v9372 = vadd.f32 %v9371, %v8281
        %v9373 = vadd.f32 %v9372, %v8285
        %v9374 = vadd.f32 %v9373, %v8289
        %v9375 = vadd.f32 %v9374, %v8293
        %v9376 = vadd.f32 %v9375, %v8297
        %v9377 = vadd.f32 %v9376, %v8301
        %v9378 = vadd.f32 %v9377, %v8305
        %v9379 = vadd.f32 %v9378, %v8309
        %v9380 = vadd.f32 %v9379, %v8313
        %v9381 = vadd.f32 %v9380, %v8317
        %v9382 = vadd.f32 %v9381, %v8321
        %v9383 = vadd.f32 %v9382, %v8325
        %v9384 = vrot.slane %v9383, 4
        %v9385 = vadd.f32 %v9383, %v9384
        %v9386 = vrot.slane %v9385, 2
        %v9387 = vadd.f32 %v9385, %v9386
        %v9388 = vrot.slane %v9387, 1
        %v9389 = vadd.f32 %v9387, %v9388
        %v9390 = vadd.f32 %v8266, %v8270
        %v9391 = vadd.f32 %v9390, %v8274
        %v9392 = vadd.f32 %v9391, %v8278
        %v9393 = vadd.f32 %v9392, %v8282
        %v9394 = vadd.f32 %v9393, %v8286
        %v9395 = vadd.f32 %v9394, %v8290
        %v9396 = vadd.f32 %v9395, %v8294
        %v9397 = vadd.f32 %v9396, %v8298
        %v9398 = vadd.f32 %v9397, %v8302
        %v9399 = vadd.f32 %v9398, %v8306
        %v9400 = vadd.f32 %v9399, %v8310
        %v9401 = vadd.f32 %v9400, %v8314
        %v9402 = vadd.f32 %v9401, %v8318
        %v9403 = vadd.f32 %v9402, %v8322
        %v9404 = vadd.f32 %v9403, %v8326
        %v9405 = vrot.slane %v9404, 4
        %v9406 = vadd.f32 %v9404, %v9405
        %v9407 = vrot.slane %v9406, 2
        %v9408 = vadd.f32 %v9406, %v9407
        %v9409 = vrot.slane %v9408, 1
        %v9410 = vadd.f32 %v9408, %v9409
        %v9411 = vadd.f32 %v8267, %v8271
        %v9412 = vadd.f32 %v9411, %v8275
        %v9413 = vadd.f32 %v9412, %v8279
        %v9414 = vadd.f32 %v9413, %v8283
        %v9415 = vadd.f32 %v9414, %v8287
        %v9416 = vadd.f32 %v9415, %v8291
        %v9417 = vadd.f32 %v9416, %v8295
        %v9418 = vadd.f32 %v9417, %v8299
        %v9419 = vadd.f32 %v9418, %v8303
        %v9420 = vadd.f32 %v9419, %v8307
        %v9421 = vadd.f32 %v9420, %v8311
        %v9422 = vadd.f32 %v9421, %v8315
        %v9423 = vadd.f32 %v9422, %v8319
        %v9424 = vadd.f32 %v9423, %v8323
        %v9425 = vadd.f32 %v9424, %v8327
        %v9426 = vrot.slane %v9425, 4
        %v9427 = vadd.f32 %v9425, %v9426
        %v9428 = vrot.slane %v9427, 2
        %v9429 = vadd.f32 %v9427, %v9428
        %v9430 = vrot.slane %v9429, 1
        %v9431 = vadd.f32 %v9429, %v9430
        %v9432 = vadd.f32 %v8268, %v8272
        %v9433 = vadd.f32 %v9432, %v8276
        %v9434 = vadd.f32 %v9433, %v8280
        %v9435 = vadd.f32 %v9434, %v8284
        %v9436 = vadd.f32 %v9435, %v8288
        %v9437 = vadd.f32 %v9436, %v8292
        %v9438 = vadd.f32 %v9437, %v8296
        %v9439 = vadd.f32 %v9438, %v8300
        %v9440 = vadd.f32 %v9439, %v8304
        %v9441 = vadd.f32 %v9440, %v8308
        %v9442 = vadd.f32 %v9441, %v8312
        %v9443 = vadd.f32 %v9442, %v8316
        %v9444 = vadd.f32 %v9443, %v8320
        %v9445 = vadd.f32 %v9444, %v8324
        %v9446 = vadd.f32 %v9445, %v8328
        %v9447 = vrot.slane %v9446, 4
        %v9448 = vadd.f32 %v9446, %v9447
        %v9449 = vrot.slane %v9448, 2
        %v9450 = vadd.f32 %v9448, %v9449
        %v9451 = vrot.slane %v9450, 1
        %v9452 = vadd.f32 %v9450, %v9451
        %v9453 = vadd.f32 %v8329, %v8333
        %v9454 = vadd.f32 %v9453, %v8337
        %v9455 = vadd.f32 %v9454, %v8341
        %v9456 = vadd.f32 %v9455, %v8345
        %v9457 = vadd.f32 %v9456, %v8349
        %v9458 = vadd.f32 %v9457, %v8353
        %v9459 = vadd.f32 %v9458, %v8357
        %v9460 = vadd.f32 %v9459, %v8361
        %v9461 = vadd.f32 %v9460, %v8365
        %v9462 = vadd.f32 %v9461, %v8369
        %v9463 = vadd.f32 %v9462, %v8373
        %v9464 = vadd.f32 %v9463, %v8377
        %v9465 = vadd.f32 %v9464, %v8381
        %v9466 = vadd.f32 %v9465, %v8385
        %v9467 = vadd.f32 %v9466, %v8389
        %v9468 = vrot.slane %v9467, 4
        %v9469 = vadd.f32 %v9467, %v9468
        %v9470 = vrot.slane %v9469, 2
        %v9471 = vadd.f32 %v9469, %v9470
        %v9472 = vrot.slane %v9471, 1
        %v9473 = vadd.f32 %v9471, %v9472
        %v9474 = vadd.f32 %v8330, %v8334
        %v9475 = vadd.f32 %v9474, %v8338
        %v9476 = vadd.f32 %v9475, %v8342
        %v9477 = vadd.f32 %v9476, %v8346
        %v9478 = vadd.f32 %v9477, %v8350
        %v9479 = vadd.f32 %v9478, %v8354
        %v9480 = vadd.f32 %v9479, %v8358
        %v9481 = vadd.f32 %v9480, %v8362
        %v9482 = vadd.f32 %v9481, %v8366
        %v9483 = vadd.f32 %v9482, %v8370
        %v9484 = vadd.f32 %v9483, %v8374
        %v9485 = vadd.f32 %v9484, %v8378
        %v9486 = vadd.f32 %v9485, %v8382
        %v9487 = vadd.f32 %v9486, %v8386
        %v9488 = vadd.f32 %v9487, %v8390
        %v9489 = vrot.slane %v9488, 4
        %v9490 = vadd.f32 %v9488, %v9489
        %v9491 = vrot.slane %v9490, 2
        %v9492 = vadd.f32 %v9490, %v9491
        %v9493 = vrot.slane %v9492, 1
        %v9494 = vadd.f32 %v9492, %v9493
        %v9495 = vadd.f32 %v8331, %v8335
        %v9496 = vadd.f32 %v9495, %v8339
        %v9497 = vadd.f32 %v9496, %v8343
        %v9498 = vadd.f32 %v9497, %v8347
        %v9499 = vadd.f32 %v9498, %v8351
        %v9500 = vadd.f32 %v9499, %v8355
        %v9501 = vadd.f32 %v9500, %v8359
        %v9502 = vadd.f32 %v9501, %v8363
        %v9503 = vadd.f32 %v9502, %v8367
        %v9504 = vadd.f32 %v9503, %v8371
        %v9505 = vadd.f32 %v9504, %v8375
        %v9506 = vadd.f32 %v9505, %v8379
        %v9507 = vadd.f32 %v9506, %v8383
        %v9508 = vadd.f32 %v9507, %v8387
        %v9509 = vadd.f32 %v9508, %v8391
        %v9510 = vrot.slane %v9509, 4
        %v9511 = vadd.f32 %v9509, %v9510
        %v9512 = vrot.slane %v9511, 2
        %v9513 = vadd.f32 %v9511, %v9512
        %v9514 = vrot.slane %v9513, 1
        %v9515 = vadd.f32 %v9513, %v9514
        %v9516 = vadd.f32 %v8332, %v8336
        %v9517 = vadd.f32 %v9516, %v8340
        %v9518 = vadd.f32 %v9517, %v8344
        %v9519 = vadd.f32 %v9518, %v8348
        %v9520 = vadd.f32 %v9519, %v8352
        %v9521 = vadd.f32 %v9520, %v8356
        %v9522 = vadd.f32 %v9521, %v8360
        %v9523 = vadd.f32 %v9522, %v8364
        %v9524 = vadd.f32 %v9523, %v8368
        %v9525 = vadd.f32 %v9524, %v8372
        %v9526 = vadd.f32 %v9525, %v8376
        %v9527 = vadd.f32 %v9526, %v8380
        %v9528 = vadd.f32 %v9527, %v8384
        %v9529 = vadd.f32 %v9528, %v8388
        %v9530 = vadd.f32 %v9529, %v8392
        %v9531 = vrot.slane %v9530, 4
        %v9532 = vadd.f32 %v9530, %v9531
        %v9533 = vrot.slane %v9532, 2
        %v9534 = vadd.f32 %v9532, %v9533
        %v9535 = vrot.slane %v9534, 1
        %v9536 = vadd.f32 %v9534, %v9535
        %v9537 = vadd.f32 %v8393, %v8397
        %v9538 = vadd.f32 %v9537, %v8401
        %v9539 = vadd.f32 %v9538, %v8405
        %v9540 = vadd.f32 %v9539, %v8409
        %v9541 = vadd.f32 %v9540, %v8413
        %v9542 = vadd.f32 %v9541, %v8417
        %v9543 = vadd.f32 %v9542, %v8421
        %v9544 = vadd.f32 %v9543, %v8425
        %v9545 = vadd.f32 %v9544, %v8429
        %v9546 = vadd.f32 %v9545, %v8433
        %v9547 = vadd.f32 %v9546, %v8437
        %v9548 = vadd.f32 %v9547, %v8441
        %v9549 = vadd.f32 %v9548, %v8445
        %v9550 = vadd.f32 %v9549, %v8449
        %v9551 = vadd.f32 %v9550, %v8453
        %v9552 = vrot.slane %v9551, 4
        %v9553 = vadd.f32 %v9551, %v9552
        %v9554 = vrot.slane %v9553, 2
        %v9555 = vadd.f32 %v9553, %v9554
        %v9556 = vrot.slane %v9555, 1
        %v9557 = vadd.f32 %v9555, %v9556
        %v9558 = vadd.f32 %v8394, %v8398
        %v9559 = vadd.f32 %v9558, %v8402
        %v9560 = vadd.f32 %v9559, %v8406
        %v9561 = vadd.f32 %v9560, %v8410
        %v9562 = vadd.f32 %v9561, %v8414
        %v9563 = vadd.f32 %v9562, %v8418
        %v9564 = vadd.f32 %v9563, %v8422
        %v9565 = vadd.f32 %v9564, %v8426
        %v9566 = vadd.f32 %v9565, %v8430
        %v9567 = vadd.f32 %v9566, %v8434
        %v9568 = vadd.f32 %v9567, %v8438
        %v9569 = vadd.f32 %v9568, %v8442
        %v9570 = vadd.f32 %v9569, %v8446
        %v9571 = vadd.f32 %v9570, %v8450
        %v9572 = vadd.f32 %v9571, %v8454
        %v9573 = vrot.slane %v9572, 4
        %v9574 = vadd.f32 %v9572, %v9573
        %v9575 = vrot.slane %v9574, 2
        %v9576 = vadd.f32 %v9574, %v9575
        %v9577 = vrot.slane %v9576, 1
        %v9578 = vadd.f32 %v9576, %v9577
        %v9579 = vadd.f32 %v8395, %v8399
        %v9580 = vadd.f32 %v9579, %v8403
        %v9581 = vadd.f32 %v9580, %v8407
        %v9582 = vadd.f32 %v9581, %v8411
        %v9583 = vadd.f32 %v9582, %v8415
        %v9584 = vadd.f32 %v9583, %v8419
        %v9585 = vadd.f32 %v9584, %v8423
        %v9586 = vadd.f32 %v9585, %v8427
        %v9587 = vadd.f32 %v9586, %v8431
        %v9588 = vadd.f32 %v9587, %v8435
        %v9589 = vadd.f32 %v9588, %v8439
        %v9590 = vadd.f32 %v9589, %v8443
        %v9591 = vadd.f32 %v9590, %v8447
        %v9592 = vadd.f32 %v9591, %v8451
        %v9593 = vadd.f32 %v9592, %v8455
        %v9594 = vrot.slane %v9593, 4
        %v9595 = vadd.f32 %v9593, %v9594
        %v9596 = vrot.slane %v9595, 2
        %v9597 = vadd.f32 %v9595, %v9596
        %v9598 = vrot.slane %v9597, 1
        %v9599 = vadd.f32 %v9597, %v9598
        %v9600 = vadd.f32 %v8396, %v8400
        %v9601 = vadd.f32 %v9600, %v8404
        %v9602 = vadd.f32 %v9601, %v8408
        %v9603 = vadd.f32 %v9602, %v8412
        %v9604 = vadd.f32 %v9603, %v8416
        %v9605 = vadd.f32 %v9604, %v8420
        %v9606 = vadd.f32 %v9605, %v8424
        %v9607 = vadd.f32 %v9606, %v8428
        %v9608 = vadd.f32 %v9607, %v8432
        %v9609 = vadd.f32 %v9608, %v8436
        %v9610 = vadd.f32 %v9609, %v8440
        %v9611 = vadd.f32 %v9610, %v8444
        %v9612 = vadd.f32 %v9611, %v8448
        %v9613 = vadd.f32 %v9612, %v8452
        %v9614 = vadd.f32 %v9613, %v8456
        %v9615 = vrot.slane %v9614, 4
        %v9616 = vadd.f32 %v9614, %v9615
        %v9617 = vrot.slane %v9616, 2
        %v9618 = vadd.f32 %v9616, %v9617
        %v9619 = vrot.slane %v9618, 1
        %v9620 = vadd.f32 %v9618, %v9619
        %v9621 = vadd.f32 %v8457, %v8461
        %v9622 = vadd.f32 %v9621, %v8465
        %v9623 = vadd.f32 %v9622, %v8469
        %v9624 = vadd.f32 %v9623, %v8473
        %v9625 = vadd.f32 %v9624, %v8477
        %v9626 = vadd.f32 %v9625, %v8481
        %v9627 = vadd.f32 %v9626, %v8485
        %v9628 = vadd.f32 %v9627, %v8489
        %v9629 = vadd.f32 %v9628, %v8493
        %v9630 = vadd.f32 %v9629, %v8497
        %v9631 = vadd.f32 %v9630, %v8501
        %v9632 = vadd.f32 %v9631, %v8505
        %v9633 = vadd.f32 %v9632, %v8509
        %v9634 = vadd.f32 %v9633, %v8513
        %v9635 = vadd.f32 %v9634, %v8517
        %v9636 = vrot.slane %v9635, 4
        %v9637 = vadd.f32 %v9635, %v9636
        %v9638 = vrot.slane %v9637, 2
        %v9639 = vadd.f32 %v9637, %v9638
        %v9640 = vrot.slane %v9639, 1
        %v9641 = vadd.f32 %v9639, %v9640
        %v9642 = vadd.f32 %v8458, %v8462
        %v9643 = vadd.f32 %v9642, %v8466
        %v9644 = vadd.f32 %v9643, %v8470
        %v9645 = vadd.f32 %v9644, %v8474
        %v9646 = vadd.f32 %v9645, %v8478
        %v9647 = vadd.f32 %v9646, %v8482
        %v9648 = vadd.f32 %v9647, %v8486
        %v9649 = vadd.f32 %v9648, %v8490
        %v9650 = vadd.f32 %v9649, %v8494
        %v9651 = vadd.f32 %v9650, %v8498
        %v9652 = vadd.f32 %v9651, %v8502
        %v9653 = vadd.f32 %v9652, %v8506
        %v9654 = vadd.f32 %v9653, %v8510
        %v9655 = vadd.f32 %v9654, %v8514
        %v9656 = vadd.f32 %v9655, %v8518
        %v9657 = vrot.slane %v9656, 4
        %v9658 = vadd.f32 %v9656, %v9657
        %v9659 = vrot.slane %v9658, 2
        %v9660 = vadd.f32 %v9658, %v9659
        %v9661 = vrot.slane %v9660, 1
        %v9662 = vadd.f32 %v9660, %v9661
        %v9663 = vadd.f32 %v8459, %v8463
        %v9664 = vadd.f32 %v9663, %v8467
        %v9665 = vadd.f32 %v9664, %v8471
        %v9666 = vadd.f32 %v9665, %v8475
        %v9667 = vadd.f32 %v9666, %v8479
        %v9668 = vadd.f32 %v9667, %v8483
        %v9669 = vadd.f32 %v9668, %v8487
        %v9670 = vadd.f32 %v9669, %v8491
        %v9671 = vadd.f32 %v9670, %v8495
        %v9672 = vadd.f32 %v9671, %v8499
        %v9673 = vadd.f32 %v9672, %v8503
        %v9674 = vadd.f32 %v9673, %v8507
        %v9675 = vadd.f32 %v9674, %v8511
        %v9676 = vadd.f32 %v9675, %v8515
        %v9677 = vadd.f32 %v9676, %v8519
        %v9678 = vrot.slane %v9677, 4
        %v9679 = vadd.f32 %v9677, %v9678
        %v9680 = vrot.slane %v9679, 2
        %v9681 = vadd.f32 %v9679, %v9680
        %v9682 = vrot.slane %v9681, 1
        %v9683 = vadd.f32 %v9681, %v9682
        %v9684 = vadd.f32 %v8460, %v8464
        %v9685 = vadd.f32 %v9684, %v8468
        %v9686 = vadd.f32 %v9685, %v8472
        %v9687 = vadd.f32 %v9686, %v8476
        %v9688 = vadd.f32 %v9687, %v8480
        %v9689 = vadd.f32 %v9688, %v8484
        %v9690 = vadd.f32 %v9689, %v8488
        %v9691 = vadd.f32 %v9690, %v8492
        %v9692 = vadd.f32 %v9691, %v8496
        %v9693 = vadd.f32 %v9692, %v8500
        %v9694 = vadd.f32 %v9693, %v8504
        %v9695 = vadd.f32 %v9694, %v8508
        %v9696 = vadd.f32 %v9695, %v8512
        %v9697 = vadd.f32 %v9696, %v8516
        %v9698 = vadd.f32 %v9697, %v8520
        %v9699 = vrot.slane %v9698, 4
        %v9700 = vadd.f32 %v9698, %v9699
        %v9701 = vrot.slane %v9700, 2
        %v9702 = vadd.f32 %v9700, %v9701
        %v9703 = vrot.slane %v9702, 1
        %v9704 = vadd.f32 %v9702, %v9703
        %v9705 = vadd.f32 %v8521, %v8525
        %v9706 = vadd.f32 %v9705, %v8529
        %v9707 = vadd.f32 %v9706, %v8533
        %v9708 = vadd.f32 %v9707, %v8537
        %v9709 = vadd.f32 %v9708, %v8541
        %v9710 = vadd.f32 %v9709, %v8545
        %v9711 = vadd.f32 %v9710, %v8549
        %v9712 = vadd.f32 %v9711, %v8553
        %v9713 = vadd.f32 %v9712, %v8557
        %v9714 = vadd.f32 %v9713, %v8561
        %v9715 = vadd.f32 %v9714, %v8565
        %v9716 = vadd.f32 %v9715, %v8569
        %v9717 = vadd.f32 %v9716, %v8573
        %v9718 = vadd.f32 %v9717, %v8577
        %v9719 = vadd.f32 %v9718, %v8581
        %v9720 = vrot.slane %v9719, 4
        %v9721 = vadd.f32 %v9719, %v9720
        %v9722 = vrot.slane %v9721, 2
        %v9723 = vadd.f32 %v9721, %v9722
        %v9724 = vrot.slane %v9723, 1
        %v9725 = vadd.f32 %v9723, %v9724
        %v9726 = vadd.f32 %v8522, %v8526
        %v9727 = vadd.f32 %v9726, %v8530
        %v9728 = vadd.f32 %v9727, %v8534
        %v9729 = vadd.f32 %v9728, %v8538
        %v9730 = vadd.f32 %v9729, %v8542
        %v9731 = vadd.f32 %v9730, %v8546
        %v9732 = vadd.f32 %v9731, %v8550
        %v9733 = vadd.f32 %v9732, %v8554
        %v9734 = vadd.f32 %v9733, %v8558
        %v9735 = vadd.f32 %v9734, %v8562
        %v9736 = vadd.f32 %v9735, %v8566
        %v9737 = vadd.f32 %v9736, %v8570
        %v9738 = vadd.f32 %v9737, %v8574
        %v9739 = vadd.f32 %v9738, %v8578
        %v9740 = vadd.f32 %v9739, %v8582
        %v9741 = vrot.slane %v9740, 4
        %v9742 = vadd.f32 %v9740, %v9741
        %v9743 = vrot.slane %v9742, 2
        %v9744 = vadd.f32 %v9742, %v9743
        %v9745 = vrot.slane %v9744, 1
        %v9746 = vadd.f32 %v9744, %v9745
        %v9747 = vadd.f32 %v8523, %v8527
        %v9748 = vadd.f32 %v9747, %v8531
        %v9749 = vadd.f32 %v9748, %v8535
        %v9750 = vadd.f32 %v9749, %v8539
        %v9751 = vadd.f32 %v9750, %v8543
        %v9752 = vadd.f32 %v9751, %v8547
        %v9753 = vadd.f32 %v9752, %v8551
        %v9754 = vadd.f32 %v9753, %v8555
        %v9755 = vadd.f32 %v9754, %v8559
        %v9756 = vadd.f32 %v9755, %v8563
        %v9757 = vadd.f32 %v9756, %v8567
        %v9758 = vadd.f32 %v9757, %v8571
        %v9759 = vadd.f32 %v9758, %v8575
        %v9760 = vadd.f32 %v9759, %v8579
        %v9761 = vadd.f32 %v9760, %v8583
        %v9762 = vrot.slane %v9761, 4
        %v9763 = vadd.f32 %v9761, %v9762
        %v9764 = vrot.slane %v9763, 2
        %v9765 = vadd.f32 %v9763, %v9764
        %v9766 = vrot.slane %v9765, 1
        %v9767 = vadd.f32 %v9765, %v9766
        %v9768 = vadd.f32 %v8524, %v8528
        %v9769 = vadd.f32 %v9768, %v8532
        %v9770 = vadd.f32 %v9769, %v8536
        %v9771 = vadd.f32 %v9770, %v8540
        %v9772 = vadd.f32 %v9771, %v8544
        %v9773 = vadd.f32 %v9772, %v8548
        %v9774 = vadd.f32 %v9773, %v8552
        %v9775 = vadd.f32 %v9774, %v8556
        %v9776 = vadd.f32 %v9775, %v8560
        %v9777 = vadd.f32 %v9776, %v8564
        %v9778 = vadd.f32 %v9777, %v8568
        %v9779 = vadd.f32 %v9778, %v8572
        %v9780 = vadd.f32 %v9779, %v8576
        %v9781 = vadd.f32 %v9780, %v8580
        %v9782 = vadd.f32 %v9781, %v8584
        %v9783 = vrot.slane %v9782, 4
        %v9784 = vadd.f32 %v9782, %v9783
        %v9785 = vrot.slane %v9784, 2
        %v9786 = vadd.f32 %v9784, %v9785
        %v9787 = vrot.slane %v9786, 1
        %v9788 = vadd.f32 %v9786, %v9787
        %v9789 = vadd.f32 %v8585, %v8589
        %v9790 = vadd.f32 %v9789, %v8593
        %v9791 = vadd.f32 %v9790, %v8597
        %v9792 = vadd.f32 %v9791, %v8601
        %v9793 = vadd.f32 %v9792, %v8605
        %v9794 = vadd.f32 %v9793, %v8609
        %v9795 = vadd.f32 %v9794, %v8613
        %v9796 = vadd.f32 %v9795, %v8617
        %v9797 = vadd.f32 %v9796, %v8621
        %v9798 = vadd.f32 %v9797, %v8625
        %v9799 = vadd.f32 %v9798, %v8629
        %v9800 = vadd.f32 %v9799, %v8633
        %v9801 = vadd.f32 %v9800, %v8637
        %v9802 = vadd.f32 %v9801, %v8641
        %v9803 = vadd.f32 %v9802, %v8645
        %v9804 = vrot.slane %v9803, 4
        %v9805 = vadd.f32 %v9803, %v9804
        %v9806 = vrot.slane %v9805, 2
        %v9807 = vadd.f32 %v9805, %v9806
        %v9808 = vrot.slane %v9807, 1
        %v9809 = vadd.f32 %v9807, %v9808
        %v9810 = vadd.f32 %v8586, %v8590
        %v9811 = vadd.f32 %v9810, %v8594
        %v9812 = vadd.f32 %v9811, %v8598
        %v9813 = vadd.f32 %v9812, %v8602
        %v9814 = vadd.f32 %v9813, %v8606
        %v9815 = vadd.f32 %v9814, %v8610
        %v9816 = vadd.f32 %v9815, %v8614
        %v9817 = vadd.f32 %v9816, %v8618
        %v9818 = vadd.f32 %v9817, %v8622
        %v9819 = vadd.f32 %v9818, %v8626
        %v9820 = vadd.f32 %v9819, %v8630
        %v9821 = vadd.f32 %v9820, %v8634
        %v9822 = vadd.f32 %v9821, %v8638
        %v9823 = vadd.f32 %v9822, %v8642
        %v9824 = vadd.f32 %v9823, %v8646
        %v9825 = vrot.slane %v9824, 4
        %v9826 = vadd.f32 %v9824, %v9825
        %v9827 = vrot.slane %v9826, 2
        %v9828 = vadd.f32 %v9826, %v9827
        %v9829 = vrot.slane %v9828, 1
        %v9830 = vadd.f32 %v9828, %v9829
        %v9831 = vadd.f32 %v8587, %v8591
        %v9832 = vadd.f32 %v9831, %v8595
        %v9833 = vadd.f32 %v9832, %v8599
        %v9834 = vadd.f32 %v9833, %v8603
        %v9835 = vadd.f32 %v9834, %v8607
        %v9836 = vadd.f32 %v9835, %v8611
        %v9837 = vadd.f32 %v9836, %v8615
        %v9838 = vadd.f32 %v9837, %v8619
        %v9839 = vadd.f32 %v9838, %v8623
        %v9840 = vadd.f32 %v9839, %v8627
        %v9841 = vadd.f32 %v9840, %v8631
        %v9842 = vadd.f32 %v9841, %v8635
        %v9843 = vadd.f32 %v9842, %v8639
        %v9844 = vadd.f32 %v9843, %v8643
        %v9845 = vadd.f32 %v9844, %v8647
        %v9846 = vrot.slane %v9845, 4
        %v9847 = vadd.f32 %v9845, %v9846
        %v9848 = vrot.slane %v9847, 2
        %v9849 = vadd.f32 %v9847, %v9848
        %v9850 = vrot.slane %v9849, 1
        %v9851 = vadd.f32 %v9849, %v9850
        %v9852 = vadd.f32 %v8588, %v8592
        %v9853 = vadd.f32 %v9852, %v8596
        %v9854 = vadd.f32 %v9853, %v8600
        %v9855 = vadd.f32 %v9854, %v8604
        %v9856 = vadd.f32 %v9855, %v8608
        %v9857 = vadd.f32 %v9856, %v8612
        %v9858 = vadd.f32 %v9857, %v8616
        %v9859 = vadd.f32 %v9858, %v8620
        %v9860 = vadd.f32 %v9859, %v8624
        %v9861 = vadd.f32 %v9860, %v8628
        %v9862 = vadd.f32 %v9861, %v8632
        %v9863 = vadd.f32 %v9862, %v8636
        %v9864 = vadd.f32 %v9863, %v8640
        %v9865 = vadd.f32 %v9864, %v8644
        %v9866 = vadd.f32 %v9865, %v8648
        %v9867 = vrot.slane %v9866, 4
        %v9868 = vadd.f32 %v9866, %v9867
        %v9869 = vrot.slane %v9868, 2
        %v9870 = vadd.f32 %v9868, %v9869
        %v9871 = vrot.slane %v9870, 1
        %v9872 = vadd.f32 %v9870, %v9871
        %v9873 = vadd.f32 %v8649, %v8653
        %v9874 = vadd.f32 %v9873, %v8657
        %v9875 = vadd.f32 %v9874, %v8661
        %v9876 = vadd.f32 %v9875, %v8665
        %v9877 = vadd.f32 %v9876, %v8669
        %v9878 = vadd.f32 %v9877, %v8673
        %v9879 = vadd.f32 %v9878, %v8677
        %v9880 = vadd.f32 %v9879, %v8681
        %v9881 = vadd.f32 %v9880, %v8685
        %v9882 = vadd.f32 %v9881, %v8689
        %v9883 = vadd.f32 %v9882, %v8693
        %v9884 = vadd.f32 %v9883, %v8697
        %v9885 = vadd.f32 %v9884, %v8701
        %v9886 = vadd.f32 %v9885, %v8705
        %v9887 = vadd.f32 %v9886, %v8709
        %v9888 = vrot.slane %v9887, 4
        %v9889 = vadd.f32 %v9887, %v9888
        %v9890 = vrot.slane %v9889, 2
        %v9891 = vadd.f32 %v9889, %v9890
        %v9892 = vrot.slane %v9891, 1
        %v9893 = vadd.f32 %v9891, %v9892
        %v9894 = vadd.f32 %v8650, %v8654
        %v9895 = vadd.f32 %v9894, %v8658
        %v9896 = vadd.f32 %v9895, %v8662
        %v9897 = vadd.f32 %v9896, %v8666
        %v9898 = vadd.f32 %v9897, %v8670
        %v9899 = vadd.f32 %v9898, %v8674
        %v9900 = vadd.f32 %v9899, %v8678
        %v9901 = vadd.f32 %v9900, %v8682
        %v9902 = vadd.f32 %v9901, %v8686
        %v9903 = vadd.f32 %v9902, %v8690
        %v9904 = vadd.f32 %v9903, %v8694
        %v9905 = vadd.f32 %v9904, %v8698
        %v9906 = vadd.f32 %v9905, %v8702
        %v9907 = vadd.f32 %v9906, %v8706
        %v9908 = vadd.f32 %v9907, %v8710
        %v9909 = vrot.slane %v9908, 4
        %v9910 = vadd.f32 %v9908, %v9909
        %v9911 = vrot.slane %v9910, 2
        %v9912 = vadd.f32 %v9910, %v9911
        %v9913 = vrot.slane %v9912, 1
        %v9914 = vadd.f32 %v9912, %v9913
        %v9915 = vadd.f32 %v8651, %v8655
        %v9916 = vadd.f32 %v9915, %v8659
        %v9917 = vadd.f32 %v9916, %v8663
        %v9918 = vadd.f32 %v9917, %v8667
        %v9919 = vadd.f32 %v9918, %v8671
        %v9920 = vadd.f32 %v9919, %v8675
        %v9921 = vadd.f32 %v9920, %v8679
        %v9922 = vadd.f32 %v9921, %v8683
        %v9923 = vadd.f32 %v9922, %v8687
        %v9924 = vadd.f32 %v9923, %v8691
        %v9925 = vadd.f32 %v9924, %v8695
        %v9926 = vadd.f32 %v9925, %v8699
        %v9927 = vadd.f32 %v9926, %v8703
        %v9928 = vadd.f32 %v9927, %v8707
        %v9929 = vadd.f32 %v9928, %v8711
        %v9930 = vrot.slane %v9929, 4
        %v9931 = vadd.f32 %v9929, %v9930
        %v9932 = vrot.slane %v9931, 2
        %v9933 = vadd.f32 %v9931, %v9932
        %v9934 = vrot.slane %v9933, 1
        %v9935 = vadd.f32 %v9933, %v9934
        %v9936 = vadd.f32 %v8652, %v8656
        %v9937 = vadd.f32 %v9936, %v8660
        %v9938 = vadd.f32 %v9937, %v8664
        %v9939 = vadd.f32 %v9938, %v8668
        %v9940 = vadd.f32 %v9939, %v8672
        %v9941 = vadd.f32 %v9940, %v8676
        %v9942 = vadd.f32 %v9941, %v8680
        %v9943 = vadd.f32 %v9942, %v8684
        %v9944 = vadd.f32 %v9943, %v8688
        %v9945 = vadd.f32 %v9944, %v8692
        %v9946 = vadd.f32 %v9945, %v8696
        %v9947 = vadd.f32 %v9946, %v8700
        %v9948 = vadd.f32 %v9947, %v8704
        %v9949 = vadd.f32 %v9948, %v8708
        %v9950 = vadd.f32 %v9949, %v8712
        %v9951 = vrot.slane %v9950, 4
        %v9952 = vadd.f32 %v9950, %v9951
        %v9953 = vrot.slane %v9952, 2
        %v9954 = vadd.f32 %v9952, %v9953
        %v9955 = vrot.slane %v9954, 1
        %v9956 = vadd.f32 %v9954, %v9955
        %v9957 = vadd.f32 %v8713, %v8717
        %v9958 = vadd.f32 %v9957, %v8721
        %v9959 = vadd.f32 %v9958, %v8725
        %v9960 = vadd.f32 %v9959, %v8729
        %v9961 = vadd.f32 %v9960, %v8733
        %v9962 = vadd.f32 %v9961, %v8737
        %v9963 = vadd.f32 %v9962, %v8741
        %v9964 = vadd.f32 %v9963, %v8745
        %v9965 = vadd.f32 %v9964, %v8749
        %v9966 = vadd.f32 %v9965, %v8753
        %v9967 = vadd.f32 %v9966, %v8757
        %v9968 = vadd.f32 %v9967, %v8761
        %v9969 = vadd.f32 %v9968, %v8765
        %v9970 = vadd.f32 %v9969, %v8769
        %v9971 = vadd.f32 %v9970, %v8773
        %v9972 = vrot.slane %v9971, 4
        %v9973 = vadd.f32 %v9971, %v9972
        %v9974 = vrot.slane %v9973, 2
        %v9975 = vadd.f32 %v9973, %v9974
        %v9976 = vrot.slane %v9975, 1
        %v9977 = vadd.f32 %v9975, %v9976
        %v9978 = vadd.f32 %v8714, %v8718
        %v9979 = vadd.f32 %v9978, %v8722
        %v9980 = vadd.f32 %v9979, %v8726
        %v9981 = vadd.f32 %v9980, %v8730
        %v9982 = vadd.f32 %v9981, %v8734
        %v9983 = vadd.f32 %v9982, %v8738
        %v9984 = vadd.f32 %v9983, %v8742
        %v9985 = vadd.f32 %v9984, %v8746
        %v9986 = vadd.f32 %v9985, %v8750
        %v9987 = vadd.f32 %v9986, %v8754
        %v9988 = vadd.f32 %v9987, %v8758
        %v9989 = vadd.f32 %v9988, %v8762
        %v9990 = vadd.f32 %v9989, %v8766
        %v9991 = vadd.f32 %v9990, %v8770
        %v9992 = vadd.f32 %v9991, %v8774
        %v9993 = vrot.slane %v9992, 4
        %v9994 = vadd.f32 %v9992, %v9993
        %v9995 = vrot.slane %v9994, 2
        %v9996 = vadd.f32 %v9994, %v9995
        %v9997 = vrot.slane %v9996, 1
        %v9998 = vadd.f32 %v9996, %v9997
        %v9999 = vadd.f32 %v8715, %v8719
        %v10000 = vadd.f32 %v9999, %v8723
        %v10001 = vadd.f32 %v10000, %v8727
        %v10002 = vadd.f32 %v10001, %v8731
        %v10003 = vadd.f32 %v10002, %v8735
        %v10004 = vadd.f32 %v10003, %v8739
        %v10005 = vadd.f32 %v10004, %v8743
        %v10006 = vadd.f32 %v10005, %v8747
        %v10007 = vadd.f32 %v10006, %v8751
        %v10008 = vadd.f32 %v10007, %v8755
        %v10009 = vadd.f32 %v10008, %v8759
        %v10010 = vadd.f32 %v10009, %v8763
        %v10011 = vadd.f32 %v10010, %v8767
        %v10012 = vadd.f32 %v10011, %v8771
        %v10013 = vadd.f32 %v10012, %v8775
        %v10014 = vrot.slane %v10013, 4
        %v10015 = vadd.f32 %v10013, %v10014
        %v10016 = vrot.slane %v10015, 2
        %v10017 = vadd.f32 %v10015, %v10016
        %v10018 = vrot.slane %v10017, 1
        %v10019 = vadd.f32 %v10017, %v10018
        %v10020 = vadd.f32 %v8716, %v8720
        %v10021 = vadd.f32 %v10020, %v8724
        %v10022 = vadd.f32 %v10021, %v8728
        %v10023 = vadd.f32 %v10022, %v8732
        %v10024 = vadd.f32 %v10023, %v8736
        %v10025 = vadd.f32 %v10024, %v8740
        %v10026 = vadd.f32 %v10025, %v8744
        %v10027 = vadd.f32 %v10026, %v8748
        %v10028 = vadd.f32 %v10027, %v8752
        %v10029 = vadd.f32 %v10028, %v8756
        %v10030 = vadd.f32 %v10029, %v8760
        %v10031 = vadd.f32 %v10030, %v8764
        %v10032 = vadd.f32 %v10031, %v8768
        %v10033 = vadd.f32 %v10032, %v8772
        %v10034 = vadd.f32 %v10033, %v8776
        %v10035 = vrot.slane %v10034, 4
        %v10036 = vadd.f32 %v10034, %v10035
        %v10037 = vrot.slane %v10036, 2
        %v10038 = vadd.f32 %v10036, %v10037
        %v10039 = vrot.slane %v10038, 1
        %v10040 = vadd.f32 %v10038, %v10039
        %v10041 = vadd.f32 %v8777, %v8781
        %v10042 = vadd.f32 %v10041, %v8785
        %v10043 = vadd.f32 %v10042, %v8789
        %v10044 = vadd.f32 %v10043, %v8793
        %v10045 = vadd.f32 %v10044, %v8797
        %v10046 = vadd.f32 %v10045, %v8801
        %v10047 = vadd.f32 %v10046, %v8805
        %v10048 = vadd.f32 %v10047, %v8809
        %v10049 = vadd.f32 %v10048, %v8813
        %v10050 = vadd.f32 %v10049, %v8817
        %v10051 = vadd.f32 %v10050, %v8821
        %v10052 = vadd.f32 %v10051, %v8825
        %v10053 = vadd.f32 %v10052, %v8829
        %v10054 = vadd.f32 %v10053, %v8833
        %v10055 = vadd.f32 %v10054, %v8837
        %v10056 = vrot.slane %v10055, 4
        %v10057 = vadd.f32 %v10055, %v10056
        %v10058 = vrot.slane %v10057, 2
        %v10059 = vadd.f32 %v10057, %v10058
        %v10060 = vrot.slane %v10059, 1
        %v10061 = vadd.f32 %v10059, %v10060
        %v10062 = vadd.f32 %v8778, %v8782
        %v10063 = vadd.f32 %v10062, %v8786
        %v10064 = vadd.f32 %v10063, %v8790
        %v10065 = vadd.f32 %v10064, %v8794
        %v10066 = vadd.f32 %v10065, %v8798
        %v10067 = vadd.f32 %v10066, %v8802
        %v10068 = vadd.f32 %v10067, %v8806
        %v10069 = vadd.f32 %v10068, %v8810
        %v10070 = vadd.f32 %v10069, %v8814
        %v10071 = vadd.f32 %v10070, %v8818
        %v10072 = vadd.f32 %v10071, %v8822
        %v10073 = vadd.f32 %v10072, %v8826
        %v10074 = vadd.f32 %v10073, %v8830
        %v10075 = vadd.f32 %v10074, %v8834
        %v10076 = vadd.f32 %v10075, %v8838
        %v10077 = vrot.slane %v10076, 4
        %v10078 = vadd.f32 %v10076, %v10077
        %v10079 = vrot.slane %v10078, 2
        %v10080 = vadd.f32 %v10078, %v10079
        %v10081 = vrot.slane %v10080, 1
        %v10082 = vadd.f32 %v10080, %v10081
        %v10083 = vadd.f32 %v8779, %v8783
        %v10084 = vadd.f32 %v10083, %v8787
        %v10085 = vadd.f32 %v10084, %v8791
        %v10086 = vadd.f32 %v10085, %v8795
        %v10087 = vadd.f32 %v10086, %v8799
        %v10088 = vadd.f32 %v10087, %v8803
        %v10089 = vadd.f32 %v10088, %v8807
        %v10090 = vadd.f32 %v10089, %v8811
        %v10091 = vadd.f32 %v10090, %v8815
        %v10092 = vadd.f32 %v10091, %v8819
        %v10093 = vadd.f32 %v10092, %v8823
        %v10094 = vadd.f32 %v10093, %v8827
        %v10095 = vadd.f32 %v10094, %v8831
        %v10096 = vadd.f32 %v10095, %v8835
        %v10097 = vadd.f32 %v10096, %v8839
        %v10098 = vrot.slane %v10097, 4
        %v10099 = vadd.f32 %v10097, %v10098
        %v10100 = vrot.slane %v10099, 2
        %v10101 = vadd.f32 %v10099, %v10100
        %v10102 = vrot.slane %v10101, 1
        %v10103 = vadd.f32 %v10101, %v10102
        %v10104 = vadd.f32 %v8780, %v8784
        %v10105 = vadd.f32 %v10104, %v8788
        %v10106 = vadd.f32 %v10105, %v8792
        %v10107 = vadd.f32 %v10106, %v8796
        %v10108 = vadd.f32 %v10107, %v8800
        %v10109 = vadd.f32 %v10108, %v8804
        %v10110 = vadd.f32 %v10109, %v8808
        %v10111 = vadd.f32 %v10110, %v8812
        %v10112 = vadd.f32 %v10111, %v8816
        %v10113 = vadd.f32 %v10112, %v8820
        %v10114 = vadd.f32 %v10113, %v8824
        %v10115 = vadd.f32 %v10114, %v8828
        %v10116 = vadd.f32 %v10115, %v8832
        %v10117 = vadd.f32 %v10116, %v8836
        %v10118 = vadd.f32 %v10117, %v8840
        %v10119 = vrot.slane %v10118, 4
        %v10120 = vadd.f32 %v10118, %v10119
        %v10121 = vrot.slane %v10120, 2
        %v10122 = vadd.f32 %v10120, %v10121
        %v10123 = vrot.slane %v10122, 1
        %v10124 = vadd.f32 %v10122, %v10123
        %v10125 = vadd.f32 %v8841, %v8845
        %v10126 = vadd.f32 %v10125, %v8849
        %v10127 = vadd.f32 %v10126, %v8853
        %v10128 = vadd.f32 %v10127, %v8857
        %v10129 = vadd.f32 %v10128, %v8861
        %v10130 = vadd.f32 %v10129, %v8865
        %v10131 = vadd.f32 %v10130, %v8869
        %v10132 = vadd.f32 %v10131, %v8873
        %v10133 = vadd.f32 %v10132, %v8877
        %v10134 = vadd.f32 %v10133, %v8881
        %v10135 = vadd.f32 %v10134, %v8885
        %v10136 = vadd.f32 %v10135, %v8889
        %v10137 = vadd.f32 %v10136, %v8893
        %v10138 = vadd.f32 %v10137, %v8897
        %v10139 = vadd.f32 %v10138, %v8901
        %v10140 = vrot.slane %v10139, 4
        %v10141 = vadd.f32 %v10139, %v10140
        %v10142 = vrot.slane %v10141, 2
        %v10143 = vadd.f32 %v10141, %v10142
        %v10144 = vrot.slane %v10143, 1
        %v10145 = vadd.f32 %v10143, %v10144
        %v10146 = vadd.f32 %v8842, %v8846
        %v10147 = vadd.f32 %v10146, %v8850
        %v10148 = vadd.f32 %v10147, %v8854
        %v10149 = vadd.f32 %v10148, %v8858
        %v10150 = vadd.f32 %v10149, %v8862
        %v10151 = vadd.f32 %v10150, %v8866
        %v10152 = vadd.f32 %v10151, %v8870
        %v10153 = vadd.f32 %v10152, %v8874
        %v10154 = vadd.f32 %v10153, %v8878
        %v10155 = vadd.f32 %v10154, %v8882
        %v10156 = vadd.f32 %v10155, %v8886
        %v10157 = vadd.f32 %v10156, %v8890
        %v10158 = vadd.f32 %v10157, %v8894
        %v10159 = vadd.f32 %v10158, %v8898
        %v10160 = vadd.f32 %v10159, %v8902
        %v10161 = vrot.slane %v10160, 4
        %v10162 = vadd.f32 %v10160, %v10161
        %v10163 = vrot.slane %v10162, 2
        %v10164 = vadd.f32 %v10162, %v10163
        %v10165 = vrot.slane %v10164, 1
        %v10166 = vadd.f32 %v10164, %v10165
        %v10167 = vadd.f32 %v8843, %v8847
        %v10168 = vadd.f32 %v10167, %v8851
        %v10169 = vadd.f32 %v10168, %v8855
        %v10170 = vadd.f32 %v10169, %v8859
        %v10171 = vadd.f32 %v10170, %v8863
        %v10172 = vadd.f32 %v10171, %v8867
        %v10173 = vadd.f32 %v10172, %v8871
        %v10174 = vadd.f32 %v10173, %v8875
        %v10175 = vadd.f32 %v10174, %v8879
        %v10176 = vadd.f32 %v10175, %v8883
        %v10177 = vadd.f32 %v10176, %v8887
        %v10178 = vadd.f32 %v10177, %v8891
        %v10179 = vadd.f32 %v10178, %v8895
        %v10180 = vadd.f32 %v10179, %v8899
        %v10181 = vadd.f32 %v10180, %v8903
        %v10182 = vrot.slane %v10181, 4
        %v10183 = vadd.f32 %v10181, %v10182
        %v10184 = vrot.slane %v10183, 2
        %v10185 = vadd.f32 %v10183, %v10184
        %v10186 = vrot.slane %v10185, 1
        %v10187 = vadd.f32 %v10185, %v10186
        %v10188 = vadd.f32 %v8844, %v8848
        %v10189 = vadd.f32 %v10188, %v8852
        %v10190 = vadd.f32 %v10189, %v8856
        %v10191 = vadd.f32 %v10190, %v8860
        %v10192 = vadd.f32 %v10191, %v8864
        %v10193 = vadd.f32 %v10192, %v8868
        %v10194 = vadd.f32 %v10193, %v8872
        %v10195 = vadd.f32 %v10194, %v8876
        %v10196 = vadd.f32 %v10195, %v8880
        %v10197 = vadd.f32 %v10196, %v8884
        %v10198 = vadd.f32 %v10197, %v8888
        %v10199 = vadd.f32 %v10198, %v8892
        %v10200 = vadd.f32 %v10199, %v8896
        %v10201 = vadd.f32 %v10200, %v8900
        %v10202 = vadd.f32 %v10201, %v8904
        %v10203 = vrot.slane %v10202, 4
        %v10204 = vadd.f32 %v10202, %v10203
        %v10205 = vrot.slane %v10204, 2
        %v10206 = vadd.f32 %v10204, %v10205
        %v10207 = vrot.slane %v10206, 1
        %v10208 = vadd.f32 %v10206, %v10207
        %v10209 = vadd.f32 %v8905, %v8909
        %v10210 = vadd.f32 %v10209, %v8913
        %v10211 = vadd.f32 %v10210, %v8917
        %v10212 = vadd.f32 %v10211, %v8921
        %v10213 = vadd.f32 %v10212, %v8925
        %v10214 = vadd.f32 %v10213, %v8929
        %v10215 = vadd.f32 %v10214, %v8933
        %v10216 = vadd.f32 %v10215, %v8937
        %v10217 = vadd.f32 %v10216, %v8941
        %v10218 = vadd.f32 %v10217, %v8945
        %v10219 = vadd.f32 %v10218, %v8949
        %v10220 = vadd.f32 %v10219, %v8953
        %v10221 = vadd.f32 %v10220, %v8957
        %v10222 = vadd.f32 %v10221, %v8961
        %v10223 = vadd.f32 %v10222, %v8965
        %v10224 = vrot.slane %v10223, 4
        %v10225 = vadd.f32 %v10223, %v10224
        %v10226 = vrot.slane %v10225, 2
        %v10227 = vadd.f32 %v10225, %v10226
        %v10228 = vrot.slane %v10227, 1
        %v10229 = vadd.f32 %v10227, %v10228
        %v10230 = vadd.f32 %v8906, %v8910
        %v10231 = vadd.f32 %v10230, %v8914
        %v10232 = vadd.f32 %v10231, %v8918
        %v10233 = vadd.f32 %v10232, %v8922
        %v10234 = vadd.f32 %v10233, %v8926
        %v10235 = vadd.f32 %v10234, %v8930
        %v10236 = vadd.f32 %v10235, %v8934
        %v10237 = vadd.f32 %v10236, %v8938
        %v10238 = vadd.f32 %v10237, %v8942
        %v10239 = vadd.f32 %v10238, %v8946
        %v10240 = vadd.f32 %v10239, %v8950
        %v10241 = vadd.f32 %v10240, %v8954
        %v10242 = vadd.f32 %v10241, %v8958
        %v10243 = vadd.f32 %v10242, %v8962
        %v10244 = vadd.f32 %v10243, %v8966
        %v10245 = vrot.slane %v10244, 4
        %v10246 = vadd.f32 %v10244, %v10245
        %v10247 = vrot.slane %v10246, 2
        %v10248 = vadd.f32 %v10246, %v10247
        %v10249 = vrot.slane %v10248, 1
        %v10250 = vadd.f32 %v10248, %v10249
        %v10251 = vadd.f32 %v8907, %v8911
        %v10252 = vadd.f32 %v10251, %v8915
        %v10253 = vadd.f32 %v10252, %v8919
        %v10254 = vadd.f32 %v10253, %v8923
        %v10255 = vadd.f32 %v10254, %v8927
        %v10256 = vadd.f32 %v10255, %v8931
        %v10257 = vadd.f32 %v10256, %v8935
        %v10258 = vadd.f32 %v10257, %v8939
        %v10259 = vadd.f32 %v10258, %v8943
        %v10260 = vadd.f32 %v10259, %v8947
        %v10261 = vadd.f32 %v10260, %v8951
        %v10262 = vadd.f32 %v10261, %v8955
        %v10263 = vadd.f32 %v10262, %v8959
        %v10264 = vadd.f32 %v10263, %v8963
        %v10265 = vadd.f32 %v10264, %v8967
        %v10266 = vrot.slane %v10265, 4
        %v10267 = vadd.f32 %v10265, %v10266
        %v10268 = vrot.slane %v10267, 2
        %v10269 = vadd.f32 %v10267, %v10268
        %v10270 = vrot.slane %v10269, 1
        %v10271 = vadd.f32 %v10269, %v10270
        %v10272 = vadd.f32 %v8908, %v8912
        %v10273 = vadd.f32 %v10272, %v8916
        %v10274 = vadd.f32 %v10273, %v8920
        %v10275 = vadd.f32 %v10274, %v8924
        %v10276 = vadd.f32 %v10275, %v8928
        %v10277 = vadd.f32 %v10276, %v8932
        %v10278 = vadd.f32 %v10277, %v8936
        %v10279 = vadd.f32 %v10278, %v8940
        %v10280 = vadd.f32 %v10279, %v8944
        %v10281 = vadd.f32 %v10280, %v8948
        %v10282 = vadd.f32 %v10281, %v8952
        %v10283 = vadd.f32 %v10282, %v8956
        %v10284 = vadd.f32 %v10283, %v8960
        %v10285 = vadd.f32 %v10284, %v8964
        %v10286 = vadd.f32 %v10285, %v8968
        %v10287 = vrot.slane %v10286, 4
        %v10288 = vadd.f32 %v10286, %v10287
        %v10289 = vrot.slane %v10288, 2
        %v10290 = vadd.f32 %v10288, %v10289
        %v10291 = vrot.slane %v10290, 1
        %v10292 = vadd.f32 %v10290, %v10291
        %v10293 = vadd.f32 %v8969, %v8973
        %v10294 = vadd.f32 %v10293, %v8977
        %v10295 = vadd.f32 %v10294, %v8981
        %v10296 = vadd.f32 %v10295, %v8985
        %v10297 = vadd.f32 %v10296, %v8989
        %v10298 = vadd.f32 %v10297, %v8993
        %v10299 = vadd.f32 %v10298, %v8997
        %v10300 = vadd.f32 %v10299, %v9001
        %v10301 = vadd.f32 %v10300, %v9005
        %v10302 = vadd.f32 %v10301, %v9009
        %v10303 = vadd.f32 %v10302, %v9013
        %v10304 = vadd.f32 %v10303, %v9017
        %v10305 = vadd.f32 %v10304, %v9021
        %v10306 = vadd.f32 %v10305, %v9025
        %v10307 = vadd.f32 %v10306, %v9029
        %v10308 = vrot.slane %v10307, 4
        %v10309 = vadd.f32 %v10307, %v10308
        %v10310 = vrot.slane %v10309, 2
        %v10311 = vadd.f32 %v10309, %v10310
        %v10312 = vrot.slane %v10311, 1
        %v10313 = vadd.f32 %v10311, %v10312
        %v10314 = vadd.f32 %v8970, %v8974
        %v10315 = vadd.f32 %v10314, %v8978
        %v10316 = vadd.f32 %v10315, %v8982
        %v10317 = vadd.f32 %v10316, %v8986
        %v10318 = vadd.f32 %v10317, %v8990
        %v10319 = vadd.f32 %v10318, %v8994
        %v10320 = vadd.f32 %v10319, %v8998
        %v10321 = vadd.f32 %v10320, %v9002
        %v10322 = vadd.f32 %v10321, %v9006
        %v10323 = vadd.f32 %v10322, %v9010
        %v10324 = vadd.f32 %v10323, %v9014
        %v10325 = vadd.f32 %v10324, %v9018
        %v10326 = vadd.f32 %v10325, %v9022
        %v10327 = vadd.f32 %v10326, %v9026
        %v10328 = vadd.f32 %v10327, %v9030
        %v10329 = vrot.slane %v10328, 4
        %v10330 = vadd.f32 %v10328, %v10329
        %v10331 = vrot.slane %v10330, 2
        %v10332 = vadd.f32 %v10330, %v10331
        %v10333 = vrot.slane %v10332, 1
        %v10334 = vadd.f32 %v10332, %v10333
        %v10335 = vadd.f32 %v8971, %v8975
        %v10336 = vadd.f32 %v10335, %v8979
        %v10337 = vadd.f32 %v10336, %v8983
        %v10338 = vadd.f32 %v10337, %v8987
        %v10339 = vadd.f32 %v10338, %v8991
        %v10340 = vadd.f32 %v10339, %v8995
        %v10341 = vadd.f32 %v10340, %v8999
        %v10342 = vadd.f32 %v10341, %v9003
        %v10343 = vadd.f32 %v10342, %v9007
        %v10344 = vadd.f32 %v10343, %v9011
        %v10345 = vadd.f32 %v10344, %v9015
        %v10346 = vadd.f32 %v10345, %v9019
        %v10347 = vadd.f32 %v10346, %v9023
        %v10348 = vadd.f32 %v10347, %v9027
        %v10349 = vadd.f32 %v10348, %v9031
        %v10350 = vrot.slane %v10349, 4
        %v10351 = vadd.f32 %v10349, %v10350
        %v10352 = vrot.slane %v10351, 2
        %v10353 = vadd.f32 %v10351, %v10352
        %v10354 = vrot.slane %v10353, 1
        %v10355 = vadd.f32 %v10353, %v10354
        %v10356 = vadd.f32 %v8972, %v8976
        %v10357 = vadd.f32 %v10356, %v8980
        %v10358 = vadd.f32 %v10357, %v8984
        %v10359 = vadd.f32 %v10358, %v8988
        %v10360 = vadd.f32 %v10359, %v8992
        %v10361 = vadd.f32 %v10360, %v8996
        %v10362 = vadd.f32 %v10361, %v9000
        %v10363 = vadd.f32 %v10362, %v9004
        %v10364 = vadd.f32 %v10363, %v9008
        %v10365 = vadd.f32 %v10364, %v9012
        %v10366 = vadd.f32 %v10365, %v9016
        %v10367 = vadd.f32 %v10366, %v9020
        %v10368 = vadd.f32 %v10367, %v9024
        %v10369 = vadd.f32 %v10368, %v9028
        %v10370 = vadd.f32 %v10369, %v9032
        %v10371 = vrot.slane %v10370, 4
        %v10372 = vadd.f32 %v10370, %v10371
        %v10373 = vrot.slane %v10372, 2
        %v10374 = vadd.f32 %v10372, %v10373
        %v10375 = vrot.slane %v10374, 1
        %v10376 = vadd.f32 %v10374, %v10375
        %vm10377 = vcmask 1040384
        %v10378 = vsel %vm10377, %v9053, %v9137
        %v10379 = vsel %vm10377, %v9074, %v9158
        %v10380 = vsel %vm10377, %v9095, %v9179
        %v10381 = vsel %vm10377, %v9116, %v9200
        %vm10382 = vcmask 1041408
        %v10383 = vsel %vm10382, %v10378, %v9221
        %v10384 = vsel %vm10382, %v10379, %v9242
        %v10385 = vsel %vm10382, %v10380, %v9263
        %v10386 = vsel %vm10382, %v10381, %v9284
        %vm10387 = vcmask 1042432
        %v10388 = vsel %vm10387, %v10383, %v9305
        %v10389 = vsel %vm10387, %v10384, %v9326
        %v10390 = vsel %vm10387, %v10385, %v9347
        %v10391 = vsel %vm10387, %v10386, %v9368
        %vm10392 = vcmask 1043456
        %v10393 = vsel %vm10392, %v10388, %v9389
        %v10394 = vsel %vm10392, %v10389, %v9410
        %v10395 = vsel %vm10392, %v10390, %v9431
        %v10396 = vsel %vm10392, %v10391, %v9452
        %vm10397 = vcmask 1044480
        %v10398 = vsel %vm10397, %v10393, %v9473
        %v10399 = vsel %vm10397, %v10394, %v9494
        %v10400 = vsel %vm10397, %v10395, %v9515
        %v10401 = vsel %vm10397, %v10396, %v9536
        %vm10402 = vcmask 1045504
        %v10403 = vsel %vm10402, %v10398, %v9557
        %v10404 = vsel %vm10402, %v10399, %v9578
        %v10405 = vsel %vm10402, %v10400, %v9599
        %v10406 = vsel %vm10402, %v10401, %v9620
        %vm10407 = vcmask 1046528
        %v10408 = vsel %vm10407, %v10403, %v9641
        %v10409 = vsel %vm10407, %v10404, %v9662
        %v10410 = vsel %vm10407, %v10405, %v9683
        %v10411 = vsel %vm10407, %v10406, %v9704
        %v10412 = vsel %vm10377, %v9725, %v9809
        %v10413 = vsel %vm10377, %v9746, %v9830
        %v10414 = vsel %vm10377, %v9767, %v9851
        %v10415 = vsel %vm10377, %v9788, %v9872
        %v10416 = vsel %vm10382, %v10412, %v9893
        %v10417 = vsel %vm10382, %v10413, %v9914
        %v10418 = vsel %vm10382, %v10414, %v9935
        %v10419 = vsel %vm10382, %v10415, %v9956
        %v10420 = vsel %vm10387, %v10416, %v9977
        %v10421 = vsel %vm10387, %v10417, %v9998
        %v10422 = vsel %vm10387, %v10418, %v10019
        %v10423 = vsel %vm10387, %v10419, %v10040
        %v10424 = vsel %vm10392, %v10420, %v10061
        %v10425 = vsel %vm10392, %v10421, %v10082
        %v10426 = vsel %vm10392, %v10422, %v10103
        %v10427 = vsel %vm10392, %v10423, %v10124
        %v10428 = vsel %vm10397, %v10424, %v10145
        %v10429 = vsel %vm10397, %v10425, %v10166
        %v10430 = vsel %vm10397, %v10426, %v10187
        %v10431 = vsel %vm10397, %v10427, %v10208
        %v10432 = vsel %vm10402, %v10428, %v10229
        %v10433 = vsel %vm10402, %v10429, %v10250
        %v10434 = vsel %vm10402, %v10430, %v10271
        %v10435 = vsel %vm10402, %v10431, %v10292
        %v10436 = vsel %vm10407, %v10432, %v10313
        %v10437 = vsel %vm10407, %v10433, %v10334
        %v10438 = vsel %vm10407, %v10434, %v10355
        %v10439 = vsel %vm10407, %v10435, %v10376
        %v10440 = vld [vmem:[#allocation2] sm:$0x1]
        %v10442 = vlaneseq
        %v10443 = vshrl.u32 %v10442, 7
        %v10444 = vsub.s32 0, %v10443
        %v10445 = vrot.slane %v10440, %v10444
        %10446 = vset.pattern.permute.xlu0 0
        %10447 = vperm.xlu0 %10446, %v10445
        %v10448 = vpop.permute.xlu0 %10447
        %v10450 = vadd.f32 %v10408, %v10448
        %v10451 = vadd.f32 %v10409, %v10448
        %v10452 = vadd.f32 %v10410, %v10448
        %v10453 = vadd.f32 %v10411, %v10448
        %v10454 = vadd.f32 %v10436, %v10448
        %v10455 = vadd.f32 %v10437, %v10448
        %v10456 = vadd.f32 %v10438, %v10448
        %v10457 = vadd.f32 %v10439, %v10448
        %10458 = vst [vmem:[%s388] sm:$0xff] %v10450
        %10459 = vst [vmem:[%s388 + $0x8] sm:$0xff] %v10451
        %10460 = vst [vmem:[%s388 + $0x10] sm:$0xff] %v10452
        %10461 = vst [vmem:[%s388 + $0x18] sm:$0xff] %v10453
        %10462 = vst [vmem:[%s388 + $0x20] sm:$0xff] %v10454
        %10463 = vst [vmem:[%s388 + $0x28] sm:$0xff] %v10455
        %10464 = vst [vmem:[%s388 + $0x30] sm:$0xff] %v10456
        %10465 = vst [vmem:[%s388 + $0x38] sm:$0xff] %v10457
        %s10466 = sand.u32 %s155, 1
        %s10467 = scalar_lea.sflag [#allocation5], %s10466
        %s10468 = sand.u32 %s155, 1
        %s10469 = smul.addr %s10468, 64
        %s10470 = scalar_lea.vmem [#allocation4], %s10469
        // Predicated region
        $region64: #{tpu_custom_call.1} parent=58 // pred_check
          %p10471 = pneg %p165
        $region65: #{tpu_custom_call.1} parent=58 // pred_check_branch
          %10473 = sbr.rel (%p10471) target = $region67
        $region66: #{tpu_custom_call.1} parent=58 // pred_region
          %s10474 = smul.u32 4, %s26
          %s10476 = ssub.s32 1024, 1024
          %10477 = vsyncadd %s10467, %s10476
          %s10478 = smul.addr %s25, 16
          %s10479 = sadd.s32 %s10474, %s10478
          %s10480 = smul.addr %s10479, 128
          %s10481 = scalar_lea.hbm %s5, %s10480
          %s10482 = sshll.u32 %s10470, 4
          %s10483 = int_to_ptr.vmem [resolvable:$true] %s10482
          %10488 = dma.vmem_to_hbm [thread:$0]  %s10483, 1024, %s10481, %s10467, 512, 1024, 32
        $region67: #{tpu_custom_call.1} parent=58 // pred_fallthru
          _
      $region59: #{tpu_custom_call.1} parent=5 // pred_fallthru
        _
      %p10489 = scmp.le.s32.totalorder 2, %s16
      // Predicated region
      $region68: #{tpu_custom_call.1} parent=5 // pred_check
        %p10490 = pneg %p10489
      $region69: #{tpu_custom_call.1} parent=5 // pred_check_branch
        %10492 = sbr.rel (%p10490) target = $region71
      $region70: #{tpu_custom_call.1} parent=5 // pred_region
        %s10493 = ssub.s32 %s16, 2
        // Predicated region
        $region72: #{tpu_custom_call.1} parent=70 // pred_check
          %p10494 = pneg %p171
        $region73: #{tpu_custom_call.1} parent=70 // pred_check_branch
          %10496 = sbr.rel (%p10494) target = $region75
        $region74: #{tpu_custom_call.1} parent=70 // pred_region
          %s10497 = sand.u32 %s156, 1
          %s10498 = scalar_lea.sflag [#allocation5], %s10497
          %s10499 = sand.u32 %s156, 1
          %s10500 = smul.addr %s10499, 64
          %s10501 = scalar_lea.vmem [#allocation4], %s10500
          %10502 = dma.done %s10498, 1024
        $region75: #{tpu_custom_call.1} parent=70 // pred_fallthru
          _
      $region71: #{tpu_custom_call.1} parent=5 // pred_fallthru
        _
    $region6: #{tpu_custom_call.1} parent=1 // loop_footer
      %s20 = sadd.s32 1, %s16
    $region7: #{tpu_custom_call.1} parent=1 // loop_footer_branch
      %15 = sbr.rel target = $region3
    $region8: #{tpu_custom_call.1} parent=1 // loop_exit
      _
    %10503 = vsyncpa [#allocation5], 1
    %s10504 = scalar_lea.sflag [#allocation5], 1
    %10505 = vsyncpa %s10504, 1

</llo_original>
